<compile_context>
chip_gen: v7x
topology: tpu7x:2x2x1
jax: 0.10.0
libtpu: 0.0.40
codegen_flags: <defaults>
</compile_context>

<pallas_src>
import jax
import jax.numpy as jnp
from jax.experimental import pallas as pl
from jax.experimental.pallas import tpu as pltpu

OUT_LANES = 128  # lane-dense packed head output: [cat(6) | view18(18) | zeros]


def _lrelu(v):
    # get_nn_act_func('lrelu') -> LeakyReLU(negative_slope=0.1) in this codebase
    # (NOT torch's 0.01 default).  max(v, 0.1*v) = 2 VPU ops, f32 throughout.
    return jnp.maximum(v, 0.1 * v)


def auxi_head_kernel(x_ref, w1_ref, b1_ref, w2_ref, b2_ref, w3_ref, b3_ref,
                     out_ref):
    h1w = w2_ref.shape[1]          # hidden width per branch (1024)

    # ---- fused layer 1: both branches in one (tm, fc_in) @ (fc_in, 2048) ----
    x = x_ref[...].astype(jnp.bfloat16)
    h1 = jnp.dot(x, w1_ref[...], preferred_element_type=jnp.float32)
    h1 = _lrelu(h1 + b1_ref[...]).astype(jnp.bfloat16)    # (tm, 2*h1w)

    # ---- layer 2: two plain MXU matmuls on lane-aligned halves of h1 ----
    h2c = jnp.dot(h1[:, :h1w], w2_ref[0], preferred_element_type=jnp.float32)
    h2v = jnp.dot(h1[:, h1w:], w2_ref[1], preferred_element_type=jnp.float32)
    h2c = _lrelu(h2c + b2_ref[0]).astype(jnp.bfloat16)     # (tm, 256)
    h2v = _lrelu(h2v + b2_ref[1]).astype(jnp.bfloat16)     # (tm, 256)

    # ---- layer 3: branch-0 weight lives in lanes 0:6, branch-1 in lanes 6:24,
    #      rest zero -> summing branches yields the packed [cat | view18 | 0].
    oc = jnp.dot(h2c, w3_ref[0], preferred_element_type=jnp.float32)
    ov = jnp.dot(h2v, w3_ref[1], preferred_element_type=jnp.float32)
    out_ref[...] = oc + ov + b3_ref[...]                   # (tm, 128) unmasked vst


def pack_params(params):
    """Fuse/stack the 12 raw f32 params into the bf16 kernel layout."""
    (w1c, b1c, w2c, b2c, wcc, bcc,
     w1v, b1v, w2v, b2v, wvv, bvv) = params
    w1 = jnp.concatenate([w1c, w1v], axis=1).astype(jnp.bfloat16)   # (fc_in, 2048)
    b1 = jnp.concatenate([b1c, b1v], axis=1).astype(jnp.float32)    # (1, 2048)
    w2 = jnp.stack([w2c, w2v], axis=0).astype(jnp.bfloat16)         # (2, 1024, 256)
    b2 = jnp.stack([b2c, b2v], axis=0).astype(jnp.float32)          # (2, 1, 256)
    nc, nv = wcc.shape[1], wvv.shape[1]                             # 6, 18
    w3c = jnp.pad(wcc, ((0, 0), (0, OUT_LANES - nc)))               # (256, 128)
    w3v = jnp.pad(wvv, ((0, 0), (nc, OUT_LANES - nc - nv)))         # (256, 128)
    w3 = jnp.stack([w3c, w3v], axis=0).astype(jnp.bfloat16)         # (2, 256, 128)
    b3 = jnp.pad(jnp.concatenate([bcc, bvv], axis=1),
                 ((0, 0), (0, OUT_LANES - nc - nv))).astype(jnp.float32)  # (1, 128)
    return (w1, b1, w2, b2, w3, b3)


def _vmem_capacity_bytes():
    try:
        return int(pltpu.get_tpu_info().vmem_capacity_bytes)
    except Exception:
        return 64 << 20            # conservative: v7x per-TensorCore VMEM


def _pick_tile_and_vmem(padded8, fc_in, weight_bytes):
    """Largest batch tile (<=512, multiple of 8) whose footprint fits VMEM."""
    budget = int(0.70 * _vmem_capacity_bytes())   # headroom for compiler scratch

    def footprint(tm):
        x_io = 2 * tm * fc_in * 4              # x tile f32, double-buffered
        out_io = 2 * tm * OUT_LANES * 4        # out tile f32, double-buffered
        interm = tm * (2 * fc_in               # x bf16 copy
                       + 6 * 2048              # h1 f32 + bf16
                       + 12 * 256              # h2 f32 + bf16 (two branches)
                       + 4 * OUT_LANES)        # f32 sum before the store
        return weight_bytes + x_io + out_io + interm

    tm = min(512, padded8)
    while tm > 8 and footprint(tm) > budget:
        tm -= 8
    # TODO(synk): if the single-buffered weights alone exceed the budget
    # (fc_in beyond ~12K on v7x), add a second "arbitrary" grid axis K-tiling
    # w1/x with an f32 VMEM accumulator; not needed at module sizes.
    vmem_limit = int(min(budget, 1.5 * footprint(tm) + (8 << 20)))
    return tm, vmem_limit


@jax.jit
def auxi_head_forward(x, packed, cat_0base_id):
    """x: (bs, feat_dim, 8, 8) f32 NCHW.  Returns (cat, view_axis)."""
    bs = x.shape[0]
    flat = x.reshape(bs, -1)                 # == torch x.flatten(2).flatten(1)
    fc_in = flat.shape[1]
    w1, b1, w2, b2, w3, b3 = packed

    weight_bytes = sum(int(a.size) * a.dtype.itemsize
                       for a in (w1, b1, w2, b2, w3, b3))

    # Pad batch to a multiple of 8 sublanes; pick the biggest tile that fits.
    padded8 = -(-bs // 8) * 8
    tm, vmem_limit = _pick_tile_and_vmem(padded8, fc_in, weight_bytes)
    padded = -(-padded8 // tm) * tm
    if padded != bs:
        flat = jnp.pad(flat, ((0, padded - bs), (0, 0)))
    grid = (padded // tm,)

    # Weights/biases: constant index_map => resident across grid steps;
    # Buffered(1) keeps them single-buffered (halves resident weight VMEM).
    def _resident(shape):
        zeros = (0,) * len(shape)
        return pl.BlockSpec(shape, lambda i, _z=zeros: _z,
                            pipeline_mode=pl.Buffered(1))

    out = pl.pallas_call(
        auxi_head_kernel,
        out_shape=jax.ShapeDtypeStruct((padded, OUT_LANES), jnp.float32),
        grid_spec=pltpu.PrefetchScalarGridSpec(
            num_scalar_prefetch=0,
            grid=grid,
            in_specs=[
                pl.BlockSpec((tm, fc_in), lambda i: (i, 0)),     # x tile
                _resident(w1.shape), _resident(b1.shape),
                _resident(w2.shape), _resident(b2.shape),
                _resident(w3.shape), _resident(b3.shape),
            ],
            out_specs=pl.BlockSpec((tm, OUT_LANES), lambda i: (i, 0)),
        ),
        compiler_params=pltpu.CompilerParams(
            dimension_semantics=("parallel",),
            vmem_limit_bytes=vmem_limit,
        ),
    )(flat, w1, b1, w2, b2, w3, b3)

    out = out[:bs, :24]
    cat = out[:, :6]
    view18 = out[:, 6:24]

    # torch: view_axis.view(bs, 6, 3)[np.arange(bs), cat_0base_id]
    # TODO(synk): tiny data-dependent per-sample gather kept in plain JAX.
    view_axis = view18.reshape(bs, 6, 3)
    view_axis = jnp.take_along_axis(
        view_axis, cat_0base_id.reshape(bs, 1, 1).astype(jnp.int32), axis=1
    )[:, 0, :]
    return cat, view_axis


def make_params(key, fc_in_dim):
    """normal_init(m, std=0.001) for every Linear; bias = 0.  (f32, raw.)"""
    dims = [
        (fc_in_dim, 1024),  # fc1_cat
        (1024, 256),        # fc2_cat
        (256, 6),           # fc_cat
        (fc_in_dim, 1024),  # fc1_view
        (1024, 256),        # fc2_view
        (256, 18),          # fc_view
    ]
    params = []
    keys = jax.random.split(key, len(dims))
    for k, (din, dout) in zip(keys, dims):
        w = 0.001 * jax.random.normal(k, (din, dout), dtype=jnp.float32)
        b = jnp.zeros((1, dout), dtype=jnp.float32)
        params.extend([w, b])
    return tuple(params)


def reference_forward(x, params, cat_0base_id):
    """Pure-JAX f32 reference (module semantics) for correctness check."""
    bs = x.shape[0]
    flat = x.reshape(bs, -1)
    (w1c, b1c, w2c, b2c, wcc, bcc,
     w1v, b1v, w2v, b2v, wvv, bvv) = params
    h = _lrelu(flat @ w1c + b1c)
    h = _lrelu(h @ w2c + b2c)
    cat = h @ wcc + bcc
    g = _lrelu(flat @ w1v + b1v)
    g = _lrelu(g @ w2v + b2v)
    view18 = g @ wvv + bvv
    view_axis = view18.reshape(bs, 6, 3)[jnp.arange(bs), cat_0base_id]
    return cat, view_axis


if __name__ == "__main__":
    # Small but module-consistent shapes: flat_op='flatten' implies 8x8 spatial.
    bs, feat_dim = 2, 16
    fc_in_dim = feat_dim * 8 * 8  # 1024

    key = jax.random.PRNGKey(0)
    kx, kp, kc = jax.random.split(key, 3)
    x = jax.random.normal(kx, (bs, feat_dim, 8, 8), dtype=jnp.float32)
    params = make_params(kp, fc_in_dim)
    packed = pack_params(params)
    cat_0base_id = jax.random.randint(kc, (bs,), 0, 6, dtype=jnp.int32)

    cat, view_axis = auxi_head_forward(x, packed, cat_0base_id)
    jax.block_until_ready((cat, view_axis))

    ref_cat, ref_view = reference_forward(x, params, cat_0base_id)
    assert cat.shape == (bs, 6) and view_axis.shape == (bs, 3)
    # bf16 weights with f32 accumulation vs. pure-f32 reference.
    assert jnp.allclose(cat, ref_cat, atol=1e-5, rtol=5e-2)
    assert jnp.allclose(view_axis, ref_view, atol=1e-5, rtol=5e-2)

    print("KERNEL_OK")
</pallas_src>

<mosaic_0001>
module attributes {stable_mosaic.version = 11 : i64} {
  func.func @auxi_head_kernel(%arg0: i32, %arg1: memref<8x1024xf32, #tpu.memory_space<vmem>>, %arg2: memref<1024x2048xbf16, #tpu.memory_space<vmem>>, %arg3: memref<1x2048xf32, #tpu.memory_space<vmem>>, %arg4: memref<2x1024x256xbf16, #tpu.memory_space<vmem>>, %arg5: memref<2x1x256xf32, #tpu.memory_space<vmem>>, %arg6: memref<2x256x128xbf16, #tpu.memory_space<vmem>>, %arg7: memref<1x128xf32, #tpu.memory_space<vmem>>, %arg8: memref<8x128xf32, #tpu.memory_space<vmem>>) attributes {dimension_semantics = [#tpu.dimension_semantics<parallel>], iteration_bounds = array<i64: 1>, scalar_prefetch = 0 : i64, scratch_operands = 0 : i64, tpu.core_type = #tpu.core_type<tc>, window_params = [{transform_indices = @transform_0, window_bounds = array<i64: 8, 1024>}, {pipeline_mode = #tpu.pipeline_mode<synchronous>, transform_indices = @transform_1, window_bounds = array<i64: 1024, 2048>}, {pipeline_mode = #tpu.pipeline_mode<synchronous>, transform_indices = @transform_2, window_bounds = array<i64: 1, 2048>}, {pipeline_mode = #tpu.pipeline_mode<synchronous>, transform_indices = @transform_3, window_bounds = array<i64: 2, 1024, 256>}, {pipeline_mode = #tpu.pipeline_mode<synchronous>, transform_indices = @transform_4, window_bounds = array<i64: 2, 1, 256>}, {pipeline_mode = #tpu.pipeline_mode<synchronous>, transform_indices = @transform_5, window_bounds = array<i64: 2, 256, 128>}, {pipeline_mode = #tpu.pipeline_mode<synchronous>, transform_indices = @transform_6, window_bounds = array<i64: 1, 128>}, {transform_indices = @transform_7, window_bounds = array<i64: 8, 128>}]} {
    %c0 = arith.constant 0 : index
    %c0_0 = arith.constant 0 : index
    %0 = vector.load %arg1[%c0, %c0_0] : memref<8x1024xf32, #tpu.memory_space<vmem>>, vector<8x1024xf32>
    %1 = arith.truncf %0 : vector<8x1024xf32> to vector<8x1024xbf16>
    %c0_1 = arith.constant 0 : index
    %c0_2 = arith.constant 0 : index
    %2 = vector.load %arg2[%c0_1, %c0_2] : memref<1024x2048xbf16, #tpu.memory_space<vmem>>, vector<1024x2048xbf16>
    %cst = arith.constant dense<0.000000e+00> : vector<8x2048xf32>
    %3 = tpu.matmul %1, %2, %cst {dimension_numbers = #tpu.dot_dimension_numbers<[1], [0], [0], [1], [0, 0, 1, 1], [], []>} : vector<8x1024xbf16>, vector<1024x2048xbf16>, vector<8x2048xf32> -> vector<8x2048xf32>
    %c0_3 = arith.constant 0 : index
    %c0_4 = arith.constant 0 : index
    %4 = vector.load %arg3[%c0_3, %c0_4] : memref<1x2048xf32, #tpu.memory_space<vmem>>, vector<1x2048xf32>
    %5 = vector.broadcast %4 : vector<1x2048xf32> to vector<8x2048xf32>
    %6 = arith.addf %3, %5 : vector<8x2048xf32>
    %cst_5 = arith.constant 1.000000e-01 : f32
    %7 = vector.broadcast %cst_5 : f32 to vector<8x2048xf32>
    %8 = arith.mulf %7, %6 : vector<8x2048xf32>
    %9 = arith.maximumf %6, %8 : vector<8x2048xf32>
    %10 = arith.truncf %9 : vector<8x2048xf32> to vector<8x2048xbf16>
    %11 = vector.extract_strided_slice %10 {offsets = [0, 0], sizes = [8, 1024], strides = [1, 1]} : vector<8x2048xbf16> to vector<8x1024xbf16>
    %c0_6 = arith.constant 0 : index
    %c0_7 = arith.constant 0 : index
    %c0_8 = arith.constant 0 : index
    %12 = vector.load %arg4[%c0_6, %c0_7, %c0_8] : memref<2x1024x256xbf16, #tpu.memory_space<vmem>>, vector<1x1024x256xbf16>
    %13 = vector.shape_cast %12 : vector<1x1024x256xbf16> to vector<1024x256xbf16>
    %cst_9 = arith.constant dense<0.000000e+00> : vector<8x256xf32>
    %14 = tpu.matmul %11, %13, %cst_9 {dimension_numbers = #tpu.dot_dimension_numbers<[1], [0], [0], [1], [0, 0, 1, 1], [], []>} : vector<8x1024xbf16>, vector<1024x256xbf16>, vector<8x256xf32> -> vector<8x256xf32>
    %15 = vector.extract_strided_slice %10 {offsets = [0, 1024], sizes = [8, 1024], strides = [1, 1]} : vector<8x2048xbf16> to vector<8x1024xbf16>
    %c1 = arith.constant 1 : index
    %c0_10 = arith.constant 0 : index
    %c0_11 = arith.constant 0 : index
    %16 = vector.load %arg4[%c1, %c0_10, %c0_11] : memref<2x1024x256xbf16, #tpu.memory_space<vmem>>, vector<1x1024x256xbf16>
    %17 = vector.shape_cast %16 : vector<1x1024x256xbf16> to vector<1024x256xbf16>
    %cst_12 = arith.constant dense<0.000000e+00> : vector<8x256xf32>
    %18 = tpu.matmul %15, %17, %cst_12 {dimension_numbers = #tpu.dot_dimension_numbers<[1], [0], [0], [1], [0, 0, 1, 1], [], []>} : vector<8x1024xbf16>, vector<1024x256xbf16>, vector<8x256xf32> -> vector<8x256xf32>
    %c0_13 = arith.constant 0 : index
    %c0_14 = arith.constant 0 : index
    %c0_15 = arith.constant 0 : index
    %19 = vector.load %arg5[%c0_13, %c0_14, %c0_15] : memref<2x1x256xf32, #tpu.memory_space<vmem>>, vector<1x1x256xf32>
    %20 = vector.shape_cast %19 : vector<1x1x256xf32> to vector<1x256xf32>
    %21 = vector.broadcast %20 : vector<1x256xf32> to vector<8x256xf32>
    %22 = arith.addf %14, %21 : vector<8x256xf32>
    %cst_16 = arith.constant 1.000000e-01 : f32
    %23 = vector.broadcast %cst_16 : f32 to vector<8x256xf32>
    %24 = arith.mulf %23, %22 : vector<8x256xf32>
    %25 = arith.maximumf %22, %24 : vector<8x256xf32>
    %26 = arith.truncf %25 : vector<8x256xf32> to vector<8x256xbf16>
    %c1_17 = arith.constant 1 : index
    %c0_18 = arith.constant 0 : index
    %c0_19 = arith.constant 0 : index
    %27 = vector.load %arg5[%c1_17, %c0_18, %c0_19] : memref<2x1x256xf32, #tpu.memory_space<vmem>>, vector<1x1x256xf32>
    %28 = vector.shape_cast %27 : vector<1x1x256xf32> to vector<1x256xf32>
    %29 = vector.broadcast %28 : vector<1x256xf32> to vector<8x256xf32>
    %30 = arith.addf %18, %29 : vector<8x256xf32>
    %cst_20 = arith.constant 1.000000e-01 : f32
    %31 = vector.broadcast %cst_20 : f32 to vector<8x256xf32>
    %32 = arith.mulf %31, %30 : vector<8x256xf32>
    %33 = arith.maximumf %30, %32 : vector<8x256xf32>
    %34 = arith.truncf %33 : vector<8x256xf32> to vector<8x256xbf16>
    %c0_21 = arith.constant 0 : index
    %c0_22 = arith.constant 0 : index
    %c0_23 = arith.constant 0 : index
    %35 = vector.load %arg6[%c0_21, %c0_22, %c0_23] : memref<2x256x128xbf16, #tpu.memory_space<vmem>>, vector<1x256x128xbf16>
    %36 = vector.shape_cast %35 : vector<1x256x128xbf16> to vector<256x128xbf16>
    %cst_24 = arith.constant dense<0.000000e+00> : vector<8x128xf32>
    %37 = tpu.matmul %26, %36, %cst_24 {dimension_numbers = #tpu.dot_dimension_numbers<[1], [0], [0], [1], [0, 0, 1, 1], [], []>} : vector<8x256xbf16>, vector<256x128xbf16>, vector<8x128xf32> -> vector<8x128xf32>
    %c1_25 = arith.constant 1 : index
    %c0_26 = arith.constant 0 : index
    %c0_27 = arith.constant 0 : index
    %38 = vector.load %arg6[%c1_25, %c0_26, %c0_27] : memref<2x256x128xbf16, #tpu.memory_space<vmem>>, vector<1x256x128xbf16>
    %39 = vector.shape_cast %38 : vector<1x256x128xbf16> to vector<256x128xbf16>
    %cst_28 = arith.constant dense<0.000000e+00> : vector<8x128xf32>
    %40 = tpu.matmul %34, %39, %cst_28 {dimension_numbers = #tpu.dot_dimension_numbers<[1], [0], [0], [1], [0, 0, 1, 1], [], []>} : vector<8x256xbf16>, vector<256x128xbf16>, vector<8x128xf32> -> vector<8x128xf32>
    %41 = arith.addf %37, %40 : vector<8x128xf32>
    %c0_29 = arith.constant 0 : index
    %c0_30 = arith.constant 0 : index
    %42 = vector.load %arg7[%c0_29, %c0_30] : memref<1x128xf32, #tpu.memory_space<vmem>>, vector<1x128xf32>
    %43 = vector.broadcast %42 : vector<1x128xf32> to vector<8x128xf32>
    %44 = arith.addf %41, %43 : vector<8x128xf32>
    %c0_31 = arith.constant 0 : index
    %c0_32 = arith.constant 0 : index
    %45 = vector.load %arg8[%c0_31, %c0_32] : memref<8x128xf32, #tpu.memory_space<vmem>>, vector<8x128xf32>
    tpu.vector_store %arg8[%c0_31, %c0_32], %44 {strides = array<i32>} : memref<8x128xf32, #tpu.memory_space<vmem>>, vector<8x128xf32>,
    return
  }
  func.func @transform_0(%arg0: i32) -> (i32, i32) {
    %c0_i32 = arith.constant 0 : i32
    %c0_i32_0 = arith.constant 0 : i32
    return %arg0, %c0_i32 : i32, i32
  }
  func.func @transform_1(%arg0: i32) -> (i32, i32) {
    %c0_i32 = arith.constant 0 : i32
    %c0_i32_0 = arith.constant 0 : i32
    %c0_i32_1 = arith.constant 0 : i32
    return %c0_i32, %c0_i32_0 : i32, i32
  }
  func.func @transform_2(%arg0: i32) -> (i32, i32) {
    %c0_i32 = arith.constant 0 : i32
    %c0_i32_0 = arith.constant 0 : i32
    %c0_i32_1 = arith.constant 0 : i32
    return %c0_i32, %c0_i32_0 : i32, i32
  }
  func.func @transform_3(%arg0: i32) -> (i32, i32, i32) {
    %c0_i32 = arith.constant 0 : i32
    %c0_i32_0 = arith.constant 0 : i32
    %c0_i32_1 = arith.constant 0 : i32
    %c0_i32_2 = arith.constant 0 : i32
    return %c0_i32, %c0_i32_0, %c0_i32_1 : i32, i32, i32
  }
  func.func @transform_4(%arg0: i32) -> (i32, i32, i32) {
    %c0_i32 = arith.constant 0 : i32
    %c0_i32_0 = arith.constant 0 : i32
    %c0_i32_1 = arith.constant 0 : i32
    %c0_i32_2 = arith.constant 0 : i32
    return %c0_i32, %c0_i32_0, %c0_i32_1 : i32, i32, i32
  }
  func.func @transform_5(%arg0: i32) -> (i32, i32, i32) {
    %c0_i32 = arith.constant 0 : i32
    %c0_i32_0 = arith.constant 0 : i32
    %c0_i32_1 = arith.constant 0 : i32
    %c0_i32_2 = arith.constant 0 : i32
    return %c0_i32, %c0_i32_0, %c0_i32_1 : i32, i32, i32
  }
  func.func @transform_6(%arg0: i32) -> (i32, i32) {
    %c0_i32 = arith.constant 0 : i32
    %c0_i32_0 = arith.constant 0 : i32
    %c0_i32_1 = arith.constant 0 : i32
    return %c0_i32, %c0_i32_0 : i32, i32
  }
  func.func @transform_7(%arg0: i32) -> (i32, i32) {
    %c0_i32 = arith.constant 0 : i32
    %c0_i32_0 = arith.constant 0 : i32
    return %arg0, %c0_i32 : i32, i32
  }
}

</mosaic_0001>

<llo_original>
// kernel: auxi_head_forward.1
$region0: #{auxi_head_forward.1}
  #allocation0 [shape = 'u32[]', space=smem, size = 0x4, offset = 0x4, fixed_abs, tag = 'smem constant byte address 0x4 - core index']
  #allocation1 [shape = 'u32[144,128]{1,0:T(1,128)}', space=vmem, size = 0x12000, scoped, tag = 'internal scratch']
  %s0 = inlined_call_operand.vmem [shape: f32[8,1024], index: 0, kind: input, shape index: {}]
  %s1 = inlined_call_operand.hbm [shape: bf16[1024,2048], index: 1, kind: input, shape index: {}]
  %s2 = inlined_call_operand.hbm [shape: f32[1,2048], index: 2, kind: input, shape index: {}]
  %s3 = inlined_call_operand.hbm [shape: bf16[2,1024,256], index: 3, kind: input, shape index: {}]
  %s4 = inlined_call_operand.hbm [shape: f32[2,1,256], index: 4, kind: input, shape index: {}]
  %s5 = inlined_call_operand.hbm [shape: bf16[2,256,128], index: 5, kind: input, shape index: {}]
  %s6 = inlined_call_operand.hbm [shape: f32[1,128], index: 6, kind: input, shape index: {}]
  %s7 = inlined_call_operand.vmem [shape: f32[8,128], index: 7, kind: output, shape index: {}]
  %s8 = sld [smem:[#allocation0]]
  $region62: #{auxi_head_forward.1} parent=0
    _
  %s10 = ssub.s32 1, %s8
  %s11 = scalar_select 0, %s10, %s8
  $region1: #{auxi_head_forward.1} parent=0
    #allocation2 [shape = 'u8[4194304]{0}', space=vmem, size = 0x400000, scoped, tag = 'input window, operand 1, single buffered']
    #allocation3 [shape = 's32[1]{0}', space=sflag, size = 0x4, scoped, tag = 'scoped memory for auxi_head_forward.1']
    #allocation4 [shape = 'u8[8192]{0}', space=vmem, size = 0x2000, scoped, tag = 'input window, operand 2, single buffered']
    #allocation5 [shape = 's32[1]{0}', space=sflag, size = 0x4, scoped, tag = 'scoped memory for auxi_head_forward.1']
    #allocation6 [shape = 'u8[1048576]{0}', space=vmem, size = 0x100000, scoped, tag = 'input window, operand 3, single buffered']
    #allocation7 [shape = 'u8[2048]{0}', space=vmem, size = 0x800, scoped, tag = 'input window, operand 4, single buffered']
    #allocation8 [shape = 's32[1]{0}', space=sflag, size = 0x4, scoped, tag = 'scoped memory for auxi_head_forward.1']
    #allocation9 [shape = 'u8[131072]{0}', space=vmem, size = 0x20000, scoped, tag = 'input window, operand 5, single buffered']
    #allocation10 [shape = 'u8[512]{0}', space=vmem, size = 0x400, scoped, tag = 'input window, operand 6, single buffered']
    #allocation11 [shape = 's32[1]{0}', space=sflag, size = 0x4, scoped, tag = 'scoped memory for auxi_head_forward.1']
    %12 = vsyncpa [#allocation3], 0
    %13 = vsyncpa [#allocation5], 0
    %14 = vsyncpa [#allocation8], 0
    %15 = vsyncpa [#allocation11], 0
    // Predicated region
    $region2: #{auxi_head_forward.1} parent=1 // pred_check
      _
    $region3: #{auxi_head_forward.1} parent=1 // pred_check_branch
      %17 = sbr.rel (0) target = $region5
    $region4: #{auxi_head_forward.1} parent=1 // pred_region
      _
    $region5: #{auxi_head_forward.1} parent=1 // pred_fallthru
      _
    // Predicated region
    $region6: #{auxi_head_forward.1} parent=1 // pred_check
      _
    $region7: #{auxi_head_forward.1} parent=1 // pred_check_branch
      %19 = sbr.rel (0) target = $region9
    $region8: #{auxi_head_forward.1} parent=1 // pred_region
      %s21 = ssub.s32 131072, 131072
      %22 = vsyncadd [#allocation3], %s21
      %s23 = sshll.u32 [#allocation2], 4
      %s24 = int_to_ptr.vmem [resolvable:$true] %s23
      %29 = dma.hbm_to_vmem [thread:$0]  %s1, 131072, %s24, [#allocation3], 1024, 1024, 64
    $region9: #{auxi_head_forward.1} parent=1 // pred_fallthru
      _
    // Predicated region
    $region10: #{auxi_head_forward.1} parent=1 // pred_check
      _
    $region11: #{auxi_head_forward.1} parent=1 // pred_check_branch
      %31 = sbr.rel (0) target = $region13
    $region12: #{auxi_head_forward.1} parent=1 // pred_region
      %s33 = ssub.s32 256, 256
      %34 = vsyncadd [#allocation5], %s33
      %s36 = sshll.u32 [#allocation4], 4
      %s37 = int_to_ptr.vmem [resolvable:$true] %s36
      %39 = dma.hbm_to_vmem [thread:$0]  %s2, 256, %s37, [#allocation5]
    $region13: #{auxi_head_forward.1} parent=1 // pred_fallthru
      _
    // Predicated region
    $region14: #{auxi_head_forward.1} parent=1 // pred_check
      _
    $region15: #{auxi_head_forward.1} parent=1 // pred_check_branch
      %41 = sbr.rel (0) target = $region17
    $region16: #{auxi_head_forward.1} parent=1 // pred_region
      %s43 = ssub.s32 32768, 32768
      %44 = vsyncadd [#allocation5], %s43
      %s45 = sshll.u32 [#allocation6], 4
      %s46 = int_to_ptr.vmem [resolvable:$true] %s45
      %51 = dma.hbm_to_vmem [thread:$0]  %s3, 32768, %s46, [#allocation5], 128, 128, 8
    $region17: #{auxi_head_forward.1} parent=1 // pred_fallthru
      _
    // Predicated region
    $region18: #{auxi_head_forward.1} parent=1 // pred_check
      _
    $region19: #{auxi_head_forward.1} parent=1 // pred_check_branch
      %53 = sbr.rel (0) target = $region21
    $region20: #{auxi_head_forward.1} parent=1 // pred_region
      %s55 = ssub.s32 64, 64
      %56 = vsyncadd [#allocation8], %s55
      %s57 = sshll.u32 [#allocation7], 4
      %s58 = int_to_ptr.vmem [resolvable:$true] %s57
      %63 = dma.hbm_to_vmem [thread:$0]  %s4, 64, %s58, [#allocation8], 32, 32, 2
    $region21: #{auxi_head_forward.1} parent=1 // pred_fallthru
      _
    // Predicated region
    $region22: #{auxi_head_forward.1} parent=1 // pred_check
      _
    $region23: #{auxi_head_forward.1} parent=1 // pred_check_branch
      %65 = sbr.rel (0) target = $region25
    $region24: #{auxi_head_forward.1} parent=1 // pred_region
      %s67 = ssub.s32 4096, 4096
      %68 = vsyncadd [#allocation8], %s67
      %s69 = sshll.u32 [#allocation9], 4
      %s70 = int_to_ptr.vmem [resolvable:$true] %s69
      %75 = dma.hbm_to_vmem [thread:$0]  %s5, 4096, %s70, [#allocation8], 64, 64, 4
    $region25: #{auxi_head_forward.1} parent=1 // pred_fallthru
      _
    // Predicated region
    $region26: #{auxi_head_forward.1} parent=1 // pred_check
      _
    $region27: #{auxi_head_forward.1} parent=1 // pred_check_branch
      %77 = sbr.rel (0) target = $region29
    $region28: #{auxi_head_forward.1} parent=1 // pred_region
      %s79 = ssub.s32 16, 16
      %80 = vsyncadd [#allocation11], %s79
      %s82 = sshll.u32 [#allocation10], 4
      %s83 = int_to_ptr.vmem [resolvable:$true] %s82
      %85 = dma.hbm_to_vmem [thread:$0]  %s6, 16, %s83, [#allocation11]
    $region29: #{auxi_head_forward.1} parent=1 // pred_fallthru
      _
    // Predicated region
    $region30: #{auxi_head_forward.1} parent=1 // pred_check
      _
    $region31: #{auxi_head_forward.1} parent=1 // pred_check_branch
      %87 = sbr.rel (0) target = $region33
    $region32: #{auxi_head_forward.1} parent=1 // pred_region
      %88 = dma.done [#allocation3], 131072
    $region33: #{auxi_head_forward.1} parent=1 // pred_fallthru
      _
    // Predicated region
    $region34: #{auxi_head_forward.1} parent=1 // pred_check
      _
    $region35: #{auxi_head_forward.1} parent=1 // pred_check_branch
      %90 = sbr.rel (0) target = $region37
    $region36: #{auxi_head_forward.1} parent=1 // pred_region
      %91 = dma.done [#allocation5], 256
    $region37: #{auxi_head_forward.1} parent=1 // pred_fallthru
      _
    // Predicated region
    $region38: #{auxi_head_forward.1} parent=1 // pred_check
      _
    $region39: #{auxi_head_forward.1} parent=1 // pred_check_branch
      %93 = sbr.rel (0) target = $region41
    $region40: #{auxi_head_forward.1} parent=1 // pred_region
      %94 = dma.done [#allocation5], 32768
    $region41: #{auxi_head_forward.1} parent=1 // pred_fallthru
      _
    // Predicated region
    $region42: #{auxi_head_forward.1} parent=1 // pred_check
      _
    $region43: #{auxi_head_forward.1} parent=1 // pred_check_branch
      %96 = sbr.rel (0) target = $region45
    $region44: #{auxi_head_forward.1} parent=1 // pred_region
      %97 = dma.done [#allocation8], 64
    $region45: #{auxi_head_forward.1} parent=1 // pred_fallthru
      _
    // Predicated region
    $region46: #{auxi_head_forward.1} parent=1 // pred_check
      _
    $region47: #{auxi_head_forward.1} parent=1 // pred_check_branch
      %99 = sbr.rel (0) target = $region49
    $region48: #{auxi_head_forward.1} parent=1 // pred_region
      %100 = dma.done [#allocation8], 4096
    $region49: #{auxi_head_forward.1} parent=1 // pred_fallthru
      _
    // Predicated region
    $region50: #{auxi_head_forward.1} parent=1 // pred_check
      _
    $region51: #{auxi_head_forward.1} parent=1 // pred_check_branch
      %102 = sbr.rel (0) target = $region53
    $region52: #{auxi_head_forward.1} parent=1 // pred_region
      %103 = dma.done [#allocation11], 16
    $region53: #{auxi_head_forward.1} parent=1 // pred_fallthru
      _
    %v105 = vld [vmem:[%s0] sm:$0xff]
    %v106 = vld [vmem:[%s0 + $0x8] sm:$0xff]
    %v107 = vld [vmem:[%s0 + $0x10] sm:$0xff]
    %v108 = vld [vmem:[%s0 + $0x18] sm:$0xff]
    %v109 = vld [vmem:[%s0 + $0x20] sm:$0xff]
    %v110 = vld [vmem:[%s0 + $0x28] sm:$0xff]
    %v111 = vld [vmem:[%s0 + $0x30] sm:$0xff]
    %v112 = vld [vmem:[%s0 + $0x38] sm:$0xff]
    %v113 = vpack.c.bf16 %v105, %v105
    %v114 = vpack.c.bf16 %v106, %v106
    %v115 = vpack.c.bf16 %v107, %v107
    %v116 = vpack.c.bf16 %v108, %v108
    %v117 = vpack.c.bf16 %v109, %v109
    %v118 = vpack.c.bf16 %v110, %v110
    %v119 = vpack.c.bf16 %v111, %v111
    %v120 = vpack.c.bf16 %v112, %v112
    %v121 = vld [vmem:[#allocation2] sm:$0xff]
    %v122 = vld [vmem:[#allocation2 + $0x8] sm:$0xff]
    %v123 = vld [vmem:[#allocation2 + $0x10] sm:$0xff]
    %v124 = vld [vmem:[#allocation2 + $0x18] sm:$0xff]
    %v125 = vld [vmem:[#allocation2 + $0x20] sm:$0xff]
    %v126 = vld [vmem:[#allocation2 + $0x28] sm:$0xff]
    %v127 = vld [vmem:[#allocation2 + $0x30] sm:$0xff]
    %v128 = vld [vmem:[#allocation2 + $0x38] sm:$0xff]
    %v129 = vld [vmem:[#allocation2 + $0x40] sm:$0xff]
    %v130 = vld [vmem:[#allocation2 + $0x48] sm:$0xff]
    %v131 = vld [vmem:[#allocation2 + $0x50] sm:$0xff]
    %v132 = vld [vmem:[#allocation2 + $0x58] sm:$0xff]
    %v133 = vld [vmem:[#allocation2 + $0x60] sm:$0xff]
    %v134 = vld [vmem:[#allocation2 + $0x68] sm:$0xff]
    %v135 = vld [vmem:[#allocation2 + $0x70] sm:$0xff]
    %v136 = vld [vmem:[#allocation2 + $0x78] sm:$0xff]
    %v137 = vld [vmem:[#allocation2 + $0x80] sm:$0xff]
    %v138 = vld [vmem:[#allocation2 + $0x88] sm:$0xff]
    %v139 = vld [vmem:[#allocation2 + $0x90] sm:$0xff]
    %v140 = vld [vmem:[#allocation2 + $0x98] sm:$0xff]
    %v141 = vld [vmem:[#allocation2 + $0xa0] sm:$0xff]
    %v142 = vld [vmem:[#allocation2 + $0xa8] sm:$0xff]
    %v143 = vld [vmem:[#allocation2 + $0xb0] sm:$0xff]
    %v144 = vld [vmem:[#allocation2 + $0xb8] sm:$0xff]
    %v145 = vld [vmem:[#allocation2 + $0xc0] sm:$0xff]
    %v146 = vld [vmem:[#allocation2 + $0xc8] sm:$0xff]
    %v147 = vld [vmem:[#allocation2 + $0xd0] sm:$0xff]
    %v148 = vld [vmem:[#allocation2 + $0xd8] sm:$0xff]
    %v149 = vld [vmem:[#allocation2 + $0xe0] sm:$0xff]
    %v150 = vld [vmem:[#allocation2 + $0xe8] sm:$0xff]
    %v151 = vld [vmem:[#allocation2 + $0xf0] sm:$0xff]
    %v152 = vld [vmem:[#allocation2 + $0xf8] sm:$0xff]
    %v153 = vld [vmem:[#allocation2 + $0x100] sm:$0xff]
    %v154 = vld [vmem:[#allocation2 + $0x108] sm:$0xff]
    %v155 = vld [vmem:[#allocation2 + $0x110] sm:$0xff]
    %v156 = vld [vmem:[#allocation2 + $0x118] sm:$0xff]
    %v157 = vld [vmem:[#allocation2 + $0x120] sm:$0xff]
    %v158 = vld [vmem:[#allocation2 + $0x128] sm:$0xff]
    %v159 = vld [vmem:[#allocation2 + $0x130] sm:$0xff]
    %v160 = vld [vmem:[#allocation2 + $0x138] sm:$0xff]
    %v161 = vld [vmem:[#allocation2 + $0x140] sm:$0xff]
    %v162 = vld [vmem:[#allocation2 + $0x148] sm:$0xff]
    %v163 = vld [vmem:[#allocation2 + $0x150] sm:$0xff]
    %v164 = vld [vmem:[#allocation2 + $0x158] sm:$0xff]
    %v165 = vld [vmem:[#allocation2 + $0x160] sm:$0xff]
    %v166 = vld [vmem:[#allocation2 + $0x168] sm:$0xff]
    %v167 = vld [vmem:[#allocation2 + $0x170] sm:$0xff]
    %v168 = vld [vmem:[#allocation2 + $0x178] sm:$0xff]
    %v169 = vld [vmem:[#allocation2 + $0x180] sm:$0xff]
    %v170 = vld [vmem:[#allocation2 + $0x188] sm:$0xff]
    %v171 = vld [vmem:[#allocation2 + $0x190] sm:$0xff]
    %v172 = vld [vmem:[#allocation2 + $0x198] sm:$0xff]
    %v173 = vld [vmem:[#allocation2 + $0x1a0] sm:$0xff]
    %v174 = vld [vmem:[#allocation2 + $0x1a8] sm:$0xff]
    %v175 = vld [vmem:[#allocation2 + $0x1b0] sm:$0xff]
    %v176 = vld [vmem:[#allocation2 + $0x1b8] sm:$0xff]
    %v177 = vld [vmem:[#allocation2 + $0x1c0] sm:$0xff]
    %v178 = vld [vmem:[#allocation2 + $0x1c8] sm:$0xff]
    %v179 = vld [vmem:[#allocation2 + $0x1d0] sm:$0xff]
    %v180 = vld [vmem:[#allocation2 + $0x1d8] sm:$0xff]
    %v181 = vld [vmem:[#allocation2 + $0x1e0] sm:$0xff]
    %v182 = vld [vmem:[#allocation2 + $0x1e8] sm:$0xff]
    %v183 = vld [vmem:[#allocation2 + $0x1f0] sm:$0xff]
    %v184 = vld [vmem:[#allocation2 + $0x1f8] sm:$0xff]
    %v185 = vld [vmem:[#allocation2 + $0x200] sm:$0xff]
    %v186 = vld [vmem:[#allocation2 + $0x208] sm:$0xff]
    %v187 = vld [vmem:[#allocation2 + $0x210] sm:$0xff]
    %v188 = vld [vmem:[#allocation2 + $0x218] sm:$0xff]
    %v189 = vld [vmem:[#allocation2 + $0x220] sm:$0xff]
    %v190 = vld [vmem:[#allocation2 + $0x228] sm:$0xff]
    %v191 = vld [vmem:[#allocation2 + $0x230] sm:$0xff]
    %v192 = vld [vmem:[#allocation2 + $0x238] sm:$0xff]
    %v193 = vld [vmem:[#allocation2 + $0x240] sm:$0xff]
    %v194 = vld [vmem:[#allocation2 + $0x248] sm:$0xff]
    %v195 = vld [vmem:[#allocation2 + $0x250] sm:$0xff]
    %v196 = vld [vmem:[#allocation2 + $0x258] sm:$0xff]
    %v197 = vld [vmem:[#allocation2 + $0x260] sm:$0xff]
    %v198 = vld [vmem:[#allocation2 + $0x268] sm:$0xff]
    %v199 = vld [vmem:[#allocation2 + $0x270] sm:$0xff]
    %v200 = vld [vmem:[#allocation2 + $0x278] sm:$0xff]
    %v201 = vld [vmem:[#allocation2 + $0x280] sm:$0xff]
    %v202 = vld [vmem:[#allocation2 + $0x288] sm:$0xff]
    %v203 = vld [vmem:[#allocation2 + $0x290] sm:$0xff]
    %v204 = vld [vmem:[#allocation2 + $0x298] sm:$0xff]
    %v205 = vld [vmem:[#allocation2 + $0x2a0] sm:$0xff]
    %v206 = vld [vmem:[#allocation2 + $0x2a8] sm:$0xff]
    %v207 = vld [vmem:[#allocation2 + $0x2b0] sm:$0xff]
    %v208 = vld [vmem:[#allocation2 + $0x2b8] sm:$0xff]
    %v209 = vld [vmem:[#allocation2 + $0x2c0] sm:$0xff]
    %v210 = vld [vmem:[#allocation2 + $0x2c8] sm:$0xff]
    %v211 = vld [vmem:[#allocation2 + $0x2d0] sm:$0xff]
    %v212 = vld [vmem:[#allocation2 + $0x2d8] sm:$0xff]
    %v213 = vld [vmem:[#allocation2 + $0x2e0] sm:$0xff]
    %v214 = vld [vmem:[#allocation2 + $0x2e8] sm:$0xff]
    %v215 = vld [vmem:[#allocation2 + $0x2f0] sm:$0xff]
    %v216 = vld [vmem:[#allocation2 + $0x2f8] sm:$0xff]
    %v217 = vld [vmem:[#allocation2 + $0x300] sm:$0xff]
    %v218 = vld [vmem:[#allocation2 + $0x308] sm:$0xff]
    %v219 = vld [vmem:[#allocation2 + $0x310] sm:$0xff]
    %v220 = vld [vmem:[#allocation2 + $0x318] sm:$0xff]
    %v221 = vld [vmem:[#allocation2 + $0x320] sm:$0xff]
    %v222 = vld [vmem:[#allocation2 + $0x328] sm:$0xff]
    %v223 = vld [vmem:[#allocation2 + $0x330] sm:$0xff]
    %v224 = vld [vmem:[#allocation2 + $0x338] sm:$0xff]
    %v225 = vld [vmem:[#allocation2 + $0x340] sm:$0xff]
    %v226 = vld [vmem:[#allocation2 + $0x348] sm:$0xff]
    %v227 = vld [vmem:[#allocation2 + $0x350] sm:$0xff]
    %v228 = vld [vmem:[#allocation2 + $0x358] sm:$0xff]
    %v229 = vld [vmem:[#allocation2 + $0x360] sm:$0xff]
    %v230 = vld [vmem:[#allocation2 + $0x368] sm:$0xff]
    %v231 = vld [vmem:[#allocation2 + $0x370] sm:$0xff]
    %v232 = vld [vmem:[#allocation2 + $0x378] sm:$0xff]
    %v233 = vld [vmem:[#allocation2 + $0x380] sm:$0xff]
    %v234 = vld [vmem:[#allocation2 + $0x388] sm:$0xff]
    %v235 = vld [vmem:[#allocation2 + $0x390] sm:$0xff]
    %v236 = vld [vmem:[#allocation2 + $0x398] sm:$0xff]
    %v237 = vld [vmem:[#allocation2 + $0x3a0] sm:$0xff]
    %v238 = vld [vmem:[#allocation2 + $0x3a8] sm:$0xff]
    %v239 = vld [vmem:[#allocation2 + $0x3b0] sm:$0xff]
    %v240 = vld [vmem:[#allocation2 + $0x3b8] sm:$0xff]
    %v241 = vld [vmem:[#allocation2 + $0x3c0] sm:$0xff]
    %v242 = vld [vmem:[#allocation2 + $0x3c8] sm:$0xff]
    %v243 = vld [vmem:[#allocation2 + $0x3d0] sm:$0xff]
    %v244 = vld [vmem:[#allocation2 + $0x3d8] sm:$0xff]
    %v245 = vld [vmem:[#allocation2 + $0x3e0] sm:$0xff]
    %v246 = vld [vmem:[#allocation2 + $0x3e8] sm:$0xff]
    %v247 = vld [vmem:[#allocation2 + $0x3f0] sm:$0xff]
    %v248 = vld [vmem:[#allocation2 + $0x3f8] sm:$0xff]
    %v249 = vld [vmem:[#allocation2 + $0x400] sm:$0xff]
    %v250 = vld [vmem:[#allocation2 + $0x408] sm:$0xff]
    %v251 = vld [vmem:[#allocation2 + $0x410] sm:$0xff]
    %v252 = vld [vmem:[#allocation2 + $0x418] sm:$0xff]
    %v253 = vld [vmem:[#allocation2 + $0x420] sm:$0xff]
    %v254 = vld [vmem:[#allocation2 + $0x428] sm:$0xff]
    %v255 = vld [vmem:[#allocation2 + $0x430] sm:$0xff]
    %v256 = vld [vmem:[#allocation2 + $0x438] sm:$0xff]
    %v257 = vld [vmem:[#allocation2 + $0x440] sm:$0xff]
    %v258 = vld [vmem:[#allocation2 + $0x448] sm:$0xff]
    %v259 = vld [vmem:[#allocation2 + $0x450] sm:$0xff]
    %v260 = vld [vmem:[#allocation2 + $0x458] sm:$0xff]
    %v261 = vld [vmem:[#allocation2 + $0x460] sm:$0xff]
    %v262 = vld [vmem:[#allocation2 + $0x468] sm:$0xff]
    %v263 = vld [vmem:[#allocation2 + $0x470] sm:$0xff]
    %v264 = vld [vmem:[#allocation2 + $0x478] sm:$0xff]
    %v265 = vld [vmem:[#allocation2 + $0x480] sm:$0xff]
    %v266 = vld [vmem:[#allocation2 + $0x488] sm:$0xff]
    %v267 = vld [vmem:[#allocation2 + $0x490] sm:$0xff]
    %v268 = vld [vmem:[#allocation2 + $0x498] sm:$0xff]
    %v269 = vld [vmem:[#allocation2 + $0x4a0] sm:$0xff]
    %v270 = vld [vmem:[#allocation2 + $0x4a8] sm:$0xff]
    %v271 = vld [vmem:[#allocation2 + $0x4b0] sm:$0xff]
    %v272 = vld [vmem:[#allocation2 + $0x4b8] sm:$0xff]
    %v273 = vld [vmem:[#allocation2 + $0x4c0] sm:$0xff]
    %v274 = vld [vmem:[#allocation2 + $0x4c8] sm:$0xff]
    %v275 = vld [vmem:[#allocation2 + $0x4d0] sm:$0xff]
    %v276 = vld [vmem:[#allocation2 + $0x4d8] sm:$0xff]
    %v277 = vld [vmem:[#allocation2 + $0x4e0] sm:$0xff]
    %v278 = vld [vmem:[#allocation2 + $0x4e8] sm:$0xff]
    %v279 = vld [vmem:[#allocation2 + $0x4f0] sm:$0xff]
    %v280 = vld [vmem:[#allocation2 + $0x4f8] sm:$0xff]
    %v281 = vld [vmem:[#allocation2 + $0x500] sm:$0xff]
    %v282 = vld [vmem:[#allocation2 + $0x508] sm:$0xff]
    %v283 = vld [vmem:[#allocation2 + $0x510] sm:$0xff]
    %v284 = vld [vmem:[#allocation2 + $0x518] sm:$0xff]
    %v285 = vld [vmem:[#allocation2 + $0x520] sm:$0xff]
    %v286 = vld [vmem:[#allocation2 + $0x528] sm:$0xff]
    %v287 = vld [vmem:[#allocation2 + $0x530] sm:$0xff]
    %v288 = vld [vmem:[#allocation2 + $0x538] sm:$0xff]
    %v289 = vld [vmem:[#allocation2 + $0x540] sm:$0xff]
    %v290 = vld [vmem:[#allocation2 + $0x548] sm:$0xff]
    %v291 = vld [vmem:[#allocation2 + $0x550] sm:$0xff]
    %v292 = vld [vmem:[#allocation2 + $0x558] sm:$0xff]
    %v293 = vld [vmem:[#allocation2 + $0x560] sm:$0xff]
    %v294 = vld [vmem:[#allocation2 + $0x568] sm:$0xff]
    %v295 = vld [vmem:[#allocation2 + $0x570] sm:$0xff]
    %v296 = vld [vmem:[#allocation2 + $0x578] sm:$0xff]
    %v297 = vld [vmem:[#allocation2 + $0x580] sm:$0xff]
    %v298 = vld [vmem:[#allocation2 + $0x588] sm:$0xff]
    %v299 = vld [vmem:[#allocation2 + $0x590] sm:$0xff]
    %v300 = vld [vmem:[#allocation2 + $0x598] sm:$0xff]
    %v301 = vld [vmem:[#allocation2 + $0x5a0] sm:$0xff]
    %v302 = vld [vmem:[#allocation2 + $0x5a8] sm:$0xff]
    %v303 = vld [vmem:[#allocation2 + $0x5b0] sm:$0xff]
    %v304 = vld [vmem:[#allocation2 + $0x5b8] sm:$0xff]
    %v305 = vld [vmem:[#allocation2 + $0x5c0] sm:$0xff]
    %v306 = vld [vmem:[#allocation2 + $0x5c8] sm:$0xff]
    %v307 = vld [vmem:[#allocation2 + $0x5d0] sm:$0xff]
    %v308 = vld [vmem:[#allocation2 + $0x5d8] sm:$0xff]
    %v309 = vld [vmem:[#allocation2 + $0x5e0] sm:$0xff]
    %v310 = vld [vmem:[#allocation2 + $0x5e8] sm:$0xff]
    %v311 = vld [vmem:[#allocation2 + $0x5f0] sm:$0xff]
    %v312 = vld [vmem:[#allocation2 + $0x5f8] sm:$0xff]
    %v313 = vld [vmem:[#allocation2 + $0x600] sm:$0xff]
    %v314 = vld [vmem:[#allocation2 + $0x608] sm:$0xff]
    %v315 = vld [vmem:[#allocation2 + $0x610] sm:$0xff]
    %v316 = vld [vmem:[#allocation2 + $0x618] sm:$0xff]
    %v317 = vld [vmem:[#allocation2 + $0x620] sm:$0xff]
    %v318 = vld [vmem:[#allocation2 + $0x628] sm:$0xff]
    %v319 = vld [vmem:[#allocation2 + $0x630] sm:$0xff]
    %v320 = vld [vmem:[#allocation2 + $0x638] sm:$0xff]
    %v321 = vld [vmem:[#allocation2 + $0x640] sm:$0xff]
    %v322 = vld [vmem:[#allocation2 + $0x648] sm:$0xff]
    %v323 = vld [vmem:[#allocation2 + $0x650] sm:$0xff]
    %v324 = vld [vmem:[#allocation2 + $0x658] sm:$0xff]
    %v325 = vld [vmem:[#allocation2 + $0x660] sm:$0xff]
    %v326 = vld [vmem:[#allocation2 + $0x668] sm:$0xff]
    %v327 = vld [vmem:[#allocation2 + $0x670] sm:$0xff]
    %v328 = vld [vmem:[#allocation2 + $0x678] sm:$0xff]
    %v329 = vld [vmem:[#allocation2 + $0x680] sm:$0xff]
    %v330 = vld [vmem:[#allocation2 + $0x688] sm:$0xff]
    %v331 = vld [vmem:[#allocation2 + $0x690] sm:$0xff]
    %v332 = vld [vmem:[#allocation2 + $0x698] sm:$0xff]
    %v333 = vld [vmem:[#allocation2 + $0x6a0] sm:$0xff]
    %v334 = vld [vmem:[#allocation2 + $0x6a8] sm:$0xff]
    %v335 = vld [vmem:[#allocation2 + $0x6b0] sm:$0xff]
    %v336 = vld [vmem:[#allocation2 + $0x6b8] sm:$0xff]
    %v337 = vld [vmem:[#allocation2 + $0x6c0] sm:$0xff]
    %v338 = vld [vmem:[#allocation2 + $0x6c8] sm:$0xff]
    %v339 = vld [vmem:[#allocation2 + $0x6d0] sm:$0xff]
    %v340 = vld [vmem:[#allocation2 + $0x6d8] sm:$0xff]
    %v341 = vld [vmem:[#allocation2 + $0x6e0] sm:$0xff]
    %v342 = vld [vmem:[#allocation2 + $0x6e8] sm:$0xff]
    %v343 = vld [vmem:[#allocation2 + $0x6f0] sm:$0xff]
    %v344 = vld [vmem:[#allocation2 + $0x6f8] sm:$0xff]
    %v345 = vld [vmem:[#allocation2 + $0x700] sm:$0xff]
    %v346 = vld [vmem:[#allocation2 + $0x708] sm:$0xff]
    %v347 = vld [vmem:[#allocation2 + $0x710] sm:$0xff]
    %v348 = vld [vmem:[#allocation2 + $0x718] sm:$0xff]
    %v349 = vld [vmem:[#allocation2 + $0x720] sm:$0xff]
    %v350 = vld [vmem:[#allocation2 + $0x728] sm:$0xff]
    %v351 = vld [vmem:[#allocation2 + $0x730] sm:$0xff]
    %v352 = vld [vmem:[#allocation2 + $0x738] sm:$0xff]
    %v353 = vld [vmem:[#allocation2 + $0x740] sm:$0xff]
    %v354 = vld [vmem:[#allocation2 + $0x748] sm:$0xff]
    %v355 = vld [vmem:[#allocation2 + $0x750] sm:$0xff]
    %v356 = vld [vmem:[#allocation2 + $0x758] sm:$0xff]
    %v357 = vld [vmem:[#allocation2 + $0x760] sm:$0xff]
    %v358 = vld [vmem:[#allocation2 + $0x768] sm:$0xff]
    %v359 = vld [vmem:[#allocation2 + $0x770] sm:$0xff]
    %v360 = vld [vmem:[#allocation2 + $0x778] sm:$0xff]
    %v361 = vld [vmem:[#allocation2 + $0x780] sm:$0xff]
    %v362 = vld [vmem:[#allocation2 + $0x788] sm:$0xff]
    %v363 = vld [vmem:[#allocation2 + $0x790] sm:$0xff]
    %v364 = vld [vmem:[#allocation2 + $0x798] sm:$0xff]
    %v365 = vld [vmem:[#allocation2 + $0x7a0] sm:$0xff]
    %v366 = vld [vmem:[#allocation2 + $0x7a8] sm:$0xff]
    %v367 = vld [vmem:[#allocation2 + $0x7b0] sm:$0xff]
    %v368 = vld [vmem:[#allocation2 + $0x7b8] sm:$0xff]
    %v369 = vld [vmem:[#allocation2 + $0x7c0] sm:$0xff]
    %v370 = vld [vmem:[#allocation2 + $0x7c8] sm:$0xff]
    %v371 = vld [vmem:[#allocation2 + $0x7d0] sm:$0xff]
    %v372 = vld [vmem:[#allocation2 + $0x7d8] sm:$0xff]
    %v373 = vld [vmem:[#allocation2 + $0x7e0] sm:$0xff]
    %v374 = vld [vmem:[#allocation2 + $0x7e8] sm:$0xff]
    %v375 = vld [vmem:[#allocation2 + $0x7f0] sm:$0xff]
    %v376 = vld [vmem:[#allocation2 + $0x7f8] sm:$0xff]
    %v377 = vld [vmem:[#allocation2 + $0x800] sm:$0xff]
    %v378 = vld [vmem:[#allocation2 + $0x808] sm:$0xff]
    %v379 = vld [vmem:[#allocation2 + $0x810] sm:$0xff]
    %v380 = vld [vmem:[#allocation2 + $0x818] sm:$0xff]
    %v381 = vld [vmem:[#allocation2 + $0x820] sm:$0xff]
    %v382 = vld [vmem:[#allocation2 + $0x828] sm:$0xff]
    %v383 = vld [vmem:[#allocation2 + $0x830] sm:$0xff]
    %v384 = vld [vmem:[#allocation2 + $0x838] sm:$0xff]
    %v385 = vld [vmem:[#allocation2 + $0x840] sm:$0xff]
    %v386 = vld [vmem:[#allocation2 + $0x848] sm:$0xff]
    %v387 = vld [vmem:[#allocation2 + $0x850] sm:$0xff]
    %v388 = vld [vmem:[#allocation2 + $0x858] sm:$0xff]
    %v389 = vld [vmem:[#allocation2 + $0x860] sm:$0xff]
    %v390 = vld [vmem:[#allocation2 + $0x868] sm:$0xff]
    %v391 = vld [vmem:[#allocation2 + $0x870] sm:$0xff]
    %v392 = vld [vmem:[#allocation2 + $0x878] sm:$0xff]
    %v393 = vld [vmem:[#allocation2 + $0x880] sm:$0xff]
    %v394 = vld [vmem:[#allocation2 + $0x888] sm:$0xff]
    %v395 = vld [vmem:[#allocation2 + $0x890] sm:$0xff]
    %v396 = vld [vmem:[#allocation2 + $0x898] sm:$0xff]
    %v397 = vld [vmem:[#allocation2 + $0x8a0] sm:$0xff]
    %v398 = vld [vmem:[#allocation2 + $0x8a8] sm:$0xff]
    %v399 = vld [vmem:[#allocation2 + $0x8b0] sm:$0xff]
    %v400 = vld [vmem:[#allocation2 + $0x8b8] sm:$0xff]
    %v401 = vld [vmem:[#allocation2 + $0x8c0] sm:$0xff]
    %v402 = vld [vmem:[#allocation2 + $0x8c8] sm:$0xff]
    %v403 = vld [vmem:[#allocation2 + $0x8d0] sm:$0xff]
    %v404 = vld [vmem:[#allocation2 + $0x8d8] sm:$0xff]
    %v405 = vld [vmem:[#allocation2 + $0x8e0] sm:$0xff]
    %v406 = vld [vmem:[#allocation2 + $0x8e8] sm:$0xff]
    %v407 = vld [vmem:[#allocation2 + $0x8f0] sm:$0xff]
    %v408 = vld [vmem:[#allocation2 + $0x8f8] sm:$0xff]
    %v409 = vld [vmem:[#allocation2 + $0x900] sm:$0xff]
    %v410 = vld [vmem:[#allocation2 + $0x908] sm:$0xff]
    %v411 = vld [vmem:[#allocation2 + $0x910] sm:$0xff]
    %v412 = vld [vmem:[#allocation2 + $0x918] sm:$0xff]
    %v413 = vld [vmem:[#allocation2 + $0x920] sm:$0xff]
    %v414 = vld [vmem:[#allocation2 + $0x928] sm:$0xff]
    %v415 = vld [vmem:[#allocation2 + $0x930] sm:$0xff]
    %v416 = vld [vmem:[#allocation2 + $0x938] sm:$0xff]
    %v417 = vld [vmem:[#allocation2 + $0x940] sm:$0xff]
    %v418 = vld [vmem:[#allocation2 + $0x948] sm:$0xff]
    %v419 = vld [vmem:[#allocation2 + $0x950] sm:$0xff]
    %v420 = vld [vmem:[#allocation2 + $0x958] sm:$0xff]
    %v421 = vld [vmem:[#allocation2 + $0x960] sm:$0xff]
    %v422 = vld [vmem:[#allocation2 + $0x968] sm:$0xff]
    %v423 = vld [vmem:[#allocation2 + $0x970] sm:$0xff]
    %v424 = vld [vmem:[#allocation2 + $0x978] sm:$0xff]
    %v425 = vld [vmem:[#allocation2 + $0x980] sm:$0xff]
    %v426 = vld [vmem:[#allocation2 + $0x988] sm:$0xff]
    %v427 = vld [vmem:[#allocation2 + $0x990] sm:$0xff]
    %v428 = vld [vmem:[#allocation2 + $0x998] sm:$0xff]
    %v429 = vld [vmem:[#allocation2 + $0x9a0] sm:$0xff]
    %v430 = vld [vmem:[#allocation2 + $0x9a8] sm:$0xff]
    %v431 = vld [vmem:[#allocation2 + $0x9b0] sm:$0xff]
    %v432 = vld [vmem:[#allocation2 + $0x9b8] sm:$0xff]
    %v433 = vld [vmem:[#allocation2 + $0x9c0] sm:$0xff]
    %v434 = vld [vmem:[#allocation2 + $0x9c8] sm:$0xff]
    %v435 = vld [vmem:[#allocation2 + $0x9d0] sm:$0xff]
    %v436 = vld [vmem:[#allocation2 + $0x9d8] sm:$0xff]
    %v437 = vld [vmem:[#allocation2 + $0x9e0] sm:$0xff]
    %v438 = vld [vmem:[#allocation2 + $0x9e8] sm:$0xff]
    %v439 = vld [vmem:[#allocation2 + $0x9f0] sm:$0xff]
    %v440 = vld [vmem:[#allocation2 + $0x9f8] sm:$0xff]
    %v441 = vld [vmem:[#allocation2 + $0xa00] sm:$0xff]
    %v442 = vld [vmem:[#allocation2 + $0xa08] sm:$0xff]
    %v443 = vld [vmem:[#allocation2 + $0xa10] sm:$0xff]
    %v444 = vld [vmem:[#allocation2 + $0xa18] sm:$0xff]
    %v445 = vld [vmem:[#allocation2 + $0xa20] sm:$0xff]
    %v446 = vld [vmem:[#allocation2 + $0xa28] sm:$0xff]
    %v447 = vld [vmem:[#allocation2 + $0xa30] sm:$0xff]
    %v448 = vld [vmem:[#allocation2 + $0xa38] sm:$0xff]
    %v449 = vld [vmem:[#allocation2 + $0xa40] sm:$0xff]
    %v450 = vld [vmem:[#allocation2 + $0xa48] sm:$0xff]
    %v451 = vld [vmem:[#allocation2 + $0xa50] sm:$0xff]
    %v452 = vld [vmem:[#allocation2 + $0xa58] sm:$0xff]
    %v453 = vld [vmem:[#allocation2 + $0xa60] sm:$0xff]
    %v454 = vld [vmem:[#allocation2 + $0xa68] sm:$0xff]
    %v455 = vld [vmem:[#allocation2 + $0xa70] sm:$0xff]
    %v456 = vld [vmem:[#allocation2 + $0xa78] sm:$0xff]
    %v457 = vld [vmem:[#allocation2 + $0xa80] sm:$0xff]
    %v458 = vld [vmem:[#allocation2 + $0xa88] sm:$0xff]
    %v459 = vld [vmem:[#allocation2 + $0xa90] sm:$0xff]
    %v460 = vld [vmem:[#allocation2 + $0xa98] sm:$0xff]
    %v461 = vld [vmem:[#allocation2 + $0xaa0] sm:$0xff]
    %v462 = vld [vmem:[#allocation2 + $0xaa8] sm:$0xff]
    %v463 = vld [vmem:[#allocation2 + $0xab0] sm:$0xff]
    %v464 = vld [vmem:[#allocation2 + $0xab8] sm:$0xff]
    %v465 = vld [vmem:[#allocation2 + $0xac0] sm:$0xff]
    %v466 = vld [vmem:[#allocation2 + $0xac8] sm:$0xff]
    %v467 = vld [vmem:[#allocation2 + $0xad0] sm:$0xff]
    %v468 = vld [vmem:[#allocation2 + $0xad8] sm:$0xff]
    %v469 = vld [vmem:[#allocation2 + $0xae0] sm:$0xff]
    %v470 = vld [vmem:[#allocation2 + $0xae8] sm:$0xff]
    %v471 = vld [vmem:[#allocation2 + $0xaf0] sm:$0xff]
    %v472 = vld [vmem:[#allocation2 + $0xaf8] sm:$0xff]
    %v473 = vld [vmem:[#allocation2 + $0xb00] sm:$0xff]
    %v474 = vld [vmem:[#allocation2 + $0xb08] sm:$0xff]
    %v475 = vld [vmem:[#allocation2 + $0xb10] sm:$0xff]
    %v476 = vld [vmem:[#allocation2 + $0xb18] sm:$0xff]
    %v477 = vld [vmem:[#allocation2 + $0xb20] sm:$0xff]
    %v478 = vld [vmem:[#allocation2 + $0xb28] sm:$0xff]
    %v479 = vld [vmem:[#allocation2 + $0xb30] sm:$0xff]
    %v480 = vld [vmem:[#allocation2 + $0xb38] sm:$0xff]
    %v481 = vld [vmem:[#allocation2 + $0xb40] sm:$0xff]
    %v482 = vld [vmem:[#allocation2 + $0xb48] sm:$0xff]
    %v483 = vld [vmem:[#allocation2 + $0xb50] sm:$0xff]
    %v484 = vld [vmem:[#allocation2 + $0xb58] sm:$0xff]
    %v485 = vld [vmem:[#allocation2 + $0xb60] sm:$0xff]
    %v486 = vld [vmem:[#allocation2 + $0xb68] sm:$0xff]
    %v487 = vld [vmem:[#allocation2 + $0xb70] sm:$0xff]
    %v488 = vld [vmem:[#allocation2 + $0xb78] sm:$0xff]
    %v489 = vld [vmem:[#allocation2 + $0xb80] sm:$0xff]
    %v490 = vld [vmem:[#allocation2 + $0xb88] sm:$0xff]
    %v491 = vld [vmem:[#allocation2 + $0xb90] sm:$0xff]
    %v492 = vld [vmem:[#allocation2 + $0xb98] sm:$0xff]
    %v493 = vld [vmem:[#allocation2 + $0xba0] sm:$0xff]
    %v494 = vld [vmem:[#allocation2 + $0xba8] sm:$0xff]
    %v495 = vld [vmem:[#allocation2 + $0xbb0] sm:$0xff]
    %v496 = vld [vmem:[#allocation2 + $0xbb8] sm:$0xff]
    %v497 = vld [vmem:[#allocation2 + $0xbc0] sm:$0xff]
    %v498 = vld [vmem:[#allocation2 + $0xbc8] sm:$0xff]
    %v499 = vld [vmem:[#allocation2 + $0xbd0] sm:$0xff]
    %v500 = vld [vmem:[#allocation2 + $0xbd8] sm:$0xff]
    %v501 = vld [vmem:[#allocation2 + $0xbe0] sm:$0xff]
    %v502 = vld [vmem:[#allocation2 + $0xbe8] sm:$0xff]
    %v503 = vld [vmem:[#allocation2 + $0xbf0] sm:$0xff]
    %v504 = vld [vmem:[#allocation2 + $0xbf8] sm:$0xff]
    %v505 = vld [vmem:[#allocation2 + $0xc00] sm:$0xff]
    %v506 = vld [vmem:[#allocation2 + $0xc08] sm:$0xff]
    %v507 = vld [vmem:[#allocation2 + $0xc10] sm:$0xff]
    %v508 = vld [vmem:[#allocation2 + $0xc18] sm:$0xff]
    %v509 = vld [vmem:[#allocation2 + $0xc20] sm:$0xff]
    %v510 = vld [vmem:[#allocation2 + $0xc28] sm:$0xff]
    %v511 = vld [vmem:[#allocation2 + $0xc30] sm:$0xff]
    %v512 = vld [vmem:[#allocation2 + $0xc38] sm:$0xff]
    %v513 = vld [vmem:[#allocation2 + $0xc40] sm:$0xff]
    %v514 = vld [vmem:[#allocation2 + $0xc48] sm:$0xff]
    %v515 = vld [vmem:[#allocation2 + $0xc50] sm:$0xff]
    %v516 = vld [vmem:[#allocation2 + $0xc58] sm:$0xff]
    %v517 = vld [vmem:[#allocation2 + $0xc60] sm:$0xff]
    %v518 = vld [vmem:[#allocation2 + $0xc68] sm:$0xff]
    %v519 = vld [vmem:[#allocation2 + $0xc70] sm:$0xff]
    %v520 = vld [vmem:[#allocation2 + $0xc78] sm:$0xff]
    %v521 = vld [vmem:[#allocation2 + $0xc80] sm:$0xff]
    %v522 = vld [vmem:[#allocation2 + $0xc88] sm:$0xff]
    %v523 = vld [vmem:[#allocation2 + $0xc90] sm:$0xff]
    %v524 = vld [vmem:[#allocation2 + $0xc98] sm:$0xff]
    %v525 = vld [vmem:[#allocation2 + $0xca0] sm:$0xff]
    %v526 = vld [vmem:[#allocation2 + $0xca8] sm:$0xff]
    %v527 = vld [vmem:[#allocation2 + $0xcb0] sm:$0xff]
    %v528 = vld [vmem:[#allocation2 + $0xcb8] sm:$0xff]
    %v529 = vld [vmem:[#allocation2 + $0xcc0] sm:$0xff]
    %v530 = vld [vmem:[#allocation2 + $0xcc8] sm:$0xff]
    %v531 = vld [vmem:[#allocation2 + $0xcd0] sm:$0xff]
    %v532 = vld [vmem:[#allocation2 + $0xcd8] sm:$0xff]
    %v533 = vld [vmem:[#allocation2 + $0xce0] sm:$0xff]
    %v534 = vld [vmem:[#allocation2 + $0xce8] sm:$0xff]
    %v535 = vld [vmem:[#allocation2 + $0xcf0] sm:$0xff]
    %v536 = vld [vmem:[#allocation2 + $0xcf8] sm:$0xff]
    %v537 = vld [vmem:[#allocation2 + $0xd00] sm:$0xff]
    %v538 = vld [vmem:[#allocation2 + $0xd08] sm:$0xff]
    %v539 = vld [vmem:[#allocation2 + $0xd10] sm:$0xff]
    %v540 = vld [vmem:[#allocation2 + $0xd18] sm:$0xff]
    %v541 = vld [vmem:[#allocation2 + $0xd20] sm:$0xff]
    %v542 = vld [vmem:[#allocation2 + $0xd28] sm:$0xff]
    %v543 = vld [vmem:[#allocation2 + $0xd30] sm:$0xff]
    %v544 = vld [vmem:[#allocation2 + $0xd38] sm:$0xff]
    %v545 = vld [vmem:[#allocation2 + $0xd40] sm:$0xff]
    %v546 = vld [vmem:[#allocation2 + $0xd48] sm:$0xff]
    %v547 = vld [vmem:[#allocation2 + $0xd50] sm:$0xff]
    %v548 = vld [vmem:[#allocation2 + $0xd58] sm:$0xff]
    %v549 = vld [vmem:[#allocation2 + $0xd60] sm:$0xff]
    %v550 = vld [vmem:[#allocation2 + $0xd68] sm:$0xff]
    %v551 = vld [vmem:[#allocation2 + $0xd70] sm:$0xff]
    %v552 = vld [vmem:[#allocation2 + $0xd78] sm:$0xff]
    %v553 = vld [vmem:[#allocation2 + $0xd80] sm:$0xff]
    %v554 = vld [vmem:[#allocation2 + $0xd88] sm:$0xff]
    %v555 = vld [vmem:[#allocation2 + $0xd90] sm:$0xff]
    %v556 = vld [vmem:[#allocation2 + $0xd98] sm:$0xff]
    %v557 = vld [vmem:[#allocation2 + $0xda0] sm:$0xff]
    %v558 = vld [vmem:[#allocation2 + $0xda8] sm:$0xff]
    %v559 = vld [vmem:[#allocation2 + $0xdb0] sm:$0xff]
    %v560 = vld [vmem:[#allocation2 + $0xdb8] sm:$0xff]
    %v561 = vld [vmem:[#allocation2 + $0xdc0] sm:$0xff]
    %v562 = vld [vmem:[#allocation2 + $0xdc8] sm:$0xff]
    %v563 = vld [vmem:[#allocation2 + $0xdd0] sm:$0xff]
    %v564 = vld [vmem:[#allocation2 + $0xdd8] sm:$0xff]
    %v565 = vld [vmem:[#allocation2 + $0xde0] sm:$0xff]
    %v566 = vld [vmem:[#allocation2 + $0xde8] sm:$0xff]
    %v567 = vld [vmem:[#allocation2 + $0xdf0] sm:$0xff]
    %v568 = vld [vmem:[#allocation2 + $0xdf8] sm:$0xff]
    %v569 = vld [vmem:[#allocation2 + $0xe00] sm:$0xff]
    %v570 = vld [vmem:[#allocation2 + $0xe08] sm:$0xff]
    %v571 = vld [vmem:[#allocation2 + $0xe10] sm:$0xff]
    %v572 = vld [vmem:[#allocation2 + $0xe18] sm:$0xff]
    %v573 = vld [vmem:[#allocation2 + $0xe20] sm:$0xff]
    %v574 = vld [vmem:[#allocation2 + $0xe28] sm:$0xff]
    %v575 = vld [vmem:[#allocation2 + $0xe30] sm:$0xff]
    %v576 = vld [vmem:[#allocation2 + $0xe38] sm:$0xff]
    %v577 = vld [vmem:[#allocation2 + $0xe40] sm:$0xff]
    %v578 = vld [vmem:[#allocation2 + $0xe48] sm:$0xff]
    %v579 = vld [vmem:[#allocation2 + $0xe50] sm:$0xff]
    %v580 = vld [vmem:[#allocation2 + $0xe58] sm:$0xff]
    %v581 = vld [vmem:[#allocation2 + $0xe60] sm:$0xff]
    %v582 = vld [vmem:[#allocation2 + $0xe68] sm:$0xff]
    %v583 = vld [vmem:[#allocation2 + $0xe70] sm:$0xff]
    %v584 = vld [vmem:[#allocation2 + $0xe78] sm:$0xff]
    %v585 = vld [vmem:[#allocation2 + $0xe80] sm:$0xff]
    %v586 = vld [vmem:[#allocation2 + $0xe88] sm:$0xff]
    %v587 = vld [vmem:[#allocation2 + $0xe90] sm:$0xff]
    %v588 = vld [vmem:[#allocation2 + $0xe98] sm:$0xff]
    %v589 = vld [vmem:[#allocation2 + $0xea0] sm:$0xff]
    %v590 = vld [vmem:[#allocation2 + $0xea8] sm:$0xff]
    %v591 = vld [vmem:[#allocation2 + $0xeb0] sm:$0xff]
    %v592 = vld [vmem:[#allocation2 + $0xeb8] sm:$0xff]
    %v593 = vld [vmem:[#allocation2 + $0xec0] sm:$0xff]
    %v594 = vld [vmem:[#allocation2 + $0xec8] sm:$0xff]
    %v595 = vld [vmem:[#allocation2 + $0xed0] sm:$0xff]
    %v596 = vld [vmem:[#allocation2 + $0xed8] sm:$0xff]
    %v597 = vld [vmem:[#allocation2 + $0xee0] sm:$0xff]
    %v598 = vld [vmem:[#allocation2 + $0xee8] sm:$0xff]
    %v599 = vld [vmem:[#allocation2 + $0xef0] sm:$0xff]
    %v600 = vld [vmem:[#allocation2 + $0xef8] sm:$0xff]
    %v601 = vld [vmem:[#allocation2 + $0xf00] sm:$0xff]
    %v602 = vld [vmem:[#allocation2 + $0xf08] sm:$0xff]
    %v603 = vld [vmem:[#allocation2 + $0xf10] sm:$0xff]
    %v604 = vld [vmem:[#allocation2 + $0xf18] sm:$0xff]
    %v605 = vld [vmem:[#allocation2 + $0xf20] sm:$0xff]
    %v606 = vld [vmem:[#allocation2 + $0xf28] sm:$0xff]
    %v607 = vld [vmem:[#allocation2 + $0xf30] sm:$0xff]
    %v608 = vld [vmem:[#allocation2 + $0xf38] sm:$0xff]
    %v609 = vld [vmem:[#allocation2 + $0xf40] sm:$0xff]
    %v610 = vld [vmem:[#allocation2 + $0xf48] sm:$0xff]
    %v611 = vld [vmem:[#allocation2 + $0xf50] sm:$0xff]
    %v612 = vld [vmem:[#allocation2 + $0xf58] sm:$0xff]
    %v613 = vld [vmem:[#allocation2 + $0xf60] sm:$0xff]
    %v614 = vld [vmem:[#allocation2 + $0xf68] sm:$0xff]
    %v615 = vld [vmem:[#allocation2 + $0xf70] sm:$0xff]
    %v616 = vld [vmem:[#allocation2 + $0xf78] sm:$0xff]
    %v617 = vld [vmem:[#allocation2 + $0xf80] sm:$0xff]
    %v618 = vld [vmem:[#allocation2 + $0xf88] sm:$0xff]
    %v619 = vld [vmem:[#allocation2 + $0xf90] sm:$0xff]
    %v620 = vld [vmem:[#allocation2 + $0xf98] sm:$0xff]
    %v621 = vld [vmem:[#allocation2 + $0xfa0] sm:$0xff]
    %v622 = vld [vmem:[#allocation2 + $0xfa8] sm:$0xff]
    %v623 = vld [vmem:[#allocation2 + $0xfb0] sm:$0xff]
    %v624 = vld [vmem:[#allocation2 + $0xfb8] sm:$0xff]
    %v625 = vld [vmem:[#allocation2 + $0xfc0] sm:$0xff]
    %v626 = vld [vmem:[#allocation2 + $0xfc8] sm:$0xff]
    %v627 = vld [vmem:[#allocation2 + $0xfd0] sm:$0xff]
    %v628 = vld [vmem:[#allocation2 + $0xfd8] sm:$0xff]
    %v629 = vld [vmem:[#allocation2 + $0xfe0] sm:$0xff]
    %v630 = vld [vmem:[#allocation2 + $0xfe8] sm:$0xff]
    %v631 = vld [vmem:[#allocation2 + $0xff0] sm:$0xff]
    %v632 = vld [vmem:[#allocation2 + $0xff8] sm:$0xff]
    %v633 = vld [vmem:[#allocation2 + $0x1000] sm:$0xff]
    %v634 = vld [vmem:[#allocation2 + $0x1008] sm:$0xff]
    %v635 = vld [vmem:[#allocation2 + $0x1010] sm:$0xff]
    %v636 = vld [vmem:[#allocation2 + $0x1018] sm:$0xff]
    %v637 = vld [vmem:[#allocation2 + $0x1020] sm:$0xff]
    %v638 = vld [vmem:[#allocation2 + $0x1028] sm:$0xff]
    %v639 = vld [vmem:[#allocation2 + $0x1030] sm:$0xff]
    %v640 = vld [vmem:[#allocation2 + $0x1038] sm:$0xff]
    %v641 = vld [vmem:[#allocation2 + $0x1040] sm:$0xff]
    %v642 = vld [vmem:[#allocation2 + $0x1048] sm:$0xff]
    %v643 = vld [vmem:[#allocation2 + $0x1050] sm:$0xff]
    %v644 = vld [vmem:[#allocation2 + $0x1058] sm:$0xff]
    %v645 = vld [vmem:[#allocation2 + $0x1060] sm:$0xff]
    %v646 = vld [vmem:[#allocation2 + $0x1068] sm:$0xff]
    %v647 = vld [vmem:[#allocation2 + $0x1070] sm:$0xff]
    %v648 = vld [vmem:[#allocation2 + $0x1078] sm:$0xff]
    %v649 = vld [vmem:[#allocation2 + $0x1080] sm:$0xff]
    %v650 = vld [vmem:[#allocation2 + $0x1088] sm:$0xff]
    %v651 = vld [vmem:[#allocation2 + $0x1090] sm:$0xff]
    %v652 = vld [vmem:[#allocation2 + $0x1098] sm:$0xff]
    %v653 = vld [vmem:[#allocation2 + $0x10a0] sm:$0xff]
    %v654 = vld [vmem:[#allocation2 + $0x10a8] sm:$0xff]
    %v655 = vld [vmem:[#allocation2 + $0x10b0] sm:$0xff]
    %v656 = vld [vmem:[#allocation2 + $0x10b8] sm:$0xff]
    %v657 = vld [vmem:[#allocation2 + $0x10c0] sm:$0xff]
    %v658 = vld [vmem:[#allocation2 + $0x10c8] sm:$0xff]
    %v659 = vld [vmem:[#allocation2 + $0x10d0] sm:$0xff]
    %v660 = vld [vmem:[#allocation2 + $0x10d8] sm:$0xff]
    %v661 = vld [vmem:[#allocation2 + $0x10e0] sm:$0xff]
    %v662 = vld [vmem:[#allocation2 + $0x10e8] sm:$0xff]
    %v663 = vld [vmem:[#allocation2 + $0x10f0] sm:$0xff]
    %v664 = vld [vmem:[#allocation2 + $0x10f8] sm:$0xff]
    %v665 = vld [vmem:[#allocation2 + $0x1100] sm:$0xff]
    %v666 = vld [vmem:[#allocation2 + $0x1108] sm:$0xff]
    %v667 = vld [vmem:[#allocation2 + $0x1110] sm:$0xff]
    %v668 = vld [vmem:[#allocation2 + $0x1118] sm:$0xff]
    %v669 = vld [vmem:[#allocation2 + $0x1120] sm:$0xff]
    %v670 = vld [vmem:[#allocation2 + $0x1128] sm:$0xff]
    %v671 = vld [vmem:[#allocation2 + $0x1130] sm:$0xff]
    %v672 = vld [vmem:[#allocation2 + $0x1138] sm:$0xff]
    %v673 = vld [vmem:[#allocation2 + $0x1140] sm:$0xff]
    %v674 = vld [vmem:[#allocation2 + $0x1148] sm:$0xff]
    %v675 = vld [vmem:[#allocation2 + $0x1150] sm:$0xff]
    %v676 = vld [vmem:[#allocation2 + $0x1158] sm:$0xff]
    %v677 = vld [vmem:[#allocation2 + $0x1160] sm:$0xff]
    %v678 = vld [vmem:[#allocation2 + $0x1168] sm:$0xff]
    %v679 = vld [vmem:[#allocation2 + $0x1170] sm:$0xff]
    %v680 = vld [vmem:[#allocation2 + $0x1178] sm:$0xff]
    %v681 = vld [vmem:[#allocation2 + $0x1180] sm:$0xff]
    %v682 = vld [vmem:[#allocation2 + $0x1188] sm:$0xff]
    %v683 = vld [vmem:[#allocation2 + $0x1190] sm:$0xff]
    %v684 = vld [vmem:[#allocation2 + $0x1198] sm:$0xff]
    %v685 = vld [vmem:[#allocation2 + $0x11a0] sm:$0xff]
    %v686 = vld [vmem:[#allocation2 + $0x11a8] sm:$0xff]
    %v687 = vld [vmem:[#allocation2 + $0x11b0] sm:$0xff]
    %v688 = vld [vmem:[#allocation2 + $0x11b8] sm:$0xff]
    %v689 = vld [vmem:[#allocation2 + $0x11c0] sm:$0xff]
    %v690 = vld [vmem:[#allocation2 + $0x11c8] sm:$0xff]
    %v691 = vld [vmem:[#allocation2 + $0x11d0] sm:$0xff]
    %v692 = vld [vmem:[#allocation2 + $0x11d8] sm:$0xff]
    %v693 = vld [vmem:[#allocation2 + $0x11e0] sm:$0xff]
    %v694 = vld [vmem:[#allocation2 + $0x11e8] sm:$0xff]
    %v695 = vld [vmem:[#allocation2 + $0x11f0] sm:$0xff]
    %v696 = vld [vmem:[#allocation2 + $0x11f8] sm:$0xff]
    %v697 = vld [vmem:[#allocation2 + $0x1200] sm:$0xff]
    %v698 = vld [vmem:[#allocation2 + $0x1208] sm:$0xff]
    %v699 = vld [vmem:[#allocation2 + $0x1210] sm:$0xff]
    %v700 = vld [vmem:[#allocation2 + $0x1218] sm:$0xff]
    %v701 = vld [vmem:[#allocation2 + $0x1220] sm:$0xff]
    %v702 = vld [vmem:[#allocation2 + $0x1228] sm:$0xff]
    %v703 = vld [vmem:[#allocation2 + $0x1230] sm:$0xff]
    %v704 = vld [vmem:[#allocation2 + $0x1238] sm:$0xff]
    %v705 = vld [vmem:[#allocation2 + $0x1240] sm:$0xff]
    %v706 = vld [vmem:[#allocation2 + $0x1248] sm:$0xff]
    %v707 = vld [vmem:[#allocation2 + $0x1250] sm:$0xff]
    %v708 = vld [vmem:[#allocation2 + $0x1258] sm:$0xff]
    %v709 = vld [vmem:[#allocation2 + $0x1260] sm:$0xff]
    %v710 = vld [vmem:[#allocation2 + $0x1268] sm:$0xff]
    %v711 = vld [vmem:[#allocation2 + $0x1270] sm:$0xff]
    %v712 = vld [vmem:[#allocation2 + $0x1278] sm:$0xff]
    %v713 = vld [vmem:[#allocation2 + $0x1280] sm:$0xff]
    %v714 = vld [vmem:[#allocation2 + $0x1288] sm:$0xff]
    %v715 = vld [vmem:[#allocation2 + $0x1290] sm:$0xff]
    %v716 = vld [vmem:[#allocation2 + $0x1298] sm:$0xff]
    %v717 = vld [vmem:[#allocation2 + $0x12a0] sm:$0xff]
    %v718 = vld [vmem:[#allocation2 + $0x12a8] sm:$0xff]
    %v719 = vld [vmem:[#allocation2 + $0x12b0] sm:$0xff]
    %v720 = vld [vmem:[#allocation2 + $0x12b8] sm:$0xff]
    %v721 = vld [vmem:[#allocation2 + $0x12c0] sm:$0xff]
    %v722 = vld [vmem:[#allocation2 + $0x12c8] sm:$0xff]
    %v723 = vld [vmem:[#allocation2 + $0x12d0] sm:$0xff]
    %v724 = vld [vmem:[#allocation2 + $0x12d8] sm:$0xff]
    %v725 = vld [vmem:[#allocation2 + $0x12e0] sm:$0xff]
    %v726 = vld [vmem:[#allocation2 + $0x12e8] sm:$0xff]
    %v727 = vld [vmem:[#allocation2 + $0x12f0] sm:$0xff]
    %v728 = vld [vmem:[#allocation2 + $0x12f8] sm:$0xff]
    %v729 = vld [vmem:[#allocation2 + $0x1300] sm:$0xff]
    %v730 = vld [vmem:[#allocation2 + $0x1308] sm:$0xff]
    %v731 = vld [vmem:[#allocation2 + $0x1310] sm:$0xff]
    %v732 = vld [vmem:[#allocation2 + $0x1318] sm:$0xff]
    %v733 = vld [vmem:[#allocation2 + $0x1320] sm:$0xff]
    %v734 = vld [vmem:[#allocation2 + $0x1328] sm:$0xff]
    %v735 = vld [vmem:[#allocation2 + $0x1330] sm:$0xff]
    %v736 = vld [vmem:[#allocation2 + $0x1338] sm:$0xff]
    %v737 = vld [vmem:[#allocation2 + $0x1340] sm:$0xff]
    %v738 = vld [vmem:[#allocation2 + $0x1348] sm:$0xff]
    %v739 = vld [vmem:[#allocation2 + $0x1350] sm:$0xff]
    %v740 = vld [vmem:[#allocation2 + $0x1358] sm:$0xff]
    %v741 = vld [vmem:[#allocation2 + $0x1360] sm:$0xff]
    %v742 = vld [vmem:[#allocation2 + $0x1368] sm:$0xff]
    %v743 = vld [vmem:[#allocation2 + $0x1370] sm:$0xff]
    %v744 = vld [vmem:[#allocation2 + $0x1378] sm:$0xff]
    %v745 = vld [vmem:[#allocation2 + $0x1380] sm:$0xff]
    %v746 = vld [vmem:[#allocation2 + $0x1388] sm:$0xff]
    %v747 = vld [vmem:[#allocation2 + $0x1390] sm:$0xff]
    %v748 = vld [vmem:[#allocation2 + $0x1398] sm:$0xff]
    %v749 = vld [vmem:[#allocation2 + $0x13a0] sm:$0xff]
    %v750 = vld [vmem:[#allocation2 + $0x13a8] sm:$0xff]
    %v751 = vld [vmem:[#allocation2 + $0x13b0] sm:$0xff]
    %v752 = vld [vmem:[#allocation2 + $0x13b8] sm:$0xff]
    %v753 = vld [vmem:[#allocation2 + $0x13c0] sm:$0xff]
    %v754 = vld [vmem:[#allocation2 + $0x13c8] sm:$0xff]
    %v755 = vld [vmem:[#allocation2 + $0x13d0] sm:$0xff]
    %v756 = vld [vmem:[#allocation2 + $0x13d8] sm:$0xff]
    %v757 = vld [vmem:[#allocation2 + $0x13e0] sm:$0xff]
    %v758 = vld [vmem:[#allocation2 + $0x13e8] sm:$0xff]
    %v759 = vld [vmem:[#allocation2 + $0x13f0] sm:$0xff]
    %v760 = vld [vmem:[#allocation2 + $0x13f8] sm:$0xff]
    %v761 = vld [vmem:[#allocation2 + $0x1400] sm:$0xff]
    %v762 = vld [vmem:[#allocation2 + $0x1408] sm:$0xff]
    %v763 = vld [vmem:[#allocation2 + $0x1410] sm:$0xff]
    %v764 = vld [vmem:[#allocation2 + $0x1418] sm:$0xff]
    %v765 = vld [vmem:[#allocation2 + $0x1420] sm:$0xff]
    %v766 = vld [vmem:[#allocation2 + $0x1428] sm:$0xff]
    %v767 = vld [vmem:[#allocation2 + $0x1430] sm:$0xff]
    %v768 = vld [vmem:[#allocation2 + $0x1438] sm:$0xff]
    %v769 = vld [vmem:[#allocation2 + $0x1440] sm:$0xff]
    %v770 = vld [vmem:[#allocation2 + $0x1448] sm:$0xff]
    %v771 = vld [vmem:[#allocation2 + $0x1450] sm:$0xff]
    %v772 = vld [vmem:[#allocation2 + $0x1458] sm:$0xff]
    %v773 = vld [vmem:[#allocation2 + $0x1460] sm:$0xff]
    %v774 = vld [vmem:[#allocation2 + $0x1468] sm:$0xff]
    %v775 = vld [vmem:[#allocation2 + $0x1470] sm:$0xff]
    %v776 = vld [vmem:[#allocation2 + $0x1478] sm:$0xff]
    %v777 = vld [vmem:[#allocation2 + $0x1480] sm:$0xff]
    %v778 = vld [vmem:[#allocation2 + $0x1488] sm:$0xff]
    %v779 = vld [vmem:[#allocation2 + $0x1490] sm:$0xff]
    %v780 = vld [vmem:[#allocation2 + $0x1498] sm:$0xff]
    %v781 = vld [vmem:[#allocation2 + $0x14a0] sm:$0xff]
    %v782 = vld [vmem:[#allocation2 + $0x14a8] sm:$0xff]
    %v783 = vld [vmem:[#allocation2 + $0x14b0] sm:$0xff]
    %v784 = vld [vmem:[#allocation2 + $0x14b8] sm:$0xff]
    %v785 = vld [vmem:[#allocation2 + $0x14c0] sm:$0xff]
    %v786 = vld [vmem:[#allocation2 + $0x14c8] sm:$0xff]
    %v787 = vld [vmem:[#allocation2 + $0x14d0] sm:$0xff]
    %v788 = vld [vmem:[#allocation2 + $0x14d8] sm:$0xff]
    %v789 = vld [vmem:[#allocation2 + $0x14e0] sm:$0xff]
    %v790 = vld [vmem:[#allocation2 + $0x14e8] sm:$0xff]
    %v791 = vld [vmem:[#allocation2 + $0x14f0] sm:$0xff]
    %v792 = vld [vmem:[#allocation2 + $0x14f8] sm:$0xff]
    %v793 = vld [vmem:[#allocation2 + $0x1500] sm:$0xff]
    %v794 = vld [vmem:[#allocation2 + $0x1508] sm:$0xff]
    %v795 = vld [vmem:[#allocation2 + $0x1510] sm:$0xff]
    %v796 = vld [vmem:[#allocation2 + $0x1518] sm:$0xff]
    %v797 = vld [vmem:[#allocation2 + $0x1520] sm:$0xff]
    %v798 = vld [vmem:[#allocation2 + $0x1528] sm:$0xff]
    %v799 = vld [vmem:[#allocation2 + $0x1530] sm:$0xff]
    %v800 = vld [vmem:[#allocation2 + $0x1538] sm:$0xff]
    %v801 = vld [vmem:[#allocation2 + $0x1540] sm:$0xff]
    %v802 = vld [vmem:[#allocation2 + $0x1548] sm:$0xff]
    %v803 = vld [vmem:[#allocation2 + $0x1550] sm:$0xff]
    %v804 = vld [vmem:[#allocation2 + $0x1558] sm:$0xff]
    %v805 = vld [vmem:[#allocation2 + $0x1560] sm:$0xff]
    %v806 = vld [vmem:[#allocation2 + $0x1568] sm:$0xff]
    %v807 = vld [vmem:[#allocation2 + $0x1570] sm:$0xff]
    %v808 = vld [vmem:[#allocation2 + $0x1578] sm:$0xff]
    %v809 = vld [vmem:[#allocation2 + $0x1580] sm:$0xff]
    %v810 = vld [vmem:[#allocation2 + $0x1588] sm:$0xff]
    %v811 = vld [vmem:[#allocation2 + $0x1590] sm:$0xff]
    %v812 = vld [vmem:[#allocation2 + $0x1598] sm:$0xff]
    %v813 = vld [vmem:[#allocation2 + $0x15a0] sm:$0xff]
    %v814 = vld [vmem:[#allocation2 + $0x15a8] sm:$0xff]
    %v815 = vld [vmem:[#allocation2 + $0x15b0] sm:$0xff]
    %v816 = vld [vmem:[#allocation2 + $0x15b8] sm:$0xff]
    %v817 = vld [vmem:[#allocation2 + $0x15c0] sm:$0xff]
    %v818 = vld [vmem:[#allocation2 + $0x15c8] sm:$0xff]
    %v819 = vld [vmem:[#allocation2 + $0x15d0] sm:$0xff]
    %v820 = vld [vmem:[#allocation2 + $0x15d8] sm:$0xff]
    %v821 = vld [vmem:[#allocation2 + $0x15e0] sm:$0xff]
    %v822 = vld [vmem:[#allocation2 + $0x15e8] sm:$0xff]
    %v823 = vld [vmem:[#allocation2 + $0x15f0] sm:$0xff]
    %v824 = vld [vmem:[#allocation2 + $0x15f8] sm:$0xff]
    %v825 = vld [vmem:[#allocation2 + $0x1600] sm:$0xff]
    %v826 = vld [vmem:[#allocation2 + $0x1608] sm:$0xff]
    %v827 = vld [vmem:[#allocation2 + $0x1610] sm:$0xff]
    %v828 = vld [vmem:[#allocation2 + $0x1618] sm:$0xff]
    %v829 = vld [vmem:[#allocation2 + $0x1620] sm:$0xff]
    %v830 = vld [vmem:[#allocation2 + $0x1628] sm:$0xff]
    %v831 = vld [vmem:[#allocation2 + $0x1630] sm:$0xff]
    %v832 = vld [vmem:[#allocation2 + $0x1638] sm:$0xff]
    %v833 = vld [vmem:[#allocation2 + $0x1640] sm:$0xff]
    %v834 = vld [vmem:[#allocation2 + $0x1648] sm:$0xff]
    %v835 = vld [vmem:[#allocation2 + $0x1650] sm:$0xff]
    %v836 = vld [vmem:[#allocation2 + $0x1658] sm:$0xff]
    %v837 = vld [vmem:[#allocation2 + $0x1660] sm:$0xff]
    %v838 = vld [vmem:[#allocation2 + $0x1668] sm:$0xff]
    %v839 = vld [vmem:[#allocation2 + $0x1670] sm:$0xff]
    %v840 = vld [vmem:[#allocation2 + $0x1678] sm:$0xff]
    %v841 = vld [vmem:[#allocation2 + $0x1680] sm:$0xff]
    %v842 = vld [vmem:[#allocation2 + $0x1688] sm:$0xff]
    %v843 = vld [vmem:[#allocation2 + $0x1690] sm:$0xff]
    %v844 = vld [vmem:[#allocation2 + $0x1698] sm:$0xff]
    %v845 = vld [vmem:[#allocation2 + $0x16a0] sm:$0xff]
    %v846 = vld [vmem:[#allocation2 + $0x16a8] sm:$0xff]
    %v847 = vld [vmem:[#allocation2 + $0x16b0] sm:$0xff]
    %v848 = vld [vmem:[#allocation2 + $0x16b8] sm:$0xff]
    %v849 = vld [vmem:[#allocation2 + $0x16c0] sm:$0xff]
    %v850 = vld [vmem:[#allocation2 + $0x16c8] sm:$0xff]
    %v851 = vld [vmem:[#allocation2 + $0x16d0] sm:$0xff]
    %v852 = vld [vmem:[#allocation2 + $0x16d8] sm:$0xff]
    %v853 = vld [vmem:[#allocation2 + $0x16e0] sm:$0xff]
    %v854 = vld [vmem:[#allocation2 + $0x16e8] sm:$0xff]
    %v855 = vld [vmem:[#allocation2 + $0x16f0] sm:$0xff]
    %v856 = vld [vmem:[#allocation2 + $0x16f8] sm:$0xff]
    %v857 = vld [vmem:[#allocation2 + $0x1700] sm:$0xff]
    %v858 = vld [vmem:[#allocation2 + $0x1708] sm:$0xff]
    %v859 = vld [vmem:[#allocation2 + $0x1710] sm:$0xff]
    %v860 = vld [vmem:[#allocation2 + $0x1718] sm:$0xff]
    %v861 = vld [vmem:[#allocation2 + $0x1720] sm:$0xff]
    %v862 = vld [vmem:[#allocation2 + $0x1728] sm:$0xff]
    %v863 = vld [vmem:[#allocation2 + $0x1730] sm:$0xff]
    %v864 = vld [vmem:[#allocation2 + $0x1738] sm:$0xff]
    %v865 = vld [vmem:[#allocation2 + $0x1740] sm:$0xff]
    %v866 = vld [vmem:[#allocation2 + $0x1748] sm:$0xff]
    %v867 = vld [vmem:[#allocation2 + $0x1750] sm:$0xff]
    %v868 = vld [vmem:[#allocation2 + $0x1758] sm:$0xff]
    %v869 = vld [vmem:[#allocation2 + $0x1760] sm:$0xff]
    %v870 = vld [vmem:[#allocation2 + $0x1768] sm:$0xff]
    %v871 = vld [vmem:[#allocation2 + $0x1770] sm:$0xff]
    %v872 = vld [vmem:[#allocation2 + $0x1778] sm:$0xff]
    %v873 = vld [vmem:[#allocation2 + $0x1780] sm:$0xff]
    %v874 = vld [vmem:[#allocation2 + $0x1788] sm:$0xff]
    %v875 = vld [vmem:[#allocation2 + $0x1790] sm:$0xff]
    %v876 = vld [vmem:[#allocation2 + $0x1798] sm:$0xff]
    %v877 = vld [vmem:[#allocation2 + $0x17a0] sm:$0xff]
    %v878 = vld [vmem:[#allocation2 + $0x17a8] sm:$0xff]
    %v879 = vld [vmem:[#allocation2 + $0x17b0] sm:$0xff]
    %v880 = vld [vmem:[#allocation2 + $0x17b8] sm:$0xff]
    %v881 = vld [vmem:[#allocation2 + $0x17c0] sm:$0xff]
    %v882 = vld [vmem:[#allocation2 + $0x17c8] sm:$0xff]
    %v883 = vld [vmem:[#allocation2 + $0x17d0] sm:$0xff]
    %v884 = vld [vmem:[#allocation2 + $0x17d8] sm:$0xff]
    %v885 = vld [vmem:[#allocation2 + $0x17e0] sm:$0xff]
    %v886 = vld [vmem:[#allocation2 + $0x17e8] sm:$0xff]
    %v887 = vld [vmem:[#allocation2 + $0x17f0] sm:$0xff]
    %v888 = vld [vmem:[#allocation2 + $0x17f8] sm:$0xff]
    %v889 = vld [vmem:[#allocation2 + $0x1800] sm:$0xff]
    %v890 = vld [vmem:[#allocation2 + $0x1808] sm:$0xff]
    %v891 = vld [vmem:[#allocation2 + $0x1810] sm:$0xff]
    %v892 = vld [vmem:[#allocation2 + $0x1818] sm:$0xff]
    %v893 = vld [vmem:[#allocation2 + $0x1820] sm:$0xff]
    %v894 = vld [vmem:[#allocation2 + $0x1828] sm:$0xff]
    %v895 = vld [vmem:[#allocation2 + $0x1830] sm:$0xff]
    %v896 = vld [vmem:[#allocation2 + $0x1838] sm:$0xff]
    %v897 = vld [vmem:[#allocation2 + $0x1840] sm:$0xff]
    %v898 = vld [vmem:[#allocation2 + $0x1848] sm:$0xff]
    %v899 = vld [vmem:[#allocation2 + $0x1850] sm:$0xff]
    %v900 = vld [vmem:[#allocation2 + $0x1858] sm:$0xff]
    %v901 = vld [vmem:[#allocation2 + $0x1860] sm:$0xff]
    %v902 = vld [vmem:[#allocation2 + $0x1868] sm:$0xff]
    %v903 = vld [vmem:[#allocation2 + $0x1870] sm:$0xff]
    %v904 = vld [vmem:[#allocation2 + $0x1878] sm:$0xff]
    %v905 = vld [vmem:[#allocation2 + $0x1880] sm:$0xff]
    %v906 = vld [vmem:[#allocation2 + $0x1888] sm:$0xff]
    %v907 = vld [vmem:[#allocation2 + $0x1890] sm:$0xff]
    %v908 = vld [vmem:[#allocation2 + $0x1898] sm:$0xff]
    %v909 = vld [vmem:[#allocation2 + $0x18a0] sm:$0xff]
    %v910 = vld [vmem:[#allocation2 + $0x18a8] sm:$0xff]
    %v911 = vld [vmem:[#allocation2 + $0x18b0] sm:$0xff]
    %v912 = vld [vmem:[#allocation2 + $0x18b8] sm:$0xff]
    %v913 = vld [vmem:[#allocation2 + $0x18c0] sm:$0xff]
    %v914 = vld [vmem:[#allocation2 + $0x18c8] sm:$0xff]
    %v915 = vld [vmem:[#allocation2 + $0x18d0] sm:$0xff]
    %v916 = vld [vmem:[#allocation2 + $0x18d8] sm:$0xff]
    %v917 = vld [vmem:[#allocation2 + $0x18e0] sm:$0xff]
    %v918 = vld [vmem:[#allocation2 + $0x18e8] sm:$0xff]
    %v919 = vld [vmem:[#allocation2 + $0x18f0] sm:$0xff]
    %v920 = vld [vmem:[#allocation2 + $0x18f8] sm:$0xff]
    %v921 = vld [vmem:[#allocation2 + $0x1900] sm:$0xff]
    %v922 = vld [vmem:[#allocation2 + $0x1908] sm:$0xff]
    %v923 = vld [vmem:[#allocation2 + $0x1910] sm:$0xff]
    %v924 = vld [vmem:[#allocation2 + $0x1918] sm:$0xff]
    %v925 = vld [vmem:[#allocation2 + $0x1920] sm:$0xff]
    %v926 = vld [vmem:[#allocation2 + $0x1928] sm:$0xff]
    %v927 = vld [vmem:[#allocation2 + $0x1930] sm:$0xff]
    %v928 = vld [vmem:[#allocation2 + $0x1938] sm:$0xff]
    %v929 = vld [vmem:[#allocation2 + $0x1940] sm:$0xff]
    %v930 = vld [vmem:[#allocation2 + $0x1948] sm:$0xff]
    %v931 = vld [vmem:[#allocation2 + $0x1950] sm:$0xff]
    %v932 = vld [vmem:[#allocation2 + $0x1958] sm:$0xff]
    %v933 = vld [vmem:[#allocation2 + $0x1960] sm:$0xff]
    %v934 = vld [vmem:[#allocation2 + $0x1968] sm:$0xff]
    %v935 = vld [vmem:[#allocation2 + $0x1970] sm:$0xff]
    %v936 = vld [vmem:[#allocation2 + $0x1978] sm:$0xff]
    %v937 = vld [vmem:[#allocation2 + $0x1980] sm:$0xff]
    %v938 = vld [vmem:[#allocation2 + $0x1988] sm:$0xff]
    %v939 = vld [vmem:[#allocation2 + $0x1990] sm:$0xff]
    %v940 = vld [vmem:[#allocation2 + $0x1998] sm:$0xff]
    %v941 = vld [vmem:[#allocation2 + $0x19a0] sm:$0xff]
    %v942 = vld [vmem:[#allocation2 + $0x19a8] sm:$0xff]
    %v943 = vld [vmem:[#allocation2 + $0x19b0] sm:$0xff]
    %v944 = vld [vmem:[#allocation2 + $0x19b8] sm:$0xff]
    %v945 = vld [vmem:[#allocation2 + $0x19c0] sm:$0xff]
    %v946 = vld [vmem:[#allocation2 + $0x19c8] sm:$0xff]
    %v947 = vld [vmem:[#allocation2 + $0x19d0] sm:$0xff]
    %v948 = vld [vmem:[#allocation2 + $0x19d8] sm:$0xff]
    %v949 = vld [vmem:[#allocation2 + $0x19e0] sm:$0xff]
    %v950 = vld [vmem:[#allocation2 + $0x19e8] sm:$0xff]
    %v951 = vld [vmem:[#allocation2 + $0x19f0] sm:$0xff]
    %v952 = vld [vmem:[#allocation2 + $0x19f8] sm:$0xff]
    %v953 = vld [vmem:[#allocation2 + $0x1a00] sm:$0xff]
    %v954 = vld [vmem:[#allocation2 + $0x1a08] sm:$0xff]
    %v955 = vld [vmem:[#allocation2 + $0x1a10] sm:$0xff]
    %v956 = vld [vmem:[#allocation2 + $0x1a18] sm:$0xff]
    %v957 = vld [vmem:[#allocation2 + $0x1a20] sm:$0xff]
    %v958 = vld [vmem:[#allocation2 + $0x1a28] sm:$0xff]
    %v959 = vld [vmem:[#allocation2 + $0x1a30] sm:$0xff]
    %v960 = vld [vmem:[#allocation2 + $0x1a38] sm:$0xff]
    %v961 = vld [vmem:[#allocation2 + $0x1a40] sm:$0xff]
    %v962 = vld [vmem:[#allocation2 + $0x1a48] sm:$0xff]
    %v963 = vld [vmem:[#allocation2 + $0x1a50] sm:$0xff]
    %v964 = vld [vmem:[#allocation2 + $0x1a58] sm:$0xff]
    %v965 = vld [vmem:[#allocation2 + $0x1a60] sm:$0xff]
    %v966 = vld [vmem:[#allocation2 + $0x1a68] sm:$0xff]
    %v967 = vld [vmem:[#allocation2 + $0x1a70] sm:$0xff]
    %v968 = vld [vmem:[#allocation2 + $0x1a78] sm:$0xff]
    %v969 = vld [vmem:[#allocation2 + $0x1a80] sm:$0xff]
    %v970 = vld [vmem:[#allocation2 + $0x1a88] sm:$0xff]
    %v971 = vld [vmem:[#allocation2 + $0x1a90] sm:$0xff]
    %v972 = vld [vmem:[#allocation2 + $0x1a98] sm:$0xff]
    %v973 = vld [vmem:[#allocation2 + $0x1aa0] sm:$0xff]
    %v974 = vld [vmem:[#allocation2 + $0x1aa8] sm:$0xff]
    %v975 = vld [vmem:[#allocation2 + $0x1ab0] sm:$0xff]
    %v976 = vld [vmem:[#allocation2 + $0x1ab8] sm:$0xff]
    %v977 = vld [vmem:[#allocation2 + $0x1ac0] sm:$0xff]
    %v978 = vld [vmem:[#allocation2 + $0x1ac8] sm:$0xff]
    %v979 = vld [vmem:[#allocation2 + $0x1ad0] sm:$0xff]
    %v980 = vld [vmem:[#allocation2 + $0x1ad8] sm:$0xff]
    %v981 = vld [vmem:[#allocation2 + $0x1ae0] sm:$0xff]
    %v982 = vld [vmem:[#allocation2 + $0x1ae8] sm:$0xff]
    %v983 = vld [vmem:[#allocation2 + $0x1af0] sm:$0xff]
    %v984 = vld [vmem:[#allocation2 + $0x1af8] sm:$0xff]
    %v985 = vld [vmem:[#allocation2 + $0x1b00] sm:$0xff]
    %v986 = vld [vmem:[#allocation2 + $0x1b08] sm:$0xff]
    %v987 = vld [vmem:[#allocation2 + $0x1b10] sm:$0xff]
    %v988 = vld [vmem:[#allocation2 + $0x1b18] sm:$0xff]
    %v989 = vld [vmem:[#allocation2 + $0x1b20] sm:$0xff]
    %v990 = vld [vmem:[#allocation2 + $0x1b28] sm:$0xff]
    %v991 = vld [vmem:[#allocation2 + $0x1b30] sm:$0xff]
    %v992 = vld [vmem:[#allocation2 + $0x1b38] sm:$0xff]
    %v993 = vld [vmem:[#allocation2 + $0x1b40] sm:$0xff]
    %v994 = vld [vmem:[#allocation2 + $0x1b48] sm:$0xff]
    %v995 = vld [vmem:[#allocation2 + $0x1b50] sm:$0xff]
    %v996 = vld [vmem:[#allocation2 + $0x1b58] sm:$0xff]
    %v997 = vld [vmem:[#allocation2 + $0x1b60] sm:$0xff]
    %v998 = vld [vmem:[#allocation2 + $0x1b68] sm:$0xff]
    %v999 = vld [vmem:[#allocation2 + $0x1b70] sm:$0xff]
    %v1000 = vld [vmem:[#allocation2 + $0x1b78] sm:$0xff]
    %v1001 = vld [vmem:[#allocation2 + $0x1b80] sm:$0xff]
    %v1002 = vld [vmem:[#allocation2 + $0x1b88] sm:$0xff]
    %v1003 = vld [vmem:[#allocation2 + $0x1b90] sm:$0xff]
    %v1004 = vld [vmem:[#allocation2 + $0x1b98] sm:$0xff]
    %v1005 = vld [vmem:[#allocation2 + $0x1ba0] sm:$0xff]
    %v1006 = vld [vmem:[#allocation2 + $0x1ba8] sm:$0xff]
    %v1007 = vld [vmem:[#allocation2 + $0x1bb0] sm:$0xff]
    %v1008 = vld [vmem:[#allocation2 + $0x1bb8] sm:$0xff]
    %v1009 = vld [vmem:[#allocation2 + $0x1bc0] sm:$0xff]
    %v1010 = vld [vmem:[#allocation2 + $0x1bc8] sm:$0xff]
    %v1011 = vld [vmem:[#allocation2 + $0x1bd0] sm:$0xff]
    %v1012 = vld [vmem:[#allocation2 + $0x1bd8] sm:$0xff]
    %v1013 = vld [vmem:[#allocation2 + $0x1be0] sm:$0xff]
    %v1014 = vld [vmem:[#allocation2 + $0x1be8] sm:$0xff]
    %v1015 = vld [vmem:[#allocation2 + $0x1bf0] sm:$0xff]
    %v1016 = vld [vmem:[#allocation2 + $0x1bf8] sm:$0xff]
    %v1017 = vld [vmem:[#allocation2 + $0x1c00] sm:$0xff]
    %v1018 = vld [vmem:[#allocation2 + $0x1c08] sm:$0xff]
    %v1019 = vld [vmem:[#allocation2 + $0x1c10] sm:$0xff]
    %v1020 = vld [vmem:[#allocation2 + $0x1c18] sm:$0xff]
    %v1021 = vld [vmem:[#allocation2 + $0x1c20] sm:$0xff]
    %v1022 = vld [vmem:[#allocation2 + $0x1c28] sm:$0xff]
    %v1023 = vld [vmem:[#allocation2 + $0x1c30] sm:$0xff]
    %v1024 = vld [vmem:[#allocation2 + $0x1c38] sm:$0xff]
    %v1025 = vld [vmem:[#allocation2 + $0x1c40] sm:$0xff]
    %v1026 = vld [vmem:[#allocation2 + $0x1c48] sm:$0xff]
    %v1027 = vld [vmem:[#allocation2 + $0x1c50] sm:$0xff]
    %v1028 = vld [vmem:[#allocation2 + $0x1c58] sm:$0xff]
    %v1029 = vld [vmem:[#allocation2 + $0x1c60] sm:$0xff]
    %v1030 = vld [vmem:[#allocation2 + $0x1c68] sm:$0xff]
    %v1031 = vld [vmem:[#allocation2 + $0x1c70] sm:$0xff]
    %v1032 = vld [vmem:[#allocation2 + $0x1c78] sm:$0xff]
    %v1033 = vld [vmem:[#allocation2 + $0x1c80] sm:$0xff]
    %v1034 = vld [vmem:[#allocation2 + $0x1c88] sm:$0xff]
    %v1035 = vld [vmem:[#allocation2 + $0x1c90] sm:$0xff]
    %v1036 = vld [vmem:[#allocation2 + $0x1c98] sm:$0xff]
    %v1037 = vld [vmem:[#allocation2 + $0x1ca0] sm:$0xff]
    %v1038 = vld [vmem:[#allocation2 + $0x1ca8] sm:$0xff]
    %v1039 = vld [vmem:[#allocation2 + $0x1cb0] sm:$0xff]
    %v1040 = vld [vmem:[#allocation2 + $0x1cb8] sm:$0xff]
    %v1041 = vld [vmem:[#allocation2 + $0x1cc0] sm:$0xff]
    %v1042 = vld [vmem:[#allocation2 + $0x1cc8] sm:$0xff]
    %v1043 = vld [vmem:[#allocation2 + $0x1cd0] sm:$0xff]
    %v1044 = vld [vmem:[#allocation2 + $0x1cd8] sm:$0xff]
    %v1045 = vld [vmem:[#allocation2 + $0x1ce0] sm:$0xff]
    %v1046 = vld [vmem:[#allocation2 + $0x1ce8] sm:$0xff]
    %v1047 = vld [vmem:[#allocation2 + $0x1cf0] sm:$0xff]
    %v1048 = vld [vmem:[#allocation2 + $0x1cf8] sm:$0xff]
    %v1049 = vld [vmem:[#allocation2 + $0x1d00] sm:$0xff]
    %v1050 = vld [vmem:[#allocation2 + $0x1d08] sm:$0xff]
    %v1051 = vld [vmem:[#allocation2 + $0x1d10] sm:$0xff]
    %v1052 = vld [vmem:[#allocation2 + $0x1d18] sm:$0xff]
    %v1053 = vld [vmem:[#allocation2 + $0x1d20] sm:$0xff]
    %v1054 = vld [vmem:[#allocation2 + $0x1d28] sm:$0xff]
    %v1055 = vld [vmem:[#allocation2 + $0x1d30] sm:$0xff]
    %v1056 = vld [vmem:[#allocation2 + $0x1d38] sm:$0xff]
    %v1057 = vld [vmem:[#allocation2 + $0x1d40] sm:$0xff]
    %v1058 = vld [vmem:[#allocation2 + $0x1d48] sm:$0xff]
    %v1059 = vld [vmem:[#allocation2 + $0x1d50] sm:$0xff]
    %v1060 = vld [vmem:[#allocation2 + $0x1d58] sm:$0xff]
    %v1061 = vld [vmem:[#allocation2 + $0x1d60] sm:$0xff]
    %v1062 = vld [vmem:[#allocation2 + $0x1d68] sm:$0xff]
    %v1063 = vld [vmem:[#allocation2 + $0x1d70] sm:$0xff]
    %v1064 = vld [vmem:[#allocation2 + $0x1d78] sm:$0xff]
    %v1065 = vld [vmem:[#allocation2 + $0x1d80] sm:$0xff]
    %v1066 = vld [vmem:[#allocation2 + $0x1d88] sm:$0xff]
    %v1067 = vld [vmem:[#allocation2 + $0x1d90] sm:$0xff]
    %v1068 = vld [vmem:[#allocation2 + $0x1d98] sm:$0xff]
    %v1069 = vld [vmem:[#allocation2 + $0x1da0] sm:$0xff]
    %v1070 = vld [vmem:[#allocation2 + $0x1da8] sm:$0xff]
    %v1071 = vld [vmem:[#allocation2 + $0x1db0] sm:$0xff]
    %v1072 = vld [vmem:[#allocation2 + $0x1db8] sm:$0xff]
    %v1073 = vld [vmem:[#allocation2 + $0x1dc0] sm:$0xff]
    %v1074 = vld [vmem:[#allocation2 + $0x1dc8] sm:$0xff]
    %v1075 = vld [vmem:[#allocation2 + $0x1dd0] sm:$0xff]
    %v1076 = vld [vmem:[#allocation2 + $0x1dd8] sm:$0xff]
    %v1077 = vld [vmem:[#allocation2 + $0x1de0] sm:$0xff]
    %v1078 = vld [vmem:[#allocation2 + $0x1de8] sm:$0xff]
    %v1079 = vld [vmem:[#allocation2 + $0x1df0] sm:$0xff]
    %v1080 = vld [vmem:[#allocation2 + $0x1df8] sm:$0xff]
    %v1081 = vld [vmem:[#allocation2 + $0x1e00] sm:$0xff]
    %v1082 = vld [vmem:[#allocation2 + $0x1e08] sm:$0xff]
    %v1083 = vld [vmem:[#allocation2 + $0x1e10] sm:$0xff]
    %v1084 = vld [vmem:[#allocation2 + $0x1e18] sm:$0xff]
    %v1085 = vld [vmem:[#allocation2 + $0x1e20] sm:$0xff]
    %v1086 = vld [vmem:[#allocation2 + $0x1e28] sm:$0xff]
    %v1087 = vld [vmem:[#allocation2 + $0x1e30] sm:$0xff]
    %v1088 = vld [vmem:[#allocation2 + $0x1e38] sm:$0xff]
    %v1089 = vld [vmem:[#allocation2 + $0x1e40] sm:$0xff]
    %v1090 = vld [vmem:[#allocation2 + $0x1e48] sm:$0xff]
    %v1091 = vld [vmem:[#allocation2 + $0x1e50] sm:$0xff]
    %v1092 = vld [vmem:[#allocation2 + $0x1e58] sm:$0xff]
    %v1093 = vld [vmem:[#allocation2 + $0x1e60] sm:$0xff]
    %v1094 = vld [vmem:[#allocation2 + $0x1e68] sm:$0xff]
    %v1095 = vld [vmem:[#allocation2 + $0x1e70] sm:$0xff]
    %v1096 = vld [vmem:[#allocation2 + $0x1e78] sm:$0xff]
    %v1097 = vld [vmem:[#allocation2 + $0x1e80] sm:$0xff]
    %v1098 = vld [vmem:[#allocation2 + $0x1e88] sm:$0xff]
    %v1099 = vld [vmem:[#allocation2 + $0x1e90] sm:$0xff]
    %v1100 = vld [vmem:[#allocation2 + $0x1e98] sm:$0xff]
    %v1101 = vld [vmem:[#allocation2 + $0x1ea0] sm:$0xff]
    %v1102 = vld [vmem:[#allocation2 + $0x1ea8] sm:$0xff]
    %v1103 = vld [vmem:[#allocation2 + $0x1eb0] sm:$0xff]
    %v1104 = vld [vmem:[#allocation2 + $0x1eb8] sm:$0xff]
    %v1105 = vld [vmem:[#allocation2 + $0x1ec0] sm:$0xff]
    %v1106 = vld [vmem:[#allocation2 + $0x1ec8] sm:$0xff]
    %v1107 = vld [vmem:[#allocation2 + $0x1ed0] sm:$0xff]
    %v1108 = vld [vmem:[#allocation2 + $0x1ed8] sm:$0xff]
    %v1109 = vld [vmem:[#allocation2 + $0x1ee0] sm:$0xff]
    %v1110 = vld [vmem:[#allocation2 + $0x1ee8] sm:$0xff]
    %v1111 = vld [vmem:[#allocation2 + $0x1ef0] sm:$0xff]
    %v1112 = vld [vmem:[#allocation2 + $0x1ef8] sm:$0xff]
    %v1113 = vld [vmem:[#allocation2 + $0x1f00] sm:$0xff]
    %v1114 = vld [vmem:[#allocation2 + $0x1f08] sm:$0xff]
    %v1115 = vld [vmem:[#allocation2 + $0x1f10] sm:$0xff]
    %v1116 = vld [vmem:[#allocation2 + $0x1f18] sm:$0xff]
    %v1117 = vld [vmem:[#allocation2 + $0x1f20] sm:$0xff]
    %v1118 = vld [vmem:[#allocation2 + $0x1f28] sm:$0xff]
    %v1119 = vld [vmem:[#allocation2 + $0x1f30] sm:$0xff]
    %v1120 = vld [vmem:[#allocation2 + $0x1f38] sm:$0xff]
    %v1121 = vld [vmem:[#allocation2 + $0x1f40] sm:$0xff]
    %v1122 = vld [vmem:[#allocation2 + $0x1f48] sm:$0xff]
    %v1123 = vld [vmem:[#allocation2 + $0x1f50] sm:$0xff]
    %v1124 = vld [vmem:[#allocation2 + $0x1f58] sm:$0xff]
    %v1125 = vld [vmem:[#allocation2 + $0x1f60] sm:$0xff]
    %v1126 = vld [vmem:[#allocation2 + $0x1f68] sm:$0xff]
    %v1127 = vld [vmem:[#allocation2 + $0x1f70] sm:$0xff]
    %v1128 = vld [vmem:[#allocation2 + $0x1f78] sm:$0xff]
    %v1129 = vld [vmem:[#allocation2 + $0x1f80] sm:$0xff]
    %v1130 = vld [vmem:[#allocation2 + $0x1f88] sm:$0xff]
    %v1131 = vld [vmem:[#allocation2 + $0x1f90] sm:$0xff]
    %v1132 = vld [vmem:[#allocation2 + $0x1f98] sm:$0xff]
    %v1133 = vld [vmem:[#allocation2 + $0x1fa0] sm:$0xff]
    %v1134 = vld [vmem:[#allocation2 + $0x1fa8] sm:$0xff]
    %v1135 = vld [vmem:[#allocation2 + $0x1fb0] sm:$0xff]
    %v1136 = vld [vmem:[#allocation2 + $0x1fb8] sm:$0xff]
    %v1137 = vld [vmem:[#allocation2 + $0x1fc0] sm:$0xff]
    %v1138 = vld [vmem:[#allocation2 + $0x1fc8] sm:$0xff]
    %v1139 = vld [vmem:[#allocation2 + $0x1fd0] sm:$0xff]
    %v1140 = vld [vmem:[#allocation2 + $0x1fd8] sm:$0xff]
    %v1141 = vld [vmem:[#allocation2 + $0x1fe0] sm:$0xff]
    %v1142 = vld [vmem:[#allocation2 + $0x1fe8] sm:$0xff]
    %v1143 = vld [vmem:[#allocation2 + $0x1ff0] sm:$0xff]
    %v1144 = vld [vmem:[#allocation2 + $0x1ff8] sm:$0xff]
    %v1145 = vld [vmem:[#allocation4] sm:$0xff]
    %v1146 = vld [vmem:[#allocation4 + $0x8] sm:$0xff]
    %v1149 = vlaneseq
    %v1150 = vshrl.u32 %v1149, 7
    %v1151 = vsub.s32 0, %v1150
    %v1152 = vrot.slane %v1145, %v1151
    %v1153 = vlaneseq
    %v1154 = vshrl.u32 %v1153, 7
    %v1155 = vsub.s32 1, %v1154
    %v1156 = vrot.slane %v1145, %v1155
    %v1157 = vlaneseq
    %v1158 = vshrl.u32 %v1157, 7
    %v1159 = vsub.s32 2, %v1158
    %v1160 = vrot.slane %v1145, %v1159
    %v1161 = vlaneseq
    %v1162 = vshrl.u32 %v1161, 7
    %v1163 = vsub.s32 3, %v1162
    %v1164 = vrot.slane %v1145, %v1163
    %v1165 = vlaneseq
    %v1166 = vshrl.u32 %v1165, 7
    %v1167 = vsub.s32 4, %v1166
    %v1168 = vrot.slane %v1145, %v1167
    %v1169 = vlaneseq
    %v1170 = vshrl.u32 %v1169, 7
    %v1171 = vsub.s32 5, %v1170
    %v1172 = vrot.slane %v1145, %v1171
    %v1173 = vlaneseq
    %v1174 = vshrl.u32 %v1173, 7
    %v1175 = vsub.s32 6, %v1174
    %v1176 = vrot.slane %v1145, %v1175
    %v1177 = vlaneseq
    %v1178 = vshrl.u32 %v1177, 7
    %v1179 = vsub.s32 7, %v1178
    %v1180 = vrot.slane %v1145, %v1179
    %v1181 = vlaneseq
    %v1182 = vshrl.u32 %v1181, 7
    %v1183 = vsub.s32 0, %v1182
    %v1184 = vrot.slane %v1146, %v1183
    %v1185 = vlaneseq
    %v1186 = vshrl.u32 %v1185, 7
    %v1187 = vsub.s32 1, %v1186
    %v1188 = vrot.slane %v1146, %v1187
    %v1189 = vlaneseq
    %v1190 = vshrl.u32 %v1189, 7
    %v1191 = vsub.s32 2, %v1190
    %v1192 = vrot.slane %v1146, %v1191
    %v1193 = vlaneseq
    %v1194 = vshrl.u32 %v1193, 7
    %v1195 = vsub.s32 3, %v1194
    %v1196 = vrot.slane %v1146, %v1195
    %v1197 = vlaneseq
    %v1198 = vshrl.u32 %v1197, 7
    %v1199 = vsub.s32 4, %v1198
    %v1200 = vrot.slane %v1146, %v1199
    %v1201 = vlaneseq
    %v1202 = vshrl.u32 %v1201, 7
    %v1203 = vsub.s32 5, %v1202
    %v1204 = vrot.slane %v1146, %v1203
    %v1205 = vlaneseq
    %v1206 = vshrl.u32 %v1205, 7
    %v1207 = vsub.s32 6, %v1206
    %v1208 = vrot.slane %v1146, %v1207
    %v1209 = vlaneseq
    %v1210 = vshrl.u32 %v1209, 7
    %v1211 = vsub.s32 7, %v1210
    %v1212 = vrot.slane %v1146, %v1211
    %v2253 = vunpack.c.l.b16 %v121
    %v2254 = vunpack.c.h.b16 %v121
    %v2255 = vunpack.c.l.b16 %v122
    %v2256 = vunpack.c.h.b16 %v122
    %v2257 = vunpack.c.l.b16 %v123
    %v2258 = vunpack.c.h.b16 %v123
    %v2259 = vunpack.c.l.b16 %v124
    %v2260 = vunpack.c.h.b16 %v124
    %v2261 = vunpack.c.l.b16 %v125
    %v2262 = vunpack.c.h.b16 %v125
    %v2263 = vunpack.c.l.b16 %v126
    %v2264 = vunpack.c.h.b16 %v126
    %v2265 = vunpack.c.l.b16 %v127
    %v2266 = vunpack.c.h.b16 %v127
    %v2267 = vunpack.c.l.b16 %v128
    %v2268 = vunpack.c.h.b16 %v128
    %v2269 = vunpack.c.l.b16 %v129
    %v2270 = vunpack.c.h.b16 %v129
    %v2271 = vunpack.c.l.b16 %v130
    %v2272 = vunpack.c.h.b16 %v130
    %v2273 = vunpack.c.l.b16 %v131
    %v2274 = vunpack.c.h.b16 %v131
    %v2275 = vunpack.c.l.b16 %v132
    %v2276 = vunpack.c.h.b16 %v132
    %v2277 = vunpack.c.l.b16 %v133
    %v2278 = vunpack.c.h.b16 %v133
    %v2279 = vunpack.c.l.b16 %v134
    %v2280 = vunpack.c.h.b16 %v134
    %v2281 = vunpack.c.l.b16 %v135
    %v2282 = vunpack.c.h.b16 %v135
    %v2283 = vunpack.c.l.b16 %v136
    %v2284 = vunpack.c.h.b16 %v136
    %v2285 = vunpack.c.l.b16 %v137
    %v2286 = vunpack.c.h.b16 %v137
    %v2287 = vunpack.c.l.b16 %v138
    %v2288 = vunpack.c.h.b16 %v138
    %v2289 = vunpack.c.l.b16 %v139
    %v2290 = vunpack.c.h.b16 %v139
    %v2291 = vunpack.c.l.b16 %v140
    %v2292 = vunpack.c.h.b16 %v140
    %v2293 = vunpack.c.l.b16 %v141
    %v2294 = vunpack.c.h.b16 %v141
    %v2295 = vunpack.c.l.b16 %v142
    %v2296 = vunpack.c.h.b16 %v142
    %v2297 = vunpack.c.l.b16 %v143
    %v2298 = vunpack.c.h.b16 %v143
    %v2299 = vunpack.c.l.b16 %v144
    %v2300 = vunpack.c.h.b16 %v144
    %v2301 = vunpack.c.l.b16 %v145
    %v2302 = vunpack.c.h.b16 %v145
    %v2303 = vunpack.c.l.b16 %v146
    %v2304 = vunpack.c.h.b16 %v146
    %v2305 = vunpack.c.l.b16 %v147
    %v2306 = vunpack.c.h.b16 %v147
    %v2307 = vunpack.c.l.b16 %v148
    %v2308 = vunpack.c.h.b16 %v148
    %v2309 = vunpack.c.l.b16 %v149
    %v2310 = vunpack.c.h.b16 %v149
    %v2311 = vunpack.c.l.b16 %v150
    %v2312 = vunpack.c.h.b16 %v150
    %v2313 = vunpack.c.l.b16 %v151
    %v2314 = vunpack.c.h.b16 %v151
    %v2315 = vunpack.c.l.b16 %v152
    %v2316 = vunpack.c.h.b16 %v152
    %v2317 = vunpack.c.l.b16 %v153
    %v2318 = vunpack.c.h.b16 %v153
    %v2319 = vunpack.c.l.b16 %v154
    %v2320 = vunpack.c.h.b16 %v154
    %v2321 = vunpack.c.l.b16 %v155
    %v2322 = vunpack.c.h.b16 %v155
    %v2323 = vunpack.c.l.b16 %v156
    %v2324 = vunpack.c.h.b16 %v156
    %v2325 = vunpack.c.l.b16 %v157
    %v2326 = vunpack.c.h.b16 %v157
    %v2327 = vunpack.c.l.b16 %v158
    %v2328 = vunpack.c.h.b16 %v158
    %v2329 = vunpack.c.l.b16 %v159
    %v2330 = vunpack.c.h.b16 %v159
    %v2331 = vunpack.c.l.b16 %v160
    %v2332 = vunpack.c.h.b16 %v160
    %v2333 = vunpack.c.l.b16 %v161
    %v2334 = vunpack.c.h.b16 %v161
    %v2335 = vunpack.c.l.b16 %v162
    %v2336 = vunpack.c.h.b16 %v162
    %v2337 = vunpack.c.l.b16 %v163
    %v2338 = vunpack.c.h.b16 %v163
    %v2339 = vunpack.c.l.b16 %v164
    %v2340 = vunpack.c.h.b16 %v164
    %v2341 = vunpack.c.l.b16 %v165
    %v2342 = vunpack.c.h.b16 %v165
    %v2343 = vunpack.c.l.b16 %v166
    %v2344 = vunpack.c.h.b16 %v166
    %v2345 = vunpack.c.l.b16 %v167
    %v2346 = vunpack.c.h.b16 %v167
    %v2347 = vunpack.c.l.b16 %v168
    %v2348 = vunpack.c.h.b16 %v168
    %v2349 = vunpack.c.l.b16 %v169
    %v2350 = vunpack.c.h.b16 %v169
    %v2351 = vunpack.c.l.b16 %v170
    %v2352 = vunpack.c.h.b16 %v170
    %v2353 = vunpack.c.l.b16 %v171
    %v2354 = vunpack.c.h.b16 %v171
    %v2355 = vunpack.c.l.b16 %v172
    %v2356 = vunpack.c.h.b16 %v172
    %v2357 = vunpack.c.l.b16 %v173
    %v2358 = vunpack.c.h.b16 %v173
    %v2359 = vunpack.c.l.b16 %v174
    %v2360 = vunpack.c.h.b16 %v174
    %v2361 = vunpack.c.l.b16 %v175
    %v2362 = vunpack.c.h.b16 %v175
    %v2363 = vunpack.c.l.b16 %v176
    %v2364 = vunpack.c.h.b16 %v176
    %v2365 = vunpack.c.l.b16 %v177
    %v2366 = vunpack.c.h.b16 %v177
    %v2367 = vunpack.c.l.b16 %v178
    %v2368 = vunpack.c.h.b16 %v178
    %v2369 = vunpack.c.l.b16 %v179
    %v2370 = vunpack.c.h.b16 %v179
    %v2371 = vunpack.c.l.b16 %v180
    %v2372 = vunpack.c.h.b16 %v180
    %v2373 = vunpack.c.l.b16 %v181
    %v2374 = vunpack.c.h.b16 %v181
    %v2375 = vunpack.c.l.b16 %v182
    %v2376 = vunpack.c.h.b16 %v182
    %v2377 = vunpack.c.l.b16 %v183
    %v2378 = vunpack.c.h.b16 %v183
    %v2379 = vunpack.c.l.b16 %v184
    %v2380 = vunpack.c.h.b16 %v184
    %v2381 = vunpack.c.l.b16 %v185
    %v2382 = vunpack.c.h.b16 %v185
    %v2383 = vunpack.c.l.b16 %v186
    %v2384 = vunpack.c.h.b16 %v186
    %v2385 = vunpack.c.l.b16 %v187
    %v2386 = vunpack.c.h.b16 %v187
    %v2387 = vunpack.c.l.b16 %v188
    %v2388 = vunpack.c.h.b16 %v188
    %v2389 = vunpack.c.l.b16 %v189
    %v2390 = vunpack.c.h.b16 %v189
    %v2391 = vunpack.c.l.b16 %v190
    %v2392 = vunpack.c.h.b16 %v190
    %v2393 = vunpack.c.l.b16 %v191
    %v2394 = vunpack.c.h.b16 %v191
    %v2395 = vunpack.c.l.b16 %v192
    %v2396 = vunpack.c.h.b16 %v192
    %v2397 = vunpack.c.l.b16 %v193
    %v2398 = vunpack.c.h.b16 %v193
    %v2399 = vunpack.c.l.b16 %v194
    %v2400 = vunpack.c.h.b16 %v194
    %v2401 = vunpack.c.l.b16 %v195
    %v2402 = vunpack.c.h.b16 %v195
    %v2403 = vunpack.c.l.b16 %v196
    %v2404 = vunpack.c.h.b16 %v196
    %v2405 = vunpack.c.l.b16 %v197
    %v2406 = vunpack.c.h.b16 %v197
    %v2407 = vunpack.c.l.b16 %v198
    %v2408 = vunpack.c.h.b16 %v198
    %v2409 = vunpack.c.l.b16 %v199
    %v2410 = vunpack.c.h.b16 %v199
    %v2411 = vunpack.c.l.b16 %v200
    %v2412 = vunpack.c.h.b16 %v200
    %v2413 = vunpack.c.l.b16 %v201
    %v2414 = vunpack.c.h.b16 %v201
    %v2415 = vunpack.c.l.b16 %v202
    %v2416 = vunpack.c.h.b16 %v202
    %v2417 = vunpack.c.l.b16 %v203
    %v2418 = vunpack.c.h.b16 %v203
    %v2419 = vunpack.c.l.b16 %v204
    %v2420 = vunpack.c.h.b16 %v204
    %v2421 = vunpack.c.l.b16 %v205
    %v2422 = vunpack.c.h.b16 %v205
    %v2423 = vunpack.c.l.b16 %v206
    %v2424 = vunpack.c.h.b16 %v206
    %v2425 = vunpack.c.l.b16 %v207
    %v2426 = vunpack.c.h.b16 %v207
    %v2427 = vunpack.c.l.b16 %v208
    %v2428 = vunpack.c.h.b16 %v208
    %v2429 = vunpack.c.l.b16 %v209
    %v2430 = vunpack.c.h.b16 %v209
    %v2431 = vunpack.c.l.b16 %v210
    %v2432 = vunpack.c.h.b16 %v210
    %v2433 = vunpack.c.l.b16 %v211
    %v2434 = vunpack.c.h.b16 %v211
    %v2435 = vunpack.c.l.b16 %v212
    %v2436 = vunpack.c.h.b16 %v212
    %v2437 = vunpack.c.l.b16 %v213
    %v2438 = vunpack.c.h.b16 %v213
    %v2439 = vunpack.c.l.b16 %v214
    %v2440 = vunpack.c.h.b16 %v214
    %v2441 = vunpack.c.l.b16 %v215
    %v2442 = vunpack.c.h.b16 %v215
    %v2443 = vunpack.c.l.b16 %v216
    %v2444 = vunpack.c.h.b16 %v216
    %v2445 = vunpack.c.l.b16 %v217
    %v2446 = vunpack.c.h.b16 %v217
    %v2447 = vunpack.c.l.b16 %v218
    %v2448 = vunpack.c.h.b16 %v218
    %v2449 = vunpack.c.l.b16 %v219
    %v2450 = vunpack.c.h.b16 %v219
    %v2451 = vunpack.c.l.b16 %v220
    %v2452 = vunpack.c.h.b16 %v220
    %v2453 = vunpack.c.l.b16 %v221
    %v2454 = vunpack.c.h.b16 %v221
    %v2455 = vunpack.c.l.b16 %v222
    %v2456 = vunpack.c.h.b16 %v222
    %v2457 = vunpack.c.l.b16 %v223
    %v2458 = vunpack.c.h.b16 %v223
    %v2459 = vunpack.c.l.b16 %v224
    %v2460 = vunpack.c.h.b16 %v224
    %v2461 = vunpack.c.l.b16 %v225
    %v2462 = vunpack.c.h.b16 %v225
    %v2463 = vunpack.c.l.b16 %v226
    %v2464 = vunpack.c.h.b16 %v226
    %v2465 = vunpack.c.l.b16 %v227
    %v2466 = vunpack.c.h.b16 %v227
    %v2467 = vunpack.c.l.b16 %v228
    %v2468 = vunpack.c.h.b16 %v228
    %v2469 = vunpack.c.l.b16 %v229
    %v2470 = vunpack.c.h.b16 %v229
    %v2471 = vunpack.c.l.b16 %v230
    %v2472 = vunpack.c.h.b16 %v230
    %v2473 = vunpack.c.l.b16 %v231
    %v2474 = vunpack.c.h.b16 %v231
    %v2475 = vunpack.c.l.b16 %v232
    %v2476 = vunpack.c.h.b16 %v232
    %v2477 = vunpack.c.l.b16 %v233
    %v2478 = vunpack.c.h.b16 %v233
    %v2479 = vunpack.c.l.b16 %v234
    %v2480 = vunpack.c.h.b16 %v234
    %v2481 = vunpack.c.l.b16 %v235
    %v2482 = vunpack.c.h.b16 %v235
    %v2483 = vunpack.c.l.b16 %v236
    %v2484 = vunpack.c.h.b16 %v236
    %v2485 = vunpack.c.l.b16 %v237
    %v2486 = vunpack.c.h.b16 %v237
    %v2487 = vunpack.c.l.b16 %v238
    %v2488 = vunpack.c.h.b16 %v238
    %v2489 = vunpack.c.l.b16 %v239
    %v2490 = vunpack.c.h.b16 %v239
    %v2491 = vunpack.c.l.b16 %v240
    %v2492 = vunpack.c.h.b16 %v240
    %v2493 = vunpack.c.l.b16 %v241
    %v2494 = vunpack.c.h.b16 %v241
    %v2495 = vunpack.c.l.b16 %v242
    %v2496 = vunpack.c.h.b16 %v242
    %v2497 = vunpack.c.l.b16 %v243
    %v2498 = vunpack.c.h.b16 %v243
    %v2499 = vunpack.c.l.b16 %v244
    %v2500 = vunpack.c.h.b16 %v244
    %v2501 = vunpack.c.l.b16 %v245
    %v2502 = vunpack.c.h.b16 %v245
    %v2503 = vunpack.c.l.b16 %v246
    %v2504 = vunpack.c.h.b16 %v246
    %v2505 = vunpack.c.l.b16 %v247
    %v2506 = vunpack.c.h.b16 %v247
    %v2507 = vunpack.c.l.b16 %v248
    %v2508 = vunpack.c.h.b16 %v248
    %v2509 = vunpack.c.l.b16 %v249
    %v2510 = vunpack.c.h.b16 %v249
    %v2511 = vunpack.c.l.b16 %v250
    %v2512 = vunpack.c.h.b16 %v250
    %v2513 = vunpack.c.l.b16 %v251
    %v2514 = vunpack.c.h.b16 %v251
    %v2515 = vunpack.c.l.b16 %v252
    %v2516 = vunpack.c.h.b16 %v252
    %v2517 = vunpack.c.l.b16 %v253
    %v2518 = vunpack.c.h.b16 %v253
    %v2519 = vunpack.c.l.b16 %v254
    %v2520 = vunpack.c.h.b16 %v254
    %v2521 = vunpack.c.l.b16 %v255
    %v2522 = vunpack.c.h.b16 %v255
    %v2523 = vunpack.c.l.b16 %v256
    %v2524 = vunpack.c.h.b16 %v256
    %v2525 = vunpack.c.l.b16 %v257
    %v2526 = vunpack.c.h.b16 %v257
    %v2527 = vunpack.c.l.b16 %v258
    %v2528 = vunpack.c.h.b16 %v258
    %v2529 = vunpack.c.l.b16 %v259
    %v2530 = vunpack.c.h.b16 %v259
    %v2531 = vunpack.c.l.b16 %v260
    %v2532 = vunpack.c.h.b16 %v260
    %v2533 = vunpack.c.l.b16 %v261
    %v2534 = vunpack.c.h.b16 %v261
    %v2535 = vunpack.c.l.b16 %v262
    %v2536 = vunpack.c.h.b16 %v262
    %v2537 = vunpack.c.l.b16 %v263
    %v2538 = vunpack.c.h.b16 %v263
    %v2539 = vunpack.c.l.b16 %v264
    %v2540 = vunpack.c.h.b16 %v264
    %v2541 = vunpack.c.l.b16 %v265
    %v2542 = vunpack.c.h.b16 %v265
    %v2543 = vunpack.c.l.b16 %v266
    %v2544 = vunpack.c.h.b16 %v266
    %v2545 = vunpack.c.l.b16 %v267
    %v2546 = vunpack.c.h.b16 %v267
    %v2547 = vunpack.c.l.b16 %v268
    %v2548 = vunpack.c.h.b16 %v268
    %v2549 = vunpack.c.l.b16 %v269
    %v2550 = vunpack.c.h.b16 %v269
    %v2551 = vunpack.c.l.b16 %v270
    %v2552 = vunpack.c.h.b16 %v270
    %v2553 = vunpack.c.l.b16 %v271
    %v2554 = vunpack.c.h.b16 %v271
    %v2555 = vunpack.c.l.b16 %v272
    %v2556 = vunpack.c.h.b16 %v272
    %v2557 = vunpack.c.l.b16 %v273
    %v2558 = vunpack.c.h.b16 %v273
    %v2559 = vunpack.c.l.b16 %v274
    %v2560 = vunpack.c.h.b16 %v274
    %v2561 = vunpack.c.l.b16 %v275
    %v2562 = vunpack.c.h.b16 %v275
    %v2563 = vunpack.c.l.b16 %v276
    %v2564 = vunpack.c.h.b16 %v276
    %v2565 = vunpack.c.l.b16 %v277
    %v2566 = vunpack.c.h.b16 %v277
    %v2567 = vunpack.c.l.b16 %v278
    %v2568 = vunpack.c.h.b16 %v278
    %v2569 = vunpack.c.l.b16 %v279
    %v2570 = vunpack.c.h.b16 %v279
    %v2571 = vunpack.c.l.b16 %v280
    %v2572 = vunpack.c.h.b16 %v280
    %v2573 = vunpack.c.l.b16 %v281
    %v2574 = vunpack.c.h.b16 %v281
    %v2575 = vunpack.c.l.b16 %v282
    %v2576 = vunpack.c.h.b16 %v282
    %v2577 = vunpack.c.l.b16 %v283
    %v2578 = vunpack.c.h.b16 %v283
    %v2579 = vunpack.c.l.b16 %v284
    %v2580 = vunpack.c.h.b16 %v284
    %v2581 = vunpack.c.l.b16 %v285
    %v2582 = vunpack.c.h.b16 %v285
    %v2583 = vunpack.c.l.b16 %v286
    %v2584 = vunpack.c.h.b16 %v286
    %v2585 = vunpack.c.l.b16 %v287
    %v2586 = vunpack.c.h.b16 %v287
    %v2587 = vunpack.c.l.b16 %v288
    %v2588 = vunpack.c.h.b16 %v288
    %v2589 = vunpack.c.l.b16 %v289
    %v2590 = vunpack.c.h.b16 %v289
    %v2591 = vunpack.c.l.b16 %v290
    %v2592 = vunpack.c.h.b16 %v290
    %v2593 = vunpack.c.l.b16 %v291
    %v2594 = vunpack.c.h.b16 %v291
    %v2595 = vunpack.c.l.b16 %v292
    %v2596 = vunpack.c.h.b16 %v292
    %v2597 = vunpack.c.l.b16 %v293
    %v2598 = vunpack.c.h.b16 %v293
    %v2599 = vunpack.c.l.b16 %v294
    %v2600 = vunpack.c.h.b16 %v294
    %v2601 = vunpack.c.l.b16 %v295
    %v2602 = vunpack.c.h.b16 %v295
    %v2603 = vunpack.c.l.b16 %v296
    %v2604 = vunpack.c.h.b16 %v296
    %v2605 = vunpack.c.l.b16 %v297
    %v2606 = vunpack.c.h.b16 %v297
    %v2607 = vunpack.c.l.b16 %v298
    %v2608 = vunpack.c.h.b16 %v298
    %v2609 = vunpack.c.l.b16 %v299
    %v2610 = vunpack.c.h.b16 %v299
    %v2611 = vunpack.c.l.b16 %v300
    %v2612 = vunpack.c.h.b16 %v300
    %v2613 = vunpack.c.l.b16 %v301
    %v2614 = vunpack.c.h.b16 %v301
    %v2615 = vunpack.c.l.b16 %v302
    %v2616 = vunpack.c.h.b16 %v302
    %v2617 = vunpack.c.l.b16 %v303
    %v2618 = vunpack.c.h.b16 %v303
    %v2619 = vunpack.c.l.b16 %v304
    %v2620 = vunpack.c.h.b16 %v304
    %v2621 = vunpack.c.l.b16 %v305
    %v2622 = vunpack.c.h.b16 %v305
    %v2623 = vunpack.c.l.b16 %v306
    %v2624 = vunpack.c.h.b16 %v306
    %v2625 = vunpack.c.l.b16 %v307
    %v2626 = vunpack.c.h.b16 %v307
    %v2627 = vunpack.c.l.b16 %v308
    %v2628 = vunpack.c.h.b16 %v308
    %v2629 = vunpack.c.l.b16 %v309
    %v2630 = vunpack.c.h.b16 %v309
    %v2631 = vunpack.c.l.b16 %v310
    %v2632 = vunpack.c.h.b16 %v310
    %v2633 = vunpack.c.l.b16 %v311
    %v2634 = vunpack.c.h.b16 %v311
    %v2635 = vunpack.c.l.b16 %v312
    %v2636 = vunpack.c.h.b16 %v312
    %v2637 = vunpack.c.l.b16 %v313
    %v2638 = vunpack.c.h.b16 %v313
    %v2639 = vunpack.c.l.b16 %v314
    %v2640 = vunpack.c.h.b16 %v314
    %v2641 = vunpack.c.l.b16 %v315
    %v2642 = vunpack.c.h.b16 %v315
    %v2643 = vunpack.c.l.b16 %v316
    %v2644 = vunpack.c.h.b16 %v316
    %v2645 = vunpack.c.l.b16 %v317
    %v2646 = vunpack.c.h.b16 %v317
    %v2647 = vunpack.c.l.b16 %v318
    %v2648 = vunpack.c.h.b16 %v318
    %v2649 = vunpack.c.l.b16 %v319
    %v2650 = vunpack.c.h.b16 %v319
    %v2651 = vunpack.c.l.b16 %v320
    %v2652 = vunpack.c.h.b16 %v320
    %v2653 = vunpack.c.l.b16 %v321
    %v2654 = vunpack.c.h.b16 %v321
    %v2655 = vunpack.c.l.b16 %v322
    %v2656 = vunpack.c.h.b16 %v322
    %v2657 = vunpack.c.l.b16 %v323
    %v2658 = vunpack.c.h.b16 %v323
    %v2659 = vunpack.c.l.b16 %v324
    %v2660 = vunpack.c.h.b16 %v324
    %v2661 = vunpack.c.l.b16 %v325
    %v2662 = vunpack.c.h.b16 %v325
    %v2663 = vunpack.c.l.b16 %v326
    %v2664 = vunpack.c.h.b16 %v326
    %v2665 = vunpack.c.l.b16 %v327
    %v2666 = vunpack.c.h.b16 %v327
    %v2667 = vunpack.c.l.b16 %v328
    %v2668 = vunpack.c.h.b16 %v328
    %v2669 = vunpack.c.l.b16 %v329
    %v2670 = vunpack.c.h.b16 %v329
    %v2671 = vunpack.c.l.b16 %v330
    %v2672 = vunpack.c.h.b16 %v330
    %v2673 = vunpack.c.l.b16 %v331
    %v2674 = vunpack.c.h.b16 %v331
    %v2675 = vunpack.c.l.b16 %v332
    %v2676 = vunpack.c.h.b16 %v332
    %v2677 = vunpack.c.l.b16 %v333
    %v2678 = vunpack.c.h.b16 %v333
    %v2679 = vunpack.c.l.b16 %v334
    %v2680 = vunpack.c.h.b16 %v334
    %v2681 = vunpack.c.l.b16 %v335
    %v2682 = vunpack.c.h.b16 %v335
    %v2683 = vunpack.c.l.b16 %v336
    %v2684 = vunpack.c.h.b16 %v336
    %v2685 = vunpack.c.l.b16 %v337
    %v2686 = vunpack.c.h.b16 %v337
    %v2687 = vunpack.c.l.b16 %v338
    %v2688 = vunpack.c.h.b16 %v338
    %v2689 = vunpack.c.l.b16 %v339
    %v2690 = vunpack.c.h.b16 %v339
    %v2691 = vunpack.c.l.b16 %v340
    %v2692 = vunpack.c.h.b16 %v340
    %v2693 = vunpack.c.l.b16 %v341
    %v2694 = vunpack.c.h.b16 %v341
    %v2695 = vunpack.c.l.b16 %v342
    %v2696 = vunpack.c.h.b16 %v342
    %v2697 = vunpack.c.l.b16 %v343
    %v2698 = vunpack.c.h.b16 %v343
    %v2699 = vunpack.c.l.b16 %v344
    %v2700 = vunpack.c.h.b16 %v344
    %v2701 = vunpack.c.l.b16 %v345
    %v2702 = vunpack.c.h.b16 %v345
    %v2703 = vunpack.c.l.b16 %v346
    %v2704 = vunpack.c.h.b16 %v346
    %v2705 = vunpack.c.l.b16 %v347
    %v2706 = vunpack.c.h.b16 %v347
    %v2707 = vunpack.c.l.b16 %v348
    %v2708 = vunpack.c.h.b16 %v348
    %v2709 = vunpack.c.l.b16 %v349
    %v2710 = vunpack.c.h.b16 %v349
    %v2711 = vunpack.c.l.b16 %v350
    %v2712 = vunpack.c.h.b16 %v350
    %v2713 = vunpack.c.l.b16 %v351
    %v2714 = vunpack.c.h.b16 %v351
    %v2715 = vunpack.c.l.b16 %v352
    %v2716 = vunpack.c.h.b16 %v352
    %v2717 = vunpack.c.l.b16 %v353
    %v2718 = vunpack.c.h.b16 %v353
    %v2719 = vunpack.c.l.b16 %v354
    %v2720 = vunpack.c.h.b16 %v354
    %v2721 = vunpack.c.l.b16 %v355
    %v2722 = vunpack.c.h.b16 %v355
    %v2723 = vunpack.c.l.b16 %v356
    %v2724 = vunpack.c.h.b16 %v356
    %v2725 = vunpack.c.l.b16 %v357
    %v2726 = vunpack.c.h.b16 %v357
    %v2727 = vunpack.c.l.b16 %v358
    %v2728 = vunpack.c.h.b16 %v358
    %v2729 = vunpack.c.l.b16 %v359
    %v2730 = vunpack.c.h.b16 %v359
    %v2731 = vunpack.c.l.b16 %v360
    %v2732 = vunpack.c.h.b16 %v360
    %v2733 = vunpack.c.l.b16 %v361
    %v2734 = vunpack.c.h.b16 %v361
    %v2735 = vunpack.c.l.b16 %v362
    %v2736 = vunpack.c.h.b16 %v362
    %v2737 = vunpack.c.l.b16 %v363
    %v2738 = vunpack.c.h.b16 %v363
    %v2739 = vunpack.c.l.b16 %v364
    %v2740 = vunpack.c.h.b16 %v364
    %v2741 = vunpack.c.l.b16 %v365
    %v2742 = vunpack.c.h.b16 %v365
    %v2743 = vunpack.c.l.b16 %v366
    %v2744 = vunpack.c.h.b16 %v366
    %v2745 = vunpack.c.l.b16 %v367
    %v2746 = vunpack.c.h.b16 %v367
    %v2747 = vunpack.c.l.b16 %v368
    %v2748 = vunpack.c.h.b16 %v368
    %v2749 = vunpack.c.l.b16 %v369
    %v2750 = vunpack.c.h.b16 %v369
    %v2751 = vunpack.c.l.b16 %v370
    %v2752 = vunpack.c.h.b16 %v370
    %v2753 = vunpack.c.l.b16 %v371
    %v2754 = vunpack.c.h.b16 %v371
    %v2755 = vunpack.c.l.b16 %v372
    %v2756 = vunpack.c.h.b16 %v372
    %v2757 = vunpack.c.l.b16 %v373
    %v2758 = vunpack.c.h.b16 %v373
    %v2759 = vunpack.c.l.b16 %v374
    %v2760 = vunpack.c.h.b16 %v374
    %v2761 = vunpack.c.l.b16 %v375
    %v2762 = vunpack.c.h.b16 %v375
    %v2763 = vunpack.c.l.b16 %v376
    %v2764 = vunpack.c.h.b16 %v376
    %v2765 = vunpack.c.l.b16 %v377
    %v2766 = vunpack.c.h.b16 %v377
    %v2767 = vunpack.c.l.b16 %v378
    %v2768 = vunpack.c.h.b16 %v378
    %v2769 = vunpack.c.l.b16 %v379
    %v2770 = vunpack.c.h.b16 %v379
    %v2771 = vunpack.c.l.b16 %v380
    %v2772 = vunpack.c.h.b16 %v380
    %v2773 = vunpack.c.l.b16 %v381
    %v2774 = vunpack.c.h.b16 %v381
    %v2775 = vunpack.c.l.b16 %v382
    %v2776 = vunpack.c.h.b16 %v382
    %v2777 = vunpack.c.l.b16 %v383
    %v2778 = vunpack.c.h.b16 %v383
    %v2779 = vunpack.c.l.b16 %v384
    %v2780 = vunpack.c.h.b16 %v384
    %v2781 = vunpack.c.l.b16 %v385
    %v2782 = vunpack.c.h.b16 %v385
    %v2783 = vunpack.c.l.b16 %v386
    %v2784 = vunpack.c.h.b16 %v386
    %v2785 = vunpack.c.l.b16 %v387
    %v2786 = vunpack.c.h.b16 %v387
    %v2787 = vunpack.c.l.b16 %v388
    %v2788 = vunpack.c.h.b16 %v388
    %v2789 = vunpack.c.l.b16 %v389
    %v2790 = vunpack.c.h.b16 %v389
    %v2791 = vunpack.c.l.b16 %v390
    %v2792 = vunpack.c.h.b16 %v390
    %v2793 = vunpack.c.l.b16 %v391
    %v2794 = vunpack.c.h.b16 %v391
    %v2795 = vunpack.c.l.b16 %v392
    %v2796 = vunpack.c.h.b16 %v392
    %v2797 = vunpack.c.l.b16 %v393
    %v2798 = vunpack.c.h.b16 %v393
    %v2799 = vunpack.c.l.b16 %v394
    %v2800 = vunpack.c.h.b16 %v394
    %v2801 = vunpack.c.l.b16 %v395
    %v2802 = vunpack.c.h.b16 %v395
    %v2803 = vunpack.c.l.b16 %v396
    %v2804 = vunpack.c.h.b16 %v396
    %v2805 = vunpack.c.l.b16 %v397
    %v2806 = vunpack.c.h.b16 %v397
    %v2807 = vunpack.c.l.b16 %v398
    %v2808 = vunpack.c.h.b16 %v398
    %v2809 = vunpack.c.l.b16 %v399
    %v2810 = vunpack.c.h.b16 %v399
    %v2811 = vunpack.c.l.b16 %v400
    %v2812 = vunpack.c.h.b16 %v400
    %v2813 = vunpack.c.l.b16 %v401
    %v2814 = vunpack.c.h.b16 %v401
    %v2815 = vunpack.c.l.b16 %v402
    %v2816 = vunpack.c.h.b16 %v402
    %v2817 = vunpack.c.l.b16 %v403
    %v2818 = vunpack.c.h.b16 %v403
    %v2819 = vunpack.c.l.b16 %v404
    %v2820 = vunpack.c.h.b16 %v404
    %v2821 = vunpack.c.l.b16 %v405
    %v2822 = vunpack.c.h.b16 %v405
    %v2823 = vunpack.c.l.b16 %v406
    %v2824 = vunpack.c.h.b16 %v406
    %v2825 = vunpack.c.l.b16 %v407
    %v2826 = vunpack.c.h.b16 %v407
    %v2827 = vunpack.c.l.b16 %v408
    %v2828 = vunpack.c.h.b16 %v408
    %v2829 = vunpack.c.l.b16 %v409
    %v2830 = vunpack.c.h.b16 %v409
    %v2831 = vunpack.c.l.b16 %v410
    %v2832 = vunpack.c.h.b16 %v410
    %v2833 = vunpack.c.l.b16 %v411
    %v2834 = vunpack.c.h.b16 %v411
    %v2835 = vunpack.c.l.b16 %v412
    %v2836 = vunpack.c.h.b16 %v412
    %v2837 = vunpack.c.l.b16 %v413
    %v2838 = vunpack.c.h.b16 %v413
    %v2839 = vunpack.c.l.b16 %v414
    %v2840 = vunpack.c.h.b16 %v414
    %v2841 = vunpack.c.l.b16 %v415
    %v2842 = vunpack.c.h.b16 %v415
    %v2843 = vunpack.c.l.b16 %v416
    %v2844 = vunpack.c.h.b16 %v416
    %v2845 = vunpack.c.l.b16 %v417
    %v2846 = vunpack.c.h.b16 %v417
    %v2847 = vunpack.c.l.b16 %v418
    %v2848 = vunpack.c.h.b16 %v418
    %v2849 = vunpack.c.l.b16 %v419
    %v2850 = vunpack.c.h.b16 %v419
    %v2851 = vunpack.c.l.b16 %v420
    %v2852 = vunpack.c.h.b16 %v420
    %v2853 = vunpack.c.l.b16 %v421
    %v2854 = vunpack.c.h.b16 %v421
    %v2855 = vunpack.c.l.b16 %v422
    %v2856 = vunpack.c.h.b16 %v422
    %v2857 = vunpack.c.l.b16 %v423
    %v2858 = vunpack.c.h.b16 %v423
    %v2859 = vunpack.c.l.b16 %v424
    %v2860 = vunpack.c.h.b16 %v424
    %v2861 = vunpack.c.l.b16 %v425
    %v2862 = vunpack.c.h.b16 %v425
    %v2863 = vunpack.c.l.b16 %v426
    %v2864 = vunpack.c.h.b16 %v426
    %v2865 = vunpack.c.l.b16 %v427
    %v2866 = vunpack.c.h.b16 %v427
    %v2867 = vunpack.c.l.b16 %v428
    %v2868 = vunpack.c.h.b16 %v428
    %v2869 = vunpack.c.l.b16 %v429
    %v2870 = vunpack.c.h.b16 %v429
    %v2871 = vunpack.c.l.b16 %v430
    %v2872 = vunpack.c.h.b16 %v430
    %v2873 = vunpack.c.l.b16 %v431
    %v2874 = vunpack.c.h.b16 %v431
    %v2875 = vunpack.c.l.b16 %v432
    %v2876 = vunpack.c.h.b16 %v432
    %v2877 = vunpack.c.l.b16 %v433
    %v2878 = vunpack.c.h.b16 %v433
    %v2879 = vunpack.c.l.b16 %v434
    %v2880 = vunpack.c.h.b16 %v434
    %v2881 = vunpack.c.l.b16 %v435
    %v2882 = vunpack.c.h.b16 %v435
    %v2883 = vunpack.c.l.b16 %v436
    %v2884 = vunpack.c.h.b16 %v436
    %v2885 = vunpack.c.l.b16 %v437
    %v2886 = vunpack.c.h.b16 %v437
    %v2887 = vunpack.c.l.b16 %v438
    %v2888 = vunpack.c.h.b16 %v438
    %v2889 = vunpack.c.l.b16 %v439
    %v2890 = vunpack.c.h.b16 %v439
    %v2891 = vunpack.c.l.b16 %v440
    %v2892 = vunpack.c.h.b16 %v440
    %v2893 = vunpack.c.l.b16 %v441
    %v2894 = vunpack.c.h.b16 %v441
    %v2895 = vunpack.c.l.b16 %v442
    %v2896 = vunpack.c.h.b16 %v442
    %v2897 = vunpack.c.l.b16 %v443
    %v2898 = vunpack.c.h.b16 %v443
    %v2899 = vunpack.c.l.b16 %v444
    %v2900 = vunpack.c.h.b16 %v444
    %v2901 = vunpack.c.l.b16 %v445
    %v2902 = vunpack.c.h.b16 %v445
    %v2903 = vunpack.c.l.b16 %v446
    %v2904 = vunpack.c.h.b16 %v446
    %v2905 = vunpack.c.l.b16 %v447
    %v2906 = vunpack.c.h.b16 %v447
    %v2907 = vunpack.c.l.b16 %v448
    %v2908 = vunpack.c.h.b16 %v448
    %v2909 = vunpack.c.l.b16 %v449
    %v2910 = vunpack.c.h.b16 %v449
    %v2911 = vunpack.c.l.b16 %v450
    %v2912 = vunpack.c.h.b16 %v450
    %v2913 = vunpack.c.l.b16 %v451
    %v2914 = vunpack.c.h.b16 %v451
    %v2915 = vunpack.c.l.b16 %v452
    %v2916 = vunpack.c.h.b16 %v452
    %v2917 = vunpack.c.l.b16 %v453
    %v2918 = vunpack.c.h.b16 %v453
    %v2919 = vunpack.c.l.b16 %v454
    %v2920 = vunpack.c.h.b16 %v454
    %v2921 = vunpack.c.l.b16 %v455
    %v2922 = vunpack.c.h.b16 %v455
    %v2923 = vunpack.c.l.b16 %v456
    %v2924 = vunpack.c.h.b16 %v456
    %v2925 = vunpack.c.l.b16 %v457
    %v2926 = vunpack.c.h.b16 %v457
    %v2927 = vunpack.c.l.b16 %v458
    %v2928 = vunpack.c.h.b16 %v458
    %v2929 = vunpack.c.l.b16 %v459
    %v2930 = vunpack.c.h.b16 %v459
    %v2931 = vunpack.c.l.b16 %v460
    %v2932 = vunpack.c.h.b16 %v460
    %v2933 = vunpack.c.l.b16 %v461
    %v2934 = vunpack.c.h.b16 %v461
    %v2935 = vunpack.c.l.b16 %v462
    %v2936 = vunpack.c.h.b16 %v462
    %v2937 = vunpack.c.l.b16 %v463
    %v2938 = vunpack.c.h.b16 %v463
    %v2939 = vunpack.c.l.b16 %v464
    %v2940 = vunpack.c.h.b16 %v464
    %v2941 = vunpack.c.l.b16 %v465
    %v2942 = vunpack.c.h.b16 %v465
    %v2943 = vunpack.c.l.b16 %v466
    %v2944 = vunpack.c.h.b16 %v466
    %v2945 = vunpack.c.l.b16 %v467
    %v2946 = vunpack.c.h.b16 %v467
    %v2947 = vunpack.c.l.b16 %v468
    %v2948 = vunpack.c.h.b16 %v468
    %v2949 = vunpack.c.l.b16 %v469
    %v2950 = vunpack.c.h.b16 %v469
    %v2951 = vunpack.c.l.b16 %v470
    %v2952 = vunpack.c.h.b16 %v470
    %v2953 = vunpack.c.l.b16 %v471
    %v2954 = vunpack.c.h.b16 %v471
    %v2955 = vunpack.c.l.b16 %v472
    %v2956 = vunpack.c.h.b16 %v472
    %v2957 = vunpack.c.l.b16 %v473
    %v2958 = vunpack.c.h.b16 %v473
    %v2959 = vunpack.c.l.b16 %v474
    %v2960 = vunpack.c.h.b16 %v474
    %v2961 = vunpack.c.l.b16 %v475
    %v2962 = vunpack.c.h.b16 %v475
    %v2963 = vunpack.c.l.b16 %v476
    %v2964 = vunpack.c.h.b16 %v476
    %v2965 = vunpack.c.l.b16 %v477
    %v2966 = vunpack.c.h.b16 %v477
    %v2967 = vunpack.c.l.b16 %v478
    %v2968 = vunpack.c.h.b16 %v478
    %v2969 = vunpack.c.l.b16 %v479
    %v2970 = vunpack.c.h.b16 %v479
    %v2971 = vunpack.c.l.b16 %v480
    %v2972 = vunpack.c.h.b16 %v480
    %v2973 = vunpack.c.l.b16 %v481
    %v2974 = vunpack.c.h.b16 %v481
    %v2975 = vunpack.c.l.b16 %v482
    %v2976 = vunpack.c.h.b16 %v482
    %v2977 = vunpack.c.l.b16 %v483
    %v2978 = vunpack.c.h.b16 %v483
    %v2979 = vunpack.c.l.b16 %v484
    %v2980 = vunpack.c.h.b16 %v484
    %v2981 = vunpack.c.l.b16 %v485
    %v2982 = vunpack.c.h.b16 %v485
    %v2983 = vunpack.c.l.b16 %v486
    %v2984 = vunpack.c.h.b16 %v486
    %v2985 = vunpack.c.l.b16 %v487
    %v2986 = vunpack.c.h.b16 %v487
    %v2987 = vunpack.c.l.b16 %v488
    %v2988 = vunpack.c.h.b16 %v488
    %v2989 = vunpack.c.l.b16 %v489
    %v2990 = vunpack.c.h.b16 %v489
    %v2991 = vunpack.c.l.b16 %v490
    %v2992 = vunpack.c.h.b16 %v490
    %v2993 = vunpack.c.l.b16 %v491
    %v2994 = vunpack.c.h.b16 %v491
    %v2995 = vunpack.c.l.b16 %v492
    %v2996 = vunpack.c.h.b16 %v492
    %v2997 = vunpack.c.l.b16 %v493
    %v2998 = vunpack.c.h.b16 %v493
    %v2999 = vunpack.c.l.b16 %v494
    %v3000 = vunpack.c.h.b16 %v494
    %v3001 = vunpack.c.l.b16 %v495
    %v3002 = vunpack.c.h.b16 %v495
    %v3003 = vunpack.c.l.b16 %v496
    %v3004 = vunpack.c.h.b16 %v496
    %v3005 = vunpack.c.l.b16 %v497
    %v3006 = vunpack.c.h.b16 %v497
    %v3007 = vunpack.c.l.b16 %v498
    %v3008 = vunpack.c.h.b16 %v498
    %v3009 = vunpack.c.l.b16 %v499
    %v3010 = vunpack.c.h.b16 %v499
    %v3011 = vunpack.c.l.b16 %v500
    %v3012 = vunpack.c.h.b16 %v500
    %v3013 = vunpack.c.l.b16 %v501
    %v3014 = vunpack.c.h.b16 %v501
    %v3015 = vunpack.c.l.b16 %v502
    %v3016 = vunpack.c.h.b16 %v502
    %v3017 = vunpack.c.l.b16 %v503
    %v3018 = vunpack.c.h.b16 %v503
    %v3019 = vunpack.c.l.b16 %v504
    %v3020 = vunpack.c.h.b16 %v504
    %v3021 = vunpack.c.l.b16 %v505
    %v3022 = vunpack.c.h.b16 %v505
    %v3023 = vunpack.c.l.b16 %v506
    %v3024 = vunpack.c.h.b16 %v506
    %v3025 = vunpack.c.l.b16 %v507
    %v3026 = vunpack.c.h.b16 %v507
    %v3027 = vunpack.c.l.b16 %v508
    %v3028 = vunpack.c.h.b16 %v508
    %v3029 = vunpack.c.l.b16 %v509
    %v3030 = vunpack.c.h.b16 %v509
    %v3031 = vunpack.c.l.b16 %v510
    %v3032 = vunpack.c.h.b16 %v510
    %v3033 = vunpack.c.l.b16 %v511
    %v3034 = vunpack.c.h.b16 %v511
    %v3035 = vunpack.c.l.b16 %v512
    %v3036 = vunpack.c.h.b16 %v512
    %v3037 = vunpack.c.l.b16 %v513
    %v3038 = vunpack.c.h.b16 %v513
    %v3039 = vunpack.c.l.b16 %v514
    %v3040 = vunpack.c.h.b16 %v514
    %v3041 = vunpack.c.l.b16 %v515
    %v3042 = vunpack.c.h.b16 %v515
    %v3043 = vunpack.c.l.b16 %v516
    %v3044 = vunpack.c.h.b16 %v516
    %v3045 = vunpack.c.l.b16 %v517
    %v3046 = vunpack.c.h.b16 %v517
    %v3047 = vunpack.c.l.b16 %v518
    %v3048 = vunpack.c.h.b16 %v518
    %v3049 = vunpack.c.l.b16 %v519
    %v3050 = vunpack.c.h.b16 %v519
    %v3051 = vunpack.c.l.b16 %v520
    %v3052 = vunpack.c.h.b16 %v520
    %v3053 = vunpack.c.l.b16 %v521
    %v3054 = vunpack.c.h.b16 %v521
    %v3055 = vunpack.c.l.b16 %v522
    %v3056 = vunpack.c.h.b16 %v522
    %v3057 = vunpack.c.l.b16 %v523
    %v3058 = vunpack.c.h.b16 %v523
    %v3059 = vunpack.c.l.b16 %v524
    %v3060 = vunpack.c.h.b16 %v524
    %v3061 = vunpack.c.l.b16 %v525
    %v3062 = vunpack.c.h.b16 %v525
    %v3063 = vunpack.c.l.b16 %v526
    %v3064 = vunpack.c.h.b16 %v526
    %v3065 = vunpack.c.l.b16 %v527
    %v3066 = vunpack.c.h.b16 %v527
    %v3067 = vunpack.c.l.b16 %v528
    %v3068 = vunpack.c.h.b16 %v528
    %v3069 = vunpack.c.l.b16 %v529
    %v3070 = vunpack.c.h.b16 %v529
    %v3071 = vunpack.c.l.b16 %v530
    %v3072 = vunpack.c.h.b16 %v530
    %v3073 = vunpack.c.l.b16 %v531
    %v3074 = vunpack.c.h.b16 %v531
    %v3075 = vunpack.c.l.b16 %v532
    %v3076 = vunpack.c.h.b16 %v532
    %v3077 = vunpack.c.l.b16 %v533
    %v3078 = vunpack.c.h.b16 %v533
    %v3079 = vunpack.c.l.b16 %v534
    %v3080 = vunpack.c.h.b16 %v534
    %v3081 = vunpack.c.l.b16 %v535
    %v3082 = vunpack.c.h.b16 %v535
    %v3083 = vunpack.c.l.b16 %v536
    %v3084 = vunpack.c.h.b16 %v536
    %v3085 = vunpack.c.l.b16 %v537
    %v3086 = vunpack.c.h.b16 %v537
    %v3087 = vunpack.c.l.b16 %v538
    %v3088 = vunpack.c.h.b16 %v538
    %v3089 = vunpack.c.l.b16 %v539
    %v3090 = vunpack.c.h.b16 %v539
    %v3091 = vunpack.c.l.b16 %v540
    %v3092 = vunpack.c.h.b16 %v540
    %v3093 = vunpack.c.l.b16 %v541
    %v3094 = vunpack.c.h.b16 %v541
    %v3095 = vunpack.c.l.b16 %v542
    %v3096 = vunpack.c.h.b16 %v542
    %v3097 = vunpack.c.l.b16 %v543
    %v3098 = vunpack.c.h.b16 %v543
    %v3099 = vunpack.c.l.b16 %v544
    %v3100 = vunpack.c.h.b16 %v544
    %v3101 = vunpack.c.l.b16 %v545
    %v3102 = vunpack.c.h.b16 %v545
    %v3103 = vunpack.c.l.b16 %v546
    %v3104 = vunpack.c.h.b16 %v546
    %v3105 = vunpack.c.l.b16 %v547
    %v3106 = vunpack.c.h.b16 %v547
    %v3107 = vunpack.c.l.b16 %v548
    %v3108 = vunpack.c.h.b16 %v548
    %v3109 = vunpack.c.l.b16 %v549
    %v3110 = vunpack.c.h.b16 %v549
    %v3111 = vunpack.c.l.b16 %v550
    %v3112 = vunpack.c.h.b16 %v550
    %v3113 = vunpack.c.l.b16 %v551
    %v3114 = vunpack.c.h.b16 %v551
    %v3115 = vunpack.c.l.b16 %v552
    %v3116 = vunpack.c.h.b16 %v552
    %v3117 = vunpack.c.l.b16 %v553
    %v3118 = vunpack.c.h.b16 %v553
    %v3119 = vunpack.c.l.b16 %v554
    %v3120 = vunpack.c.h.b16 %v554
    %v3121 = vunpack.c.l.b16 %v555
    %v3122 = vunpack.c.h.b16 %v555
    %v3123 = vunpack.c.l.b16 %v556
    %v3124 = vunpack.c.h.b16 %v556
    %v3125 = vunpack.c.l.b16 %v557
    %v3126 = vunpack.c.h.b16 %v557
    %v3127 = vunpack.c.l.b16 %v558
    %v3128 = vunpack.c.h.b16 %v558
    %v3129 = vunpack.c.l.b16 %v559
    %v3130 = vunpack.c.h.b16 %v559
    %v3131 = vunpack.c.l.b16 %v560
    %v3132 = vunpack.c.h.b16 %v560
    %v3133 = vunpack.c.l.b16 %v561
    %v3134 = vunpack.c.h.b16 %v561
    %v3135 = vunpack.c.l.b16 %v562
    %v3136 = vunpack.c.h.b16 %v562
    %v3137 = vunpack.c.l.b16 %v563
    %v3138 = vunpack.c.h.b16 %v563
    %v3139 = vunpack.c.l.b16 %v564
    %v3140 = vunpack.c.h.b16 %v564
    %v3141 = vunpack.c.l.b16 %v565
    %v3142 = vunpack.c.h.b16 %v565
    %v3143 = vunpack.c.l.b16 %v566
    %v3144 = vunpack.c.h.b16 %v566
    %v3145 = vunpack.c.l.b16 %v567
    %v3146 = vunpack.c.h.b16 %v567
    %v3147 = vunpack.c.l.b16 %v568
    %v3148 = vunpack.c.h.b16 %v568
    %v3149 = vunpack.c.l.b16 %v569
    %v3150 = vunpack.c.h.b16 %v569
    %v3151 = vunpack.c.l.b16 %v570
    %v3152 = vunpack.c.h.b16 %v570
    %v3153 = vunpack.c.l.b16 %v571
    %v3154 = vunpack.c.h.b16 %v571
    %v3155 = vunpack.c.l.b16 %v572
    %v3156 = vunpack.c.h.b16 %v572
    %v3157 = vunpack.c.l.b16 %v573
    %v3158 = vunpack.c.h.b16 %v573
    %v3159 = vunpack.c.l.b16 %v574
    %v3160 = vunpack.c.h.b16 %v574
    %v3161 = vunpack.c.l.b16 %v575
    %v3162 = vunpack.c.h.b16 %v575
    %v3163 = vunpack.c.l.b16 %v576
    %v3164 = vunpack.c.h.b16 %v576
    %v3165 = vunpack.c.l.b16 %v577
    %v3166 = vunpack.c.h.b16 %v577
    %v3167 = vunpack.c.l.b16 %v578
    %v3168 = vunpack.c.h.b16 %v578
    %v3169 = vunpack.c.l.b16 %v579
    %v3170 = vunpack.c.h.b16 %v579
    %v3171 = vunpack.c.l.b16 %v580
    %v3172 = vunpack.c.h.b16 %v580
    %v3173 = vunpack.c.l.b16 %v581
    %v3174 = vunpack.c.h.b16 %v581
    %v3175 = vunpack.c.l.b16 %v582
    %v3176 = vunpack.c.h.b16 %v582
    %v3177 = vunpack.c.l.b16 %v583
    %v3178 = vunpack.c.h.b16 %v583
    %v3179 = vunpack.c.l.b16 %v584
    %v3180 = vunpack.c.h.b16 %v584
    %v3181 = vunpack.c.l.b16 %v585
    %v3182 = vunpack.c.h.b16 %v585
    %v3183 = vunpack.c.l.b16 %v586
    %v3184 = vunpack.c.h.b16 %v586
    %v3185 = vunpack.c.l.b16 %v587
    %v3186 = vunpack.c.h.b16 %v587
    %v3187 = vunpack.c.l.b16 %v588
    %v3188 = vunpack.c.h.b16 %v588
    %v3189 = vunpack.c.l.b16 %v589
    %v3190 = vunpack.c.h.b16 %v589
    %v3191 = vunpack.c.l.b16 %v590
    %v3192 = vunpack.c.h.b16 %v590
    %v3193 = vunpack.c.l.b16 %v591
    %v3194 = vunpack.c.h.b16 %v591
    %v3195 = vunpack.c.l.b16 %v592
    %v3196 = vunpack.c.h.b16 %v592
    %v3197 = vunpack.c.l.b16 %v593
    %v3198 = vunpack.c.h.b16 %v593
    %v3199 = vunpack.c.l.b16 %v594
    %v3200 = vunpack.c.h.b16 %v594
    %v3201 = vunpack.c.l.b16 %v595
    %v3202 = vunpack.c.h.b16 %v595
    %v3203 = vunpack.c.l.b16 %v596
    %v3204 = vunpack.c.h.b16 %v596
    %v3205 = vunpack.c.l.b16 %v597
    %v3206 = vunpack.c.h.b16 %v597
    %v3207 = vunpack.c.l.b16 %v598
    %v3208 = vunpack.c.h.b16 %v598
    %v3209 = vunpack.c.l.b16 %v599
    %v3210 = vunpack.c.h.b16 %v599
    %v3211 = vunpack.c.l.b16 %v600
    %v3212 = vunpack.c.h.b16 %v600
    %v3213 = vunpack.c.l.b16 %v601
    %v3214 = vunpack.c.h.b16 %v601
    %v3215 = vunpack.c.l.b16 %v602
    %v3216 = vunpack.c.h.b16 %v602
    %v3217 = vunpack.c.l.b16 %v603
    %v3218 = vunpack.c.h.b16 %v603
    %v3219 = vunpack.c.l.b16 %v604
    %v3220 = vunpack.c.h.b16 %v604
    %v3221 = vunpack.c.l.b16 %v605
    %v3222 = vunpack.c.h.b16 %v605
    %v3223 = vunpack.c.l.b16 %v606
    %v3224 = vunpack.c.h.b16 %v606
    %v3225 = vunpack.c.l.b16 %v607
    %v3226 = vunpack.c.h.b16 %v607
    %v3227 = vunpack.c.l.b16 %v608
    %v3228 = vunpack.c.h.b16 %v608
    %v3229 = vunpack.c.l.b16 %v609
    %v3230 = vunpack.c.h.b16 %v609
    %v3231 = vunpack.c.l.b16 %v610
    %v3232 = vunpack.c.h.b16 %v610
    %v3233 = vunpack.c.l.b16 %v611
    %v3234 = vunpack.c.h.b16 %v611
    %v3235 = vunpack.c.l.b16 %v612
    %v3236 = vunpack.c.h.b16 %v612
    %v3237 = vunpack.c.l.b16 %v613
    %v3238 = vunpack.c.h.b16 %v613
    %v3239 = vunpack.c.l.b16 %v614
    %v3240 = vunpack.c.h.b16 %v614
    %v3241 = vunpack.c.l.b16 %v615
    %v3242 = vunpack.c.h.b16 %v615
    %v3243 = vunpack.c.l.b16 %v616
    %v3244 = vunpack.c.h.b16 %v616
    %v3245 = vunpack.c.l.b16 %v617
    %v3246 = vunpack.c.h.b16 %v617
    %v3247 = vunpack.c.l.b16 %v618
    %v3248 = vunpack.c.h.b16 %v618
    %v3249 = vunpack.c.l.b16 %v619
    %v3250 = vunpack.c.h.b16 %v619
    %v3251 = vunpack.c.l.b16 %v620
    %v3252 = vunpack.c.h.b16 %v620
    %v3253 = vunpack.c.l.b16 %v621
    %v3254 = vunpack.c.h.b16 %v621
    %v3255 = vunpack.c.l.b16 %v622
    %v3256 = vunpack.c.h.b16 %v622
    %v3257 = vunpack.c.l.b16 %v623
    %v3258 = vunpack.c.h.b16 %v623
    %v3259 = vunpack.c.l.b16 %v624
    %v3260 = vunpack.c.h.b16 %v624
    %v3261 = vunpack.c.l.b16 %v625
    %v3262 = vunpack.c.h.b16 %v625
    %v3263 = vunpack.c.l.b16 %v626
    %v3264 = vunpack.c.h.b16 %v626
    %v3265 = vunpack.c.l.b16 %v627
    %v3266 = vunpack.c.h.b16 %v627
    %v3267 = vunpack.c.l.b16 %v628
    %v3268 = vunpack.c.h.b16 %v628
    %v3269 = vunpack.c.l.b16 %v629
    %v3270 = vunpack.c.h.b16 %v629
    %v3271 = vunpack.c.l.b16 %v630
    %v3272 = vunpack.c.h.b16 %v630
    %v3273 = vunpack.c.l.b16 %v631
    %v3274 = vunpack.c.h.b16 %v631
    %v3275 = vunpack.c.l.b16 %v632
    %v3276 = vunpack.c.h.b16 %v632
    %v3277 = vunpack.c.l.b16 %v633
    %v3278 = vunpack.c.h.b16 %v633
    %v3279 = vunpack.c.l.b16 %v634
    %v3280 = vunpack.c.h.b16 %v634
    %v3281 = vunpack.c.l.b16 %v635
    %v3282 = vunpack.c.h.b16 %v635
    %v3283 = vunpack.c.l.b16 %v636
    %v3284 = vunpack.c.h.b16 %v636
    %v3285 = vunpack.c.l.b16 %v637
    %v3286 = vunpack.c.h.b16 %v637
    %v3287 = vunpack.c.l.b16 %v638
    %v3288 = vunpack.c.h.b16 %v638
    %v3289 = vunpack.c.l.b16 %v639
    %v3290 = vunpack.c.h.b16 %v639
    %v3291 = vunpack.c.l.b16 %v640
    %v3292 = vunpack.c.h.b16 %v640
    %v3293 = vunpack.c.l.b16 %v641
    %v3294 = vunpack.c.h.b16 %v641
    %v3295 = vunpack.c.l.b16 %v642
    %v3296 = vunpack.c.h.b16 %v642
    %v3297 = vunpack.c.l.b16 %v643
    %v3298 = vunpack.c.h.b16 %v643
    %v3299 = vunpack.c.l.b16 %v644
    %v3300 = vunpack.c.h.b16 %v644
    %v3301 = vunpack.c.l.b16 %v645
    %v3302 = vunpack.c.h.b16 %v645
    %v3303 = vunpack.c.l.b16 %v646
    %v3304 = vunpack.c.h.b16 %v646
    %v3305 = vunpack.c.l.b16 %v647
    %v3306 = vunpack.c.h.b16 %v647
    %v3307 = vunpack.c.l.b16 %v648
    %v3308 = vunpack.c.h.b16 %v648
    %v3309 = vunpack.c.l.b16 %v649
    %v3310 = vunpack.c.h.b16 %v649
    %v3311 = vunpack.c.l.b16 %v650
    %v3312 = vunpack.c.h.b16 %v650
    %v3313 = vunpack.c.l.b16 %v651
    %v3314 = vunpack.c.h.b16 %v651
    %v3315 = vunpack.c.l.b16 %v652
    %v3316 = vunpack.c.h.b16 %v652
    %v3317 = vunpack.c.l.b16 %v653
    %v3318 = vunpack.c.h.b16 %v653
    %v3319 = vunpack.c.l.b16 %v654
    %v3320 = vunpack.c.h.b16 %v654
    %v3321 = vunpack.c.l.b16 %v655
    %v3322 = vunpack.c.h.b16 %v655
    %v3323 = vunpack.c.l.b16 %v656
    %v3324 = vunpack.c.h.b16 %v656
    %v3325 = vunpack.c.l.b16 %v657
    %v3326 = vunpack.c.h.b16 %v657
    %v3327 = vunpack.c.l.b16 %v658
    %v3328 = vunpack.c.h.b16 %v658
    %v3329 = vunpack.c.l.b16 %v659
    %v3330 = vunpack.c.h.b16 %v659
    %v3331 = vunpack.c.l.b16 %v660
    %v3332 = vunpack.c.h.b16 %v660
    %v3333 = vunpack.c.l.b16 %v661
    %v3334 = vunpack.c.h.b16 %v661
    %v3335 = vunpack.c.l.b16 %v662
    %v3336 = vunpack.c.h.b16 %v662
    %v3337 = vunpack.c.l.b16 %v663
    %v3338 = vunpack.c.h.b16 %v663
    %v3339 = vunpack.c.l.b16 %v664
    %v3340 = vunpack.c.h.b16 %v664
    %v3341 = vunpack.c.l.b16 %v665
    %v3342 = vunpack.c.h.b16 %v665
    %v3343 = vunpack.c.l.b16 %v666
    %v3344 = vunpack.c.h.b16 %v666
    %v3345 = vunpack.c.l.b16 %v667
    %v3346 = vunpack.c.h.b16 %v667
    %v3347 = vunpack.c.l.b16 %v668
    %v3348 = vunpack.c.h.b16 %v668
    %v3349 = vunpack.c.l.b16 %v669
    %v3350 = vunpack.c.h.b16 %v669
    %v3351 = vunpack.c.l.b16 %v670
    %v3352 = vunpack.c.h.b16 %v670
    %v3353 = vunpack.c.l.b16 %v671
    %v3354 = vunpack.c.h.b16 %v671
    %v3355 = vunpack.c.l.b16 %v672
    %v3356 = vunpack.c.h.b16 %v672
    %v3357 = vunpack.c.l.b16 %v673
    %v3358 = vunpack.c.h.b16 %v673
    %v3359 = vunpack.c.l.b16 %v674
    %v3360 = vunpack.c.h.b16 %v674
    %v3361 = vunpack.c.l.b16 %v675
    %v3362 = vunpack.c.h.b16 %v675
    %v3363 = vunpack.c.l.b16 %v676
    %v3364 = vunpack.c.h.b16 %v676
    %v3365 = vunpack.c.l.b16 %v677
    %v3366 = vunpack.c.h.b16 %v677
    %v3367 = vunpack.c.l.b16 %v678
    %v3368 = vunpack.c.h.b16 %v678
    %v3369 = vunpack.c.l.b16 %v679
    %v3370 = vunpack.c.h.b16 %v679
    %v3371 = vunpack.c.l.b16 %v680
    %v3372 = vunpack.c.h.b16 %v680
    %v3373 = vunpack.c.l.b16 %v681
    %v3374 = vunpack.c.h.b16 %v681
    %v3375 = vunpack.c.l.b16 %v682
    %v3376 = vunpack.c.h.b16 %v682
    %v3377 = vunpack.c.l.b16 %v683
    %v3378 = vunpack.c.h.b16 %v683
    %v3379 = vunpack.c.l.b16 %v684
    %v3380 = vunpack.c.h.b16 %v684
    %v3381 = vunpack.c.l.b16 %v685
    %v3382 = vunpack.c.h.b16 %v685
    %v3383 = vunpack.c.l.b16 %v686
    %v3384 = vunpack.c.h.b16 %v686
    %v3385 = vunpack.c.l.b16 %v687
    %v3386 = vunpack.c.h.b16 %v687
    %v3387 = vunpack.c.l.b16 %v688
    %v3388 = vunpack.c.h.b16 %v688
    %v3389 = vunpack.c.l.b16 %v689
    %v3390 = vunpack.c.h.b16 %v689
    %v3391 = vunpack.c.l.b16 %v690
    %v3392 = vunpack.c.h.b16 %v690
    %v3393 = vunpack.c.l.b16 %v691
    %v3394 = vunpack.c.h.b16 %v691
    %v3395 = vunpack.c.l.b16 %v692
    %v3396 = vunpack.c.h.b16 %v692
    %v3397 = vunpack.c.l.b16 %v693
    %v3398 = vunpack.c.h.b16 %v693
    %v3399 = vunpack.c.l.b16 %v694
    %v3400 = vunpack.c.h.b16 %v694
    %v3401 = vunpack.c.l.b16 %v695
    %v3402 = vunpack.c.h.b16 %v695
    %v3403 = vunpack.c.l.b16 %v696
    %v3404 = vunpack.c.h.b16 %v696
    %v3405 = vunpack.c.l.b16 %v697
    %v3406 = vunpack.c.h.b16 %v697
    %v3407 = vunpack.c.l.b16 %v698
    %v3408 = vunpack.c.h.b16 %v698
    %v3409 = vunpack.c.l.b16 %v699
    %v3410 = vunpack.c.h.b16 %v699
    %v3411 = vunpack.c.l.b16 %v700
    %v3412 = vunpack.c.h.b16 %v700
    %v3413 = vunpack.c.l.b16 %v701
    %v3414 = vunpack.c.h.b16 %v701
    %v3415 = vunpack.c.l.b16 %v702
    %v3416 = vunpack.c.h.b16 %v702
    %v3417 = vunpack.c.l.b16 %v703
    %v3418 = vunpack.c.h.b16 %v703
    %v3419 = vunpack.c.l.b16 %v704
    %v3420 = vunpack.c.h.b16 %v704
    %v3421 = vunpack.c.l.b16 %v705
    %v3422 = vunpack.c.h.b16 %v705
    %v3423 = vunpack.c.l.b16 %v706
    %v3424 = vunpack.c.h.b16 %v706
    %v3425 = vunpack.c.l.b16 %v707
    %v3426 = vunpack.c.h.b16 %v707
    %v3427 = vunpack.c.l.b16 %v708
    %v3428 = vunpack.c.h.b16 %v708
    %v3429 = vunpack.c.l.b16 %v709
    %v3430 = vunpack.c.h.b16 %v709
    %v3431 = vunpack.c.l.b16 %v710
    %v3432 = vunpack.c.h.b16 %v710
    %v3433 = vunpack.c.l.b16 %v711
    %v3434 = vunpack.c.h.b16 %v711
    %v3435 = vunpack.c.l.b16 %v712
    %v3436 = vunpack.c.h.b16 %v712
    %v3437 = vunpack.c.l.b16 %v713
    %v3438 = vunpack.c.h.b16 %v713
    %v3439 = vunpack.c.l.b16 %v714
    %v3440 = vunpack.c.h.b16 %v714
    %v3441 = vunpack.c.l.b16 %v715
    %v3442 = vunpack.c.h.b16 %v715
    %v3443 = vunpack.c.l.b16 %v716
    %v3444 = vunpack.c.h.b16 %v716
    %v3445 = vunpack.c.l.b16 %v717
    %v3446 = vunpack.c.h.b16 %v717
    %v3447 = vunpack.c.l.b16 %v718
    %v3448 = vunpack.c.h.b16 %v718
    %v3449 = vunpack.c.l.b16 %v719
    %v3450 = vunpack.c.h.b16 %v719
    %v3451 = vunpack.c.l.b16 %v720
    %v3452 = vunpack.c.h.b16 %v720
    %v3453 = vunpack.c.l.b16 %v721
    %v3454 = vunpack.c.h.b16 %v721
    %v3455 = vunpack.c.l.b16 %v722
    %v3456 = vunpack.c.h.b16 %v722
    %v3457 = vunpack.c.l.b16 %v723
    %v3458 = vunpack.c.h.b16 %v723
    %v3459 = vunpack.c.l.b16 %v724
    %v3460 = vunpack.c.h.b16 %v724
    %v3461 = vunpack.c.l.b16 %v725
    %v3462 = vunpack.c.h.b16 %v725
    %v3463 = vunpack.c.l.b16 %v726
    %v3464 = vunpack.c.h.b16 %v726
    %v3465 = vunpack.c.l.b16 %v727
    %v3466 = vunpack.c.h.b16 %v727
    %v3467 = vunpack.c.l.b16 %v728
    %v3468 = vunpack.c.h.b16 %v728
    %v3469 = vunpack.c.l.b16 %v729
    %v3470 = vunpack.c.h.b16 %v729
    %v3471 = vunpack.c.l.b16 %v730
    %v3472 = vunpack.c.h.b16 %v730
    %v3473 = vunpack.c.l.b16 %v731
    %v3474 = vunpack.c.h.b16 %v731
    %v3475 = vunpack.c.l.b16 %v732
    %v3476 = vunpack.c.h.b16 %v732
    %v3477 = vunpack.c.l.b16 %v733
    %v3478 = vunpack.c.h.b16 %v733
    %v3479 = vunpack.c.l.b16 %v734
    %v3480 = vunpack.c.h.b16 %v734
    %v3481 = vunpack.c.l.b16 %v735
    %v3482 = vunpack.c.h.b16 %v735
    %v3483 = vunpack.c.l.b16 %v736
    %v3484 = vunpack.c.h.b16 %v736
    %v3485 = vunpack.c.l.b16 %v737
    %v3486 = vunpack.c.h.b16 %v737
    %v3487 = vunpack.c.l.b16 %v738
    %v3488 = vunpack.c.h.b16 %v738
    %v3489 = vunpack.c.l.b16 %v739
    %v3490 = vunpack.c.h.b16 %v739
    %v3491 = vunpack.c.l.b16 %v740
    %v3492 = vunpack.c.h.b16 %v740
    %v3493 = vunpack.c.l.b16 %v741
    %v3494 = vunpack.c.h.b16 %v741
    %v3495 = vunpack.c.l.b16 %v742
    %v3496 = vunpack.c.h.b16 %v742
    %v3497 = vunpack.c.l.b16 %v743
    %v3498 = vunpack.c.h.b16 %v743
    %v3499 = vunpack.c.l.b16 %v744
    %v3500 = vunpack.c.h.b16 %v744
    %v3501 = vunpack.c.l.b16 %v745
    %v3502 = vunpack.c.h.b16 %v745
    %v3503 = vunpack.c.l.b16 %v746
    %v3504 = vunpack.c.h.b16 %v746
    %v3505 = vunpack.c.l.b16 %v747
    %v3506 = vunpack.c.h.b16 %v747
    %v3507 = vunpack.c.l.b16 %v748
    %v3508 = vunpack.c.h.b16 %v748
    %v3509 = vunpack.c.l.b16 %v749
    %v3510 = vunpack.c.h.b16 %v749
    %v3511 = vunpack.c.l.b16 %v750
    %v3512 = vunpack.c.h.b16 %v750
    %v3513 = vunpack.c.l.b16 %v751
    %v3514 = vunpack.c.h.b16 %v751
    %v3515 = vunpack.c.l.b16 %v752
    %v3516 = vunpack.c.h.b16 %v752
    %v3517 = vunpack.c.l.b16 %v753
    %v3518 = vunpack.c.h.b16 %v753
    %v3519 = vunpack.c.l.b16 %v754
    %v3520 = vunpack.c.h.b16 %v754
    %v3521 = vunpack.c.l.b16 %v755
    %v3522 = vunpack.c.h.b16 %v755
    %v3523 = vunpack.c.l.b16 %v756
    %v3524 = vunpack.c.h.b16 %v756
    %v3525 = vunpack.c.l.b16 %v757
    %v3526 = vunpack.c.h.b16 %v757
    %v3527 = vunpack.c.l.b16 %v758
    %v3528 = vunpack.c.h.b16 %v758
    %v3529 = vunpack.c.l.b16 %v759
    %v3530 = vunpack.c.h.b16 %v759
    %v3531 = vunpack.c.l.b16 %v760
    %v3532 = vunpack.c.h.b16 %v760
    %v3533 = vunpack.c.l.b16 %v761
    %v3534 = vunpack.c.h.b16 %v761
    %v3535 = vunpack.c.l.b16 %v762
    %v3536 = vunpack.c.h.b16 %v762
    %v3537 = vunpack.c.l.b16 %v763
    %v3538 = vunpack.c.h.b16 %v763
    %v3539 = vunpack.c.l.b16 %v764
    %v3540 = vunpack.c.h.b16 %v764
    %v3541 = vunpack.c.l.b16 %v765
    %v3542 = vunpack.c.h.b16 %v765
    %v3543 = vunpack.c.l.b16 %v766
    %v3544 = vunpack.c.h.b16 %v766
    %v3545 = vunpack.c.l.b16 %v767
    %v3546 = vunpack.c.h.b16 %v767
    %v3547 = vunpack.c.l.b16 %v768
    %v3548 = vunpack.c.h.b16 %v768
    %v3549 = vunpack.c.l.b16 %v769
    %v3550 = vunpack.c.h.b16 %v769
    %v3551 = vunpack.c.l.b16 %v770
    %v3552 = vunpack.c.h.b16 %v770
    %v3553 = vunpack.c.l.b16 %v771
    %v3554 = vunpack.c.h.b16 %v771
    %v3555 = vunpack.c.l.b16 %v772
    %v3556 = vunpack.c.h.b16 %v772
    %v3557 = vunpack.c.l.b16 %v773
    %v3558 = vunpack.c.h.b16 %v773
    %v3559 = vunpack.c.l.b16 %v774
    %v3560 = vunpack.c.h.b16 %v774
    %v3561 = vunpack.c.l.b16 %v775
    %v3562 = vunpack.c.h.b16 %v775
    %v3563 = vunpack.c.l.b16 %v776
    %v3564 = vunpack.c.h.b16 %v776
    %v3565 = vunpack.c.l.b16 %v777
    %v3566 = vunpack.c.h.b16 %v777
    %v3567 = vunpack.c.l.b16 %v778
    %v3568 = vunpack.c.h.b16 %v778
    %v3569 = vunpack.c.l.b16 %v779
    %v3570 = vunpack.c.h.b16 %v779
    %v3571 = vunpack.c.l.b16 %v780
    %v3572 = vunpack.c.h.b16 %v780
    %v3573 = vunpack.c.l.b16 %v781
    %v3574 = vunpack.c.h.b16 %v781
    %v3575 = vunpack.c.l.b16 %v782
    %v3576 = vunpack.c.h.b16 %v782
    %v3577 = vunpack.c.l.b16 %v783
    %v3578 = vunpack.c.h.b16 %v783
    %v3579 = vunpack.c.l.b16 %v784
    %v3580 = vunpack.c.h.b16 %v784
    %v3581 = vunpack.c.l.b16 %v785
    %v3582 = vunpack.c.h.b16 %v785
    %v3583 = vunpack.c.l.b16 %v786
    %v3584 = vunpack.c.h.b16 %v786
    %v3585 = vunpack.c.l.b16 %v787
    %v3586 = vunpack.c.h.b16 %v787
    %v3587 = vunpack.c.l.b16 %v788
    %v3588 = vunpack.c.h.b16 %v788
    %v3589 = vunpack.c.l.b16 %v789
    %v3590 = vunpack.c.h.b16 %v789
    %v3591 = vunpack.c.l.b16 %v790
    %v3592 = vunpack.c.h.b16 %v790
    %v3593 = vunpack.c.l.b16 %v791
    %v3594 = vunpack.c.h.b16 %v791
    %v3595 = vunpack.c.l.b16 %v792
    %v3596 = vunpack.c.h.b16 %v792
    %v3597 = vunpack.c.l.b16 %v793
    %v3598 = vunpack.c.h.b16 %v793
    %v3599 = vunpack.c.l.b16 %v794
    %v3600 = vunpack.c.h.b16 %v794
    %v3601 = vunpack.c.l.b16 %v795
    %v3602 = vunpack.c.h.b16 %v795
    %v3603 = vunpack.c.l.b16 %v796
    %v3604 = vunpack.c.h.b16 %v796
    %v3605 = vunpack.c.l.b16 %v797
    %v3606 = vunpack.c.h.b16 %v797
    %v3607 = vunpack.c.l.b16 %v798
    %v3608 = vunpack.c.h.b16 %v798
    %v3609 = vunpack.c.l.b16 %v799
    %v3610 = vunpack.c.h.b16 %v799
    %v3611 = vunpack.c.l.b16 %v800
    %v3612 = vunpack.c.h.b16 %v800
    %v3613 = vunpack.c.l.b16 %v801
    %v3614 = vunpack.c.h.b16 %v801
    %v3615 = vunpack.c.l.b16 %v802
    %v3616 = vunpack.c.h.b16 %v802
    %v3617 = vunpack.c.l.b16 %v803
    %v3618 = vunpack.c.h.b16 %v803
    %v3619 = vunpack.c.l.b16 %v804
    %v3620 = vunpack.c.h.b16 %v804
    %v3621 = vunpack.c.l.b16 %v805
    %v3622 = vunpack.c.h.b16 %v805
    %v3623 = vunpack.c.l.b16 %v806
    %v3624 = vunpack.c.h.b16 %v806
    %v3625 = vunpack.c.l.b16 %v807
    %v3626 = vunpack.c.h.b16 %v807
    %v3627 = vunpack.c.l.b16 %v808
    %v3628 = vunpack.c.h.b16 %v808
    %v3629 = vunpack.c.l.b16 %v809
    %v3630 = vunpack.c.h.b16 %v809
    %v3631 = vunpack.c.l.b16 %v810
    %v3632 = vunpack.c.h.b16 %v810
    %v3633 = vunpack.c.l.b16 %v811
    %v3634 = vunpack.c.h.b16 %v811
    %v3635 = vunpack.c.l.b16 %v812
    %v3636 = vunpack.c.h.b16 %v812
    %v3637 = vunpack.c.l.b16 %v813
    %v3638 = vunpack.c.h.b16 %v813
    %v3639 = vunpack.c.l.b16 %v814
    %v3640 = vunpack.c.h.b16 %v814
    %v3641 = vunpack.c.l.b16 %v815
    %v3642 = vunpack.c.h.b16 %v815
    %v3643 = vunpack.c.l.b16 %v816
    %v3644 = vunpack.c.h.b16 %v816
    %v3645 = vunpack.c.l.b16 %v817
    %v3646 = vunpack.c.h.b16 %v817
    %v3647 = vunpack.c.l.b16 %v818
    %v3648 = vunpack.c.h.b16 %v818
    %v3649 = vunpack.c.l.b16 %v819
    %v3650 = vunpack.c.h.b16 %v819
    %v3651 = vunpack.c.l.b16 %v820
    %v3652 = vunpack.c.h.b16 %v820
    %v3653 = vunpack.c.l.b16 %v821
    %v3654 = vunpack.c.h.b16 %v821
    %v3655 = vunpack.c.l.b16 %v822
    %v3656 = vunpack.c.h.b16 %v822
    %v3657 = vunpack.c.l.b16 %v823
    %v3658 = vunpack.c.h.b16 %v823
    %v3659 = vunpack.c.l.b16 %v824
    %v3660 = vunpack.c.h.b16 %v824
    %v3661 = vunpack.c.l.b16 %v825
    %v3662 = vunpack.c.h.b16 %v825
    %v3663 = vunpack.c.l.b16 %v826
    %v3664 = vunpack.c.h.b16 %v826
    %v3665 = vunpack.c.l.b16 %v827
    %v3666 = vunpack.c.h.b16 %v827
    %v3667 = vunpack.c.l.b16 %v828
    %v3668 = vunpack.c.h.b16 %v828
    %v3669 = vunpack.c.l.b16 %v829
    %v3670 = vunpack.c.h.b16 %v829
    %v3671 = vunpack.c.l.b16 %v830
    %v3672 = vunpack.c.h.b16 %v830
    %v3673 = vunpack.c.l.b16 %v831
    %v3674 = vunpack.c.h.b16 %v831
    %v3675 = vunpack.c.l.b16 %v832
    %v3676 = vunpack.c.h.b16 %v832
    %v3677 = vunpack.c.l.b16 %v833
    %v3678 = vunpack.c.h.b16 %v833
    %v3679 = vunpack.c.l.b16 %v834
    %v3680 = vunpack.c.h.b16 %v834
    %v3681 = vunpack.c.l.b16 %v835
    %v3682 = vunpack.c.h.b16 %v835
    %v3683 = vunpack.c.l.b16 %v836
    %v3684 = vunpack.c.h.b16 %v836
    %v3685 = vunpack.c.l.b16 %v837
    %v3686 = vunpack.c.h.b16 %v837
    %v3687 = vunpack.c.l.b16 %v838
    %v3688 = vunpack.c.h.b16 %v838
    %v3689 = vunpack.c.l.b16 %v839
    %v3690 = vunpack.c.h.b16 %v839
    %v3691 = vunpack.c.l.b16 %v840
    %v3692 = vunpack.c.h.b16 %v840
    %v3693 = vunpack.c.l.b16 %v841
    %v3694 = vunpack.c.h.b16 %v841
    %v3695 = vunpack.c.l.b16 %v842
    %v3696 = vunpack.c.h.b16 %v842
    %v3697 = vunpack.c.l.b16 %v843
    %v3698 = vunpack.c.h.b16 %v843
    %v3699 = vunpack.c.l.b16 %v844
    %v3700 = vunpack.c.h.b16 %v844
    %v3701 = vunpack.c.l.b16 %v845
    %v3702 = vunpack.c.h.b16 %v845
    %v3703 = vunpack.c.l.b16 %v846
    %v3704 = vunpack.c.h.b16 %v846
    %v3705 = vunpack.c.l.b16 %v847
    %v3706 = vunpack.c.h.b16 %v847
    %v3707 = vunpack.c.l.b16 %v848
    %v3708 = vunpack.c.h.b16 %v848
    %v3709 = vunpack.c.l.b16 %v849
    %v3710 = vunpack.c.h.b16 %v849
    %v3711 = vunpack.c.l.b16 %v850
    %v3712 = vunpack.c.h.b16 %v850
    %v3713 = vunpack.c.l.b16 %v851
    %v3714 = vunpack.c.h.b16 %v851
    %v3715 = vunpack.c.l.b16 %v852
    %v3716 = vunpack.c.h.b16 %v852
    %v3717 = vunpack.c.l.b16 %v853
    %v3718 = vunpack.c.h.b16 %v853
    %v3719 = vunpack.c.l.b16 %v854
    %v3720 = vunpack.c.h.b16 %v854
    %v3721 = vunpack.c.l.b16 %v855
    %v3722 = vunpack.c.h.b16 %v855
    %v3723 = vunpack.c.l.b16 %v856
    %v3724 = vunpack.c.h.b16 %v856
    %v3725 = vunpack.c.l.b16 %v857
    %v3726 = vunpack.c.h.b16 %v857
    %v3727 = vunpack.c.l.b16 %v858
    %v3728 = vunpack.c.h.b16 %v858
    %v3729 = vunpack.c.l.b16 %v859
    %v3730 = vunpack.c.h.b16 %v859
    %v3731 = vunpack.c.l.b16 %v860
    %v3732 = vunpack.c.h.b16 %v860
    %v3733 = vunpack.c.l.b16 %v861
    %v3734 = vunpack.c.h.b16 %v861
    %v3735 = vunpack.c.l.b16 %v862
    %v3736 = vunpack.c.h.b16 %v862
    %v3737 = vunpack.c.l.b16 %v863
    %v3738 = vunpack.c.h.b16 %v863
    %v3739 = vunpack.c.l.b16 %v864
    %v3740 = vunpack.c.h.b16 %v864
    %v3741 = vunpack.c.l.b16 %v865
    %v3742 = vunpack.c.h.b16 %v865
    %v3743 = vunpack.c.l.b16 %v866
    %v3744 = vunpack.c.h.b16 %v866
    %v3745 = vunpack.c.l.b16 %v867
    %v3746 = vunpack.c.h.b16 %v867
    %v3747 = vunpack.c.l.b16 %v868
    %v3748 = vunpack.c.h.b16 %v868
    %v3749 = vunpack.c.l.b16 %v869
    %v3750 = vunpack.c.h.b16 %v869
    %v3751 = vunpack.c.l.b16 %v870
    %v3752 = vunpack.c.h.b16 %v870
    %v3753 = vunpack.c.l.b16 %v871
    %v3754 = vunpack.c.h.b16 %v871
    %v3755 = vunpack.c.l.b16 %v872
    %v3756 = vunpack.c.h.b16 %v872
    %v3757 = vunpack.c.l.b16 %v873
    %v3758 = vunpack.c.h.b16 %v873
    %v3759 = vunpack.c.l.b16 %v874
    %v3760 = vunpack.c.h.b16 %v874
    %v3761 = vunpack.c.l.b16 %v875
    %v3762 = vunpack.c.h.b16 %v875
    %v3763 = vunpack.c.l.b16 %v876
    %v3764 = vunpack.c.h.b16 %v876
    %v3765 = vunpack.c.l.b16 %v877
    %v3766 = vunpack.c.h.b16 %v877
    %v3767 = vunpack.c.l.b16 %v878
    %v3768 = vunpack.c.h.b16 %v878
    %v3769 = vunpack.c.l.b16 %v879
    %v3770 = vunpack.c.h.b16 %v879
    %v3771 = vunpack.c.l.b16 %v880
    %v3772 = vunpack.c.h.b16 %v880
    %v3773 = vunpack.c.l.b16 %v881
    %v3774 = vunpack.c.h.b16 %v881
    %v3775 = vunpack.c.l.b16 %v882
    %v3776 = vunpack.c.h.b16 %v882
    %v3777 = vunpack.c.l.b16 %v883
    %v3778 = vunpack.c.h.b16 %v883
    %v3779 = vunpack.c.l.b16 %v884
    %v3780 = vunpack.c.h.b16 %v884
    %v3781 = vunpack.c.l.b16 %v885
    %v3782 = vunpack.c.h.b16 %v885
    %v3783 = vunpack.c.l.b16 %v886
    %v3784 = vunpack.c.h.b16 %v886
    %v3785 = vunpack.c.l.b16 %v887
    %v3786 = vunpack.c.h.b16 %v887
    %v3787 = vunpack.c.l.b16 %v888
    %v3788 = vunpack.c.h.b16 %v888
    %v3789 = vunpack.c.l.b16 %v889
    %v3790 = vunpack.c.h.b16 %v889
    %v3791 = vunpack.c.l.b16 %v890
    %v3792 = vunpack.c.h.b16 %v890
    %v3793 = vunpack.c.l.b16 %v891
    %v3794 = vunpack.c.h.b16 %v891
    %v3795 = vunpack.c.l.b16 %v892
    %v3796 = vunpack.c.h.b16 %v892
    %v3797 = vunpack.c.l.b16 %v893
    %v3798 = vunpack.c.h.b16 %v893
    %v3799 = vunpack.c.l.b16 %v894
    %v3800 = vunpack.c.h.b16 %v894
    %v3801 = vunpack.c.l.b16 %v895
    %v3802 = vunpack.c.h.b16 %v895
    %v3803 = vunpack.c.l.b16 %v896
    %v3804 = vunpack.c.h.b16 %v896
    %v3805 = vunpack.c.l.b16 %v897
    %v3806 = vunpack.c.h.b16 %v897
    %v3807 = vunpack.c.l.b16 %v898
    %v3808 = vunpack.c.h.b16 %v898
    %v3809 = vunpack.c.l.b16 %v899
    %v3810 = vunpack.c.h.b16 %v899
    %v3811 = vunpack.c.l.b16 %v900
    %v3812 = vunpack.c.h.b16 %v900
    %v3813 = vunpack.c.l.b16 %v901
    %v3814 = vunpack.c.h.b16 %v901
    %v3815 = vunpack.c.l.b16 %v902
    %v3816 = vunpack.c.h.b16 %v902
    %v3817 = vunpack.c.l.b16 %v903
    %v3818 = vunpack.c.h.b16 %v903
    %v3819 = vunpack.c.l.b16 %v904
    %v3820 = vunpack.c.h.b16 %v904
    %v3821 = vunpack.c.l.b16 %v905
    %v3822 = vunpack.c.h.b16 %v905
    %v3823 = vunpack.c.l.b16 %v906
    %v3824 = vunpack.c.h.b16 %v906
    %v3825 = vunpack.c.l.b16 %v907
    %v3826 = vunpack.c.h.b16 %v907
    %v3827 = vunpack.c.l.b16 %v908
    %v3828 = vunpack.c.h.b16 %v908
    %v3829 = vunpack.c.l.b16 %v909
    %v3830 = vunpack.c.h.b16 %v909
    %v3831 = vunpack.c.l.b16 %v910
    %v3832 = vunpack.c.h.b16 %v910
    %v3833 = vunpack.c.l.b16 %v911
    %v3834 = vunpack.c.h.b16 %v911
    %v3835 = vunpack.c.l.b16 %v912
    %v3836 = vunpack.c.h.b16 %v912
    %v3837 = vunpack.c.l.b16 %v913
    %v3838 = vunpack.c.h.b16 %v913
    %v3839 = vunpack.c.l.b16 %v914
    %v3840 = vunpack.c.h.b16 %v914
    %v3841 = vunpack.c.l.b16 %v915
    %v3842 = vunpack.c.h.b16 %v915
    %v3843 = vunpack.c.l.b16 %v916
    %v3844 = vunpack.c.h.b16 %v916
    %v3845 = vunpack.c.l.b16 %v917
    %v3846 = vunpack.c.h.b16 %v917
    %v3847 = vunpack.c.l.b16 %v918
    %v3848 = vunpack.c.h.b16 %v918
    %v3849 = vunpack.c.l.b16 %v919
    %v3850 = vunpack.c.h.b16 %v919
    %v3851 = vunpack.c.l.b16 %v920
    %v3852 = vunpack.c.h.b16 %v920
    %v3853 = vunpack.c.l.b16 %v921
    %v3854 = vunpack.c.h.b16 %v921
    %v3855 = vunpack.c.l.b16 %v922
    %v3856 = vunpack.c.h.b16 %v922
    %v3857 = vunpack.c.l.b16 %v923
    %v3858 = vunpack.c.h.b16 %v923
    %v3859 = vunpack.c.l.b16 %v924
    %v3860 = vunpack.c.h.b16 %v924
    %v3861 = vunpack.c.l.b16 %v925
    %v3862 = vunpack.c.h.b16 %v925
    %v3863 = vunpack.c.l.b16 %v926
    %v3864 = vunpack.c.h.b16 %v926
    %v3865 = vunpack.c.l.b16 %v927
    %v3866 = vunpack.c.h.b16 %v927
    %v3867 = vunpack.c.l.b16 %v928
    %v3868 = vunpack.c.h.b16 %v928
    %v3869 = vunpack.c.l.b16 %v929
    %v3870 = vunpack.c.h.b16 %v929
    %v3871 = vunpack.c.l.b16 %v930
    %v3872 = vunpack.c.h.b16 %v930
    %v3873 = vunpack.c.l.b16 %v931
    %v3874 = vunpack.c.h.b16 %v931
    %v3875 = vunpack.c.l.b16 %v932
    %v3876 = vunpack.c.h.b16 %v932
    %v3877 = vunpack.c.l.b16 %v933
    %v3878 = vunpack.c.h.b16 %v933
    %v3879 = vunpack.c.l.b16 %v934
    %v3880 = vunpack.c.h.b16 %v934
    %v3881 = vunpack.c.l.b16 %v935
    %v3882 = vunpack.c.h.b16 %v935
    %v3883 = vunpack.c.l.b16 %v936
    %v3884 = vunpack.c.h.b16 %v936
    %v3885 = vunpack.c.l.b16 %v937
    %v3886 = vunpack.c.h.b16 %v937
    %v3887 = vunpack.c.l.b16 %v938
    %v3888 = vunpack.c.h.b16 %v938
    %v3889 = vunpack.c.l.b16 %v939
    %v3890 = vunpack.c.h.b16 %v939
    %v3891 = vunpack.c.l.b16 %v940
    %v3892 = vunpack.c.h.b16 %v940
    %v3893 = vunpack.c.l.b16 %v941
    %v3894 = vunpack.c.h.b16 %v941
    %v3895 = vunpack.c.l.b16 %v942
    %v3896 = vunpack.c.h.b16 %v942
    %v3897 = vunpack.c.l.b16 %v943
    %v3898 = vunpack.c.h.b16 %v943
    %v3899 = vunpack.c.l.b16 %v944
    %v3900 = vunpack.c.h.b16 %v944
    %v3901 = vunpack.c.l.b16 %v945
    %v3902 = vunpack.c.h.b16 %v945
    %v3903 = vunpack.c.l.b16 %v946
    %v3904 = vunpack.c.h.b16 %v946
    %v3905 = vunpack.c.l.b16 %v947
    %v3906 = vunpack.c.h.b16 %v947
    %v3907 = vunpack.c.l.b16 %v948
    %v3908 = vunpack.c.h.b16 %v948
    %v3909 = vunpack.c.l.b16 %v949
    %v3910 = vunpack.c.h.b16 %v949
    %v3911 = vunpack.c.l.b16 %v950
    %v3912 = vunpack.c.h.b16 %v950
    %v3913 = vunpack.c.l.b16 %v951
    %v3914 = vunpack.c.h.b16 %v951
    %v3915 = vunpack.c.l.b16 %v952
    %v3916 = vunpack.c.h.b16 %v952
    %v3917 = vunpack.c.l.b16 %v953
    %v3918 = vunpack.c.h.b16 %v953
    %v3919 = vunpack.c.l.b16 %v954
    %v3920 = vunpack.c.h.b16 %v954
    %v3921 = vunpack.c.l.b16 %v955
    %v3922 = vunpack.c.h.b16 %v955
    %v3923 = vunpack.c.l.b16 %v956
    %v3924 = vunpack.c.h.b16 %v956
    %v3925 = vunpack.c.l.b16 %v957
    %v3926 = vunpack.c.h.b16 %v957
    %v3927 = vunpack.c.l.b16 %v958
    %v3928 = vunpack.c.h.b16 %v958
    %v3929 = vunpack.c.l.b16 %v959
    %v3930 = vunpack.c.h.b16 %v959
    %v3931 = vunpack.c.l.b16 %v960
    %v3932 = vunpack.c.h.b16 %v960
    %v3933 = vunpack.c.l.b16 %v961
    %v3934 = vunpack.c.h.b16 %v961
    %v3935 = vunpack.c.l.b16 %v962
    %v3936 = vunpack.c.h.b16 %v962
    %v3937 = vunpack.c.l.b16 %v963
    %v3938 = vunpack.c.h.b16 %v963
    %v3939 = vunpack.c.l.b16 %v964
    %v3940 = vunpack.c.h.b16 %v964
    %v3941 = vunpack.c.l.b16 %v965
    %v3942 = vunpack.c.h.b16 %v965
    %v3943 = vunpack.c.l.b16 %v966
    %v3944 = vunpack.c.h.b16 %v966
    %v3945 = vunpack.c.l.b16 %v967
    %v3946 = vunpack.c.h.b16 %v967
    %v3947 = vunpack.c.l.b16 %v968
    %v3948 = vunpack.c.h.b16 %v968
    %v3949 = vunpack.c.l.b16 %v969
    %v3950 = vunpack.c.h.b16 %v969
    %v3951 = vunpack.c.l.b16 %v970
    %v3952 = vunpack.c.h.b16 %v970
    %v3953 = vunpack.c.l.b16 %v971
    %v3954 = vunpack.c.h.b16 %v971
    %v3955 = vunpack.c.l.b16 %v972
    %v3956 = vunpack.c.h.b16 %v972
    %v3957 = vunpack.c.l.b16 %v973
    %v3958 = vunpack.c.h.b16 %v973
    %v3959 = vunpack.c.l.b16 %v974
    %v3960 = vunpack.c.h.b16 %v974
    %v3961 = vunpack.c.l.b16 %v975
    %v3962 = vunpack.c.h.b16 %v975
    %v3963 = vunpack.c.l.b16 %v976
    %v3964 = vunpack.c.h.b16 %v976
    %v3965 = vunpack.c.l.b16 %v977
    %v3966 = vunpack.c.h.b16 %v977
    %v3967 = vunpack.c.l.b16 %v978
    %v3968 = vunpack.c.h.b16 %v978
    %v3969 = vunpack.c.l.b16 %v979
    %v3970 = vunpack.c.h.b16 %v979
    %v3971 = vunpack.c.l.b16 %v980
    %v3972 = vunpack.c.h.b16 %v980
    %v3973 = vunpack.c.l.b16 %v981
    %v3974 = vunpack.c.h.b16 %v981
    %v3975 = vunpack.c.l.b16 %v982
    %v3976 = vunpack.c.h.b16 %v982
    %v3977 = vunpack.c.l.b16 %v983
    %v3978 = vunpack.c.h.b16 %v983
    %v3979 = vunpack.c.l.b16 %v984
    %v3980 = vunpack.c.h.b16 %v984
    %v3981 = vunpack.c.l.b16 %v985
    %v3982 = vunpack.c.h.b16 %v985
    %v3983 = vunpack.c.l.b16 %v986
    %v3984 = vunpack.c.h.b16 %v986
    %v3985 = vunpack.c.l.b16 %v987
    %v3986 = vunpack.c.h.b16 %v987
    %v3987 = vunpack.c.l.b16 %v988
    %v3988 = vunpack.c.h.b16 %v988
    %v3989 = vunpack.c.l.b16 %v989
    %v3990 = vunpack.c.h.b16 %v989
    %v3991 = vunpack.c.l.b16 %v990
    %v3992 = vunpack.c.h.b16 %v990
    %v3993 = vunpack.c.l.b16 %v991
    %v3994 = vunpack.c.h.b16 %v991
    %v3995 = vunpack.c.l.b16 %v992
    %v3996 = vunpack.c.h.b16 %v992
    %v3997 = vunpack.c.l.b16 %v993
    %v3998 = vunpack.c.h.b16 %v993
    %v3999 = vunpack.c.l.b16 %v994
    %v4000 = vunpack.c.h.b16 %v994
    %v4001 = vunpack.c.l.b16 %v995
    %v4002 = vunpack.c.h.b16 %v995
    %v4003 = vunpack.c.l.b16 %v996
    %v4004 = vunpack.c.h.b16 %v996
    %v4005 = vunpack.c.l.b16 %v997
    %v4006 = vunpack.c.h.b16 %v997
    %v4007 = vunpack.c.l.b16 %v998
    %v4008 = vunpack.c.h.b16 %v998
    %v4009 = vunpack.c.l.b16 %v999
    %v4010 = vunpack.c.h.b16 %v999
    %v4011 = vunpack.c.l.b16 %v1000
    %v4012 = vunpack.c.h.b16 %v1000
    %v4013 = vunpack.c.l.b16 %v1001
    %v4014 = vunpack.c.h.b16 %v1001
    %v4015 = vunpack.c.l.b16 %v1002
    %v4016 = vunpack.c.h.b16 %v1002
    %v4017 = vunpack.c.l.b16 %v1003
    %v4018 = vunpack.c.h.b16 %v1003
    %v4019 = vunpack.c.l.b16 %v1004
    %v4020 = vunpack.c.h.b16 %v1004
    %v4021 = vunpack.c.l.b16 %v1005
    %v4022 = vunpack.c.h.b16 %v1005
    %v4023 = vunpack.c.l.b16 %v1006
    %v4024 = vunpack.c.h.b16 %v1006
    %v4025 = vunpack.c.l.b16 %v1007
    %v4026 = vunpack.c.h.b16 %v1007
    %v4027 = vunpack.c.l.b16 %v1008
    %v4028 = vunpack.c.h.b16 %v1008
    %v4029 = vunpack.c.l.b16 %v1009
    %v4030 = vunpack.c.h.b16 %v1009
    %v4031 = vunpack.c.l.b16 %v1010
    %v4032 = vunpack.c.h.b16 %v1010
    %v4033 = vunpack.c.l.b16 %v1011
    %v4034 = vunpack.c.h.b16 %v1011
    %v4035 = vunpack.c.l.b16 %v1012
    %v4036 = vunpack.c.h.b16 %v1012
    %v4037 = vunpack.c.l.b16 %v1013
    %v4038 = vunpack.c.h.b16 %v1013
    %v4039 = vunpack.c.l.b16 %v1014
    %v4040 = vunpack.c.h.b16 %v1014
    %v4041 = vunpack.c.l.b16 %v1015
    %v4042 = vunpack.c.h.b16 %v1015
    %v4043 = vunpack.c.l.b16 %v1016
    %v4044 = vunpack.c.h.b16 %v1016
    %v4045 = vunpack.c.l.b16 %v1017
    %v4046 = vunpack.c.h.b16 %v1017
    %v4047 = vunpack.c.l.b16 %v1018
    %v4048 = vunpack.c.h.b16 %v1018
    %v4049 = vunpack.c.l.b16 %v1019
    %v4050 = vunpack.c.h.b16 %v1019
    %v4051 = vunpack.c.l.b16 %v1020
    %v4052 = vunpack.c.h.b16 %v1020
    %v4053 = vunpack.c.l.b16 %v1021
    %v4054 = vunpack.c.h.b16 %v1021
    %v4055 = vunpack.c.l.b16 %v1022
    %v4056 = vunpack.c.h.b16 %v1022
    %v4057 = vunpack.c.l.b16 %v1023
    %v4058 = vunpack.c.h.b16 %v1023
    %v4059 = vunpack.c.l.b16 %v1024
    %v4060 = vunpack.c.h.b16 %v1024
    %v4061 = vunpack.c.l.b16 %v1025
    %v4062 = vunpack.c.h.b16 %v1025
    %v4063 = vunpack.c.l.b16 %v1026
    %v4064 = vunpack.c.h.b16 %v1026
    %v4065 = vunpack.c.l.b16 %v1027
    %v4066 = vunpack.c.h.b16 %v1027
    %v4067 = vunpack.c.l.b16 %v1028
    %v4068 = vunpack.c.h.b16 %v1028
    %v4069 = vunpack.c.l.b16 %v1029
    %v4070 = vunpack.c.h.b16 %v1029
    %v4071 = vunpack.c.l.b16 %v1030
    %v4072 = vunpack.c.h.b16 %v1030
    %v4073 = vunpack.c.l.b16 %v1031
    %v4074 = vunpack.c.h.b16 %v1031
    %v4075 = vunpack.c.l.b16 %v1032
    %v4076 = vunpack.c.h.b16 %v1032
    %v4077 = vunpack.c.l.b16 %v1033
    %v4078 = vunpack.c.h.b16 %v1033
    %v4079 = vunpack.c.l.b16 %v1034
    %v4080 = vunpack.c.h.b16 %v1034
    %v4081 = vunpack.c.l.b16 %v1035
    %v4082 = vunpack.c.h.b16 %v1035
    %v4083 = vunpack.c.l.b16 %v1036
    %v4084 = vunpack.c.h.b16 %v1036
    %v4085 = vunpack.c.l.b16 %v1037
    %v4086 = vunpack.c.h.b16 %v1037
    %v4087 = vunpack.c.l.b16 %v1038
    %v4088 = vunpack.c.h.b16 %v1038
    %v4089 = vunpack.c.l.b16 %v1039
    %v4090 = vunpack.c.h.b16 %v1039
    %v4091 = vunpack.c.l.b16 %v1040
    %v4092 = vunpack.c.h.b16 %v1040
    %v4093 = vunpack.c.l.b16 %v1041
    %v4094 = vunpack.c.h.b16 %v1041
    %v4095 = vunpack.c.l.b16 %v1042
    %v4096 = vunpack.c.h.b16 %v1042
    %v4097 = vunpack.c.l.b16 %v1043
    %v4098 = vunpack.c.h.b16 %v1043
    %v4099 = vunpack.c.l.b16 %v1044
    %v4100 = vunpack.c.h.b16 %v1044
    %v4101 = vunpack.c.l.b16 %v1045
    %v4102 = vunpack.c.h.b16 %v1045
    %v4103 = vunpack.c.l.b16 %v1046
    %v4104 = vunpack.c.h.b16 %v1046
    %v4105 = vunpack.c.l.b16 %v1047
    %v4106 = vunpack.c.h.b16 %v1047
    %v4107 = vunpack.c.l.b16 %v1048
    %v4108 = vunpack.c.h.b16 %v1048
    %v4109 = vunpack.c.l.b16 %v1049
    %v4110 = vunpack.c.h.b16 %v1049
    %v4111 = vunpack.c.l.b16 %v1050
    %v4112 = vunpack.c.h.b16 %v1050
    %v4113 = vunpack.c.l.b16 %v1051
    %v4114 = vunpack.c.h.b16 %v1051
    %v4115 = vunpack.c.l.b16 %v1052
    %v4116 = vunpack.c.h.b16 %v1052
    %v4117 = vunpack.c.l.b16 %v1053
    %v4118 = vunpack.c.h.b16 %v1053
    %v4119 = vunpack.c.l.b16 %v1054
    %v4120 = vunpack.c.h.b16 %v1054
    %v4121 = vunpack.c.l.b16 %v1055
    %v4122 = vunpack.c.h.b16 %v1055
    %v4123 = vunpack.c.l.b16 %v1056
    %v4124 = vunpack.c.h.b16 %v1056
    %v4125 = vunpack.c.l.b16 %v1057
    %v4126 = vunpack.c.h.b16 %v1057
    %v4127 = vunpack.c.l.b16 %v1058
    %v4128 = vunpack.c.h.b16 %v1058
    %v4129 = vunpack.c.l.b16 %v1059
    %v4130 = vunpack.c.h.b16 %v1059
    %v4131 = vunpack.c.l.b16 %v1060
    %v4132 = vunpack.c.h.b16 %v1060
    %v4133 = vunpack.c.l.b16 %v1061
    %v4134 = vunpack.c.h.b16 %v1061
    %v4135 = vunpack.c.l.b16 %v1062
    %v4136 = vunpack.c.h.b16 %v1062
    %v4137 = vunpack.c.l.b16 %v1063
    %v4138 = vunpack.c.h.b16 %v1063
    %v4139 = vunpack.c.l.b16 %v1064
    %v4140 = vunpack.c.h.b16 %v1064
    %v4141 = vunpack.c.l.b16 %v1065
    %v4142 = vunpack.c.h.b16 %v1065
    %v4143 = vunpack.c.l.b16 %v1066
    %v4144 = vunpack.c.h.b16 %v1066
    %v4145 = vunpack.c.l.b16 %v1067
    %v4146 = vunpack.c.h.b16 %v1067
    %v4147 = vunpack.c.l.b16 %v1068
    %v4148 = vunpack.c.h.b16 %v1068
    %v4149 = vunpack.c.l.b16 %v1069
    %v4150 = vunpack.c.h.b16 %v1069
    %v4151 = vunpack.c.l.b16 %v1070
    %v4152 = vunpack.c.h.b16 %v1070
    %v4153 = vunpack.c.l.b16 %v1071
    %v4154 = vunpack.c.h.b16 %v1071
    %v4155 = vunpack.c.l.b16 %v1072
    %v4156 = vunpack.c.h.b16 %v1072
    %v4157 = vunpack.c.l.b16 %v1073
    %v4158 = vunpack.c.h.b16 %v1073
    %v4159 = vunpack.c.l.b16 %v1074
    %v4160 = vunpack.c.h.b16 %v1074
    %v4161 = vunpack.c.l.b16 %v1075
    %v4162 = vunpack.c.h.b16 %v1075
    %v4163 = vunpack.c.l.b16 %v1076
    %v4164 = vunpack.c.h.b16 %v1076
    %v4165 = vunpack.c.l.b16 %v1077
    %v4166 = vunpack.c.h.b16 %v1077
    %v4167 = vunpack.c.l.b16 %v1078
    %v4168 = vunpack.c.h.b16 %v1078
    %v4169 = vunpack.c.l.b16 %v1079
    %v4170 = vunpack.c.h.b16 %v1079
    %v4171 = vunpack.c.l.b16 %v1080
    %v4172 = vunpack.c.h.b16 %v1080
    %v4173 = vunpack.c.l.b16 %v1081
    %v4174 = vunpack.c.h.b16 %v1081
    %v4175 = vunpack.c.l.b16 %v1082
    %v4176 = vunpack.c.h.b16 %v1082
    %v4177 = vunpack.c.l.b16 %v1083
    %v4178 = vunpack.c.h.b16 %v1083
    %v4179 = vunpack.c.l.b16 %v1084
    %v4180 = vunpack.c.h.b16 %v1084
    %v4181 = vunpack.c.l.b16 %v1085
    %v4182 = vunpack.c.h.b16 %v1085
    %v4183 = vunpack.c.l.b16 %v1086
    %v4184 = vunpack.c.h.b16 %v1086
    %v4185 = vunpack.c.l.b16 %v1087
    %v4186 = vunpack.c.h.b16 %v1087
    %v4187 = vunpack.c.l.b16 %v1088
    %v4188 = vunpack.c.h.b16 %v1088
    %v4189 = vunpack.c.l.b16 %v1089
    %v4190 = vunpack.c.h.b16 %v1089
    %v4191 = vunpack.c.l.b16 %v1090
    %v4192 = vunpack.c.h.b16 %v1090
    %v4193 = vunpack.c.l.b16 %v1091
    %v4194 = vunpack.c.h.b16 %v1091
    %v4195 = vunpack.c.l.b16 %v1092
    %v4196 = vunpack.c.h.b16 %v1092
    %v4197 = vunpack.c.l.b16 %v1093
    %v4198 = vunpack.c.h.b16 %v1093
    %v4199 = vunpack.c.l.b16 %v1094
    %v4200 = vunpack.c.h.b16 %v1094
    %v4201 = vunpack.c.l.b16 %v1095
    %v4202 = vunpack.c.h.b16 %v1095
    %v4203 = vunpack.c.l.b16 %v1096
    %v4204 = vunpack.c.h.b16 %v1096
    %v4205 = vunpack.c.l.b16 %v1097
    %v4206 = vunpack.c.h.b16 %v1097
    %v4207 = vunpack.c.l.b16 %v1098
    %v4208 = vunpack.c.h.b16 %v1098
    %v4209 = vunpack.c.l.b16 %v1099
    %v4210 = vunpack.c.h.b16 %v1099
    %v4211 = vunpack.c.l.b16 %v1100
    %v4212 = vunpack.c.h.b16 %v1100
    %v4213 = vunpack.c.l.b16 %v1101
    %v4214 = vunpack.c.h.b16 %v1101
    %v4215 = vunpack.c.l.b16 %v1102
    %v4216 = vunpack.c.h.b16 %v1102
    %v4217 = vunpack.c.l.b16 %v1103
    %v4218 = vunpack.c.h.b16 %v1103
    %v4219 = vunpack.c.l.b16 %v1104
    %v4220 = vunpack.c.h.b16 %v1104
    %v4221 = vunpack.c.l.b16 %v1105
    %v4222 = vunpack.c.h.b16 %v1105
    %v4223 = vunpack.c.l.b16 %v1106
    %v4224 = vunpack.c.h.b16 %v1106
    %v4225 = vunpack.c.l.b16 %v1107
    %v4226 = vunpack.c.h.b16 %v1107
    %v4227 = vunpack.c.l.b16 %v1108
    %v4228 = vunpack.c.h.b16 %v1108
    %v4229 = vunpack.c.l.b16 %v1109
    %v4230 = vunpack.c.h.b16 %v1109
    %v4231 = vunpack.c.l.b16 %v1110
    %v4232 = vunpack.c.h.b16 %v1110
    %v4233 = vunpack.c.l.b16 %v1111
    %v4234 = vunpack.c.h.b16 %v1111
    %v4235 = vunpack.c.l.b16 %v1112
    %v4236 = vunpack.c.h.b16 %v1112
    %v4237 = vunpack.c.l.b16 %v1113
    %v4238 = vunpack.c.h.b16 %v1113
    %v4239 = vunpack.c.l.b16 %v1114
    %v4240 = vunpack.c.h.b16 %v1114
    %v4241 = vunpack.c.l.b16 %v1115
    %v4242 = vunpack.c.h.b16 %v1115
    %v4243 = vunpack.c.l.b16 %v1116
    %v4244 = vunpack.c.h.b16 %v1116
    %v4245 = vunpack.c.l.b16 %v1117
    %v4246 = vunpack.c.h.b16 %v1117
    %v4247 = vunpack.c.l.b16 %v1118
    %v4248 = vunpack.c.h.b16 %v1118
    %v4249 = vunpack.c.l.b16 %v1119
    %v4250 = vunpack.c.h.b16 %v1119
    %v4251 = vunpack.c.l.b16 %v1120
    %v4252 = vunpack.c.h.b16 %v1120
    %v4253 = vunpack.c.l.b16 %v1121
    %v4254 = vunpack.c.h.b16 %v1121
    %v4255 = vunpack.c.l.b16 %v1122
    %v4256 = vunpack.c.h.b16 %v1122
    %v4257 = vunpack.c.l.b16 %v1123
    %v4258 = vunpack.c.h.b16 %v1123
    %v4259 = vunpack.c.l.b16 %v1124
    %v4260 = vunpack.c.h.b16 %v1124
    %v4261 = vunpack.c.l.b16 %v1125
    %v4262 = vunpack.c.h.b16 %v1125
    %v4263 = vunpack.c.l.b16 %v1126
    %v4264 = vunpack.c.h.b16 %v1126
    %v4265 = vunpack.c.l.b16 %v1127
    %v4266 = vunpack.c.h.b16 %v1127
    %v4267 = vunpack.c.l.b16 %v1128
    %v4268 = vunpack.c.h.b16 %v1128
    %v4269 = vunpack.c.l.b16 %v1129
    %v4270 = vunpack.c.h.b16 %v1129
    %v4271 = vunpack.c.l.b16 %v1130
    %v4272 = vunpack.c.h.b16 %v1130
    %v4273 = vunpack.c.l.b16 %v1131
    %v4274 = vunpack.c.h.b16 %v1131
    %v4275 = vunpack.c.l.b16 %v1132
    %v4276 = vunpack.c.h.b16 %v1132
    %v4277 = vunpack.c.l.b16 %v1133
    %v4278 = vunpack.c.h.b16 %v1133
    %v4279 = vunpack.c.l.b16 %v1134
    %v4280 = vunpack.c.h.b16 %v1134
    %v4281 = vunpack.c.l.b16 %v1135
    %v4282 = vunpack.c.h.b16 %v1135
    %v4283 = vunpack.c.l.b16 %v1136
    %v4284 = vunpack.c.h.b16 %v1136
    %v4285 = vunpack.c.l.b16 %v1137
    %v4286 = vunpack.c.h.b16 %v1137
    %v4287 = vunpack.c.l.b16 %v1138
    %v4288 = vunpack.c.h.b16 %v1138
    %v4289 = vunpack.c.l.b16 %v1139
    %v4290 = vunpack.c.h.b16 %v1139
    %v4291 = vunpack.c.l.b16 %v1140
    %v4292 = vunpack.c.h.b16 %v1140
    %v4293 = vunpack.c.l.b16 %v1141
    %v4294 = vunpack.c.h.b16 %v1141
    %v4295 = vunpack.c.l.b16 %v1142
    %v4296 = vunpack.c.h.b16 %v1142
    %v4297 = vunpack.c.l.b16 %v1143
    %v4298 = vunpack.c.h.b16 %v1143
    %v4299 = vunpack.c.l.b16 %v1144
    %v4300 = vunpack.c.h.b16 %v1144
    %v4301 = vpack.c.b16 %v2269, %v2253
    %v4302 = vpack.c.b16 %v2270, %v2254
    %v4303 = vpack.c.b16 %v2271, %v2255
    %v4304 = vpack.c.b16 %v2272, %v2256
    %v4305 = vpack.c.b16 %v2273, %v2257
    %v4306 = vpack.c.b16 %v2274, %v2258
    %v4307 = vpack.c.b16 %v2275, %v2259
    %v4308 = vpack.c.b16 %v2276, %v2260
    %v4309 = vpack.c.b16 %v2277, %v2261
    %v4310 = vpack.c.b16 %v2278, %v2262
    %v4311 = vpack.c.b16 %v2279, %v2263
    %v4312 = vpack.c.b16 %v2280, %v2264
    %v4313 = vpack.c.b16 %v2281, %v2265
    %v4314 = vpack.c.b16 %v2282, %v2266
    %v4315 = vpack.c.b16 %v2283, %v2267
    %v4316 = vpack.c.b16 %v2284, %v2268
    %v4317 = vpack.c.b16 %v2301, %v2285
    %v4318 = vpack.c.b16 %v2302, %v2286
    %v4319 = vpack.c.b16 %v2303, %v2287
    %v4320 = vpack.c.b16 %v2304, %v2288
    %v4321 = vpack.c.b16 %v2305, %v2289
    %v4322 = vpack.c.b16 %v2306, %v2290
    %v4323 = vpack.c.b16 %v2307, %v2291
    %v4324 = vpack.c.b16 %v2308, %v2292
    %v4325 = vpack.c.b16 %v2309, %v2293
    %v4326 = vpack.c.b16 %v2310, %v2294
    %v4327 = vpack.c.b16 %v2311, %v2295
    %v4328 = vpack.c.b16 %v2312, %v2296
    %v4329 = vpack.c.b16 %v2313, %v2297
    %v4330 = vpack.c.b16 %v2314, %v2298
    %v4331 = vpack.c.b16 %v2315, %v2299
    %v4332 = vpack.c.b16 %v2316, %v2300
    %v4333 = vpack.c.b16 %v2333, %v2317
    %v4334 = vpack.c.b16 %v2334, %v2318
    %v4335 = vpack.c.b16 %v2335, %v2319
    %v4336 = vpack.c.b16 %v2336, %v2320
    %v4337 = vpack.c.b16 %v2337, %v2321
    %v4338 = vpack.c.b16 %v2338, %v2322
    %v4339 = vpack.c.b16 %v2339, %v2323
    %v4340 = vpack.c.b16 %v2340, %v2324
    %v4341 = vpack.c.b16 %v2341, %v2325
    %v4342 = vpack.c.b16 %v2342, %v2326
    %v4343 = vpack.c.b16 %v2343, %v2327
    %v4344 = vpack.c.b16 %v2344, %v2328
    %v4345 = vpack.c.b16 %v2345, %v2329
    %v4346 = vpack.c.b16 %v2346, %v2330
    %v4347 = vpack.c.b16 %v2347, %v2331
    %v4348 = vpack.c.b16 %v2348, %v2332
    %v4349 = vpack.c.b16 %v2365, %v2349
    %v4350 = vpack.c.b16 %v2366, %v2350
    %v4351 = vpack.c.b16 %v2367, %v2351
    %v4352 = vpack.c.b16 %v2368, %v2352
    %v4353 = vpack.c.b16 %v2369, %v2353
    %v4354 = vpack.c.b16 %v2370, %v2354
    %v4355 = vpack.c.b16 %v2371, %v2355
    %v4356 = vpack.c.b16 %v2372, %v2356
    %v4357 = vpack.c.b16 %v2373, %v2357
    %v4358 = vpack.c.b16 %v2374, %v2358
    %v4359 = vpack.c.b16 %v2375, %v2359
    %v4360 = vpack.c.b16 %v2376, %v2360
    %v4361 = vpack.c.b16 %v2377, %v2361
    %v4362 = vpack.c.b16 %v2378, %v2362
    %v4363 = vpack.c.b16 %v2379, %v2363
    %v4364 = vpack.c.b16 %v2380, %v2364
    %v4365 = vpack.c.b16 %v2397, %v2381
    %v4366 = vpack.c.b16 %v2398, %v2382
    %v4367 = vpack.c.b16 %v2399, %v2383
    %v4368 = vpack.c.b16 %v2400, %v2384
    %v4369 = vpack.c.b16 %v2401, %v2385
    %v4370 = vpack.c.b16 %v2402, %v2386
    %v4371 = vpack.c.b16 %v2403, %v2387
    %v4372 = vpack.c.b16 %v2404, %v2388
    %v4373 = vpack.c.b16 %v2405, %v2389
    %v4374 = vpack.c.b16 %v2406, %v2390
    %v4375 = vpack.c.b16 %v2407, %v2391
    %v4376 = vpack.c.b16 %v2408, %v2392
    %v4377 = vpack.c.b16 %v2409, %v2393
    %v4378 = vpack.c.b16 %v2410, %v2394
    %v4379 = vpack.c.b16 %v2411, %v2395
    %v4380 = vpack.c.b16 %v2412, %v2396
    %v4381 = vpack.c.b16 %v2429, %v2413
    %v4382 = vpack.c.b16 %v2430, %v2414
    %v4383 = vpack.c.b16 %v2431, %v2415
    %v4384 = vpack.c.b16 %v2432, %v2416
    %v4385 = vpack.c.b16 %v2433, %v2417
    %v4386 = vpack.c.b16 %v2434, %v2418
    %v4387 = vpack.c.b16 %v2435, %v2419
    %v4388 = vpack.c.b16 %v2436, %v2420
    %v4389 = vpack.c.b16 %v2437, %v2421
    %v4390 = vpack.c.b16 %v2438, %v2422
    %v4391 = vpack.c.b16 %v2439, %v2423
    %v4392 = vpack.c.b16 %v2440, %v2424
    %v4393 = vpack.c.b16 %v2441, %v2425
    %v4394 = vpack.c.b16 %v2442, %v2426
    %v4395 = vpack.c.b16 %v2443, %v2427
    %v4396 = vpack.c.b16 %v2444, %v2428
    %v4397 = vpack.c.b16 %v2461, %v2445
    %v4398 = vpack.c.b16 %v2462, %v2446
    %v4399 = vpack.c.b16 %v2463, %v2447
    %v4400 = vpack.c.b16 %v2464, %v2448
    %v4401 = vpack.c.b16 %v2465, %v2449
    %v4402 = vpack.c.b16 %v2466, %v2450
    %v4403 = vpack.c.b16 %v2467, %v2451
    %v4404 = vpack.c.b16 %v2468, %v2452
    %v4405 = vpack.c.b16 %v2469, %v2453
    %v4406 = vpack.c.b16 %v2470, %v2454
    %v4407 = vpack.c.b16 %v2471, %v2455
    %v4408 = vpack.c.b16 %v2472, %v2456
    %v4409 = vpack.c.b16 %v2473, %v2457
    %v4410 = vpack.c.b16 %v2474, %v2458
    %v4411 = vpack.c.b16 %v2475, %v2459
    %v4412 = vpack.c.b16 %v2476, %v2460
    %v4413 = vpack.c.b16 %v2493, %v2477
    %v4414 = vpack.c.b16 %v2494, %v2478
    %v4415 = vpack.c.b16 %v2495, %v2479
    %v4416 = vpack.c.b16 %v2496, %v2480
    %v4417 = vpack.c.b16 %v2497, %v2481
    %v4418 = vpack.c.b16 %v2498, %v2482
    %v4419 = vpack.c.b16 %v2499, %v2483
    %v4420 = vpack.c.b16 %v2500, %v2484
    %v4421 = vpack.c.b16 %v2501, %v2485
    %v4422 = vpack.c.b16 %v2502, %v2486
    %v4423 = vpack.c.b16 %v2503, %v2487
    %v4424 = vpack.c.b16 %v2504, %v2488
    %v4425 = vpack.c.b16 %v2505, %v2489
    %v4426 = vpack.c.b16 %v2506, %v2490
    %v4427 = vpack.c.b16 %v2507, %v2491
    %v4428 = vpack.c.b16 %v2508, %v2492
    %v4429 = vpack.c.b16 %v2525, %v2509
    %v4430 = vpack.c.b16 %v2526, %v2510
    %v4431 = vpack.c.b16 %v2527, %v2511
    %v4432 = vpack.c.b16 %v2528, %v2512
    %v4433 = vpack.c.b16 %v2529, %v2513
    %v4434 = vpack.c.b16 %v2530, %v2514
    %v4435 = vpack.c.b16 %v2531, %v2515
    %v4436 = vpack.c.b16 %v2532, %v2516
    %v4437 = vpack.c.b16 %v2533, %v2517
    %v4438 = vpack.c.b16 %v2534, %v2518
    %v4439 = vpack.c.b16 %v2535, %v2519
    %v4440 = vpack.c.b16 %v2536, %v2520
    %v4441 = vpack.c.b16 %v2537, %v2521
    %v4442 = vpack.c.b16 %v2538, %v2522
    %v4443 = vpack.c.b16 %v2539, %v2523
    %v4444 = vpack.c.b16 %v2540, %v2524
    %v4445 = vpack.c.b16 %v2557, %v2541
    %v4446 = vpack.c.b16 %v2558, %v2542
    %v4447 = vpack.c.b16 %v2559, %v2543
    %v4448 = vpack.c.b16 %v2560, %v2544
    %v4449 = vpack.c.b16 %v2561, %v2545
    %v4450 = vpack.c.b16 %v2562, %v2546
    %v4451 = vpack.c.b16 %v2563, %v2547
    %v4452 = vpack.c.b16 %v2564, %v2548
    %v4453 = vpack.c.b16 %v2565, %v2549
    %v4454 = vpack.c.b16 %v2566, %v2550
    %v4455 = vpack.c.b16 %v2567, %v2551
    %v4456 = vpack.c.b16 %v2568, %v2552
    %v4457 = vpack.c.b16 %v2569, %v2553
    %v4458 = vpack.c.b16 %v2570, %v2554
    %v4459 = vpack.c.b16 %v2571, %v2555
    %v4460 = vpack.c.b16 %v2572, %v2556
    %v4461 = vpack.c.b16 %v2589, %v2573
    %v4462 = vpack.c.b16 %v2590, %v2574
    %v4463 = vpack.c.b16 %v2591, %v2575
    %v4464 = vpack.c.b16 %v2592, %v2576
    %v4465 = vpack.c.b16 %v2593, %v2577
    %v4466 = vpack.c.b16 %v2594, %v2578
    %v4467 = vpack.c.b16 %v2595, %v2579
    %v4468 = vpack.c.b16 %v2596, %v2580
    %v4469 = vpack.c.b16 %v2597, %v2581
    %v4470 = vpack.c.b16 %v2598, %v2582
    %v4471 = vpack.c.b16 %v2599, %v2583
    %v4472 = vpack.c.b16 %v2600, %v2584
    %v4473 = vpack.c.b16 %v2601, %v2585
    %v4474 = vpack.c.b16 %v2602, %v2586
    %v4475 = vpack.c.b16 %v2603, %v2587
    %v4476 = vpack.c.b16 %v2604, %v2588
    %v4477 = vpack.c.b16 %v2621, %v2605
    %v4478 = vpack.c.b16 %v2622, %v2606
    %v4479 = vpack.c.b16 %v2623, %v2607
    %v4480 = vpack.c.b16 %v2624, %v2608
    %v4481 = vpack.c.b16 %v2625, %v2609
    %v4482 = vpack.c.b16 %v2626, %v2610
    %v4483 = vpack.c.b16 %v2627, %v2611
    %v4484 = vpack.c.b16 %v2628, %v2612
    %v4485 = vpack.c.b16 %v2629, %v2613
    %v4486 = vpack.c.b16 %v2630, %v2614
    %v4487 = vpack.c.b16 %v2631, %v2615
    %v4488 = vpack.c.b16 %v2632, %v2616
    %v4489 = vpack.c.b16 %v2633, %v2617
    %v4490 = vpack.c.b16 %v2634, %v2618
    %v4491 = vpack.c.b16 %v2635, %v2619
    %v4492 = vpack.c.b16 %v2636, %v2620
    %v4493 = vpack.c.b16 %v2653, %v2637
    %v4494 = vpack.c.b16 %v2654, %v2638
    %v4495 = vpack.c.b16 %v2655, %v2639
    %v4496 = vpack.c.b16 %v2656, %v2640
    %v4497 = vpack.c.b16 %v2657, %v2641
    %v4498 = vpack.c.b16 %v2658, %v2642
    %v4499 = vpack.c.b16 %v2659, %v2643
    %v4500 = vpack.c.b16 %v2660, %v2644
    %v4501 = vpack.c.b16 %v2661, %v2645
    %v4502 = vpack.c.b16 %v2662, %v2646
    %v4503 = vpack.c.b16 %v2663, %v2647
    %v4504 = vpack.c.b16 %v2664, %v2648
    %v4505 = vpack.c.b16 %v2665, %v2649
    %v4506 = vpack.c.b16 %v2666, %v2650
    %v4507 = vpack.c.b16 %v2667, %v2651
    %v4508 = vpack.c.b16 %v2668, %v2652
    %v4509 = vpack.c.b16 %v2685, %v2669
    %v4510 = vpack.c.b16 %v2686, %v2670
    %v4511 = vpack.c.b16 %v2687, %v2671
    %v4512 = vpack.c.b16 %v2688, %v2672
    %v4513 = vpack.c.b16 %v2689, %v2673
    %v4514 = vpack.c.b16 %v2690, %v2674
    %v4515 = vpack.c.b16 %v2691, %v2675
    %v4516 = vpack.c.b16 %v2692, %v2676
    %v4517 = vpack.c.b16 %v2693, %v2677
    %v4518 = vpack.c.b16 %v2694, %v2678
    %v4519 = vpack.c.b16 %v2695, %v2679
    %v4520 = vpack.c.b16 %v2696, %v2680
    %v4521 = vpack.c.b16 %v2697, %v2681
    %v4522 = vpack.c.b16 %v2698, %v2682
    %v4523 = vpack.c.b16 %v2699, %v2683
    %v4524 = vpack.c.b16 %v2700, %v2684
    %v4525 = vpack.c.b16 %v2717, %v2701
    %v4526 = vpack.c.b16 %v2718, %v2702
    %v4527 = vpack.c.b16 %v2719, %v2703
    %v4528 = vpack.c.b16 %v2720, %v2704
    %v4529 = vpack.c.b16 %v2721, %v2705
    %v4530 = vpack.c.b16 %v2722, %v2706
    %v4531 = vpack.c.b16 %v2723, %v2707
    %v4532 = vpack.c.b16 %v2724, %v2708
    %v4533 = vpack.c.b16 %v2725, %v2709
    %v4534 = vpack.c.b16 %v2726, %v2710
    %v4535 = vpack.c.b16 %v2727, %v2711
    %v4536 = vpack.c.b16 %v2728, %v2712
    %v4537 = vpack.c.b16 %v2729, %v2713
    %v4538 = vpack.c.b16 %v2730, %v2714
    %v4539 = vpack.c.b16 %v2731, %v2715
    %v4540 = vpack.c.b16 %v2732, %v2716
    %v4541 = vpack.c.b16 %v2749, %v2733
    %v4542 = vpack.c.b16 %v2750, %v2734
    %v4543 = vpack.c.b16 %v2751, %v2735
    %v4544 = vpack.c.b16 %v2752, %v2736
    %v4545 = vpack.c.b16 %v2753, %v2737
    %v4546 = vpack.c.b16 %v2754, %v2738
    %v4547 = vpack.c.b16 %v2755, %v2739
    %v4548 = vpack.c.b16 %v2756, %v2740
    %v4549 = vpack.c.b16 %v2757, %v2741
    %v4550 = vpack.c.b16 %v2758, %v2742
    %v4551 = vpack.c.b16 %v2759, %v2743
    %v4552 = vpack.c.b16 %v2760, %v2744
    %v4553 = vpack.c.b16 %v2761, %v2745
    %v4554 = vpack.c.b16 %v2762, %v2746
    %v4555 = vpack.c.b16 %v2763, %v2747
    %v4556 = vpack.c.b16 %v2764, %v2748
    %v4557 = vpack.c.b16 %v2781, %v2765
    %v4558 = vpack.c.b16 %v2782, %v2766
    %v4559 = vpack.c.b16 %v2783, %v2767
    %v4560 = vpack.c.b16 %v2784, %v2768
    %v4561 = vpack.c.b16 %v2785, %v2769
    %v4562 = vpack.c.b16 %v2786, %v2770
    %v4563 = vpack.c.b16 %v2787, %v2771
    %v4564 = vpack.c.b16 %v2788, %v2772
    %v4565 = vpack.c.b16 %v2789, %v2773
    %v4566 = vpack.c.b16 %v2790, %v2774
    %v4567 = vpack.c.b16 %v2791, %v2775
    %v4568 = vpack.c.b16 %v2792, %v2776
    %v4569 = vpack.c.b16 %v2793, %v2777
    %v4570 = vpack.c.b16 %v2794, %v2778
    %v4571 = vpack.c.b16 %v2795, %v2779
    %v4572 = vpack.c.b16 %v2796, %v2780
    %v4573 = vpack.c.b16 %v2813, %v2797
    %v4574 = vpack.c.b16 %v2814, %v2798
    %v4575 = vpack.c.b16 %v2815, %v2799
    %v4576 = vpack.c.b16 %v2816, %v2800
    %v4577 = vpack.c.b16 %v2817, %v2801
    %v4578 = vpack.c.b16 %v2818, %v2802
    %v4579 = vpack.c.b16 %v2819, %v2803
    %v4580 = vpack.c.b16 %v2820, %v2804
    %v4581 = vpack.c.b16 %v2821, %v2805
    %v4582 = vpack.c.b16 %v2822, %v2806
    %v4583 = vpack.c.b16 %v2823, %v2807
    %v4584 = vpack.c.b16 %v2824, %v2808
    %v4585 = vpack.c.b16 %v2825, %v2809
    %v4586 = vpack.c.b16 %v2826, %v2810
    %v4587 = vpack.c.b16 %v2827, %v2811
    %v4588 = vpack.c.b16 %v2828, %v2812
    %v4589 = vpack.c.b16 %v2845, %v2829
    %v4590 = vpack.c.b16 %v2846, %v2830
    %v4591 = vpack.c.b16 %v2847, %v2831
    %v4592 = vpack.c.b16 %v2848, %v2832
    %v4593 = vpack.c.b16 %v2849, %v2833
    %v4594 = vpack.c.b16 %v2850, %v2834
    %v4595 = vpack.c.b16 %v2851, %v2835
    %v4596 = vpack.c.b16 %v2852, %v2836
    %v4597 = vpack.c.b16 %v2853, %v2837
    %v4598 = vpack.c.b16 %v2854, %v2838
    %v4599 = vpack.c.b16 %v2855, %v2839
    %v4600 = vpack.c.b16 %v2856, %v2840
    %v4601 = vpack.c.b16 %v2857, %v2841
    %v4602 = vpack.c.b16 %v2858, %v2842
    %v4603 = vpack.c.b16 %v2859, %v2843
    %v4604 = vpack.c.b16 %v2860, %v2844
    %v4605 = vpack.c.b16 %v2877, %v2861
    %v4606 = vpack.c.b16 %v2878, %v2862
    %v4607 = vpack.c.b16 %v2879, %v2863
    %v4608 = vpack.c.b16 %v2880, %v2864
    %v4609 = vpack.c.b16 %v2881, %v2865
    %v4610 = vpack.c.b16 %v2882, %v2866
    %v4611 = vpack.c.b16 %v2883, %v2867
    %v4612 = vpack.c.b16 %v2884, %v2868
    %v4613 = vpack.c.b16 %v2885, %v2869
    %v4614 = vpack.c.b16 %v2886, %v2870
    %v4615 = vpack.c.b16 %v2887, %v2871
    %v4616 = vpack.c.b16 %v2888, %v2872
    %v4617 = vpack.c.b16 %v2889, %v2873
    %v4618 = vpack.c.b16 %v2890, %v2874
    %v4619 = vpack.c.b16 %v2891, %v2875
    %v4620 = vpack.c.b16 %v2892, %v2876
    %v4621 = vpack.c.b16 %v2909, %v2893
    %v4622 = vpack.c.b16 %v2910, %v2894
    %v4623 = vpack.c.b16 %v2911, %v2895
    %v4624 = vpack.c.b16 %v2912, %v2896
    %v4625 = vpack.c.b16 %v2913, %v2897
    %v4626 = vpack.c.b16 %v2914, %v2898
    %v4627 = vpack.c.b16 %v2915, %v2899
    %v4628 = vpack.c.b16 %v2916, %v2900
    %v4629 = vpack.c.b16 %v2917, %v2901
    %v4630 = vpack.c.b16 %v2918, %v2902
    %v4631 = vpack.c.b16 %v2919, %v2903
    %v4632 = vpack.c.b16 %v2920, %v2904
    %v4633 = vpack.c.b16 %v2921, %v2905
    %v4634 = vpack.c.b16 %v2922, %v2906
    %v4635 = vpack.c.b16 %v2923, %v2907
    %v4636 = vpack.c.b16 %v2924, %v2908
    %v4637 = vpack.c.b16 %v2941, %v2925
    %v4638 = vpack.c.b16 %v2942, %v2926
    %v4639 = vpack.c.b16 %v2943, %v2927
    %v4640 = vpack.c.b16 %v2944, %v2928
    %v4641 = vpack.c.b16 %v2945, %v2929
    %v4642 = vpack.c.b16 %v2946, %v2930
    %v4643 = vpack.c.b16 %v2947, %v2931
    %v4644 = vpack.c.b16 %v2948, %v2932
    %v4645 = vpack.c.b16 %v2949, %v2933
    %v4646 = vpack.c.b16 %v2950, %v2934
    %v4647 = vpack.c.b16 %v2951, %v2935
    %v4648 = vpack.c.b16 %v2952, %v2936
    %v4649 = vpack.c.b16 %v2953, %v2937
    %v4650 = vpack.c.b16 %v2954, %v2938
    %v4651 = vpack.c.b16 %v2955, %v2939
    %v4652 = vpack.c.b16 %v2956, %v2940
    %v4653 = vpack.c.b16 %v2973, %v2957
    %v4654 = vpack.c.b16 %v2974, %v2958
    %v4655 = vpack.c.b16 %v2975, %v2959
    %v4656 = vpack.c.b16 %v2976, %v2960
    %v4657 = vpack.c.b16 %v2977, %v2961
    %v4658 = vpack.c.b16 %v2978, %v2962
    %v4659 = vpack.c.b16 %v2979, %v2963
    %v4660 = vpack.c.b16 %v2980, %v2964
    %v4661 = vpack.c.b16 %v2981, %v2965
    %v4662 = vpack.c.b16 %v2982, %v2966
    %v4663 = vpack.c.b16 %v2983, %v2967
    %v4664 = vpack.c.b16 %v2984, %v2968
    %v4665 = vpack.c.b16 %v2985, %v2969
    %v4666 = vpack.c.b16 %v2986, %v2970
    %v4667 = vpack.c.b16 %v2987, %v2971
    %v4668 = vpack.c.b16 %v2988, %v2972
    %v4669 = vpack.c.b16 %v3005, %v2989
    %v4670 = vpack.c.b16 %v3006, %v2990
    %v4671 = vpack.c.b16 %v3007, %v2991
    %v4672 = vpack.c.b16 %v3008, %v2992
    %v4673 = vpack.c.b16 %v3009, %v2993
    %v4674 = vpack.c.b16 %v3010, %v2994
    %v4675 = vpack.c.b16 %v3011, %v2995
    %v4676 = vpack.c.b16 %v3012, %v2996
    %v4677 = vpack.c.b16 %v3013, %v2997
    %v4678 = vpack.c.b16 %v3014, %v2998
    %v4679 = vpack.c.b16 %v3015, %v2999
    %v4680 = vpack.c.b16 %v3016, %v3000
    %v4681 = vpack.c.b16 %v3017, %v3001
    %v4682 = vpack.c.b16 %v3018, %v3002
    %v4683 = vpack.c.b16 %v3019, %v3003
    %v4684 = vpack.c.b16 %v3020, %v3004
    %v4685 = vpack.c.b16 %v3037, %v3021
    %v4686 = vpack.c.b16 %v3038, %v3022
    %v4687 = vpack.c.b16 %v3039, %v3023
    %v4688 = vpack.c.b16 %v3040, %v3024
    %v4689 = vpack.c.b16 %v3041, %v3025
    %v4690 = vpack.c.b16 %v3042, %v3026
    %v4691 = vpack.c.b16 %v3043, %v3027
    %v4692 = vpack.c.b16 %v3044, %v3028
    %v4693 = vpack.c.b16 %v3045, %v3029
    %v4694 = vpack.c.b16 %v3046, %v3030
    %v4695 = vpack.c.b16 %v3047, %v3031
    %v4696 = vpack.c.b16 %v3048, %v3032
    %v4697 = vpack.c.b16 %v3049, %v3033
    %v4698 = vpack.c.b16 %v3050, %v3034
    %v4699 = vpack.c.b16 %v3051, %v3035
    %v4700 = vpack.c.b16 %v3052, %v3036
    %v4701 = vpack.c.b16 %v3069, %v3053
    %v4702 = vpack.c.b16 %v3070, %v3054
    %v4703 = vpack.c.b16 %v3071, %v3055
    %v4704 = vpack.c.b16 %v3072, %v3056
    %v4705 = vpack.c.b16 %v3073, %v3057
    %v4706 = vpack.c.b16 %v3074, %v3058
    %v4707 = vpack.c.b16 %v3075, %v3059
    %v4708 = vpack.c.b16 %v3076, %v3060
    %v4709 = vpack.c.b16 %v3077, %v3061
    %v4710 = vpack.c.b16 %v3078, %v3062
    %v4711 = vpack.c.b16 %v3079, %v3063
    %v4712 = vpack.c.b16 %v3080, %v3064
    %v4713 = vpack.c.b16 %v3081, %v3065
    %v4714 = vpack.c.b16 %v3082, %v3066
    %v4715 = vpack.c.b16 %v3083, %v3067
    %v4716 = vpack.c.b16 %v3084, %v3068
    %v4717 = vpack.c.b16 %v3101, %v3085
    %v4718 = vpack.c.b16 %v3102, %v3086
    %v4719 = vpack.c.b16 %v3103, %v3087
    %v4720 = vpack.c.b16 %v3104, %v3088
    %v4721 = vpack.c.b16 %v3105, %v3089
    %v4722 = vpack.c.b16 %v3106, %v3090
    %v4723 = vpack.c.b16 %v3107, %v3091
    %v4724 = vpack.c.b16 %v3108, %v3092
    %v4725 = vpack.c.b16 %v3109, %v3093
    %v4726 = vpack.c.b16 %v3110, %v3094
    %v4727 = vpack.c.b16 %v3111, %v3095
    %v4728 = vpack.c.b16 %v3112, %v3096
    %v4729 = vpack.c.b16 %v3113, %v3097
    %v4730 = vpack.c.b16 %v3114, %v3098
    %v4731 = vpack.c.b16 %v3115, %v3099
    %v4732 = vpack.c.b16 %v3116, %v3100
    %v4733 = vpack.c.b16 %v3133, %v3117
    %v4734 = vpack.c.b16 %v3134, %v3118
    %v4735 = vpack.c.b16 %v3135, %v3119
    %v4736 = vpack.c.b16 %v3136, %v3120
    %v4737 = vpack.c.b16 %v3137, %v3121
    %v4738 = vpack.c.b16 %v3138, %v3122
    %v4739 = vpack.c.b16 %v3139, %v3123
    %v4740 = vpack.c.b16 %v3140, %v3124
    %v4741 = vpack.c.b16 %v3141, %v3125
    %v4742 = vpack.c.b16 %v3142, %v3126
    %v4743 = vpack.c.b16 %v3143, %v3127
    %v4744 = vpack.c.b16 %v3144, %v3128
    %v4745 = vpack.c.b16 %v3145, %v3129
    %v4746 = vpack.c.b16 %v3146, %v3130
    %v4747 = vpack.c.b16 %v3147, %v3131
    %v4748 = vpack.c.b16 %v3148, %v3132
    %v4749 = vpack.c.b16 %v3165, %v3149
    %v4750 = vpack.c.b16 %v3166, %v3150
    %v4751 = vpack.c.b16 %v3167, %v3151
    %v4752 = vpack.c.b16 %v3168, %v3152
    %v4753 = vpack.c.b16 %v3169, %v3153
    %v4754 = vpack.c.b16 %v3170, %v3154
    %v4755 = vpack.c.b16 %v3171, %v3155
    %v4756 = vpack.c.b16 %v3172, %v3156
    %v4757 = vpack.c.b16 %v3173, %v3157
    %v4758 = vpack.c.b16 %v3174, %v3158
    %v4759 = vpack.c.b16 %v3175, %v3159
    %v4760 = vpack.c.b16 %v3176, %v3160
    %v4761 = vpack.c.b16 %v3177, %v3161
    %v4762 = vpack.c.b16 %v3178, %v3162
    %v4763 = vpack.c.b16 %v3179, %v3163
    %v4764 = vpack.c.b16 %v3180, %v3164
    %v4765 = vpack.c.b16 %v3197, %v3181
    %v4766 = vpack.c.b16 %v3198, %v3182
    %v4767 = vpack.c.b16 %v3199, %v3183
    %v4768 = vpack.c.b16 %v3200, %v3184
    %v4769 = vpack.c.b16 %v3201, %v3185
    %v4770 = vpack.c.b16 %v3202, %v3186
    %v4771 = vpack.c.b16 %v3203, %v3187
    %v4772 = vpack.c.b16 %v3204, %v3188
    %v4773 = vpack.c.b16 %v3205, %v3189
    %v4774 = vpack.c.b16 %v3206, %v3190
    %v4775 = vpack.c.b16 %v3207, %v3191
    %v4776 = vpack.c.b16 %v3208, %v3192
    %v4777 = vpack.c.b16 %v3209, %v3193
    %v4778 = vpack.c.b16 %v3210, %v3194
    %v4779 = vpack.c.b16 %v3211, %v3195
    %v4780 = vpack.c.b16 %v3212, %v3196
    %v4781 = vpack.c.b16 %v3229, %v3213
    %v4782 = vpack.c.b16 %v3230, %v3214
    %v4783 = vpack.c.b16 %v3231, %v3215
    %v4784 = vpack.c.b16 %v3232, %v3216
    %v4785 = vpack.c.b16 %v3233, %v3217
    %v4786 = vpack.c.b16 %v3234, %v3218
    %v4787 = vpack.c.b16 %v3235, %v3219
    %v4788 = vpack.c.b16 %v3236, %v3220
    %v4789 = vpack.c.b16 %v3237, %v3221
    %v4790 = vpack.c.b16 %v3238, %v3222
    %v4791 = vpack.c.b16 %v3239, %v3223
    %v4792 = vpack.c.b16 %v3240, %v3224
    %v4793 = vpack.c.b16 %v3241, %v3225
    %v4794 = vpack.c.b16 %v3242, %v3226
    %v4795 = vpack.c.b16 %v3243, %v3227
    %v4796 = vpack.c.b16 %v3244, %v3228
    %v4797 = vpack.c.b16 %v3261, %v3245
    %v4798 = vpack.c.b16 %v3262, %v3246
    %v4799 = vpack.c.b16 %v3263, %v3247
    %v4800 = vpack.c.b16 %v3264, %v3248
    %v4801 = vpack.c.b16 %v3265, %v3249
    %v4802 = vpack.c.b16 %v3266, %v3250
    %v4803 = vpack.c.b16 %v3267, %v3251
    %v4804 = vpack.c.b16 %v3268, %v3252
    %v4805 = vpack.c.b16 %v3269, %v3253
    %v4806 = vpack.c.b16 %v3270, %v3254
    %v4807 = vpack.c.b16 %v3271, %v3255
    %v4808 = vpack.c.b16 %v3272, %v3256
    %v4809 = vpack.c.b16 %v3273, %v3257
    %v4810 = vpack.c.b16 %v3274, %v3258
    %v4811 = vpack.c.b16 %v3275, %v3259
    %v4812 = vpack.c.b16 %v3276, %v3260
    %v4813 = vpack.c.b16 %v3293, %v3277
    %v4814 = vpack.c.b16 %v3294, %v3278
    %v4815 = vpack.c.b16 %v3295, %v3279
    %v4816 = vpack.c.b16 %v3296, %v3280
    %v4817 = vpack.c.b16 %v3297, %v3281
    %v4818 = vpack.c.b16 %v3298, %v3282
    %v4819 = vpack.c.b16 %v3299, %v3283
    %v4820 = vpack.c.b16 %v3300, %v3284
    %v4821 = vpack.c.b16 %v3301, %v3285
    %v4822 = vpack.c.b16 %v3302, %v3286
    %v4823 = vpack.c.b16 %v3303, %v3287
    %v4824 = vpack.c.b16 %v3304, %v3288
    %v4825 = vpack.c.b16 %v3305, %v3289
    %v4826 = vpack.c.b16 %v3306, %v3290
    %v4827 = vpack.c.b16 %v3307, %v3291
    %v4828 = vpack.c.b16 %v3308, %v3292
    %v4829 = vpack.c.b16 %v3325, %v3309
    %v4830 = vpack.c.b16 %v3326, %v3310
    %v4831 = vpack.c.b16 %v3327, %v3311
    %v4832 = vpack.c.b16 %v3328, %v3312
    %v4833 = vpack.c.b16 %v3329, %v3313
    %v4834 = vpack.c.b16 %v3330, %v3314
    %v4835 = vpack.c.b16 %v3331, %v3315
    %v4836 = vpack.c.b16 %v3332, %v3316
    %v4837 = vpack.c.b16 %v3333, %v3317
    %v4838 = vpack.c.b16 %v3334, %v3318
    %v4839 = vpack.c.b16 %v3335, %v3319
    %v4840 = vpack.c.b16 %v3336, %v3320
    %v4841 = vpack.c.b16 %v3337, %v3321
    %v4842 = vpack.c.b16 %v3338, %v3322
    %v4843 = vpack.c.b16 %v3339, %v3323
    %v4844 = vpack.c.b16 %v3340, %v3324
    %v4845 = vpack.c.b16 %v3357, %v3341
    %v4846 = vpack.c.b16 %v3358, %v3342
    %v4847 = vpack.c.b16 %v3359, %v3343
    %v4848 = vpack.c.b16 %v3360, %v3344
    %v4849 = vpack.c.b16 %v3361, %v3345
    %v4850 = vpack.c.b16 %v3362, %v3346
    %v4851 = vpack.c.b16 %v3363, %v3347
    %v4852 = vpack.c.b16 %v3364, %v3348
    %v4853 = vpack.c.b16 %v3365, %v3349
    %v4854 = vpack.c.b16 %v3366, %v3350
    %v4855 = vpack.c.b16 %v3367, %v3351
    %v4856 = vpack.c.b16 %v3368, %v3352
    %v4857 = vpack.c.b16 %v3369, %v3353
    %v4858 = vpack.c.b16 %v3370, %v3354
    %v4859 = vpack.c.b16 %v3371, %v3355
    %v4860 = vpack.c.b16 %v3372, %v3356
    %v4861 = vpack.c.b16 %v3389, %v3373
    %v4862 = vpack.c.b16 %v3390, %v3374
    %v4863 = vpack.c.b16 %v3391, %v3375
    %v4864 = vpack.c.b16 %v3392, %v3376
    %v4865 = vpack.c.b16 %v3393, %v3377
    %v4866 = vpack.c.b16 %v3394, %v3378
    %v4867 = vpack.c.b16 %v3395, %v3379
    %v4868 = vpack.c.b16 %v3396, %v3380
    %v4869 = vpack.c.b16 %v3397, %v3381
    %v4870 = vpack.c.b16 %v3398, %v3382
    %v4871 = vpack.c.b16 %v3399, %v3383
    %v4872 = vpack.c.b16 %v3400, %v3384
    %v4873 = vpack.c.b16 %v3401, %v3385
    %v4874 = vpack.c.b16 %v3402, %v3386
    %v4875 = vpack.c.b16 %v3403, %v3387
    %v4876 = vpack.c.b16 %v3404, %v3388
    %v4877 = vpack.c.b16 %v3421, %v3405
    %v4878 = vpack.c.b16 %v3422, %v3406
    %v4879 = vpack.c.b16 %v3423, %v3407
    %v4880 = vpack.c.b16 %v3424, %v3408
    %v4881 = vpack.c.b16 %v3425, %v3409
    %v4882 = vpack.c.b16 %v3426, %v3410
    %v4883 = vpack.c.b16 %v3427, %v3411
    %v4884 = vpack.c.b16 %v3428, %v3412
    %v4885 = vpack.c.b16 %v3429, %v3413
    %v4886 = vpack.c.b16 %v3430, %v3414
    %v4887 = vpack.c.b16 %v3431, %v3415
    %v4888 = vpack.c.b16 %v3432, %v3416
    %v4889 = vpack.c.b16 %v3433, %v3417
    %v4890 = vpack.c.b16 %v3434, %v3418
    %v4891 = vpack.c.b16 %v3435, %v3419
    %v4892 = vpack.c.b16 %v3436, %v3420
    %v4893 = vpack.c.b16 %v3453, %v3437
    %v4894 = vpack.c.b16 %v3454, %v3438
    %v4895 = vpack.c.b16 %v3455, %v3439
    %v4896 = vpack.c.b16 %v3456, %v3440
    %v4897 = vpack.c.b16 %v3457, %v3441
    %v4898 = vpack.c.b16 %v3458, %v3442
    %v4899 = vpack.c.b16 %v3459, %v3443
    %v4900 = vpack.c.b16 %v3460, %v3444
    %v4901 = vpack.c.b16 %v3461, %v3445
    %v4902 = vpack.c.b16 %v3462, %v3446
    %v4903 = vpack.c.b16 %v3463, %v3447
    %v4904 = vpack.c.b16 %v3464, %v3448
    %v4905 = vpack.c.b16 %v3465, %v3449
    %v4906 = vpack.c.b16 %v3466, %v3450
    %v4907 = vpack.c.b16 %v3467, %v3451
    %v4908 = vpack.c.b16 %v3468, %v3452
    %v4909 = vpack.c.b16 %v3485, %v3469
    %v4910 = vpack.c.b16 %v3486, %v3470
    %v4911 = vpack.c.b16 %v3487, %v3471
    %v4912 = vpack.c.b16 %v3488, %v3472
    %v4913 = vpack.c.b16 %v3489, %v3473
    %v4914 = vpack.c.b16 %v3490, %v3474
    %v4915 = vpack.c.b16 %v3491, %v3475
    %v4916 = vpack.c.b16 %v3492, %v3476
    %v4917 = vpack.c.b16 %v3493, %v3477
    %v4918 = vpack.c.b16 %v3494, %v3478
    %v4919 = vpack.c.b16 %v3495, %v3479
    %v4920 = vpack.c.b16 %v3496, %v3480
    %v4921 = vpack.c.b16 %v3497, %v3481
    %v4922 = vpack.c.b16 %v3498, %v3482
    %v4923 = vpack.c.b16 %v3499, %v3483
    %v4924 = vpack.c.b16 %v3500, %v3484
    %v4925 = vpack.c.b16 %v3517, %v3501
    %v4926 = vpack.c.b16 %v3518, %v3502
    %v4927 = vpack.c.b16 %v3519, %v3503
    %v4928 = vpack.c.b16 %v3520, %v3504
    %v4929 = vpack.c.b16 %v3521, %v3505
    %v4930 = vpack.c.b16 %v3522, %v3506
    %v4931 = vpack.c.b16 %v3523, %v3507
    %v4932 = vpack.c.b16 %v3524, %v3508
    %v4933 = vpack.c.b16 %v3525, %v3509
    %v4934 = vpack.c.b16 %v3526, %v3510
    %v4935 = vpack.c.b16 %v3527, %v3511
    %v4936 = vpack.c.b16 %v3528, %v3512
    %v4937 = vpack.c.b16 %v3529, %v3513
    %v4938 = vpack.c.b16 %v3530, %v3514
    %v4939 = vpack.c.b16 %v3531, %v3515
    %v4940 = vpack.c.b16 %v3532, %v3516
    %v4941 = vpack.c.b16 %v3549, %v3533
    %v4942 = vpack.c.b16 %v3550, %v3534
    %v4943 = vpack.c.b16 %v3551, %v3535
    %v4944 = vpack.c.b16 %v3552, %v3536
    %v4945 = vpack.c.b16 %v3553, %v3537
    %v4946 = vpack.c.b16 %v3554, %v3538
    %v4947 = vpack.c.b16 %v3555, %v3539
    %v4948 = vpack.c.b16 %v3556, %v3540
    %v4949 = vpack.c.b16 %v3557, %v3541
    %v4950 = vpack.c.b16 %v3558, %v3542
    %v4951 = vpack.c.b16 %v3559, %v3543
    %v4952 = vpack.c.b16 %v3560, %v3544
    %v4953 = vpack.c.b16 %v3561, %v3545
    %v4954 = vpack.c.b16 %v3562, %v3546
    %v4955 = vpack.c.b16 %v3563, %v3547
    %v4956 = vpack.c.b16 %v3564, %v3548
    %v4957 = vpack.c.b16 %v3581, %v3565
    %v4958 = vpack.c.b16 %v3582, %v3566
    %v4959 = vpack.c.b16 %v3583, %v3567
    %v4960 = vpack.c.b16 %v3584, %v3568
    %v4961 = vpack.c.b16 %v3585, %v3569
    %v4962 = vpack.c.b16 %v3586, %v3570
    %v4963 = vpack.c.b16 %v3587, %v3571
    %v4964 = vpack.c.b16 %v3588, %v3572
    %v4965 = vpack.c.b16 %v3589, %v3573
    %v4966 = vpack.c.b16 %v3590, %v3574
    %v4967 = vpack.c.b16 %v3591, %v3575
    %v4968 = vpack.c.b16 %v3592, %v3576
    %v4969 = vpack.c.b16 %v3593, %v3577
    %v4970 = vpack.c.b16 %v3594, %v3578
    %v4971 = vpack.c.b16 %v3595, %v3579
    %v4972 = vpack.c.b16 %v3596, %v3580
    %v4973 = vpack.c.b16 %v3613, %v3597
    %v4974 = vpack.c.b16 %v3614, %v3598
    %v4975 = vpack.c.b16 %v3615, %v3599
    %v4976 = vpack.c.b16 %v3616, %v3600
    %v4977 = vpack.c.b16 %v3617, %v3601
    %v4978 = vpack.c.b16 %v3618, %v3602
    %v4979 = vpack.c.b16 %v3619, %v3603
    %v4980 = vpack.c.b16 %v3620, %v3604
    %v4981 = vpack.c.b16 %v3621, %v3605
    %v4982 = vpack.c.b16 %v3622, %v3606
    %v4983 = vpack.c.b16 %v3623, %v3607
    %v4984 = vpack.c.b16 %v3624, %v3608
    %v4985 = vpack.c.b16 %v3625, %v3609
    %v4986 = vpack.c.b16 %v3626, %v3610
    %v4987 = vpack.c.b16 %v3627, %v3611
    %v4988 = vpack.c.b16 %v3628, %v3612
    %v4989 = vpack.c.b16 %v3645, %v3629
    %v4990 = vpack.c.b16 %v3646, %v3630
    %v4991 = vpack.c.b16 %v3647, %v3631
    %v4992 = vpack.c.b16 %v3648, %v3632
    %v4993 = vpack.c.b16 %v3649, %v3633
    %v4994 = vpack.c.b16 %v3650, %v3634
    %v4995 = vpack.c.b16 %v3651, %v3635
    %v4996 = vpack.c.b16 %v3652, %v3636
    %v4997 = vpack.c.b16 %v3653, %v3637
    %v4998 = vpack.c.b16 %v3654, %v3638
    %v4999 = vpack.c.b16 %v3655, %v3639
    %v5000 = vpack.c.b16 %v3656, %v3640
    %v5001 = vpack.c.b16 %v3657, %v3641
    %v5002 = vpack.c.b16 %v3658, %v3642
    %v5003 = vpack.c.b16 %v3659, %v3643
    %v5004 = vpack.c.b16 %v3660, %v3644
    %v5005 = vpack.c.b16 %v3677, %v3661
    %v5006 = vpack.c.b16 %v3678, %v3662
    %v5007 = vpack.c.b16 %v3679, %v3663
    %v5008 = vpack.c.b16 %v3680, %v3664
    %v5009 = vpack.c.b16 %v3681, %v3665
    %v5010 = vpack.c.b16 %v3682, %v3666
    %v5011 = vpack.c.b16 %v3683, %v3667
    %v5012 = vpack.c.b16 %v3684, %v3668
    %v5013 = vpack.c.b16 %v3685, %v3669
    %v5014 = vpack.c.b16 %v3686, %v3670
    %v5015 = vpack.c.b16 %v3687, %v3671
    %v5016 = vpack.c.b16 %v3688, %v3672
    %v5017 = vpack.c.b16 %v3689, %v3673
    %v5018 = vpack.c.b16 %v3690, %v3674
    %v5019 = vpack.c.b16 %v3691, %v3675
    %v5020 = vpack.c.b16 %v3692, %v3676
    %v5021 = vpack.c.b16 %v3709, %v3693
    %v5022 = vpack.c.b16 %v3710, %v3694
    %v5023 = vpack.c.b16 %v3711, %v3695
    %v5024 = vpack.c.b16 %v3712, %v3696
    %v5025 = vpack.c.b16 %v3713, %v3697
    %v5026 = vpack.c.b16 %v3714, %v3698
    %v5027 = vpack.c.b16 %v3715, %v3699
    %v5028 = vpack.c.b16 %v3716, %v3700
    %v5029 = vpack.c.b16 %v3717, %v3701
    %v5030 = vpack.c.b16 %v3718, %v3702
    %v5031 = vpack.c.b16 %v3719, %v3703
    %v5032 = vpack.c.b16 %v3720, %v3704
    %v5033 = vpack.c.b16 %v3721, %v3705
    %v5034 = vpack.c.b16 %v3722, %v3706
    %v5035 = vpack.c.b16 %v3723, %v3707
    %v5036 = vpack.c.b16 %v3724, %v3708
    %v5037 = vpack.c.b16 %v3741, %v3725
    %v5038 = vpack.c.b16 %v3742, %v3726
    %v5039 = vpack.c.b16 %v3743, %v3727
    %v5040 = vpack.c.b16 %v3744, %v3728
    %v5041 = vpack.c.b16 %v3745, %v3729
    %v5042 = vpack.c.b16 %v3746, %v3730
    %v5043 = vpack.c.b16 %v3747, %v3731
    %v5044 = vpack.c.b16 %v3748, %v3732
    %v5045 = vpack.c.b16 %v3749, %v3733
    %v5046 = vpack.c.b16 %v3750, %v3734
    %v5047 = vpack.c.b16 %v3751, %v3735
    %v5048 = vpack.c.b16 %v3752, %v3736
    %v5049 = vpack.c.b16 %v3753, %v3737
    %v5050 = vpack.c.b16 %v3754, %v3738
    %v5051 = vpack.c.b16 %v3755, %v3739
    %v5052 = vpack.c.b16 %v3756, %v3740
    %v5053 = vpack.c.b16 %v3773, %v3757
    %v5054 = vpack.c.b16 %v3774, %v3758
    %v5055 = vpack.c.b16 %v3775, %v3759
    %v5056 = vpack.c.b16 %v3776, %v3760
    %v5057 = vpack.c.b16 %v3777, %v3761
    %v5058 = vpack.c.b16 %v3778, %v3762
    %v5059 = vpack.c.b16 %v3779, %v3763
    %v5060 = vpack.c.b16 %v3780, %v3764
    %v5061 = vpack.c.b16 %v3781, %v3765
    %v5062 = vpack.c.b16 %v3782, %v3766
    %v5063 = vpack.c.b16 %v3783, %v3767
    %v5064 = vpack.c.b16 %v3784, %v3768
    %v5065 = vpack.c.b16 %v3785, %v3769
    %v5066 = vpack.c.b16 %v3786, %v3770
    %v5067 = vpack.c.b16 %v3787, %v3771
    %v5068 = vpack.c.b16 %v3788, %v3772
    %v5069 = vpack.c.b16 %v3805, %v3789
    %v5070 = vpack.c.b16 %v3806, %v3790
    %v5071 = vpack.c.b16 %v3807, %v3791
    %v5072 = vpack.c.b16 %v3808, %v3792
    %v5073 = vpack.c.b16 %v3809, %v3793
    %v5074 = vpack.c.b16 %v3810, %v3794
    %v5075 = vpack.c.b16 %v3811, %v3795
    %v5076 = vpack.c.b16 %v3812, %v3796
    %v5077 = vpack.c.b16 %v3813, %v3797
    %v5078 = vpack.c.b16 %v3814, %v3798
    %v5079 = vpack.c.b16 %v3815, %v3799
    %v5080 = vpack.c.b16 %v3816, %v3800
    %v5081 = vpack.c.b16 %v3817, %v3801
    %v5082 = vpack.c.b16 %v3818, %v3802
    %v5083 = vpack.c.b16 %v3819, %v3803
    %v5084 = vpack.c.b16 %v3820, %v3804
    %v5085 = vpack.c.b16 %v3837, %v3821
    %v5086 = vpack.c.b16 %v3838, %v3822
    %v5087 = vpack.c.b16 %v3839, %v3823
    %v5088 = vpack.c.b16 %v3840, %v3824
    %v5089 = vpack.c.b16 %v3841, %v3825
    %v5090 = vpack.c.b16 %v3842, %v3826
    %v5091 = vpack.c.b16 %v3843, %v3827
    %v5092 = vpack.c.b16 %v3844, %v3828
    %v5093 = vpack.c.b16 %v3845, %v3829
    %v5094 = vpack.c.b16 %v3846, %v3830
    %v5095 = vpack.c.b16 %v3847, %v3831
    %v5096 = vpack.c.b16 %v3848, %v3832
    %v5097 = vpack.c.b16 %v3849, %v3833
    %v5098 = vpack.c.b16 %v3850, %v3834
    %v5099 = vpack.c.b16 %v3851, %v3835
    %v5100 = vpack.c.b16 %v3852, %v3836
    %v5101 = vpack.c.b16 %v3869, %v3853
    %v5102 = vpack.c.b16 %v3870, %v3854
    %v5103 = vpack.c.b16 %v3871, %v3855
    %v5104 = vpack.c.b16 %v3872, %v3856
    %v5105 = vpack.c.b16 %v3873, %v3857
    %v5106 = vpack.c.b16 %v3874, %v3858
    %v5107 = vpack.c.b16 %v3875, %v3859
    %v5108 = vpack.c.b16 %v3876, %v3860
    %v5109 = vpack.c.b16 %v3877, %v3861
    %v5110 = vpack.c.b16 %v3878, %v3862
    %v5111 = vpack.c.b16 %v3879, %v3863
    %v5112 = vpack.c.b16 %v3880, %v3864
    %v5113 = vpack.c.b16 %v3881, %v3865
    %v5114 = vpack.c.b16 %v3882, %v3866
    %v5115 = vpack.c.b16 %v3883, %v3867
    %v5116 = vpack.c.b16 %v3884, %v3868
    %v5117 = vpack.c.b16 %v3901, %v3885
    %v5118 = vpack.c.b16 %v3902, %v3886
    %v5119 = vpack.c.b16 %v3903, %v3887
    %v5120 = vpack.c.b16 %v3904, %v3888
    %v5121 = vpack.c.b16 %v3905, %v3889
    %v5122 = vpack.c.b16 %v3906, %v3890
    %v5123 = vpack.c.b16 %v3907, %v3891
    %v5124 = vpack.c.b16 %v3908, %v3892
    %v5125 = vpack.c.b16 %v3909, %v3893
    %v5126 = vpack.c.b16 %v3910, %v3894
    %v5127 = vpack.c.b16 %v3911, %v3895
    %v5128 = vpack.c.b16 %v3912, %v3896
    %v5129 = vpack.c.b16 %v3913, %v3897
    %v5130 = vpack.c.b16 %v3914, %v3898
    %v5131 = vpack.c.b16 %v3915, %v3899
    %v5132 = vpack.c.b16 %v3916, %v3900
    %v5133 = vpack.c.b16 %v3933, %v3917
    %v5134 = vpack.c.b16 %v3934, %v3918
    %v5135 = vpack.c.b16 %v3935, %v3919
    %v5136 = vpack.c.b16 %v3936, %v3920
    %v5137 = vpack.c.b16 %v3937, %v3921
    %v5138 = vpack.c.b16 %v3938, %v3922
    %v5139 = vpack.c.b16 %v3939, %v3923
    %v5140 = vpack.c.b16 %v3940, %v3924
    %v5141 = vpack.c.b16 %v3941, %v3925
    %v5142 = vpack.c.b16 %v3942, %v3926
    %v5143 = vpack.c.b16 %v3943, %v3927
    %v5144 = vpack.c.b16 %v3944, %v3928
    %v5145 = vpack.c.b16 %v3945, %v3929
    %v5146 = vpack.c.b16 %v3946, %v3930
    %v5147 = vpack.c.b16 %v3947, %v3931
    %v5148 = vpack.c.b16 %v3948, %v3932
    %v5149 = vpack.c.b16 %v3965, %v3949
    %v5150 = vpack.c.b16 %v3966, %v3950
    %v5151 = vpack.c.b16 %v3967, %v3951
    %v5152 = vpack.c.b16 %v3968, %v3952
    %v5153 = vpack.c.b16 %v3969, %v3953
    %v5154 = vpack.c.b16 %v3970, %v3954
    %v5155 = vpack.c.b16 %v3971, %v3955
    %v5156 = vpack.c.b16 %v3972, %v3956
    %v5157 = vpack.c.b16 %v3973, %v3957
    %v5158 = vpack.c.b16 %v3974, %v3958
    %v5159 = vpack.c.b16 %v3975, %v3959
    %v5160 = vpack.c.b16 %v3976, %v3960
    %v5161 = vpack.c.b16 %v3977, %v3961
    %v5162 = vpack.c.b16 %v3978, %v3962
    %v5163 = vpack.c.b16 %v3979, %v3963
    %v5164 = vpack.c.b16 %v3980, %v3964
    %v5165 = vpack.c.b16 %v3997, %v3981
    %v5166 = vpack.c.b16 %v3998, %v3982
    %v5167 = vpack.c.b16 %v3999, %v3983
    %v5168 = vpack.c.b16 %v4000, %v3984
    %v5169 = vpack.c.b16 %v4001, %v3985
    %v5170 = vpack.c.b16 %v4002, %v3986
    %v5171 = vpack.c.b16 %v4003, %v3987
    %v5172 = vpack.c.b16 %v4004, %v3988
    %v5173 = vpack.c.b16 %v4005, %v3989
    %v5174 = vpack.c.b16 %v4006, %v3990
    %v5175 = vpack.c.b16 %v4007, %v3991
    %v5176 = vpack.c.b16 %v4008, %v3992
    %v5177 = vpack.c.b16 %v4009, %v3993
    %v5178 = vpack.c.b16 %v4010, %v3994
    %v5179 = vpack.c.b16 %v4011, %v3995
    %v5180 = vpack.c.b16 %v4012, %v3996
    %v5181 = vpack.c.b16 %v4029, %v4013
    %v5182 = vpack.c.b16 %v4030, %v4014
    %v5183 = vpack.c.b16 %v4031, %v4015
    %v5184 = vpack.c.b16 %v4032, %v4016
    %v5185 = vpack.c.b16 %v4033, %v4017
    %v5186 = vpack.c.b16 %v4034, %v4018
    %v5187 = vpack.c.b16 %v4035, %v4019
    %v5188 = vpack.c.b16 %v4036, %v4020
    %v5189 = vpack.c.b16 %v4037, %v4021
    %v5190 = vpack.c.b16 %v4038, %v4022
    %v5191 = vpack.c.b16 %v4039, %v4023
    %v5192 = vpack.c.b16 %v4040, %v4024
    %v5193 = vpack.c.b16 %v4041, %v4025
    %v5194 = vpack.c.b16 %v4042, %v4026
    %v5195 = vpack.c.b16 %v4043, %v4027
    %v5196 = vpack.c.b16 %v4044, %v4028
    %v5197 = vpack.c.b16 %v4061, %v4045
    %v5198 = vpack.c.b16 %v4062, %v4046
    %v5199 = vpack.c.b16 %v4063, %v4047
    %v5200 = vpack.c.b16 %v4064, %v4048
    %v5201 = vpack.c.b16 %v4065, %v4049
    %v5202 = vpack.c.b16 %v4066, %v4050
    %v5203 = vpack.c.b16 %v4067, %v4051
    %v5204 = vpack.c.b16 %v4068, %v4052
    %v5205 = vpack.c.b16 %v4069, %v4053
    %v5206 = vpack.c.b16 %v4070, %v4054
    %v5207 = vpack.c.b16 %v4071, %v4055
    %v5208 = vpack.c.b16 %v4072, %v4056
    %v5209 = vpack.c.b16 %v4073, %v4057
    %v5210 = vpack.c.b16 %v4074, %v4058
    %v5211 = vpack.c.b16 %v4075, %v4059
    %v5212 = vpack.c.b16 %v4076, %v4060
    %v5213 = vpack.c.b16 %v4093, %v4077
    %v5214 = vpack.c.b16 %v4094, %v4078
    %v5215 = vpack.c.b16 %v4095, %v4079
    %v5216 = vpack.c.b16 %v4096, %v4080
    %v5217 = vpack.c.b16 %v4097, %v4081
    %v5218 = vpack.c.b16 %v4098, %v4082
    %v5219 = vpack.c.b16 %v4099, %v4083
    %v5220 = vpack.c.b16 %v4100, %v4084
    %v5221 = vpack.c.b16 %v4101, %v4085
    %v5222 = vpack.c.b16 %v4102, %v4086
    %v5223 = vpack.c.b16 %v4103, %v4087
    %v5224 = vpack.c.b16 %v4104, %v4088
    %v5225 = vpack.c.b16 %v4105, %v4089
    %v5226 = vpack.c.b16 %v4106, %v4090
    %v5227 = vpack.c.b16 %v4107, %v4091
    %v5228 = vpack.c.b16 %v4108, %v4092
    %v5229 = vpack.c.b16 %v4125, %v4109
    %v5230 = vpack.c.b16 %v4126, %v4110
    %v5231 = vpack.c.b16 %v4127, %v4111
    %v5232 = vpack.c.b16 %v4128, %v4112
    %v5233 = vpack.c.b16 %v4129, %v4113
    %v5234 = vpack.c.b16 %v4130, %v4114
    %v5235 = vpack.c.b16 %v4131, %v4115
    %v5236 = vpack.c.b16 %v4132, %v4116
    %v5237 = vpack.c.b16 %v4133, %v4117
    %v5238 = vpack.c.b16 %v4134, %v4118
    %v5239 = vpack.c.b16 %v4135, %v4119
    %v5240 = vpack.c.b16 %v4136, %v4120
    %v5241 = vpack.c.b16 %v4137, %v4121
    %v5242 = vpack.c.b16 %v4138, %v4122
    %v5243 = vpack.c.b16 %v4139, %v4123
    %v5244 = vpack.c.b16 %v4140, %v4124
    %v5245 = vpack.c.b16 %v4157, %v4141
    %v5246 = vpack.c.b16 %v4158, %v4142
    %v5247 = vpack.c.b16 %v4159, %v4143
    %v5248 = vpack.c.b16 %v4160, %v4144
    %v5249 = vpack.c.b16 %v4161, %v4145
    %v5250 = vpack.c.b16 %v4162, %v4146
    %v5251 = vpack.c.b16 %v4163, %v4147
    %v5252 = vpack.c.b16 %v4164, %v4148
    %v5253 = vpack.c.b16 %v4165, %v4149
    %v5254 = vpack.c.b16 %v4166, %v4150
    %v5255 = vpack.c.b16 %v4167, %v4151
    %v5256 = vpack.c.b16 %v4168, %v4152
    %v5257 = vpack.c.b16 %v4169, %v4153
    %v5258 = vpack.c.b16 %v4170, %v4154
    %v5259 = vpack.c.b16 %v4171, %v4155
    %v5260 = vpack.c.b16 %v4172, %v4156
    %v5261 = vpack.c.b16 %v4189, %v4173
    %v5262 = vpack.c.b16 %v4190, %v4174
    %v5263 = vpack.c.b16 %v4191, %v4175
    %v5264 = vpack.c.b16 %v4192, %v4176
    %v5265 = vpack.c.b16 %v4193, %v4177
    %v5266 = vpack.c.b16 %v4194, %v4178
    %v5267 = vpack.c.b16 %v4195, %v4179
    %v5268 = vpack.c.b16 %v4196, %v4180
    %v5269 = vpack.c.b16 %v4197, %v4181
    %v5270 = vpack.c.b16 %v4198, %v4182
    %v5271 = vpack.c.b16 %v4199, %v4183
    %v5272 = vpack.c.b16 %v4200, %v4184
    %v5273 = vpack.c.b16 %v4201, %v4185
    %v5274 = vpack.c.b16 %v4202, %v4186
    %v5275 = vpack.c.b16 %v4203, %v4187
    %v5276 = vpack.c.b16 %v4204, %v4188
    %v5277 = vpack.c.b16 %v4221, %v4205
    %v5278 = vpack.c.b16 %v4222, %v4206
    %v5279 = vpack.c.b16 %v4223, %v4207
    %v5280 = vpack.c.b16 %v4224, %v4208
    %v5281 = vpack.c.b16 %v4225, %v4209
    %v5282 = vpack.c.b16 %v4226, %v4210
    %v5283 = vpack.c.b16 %v4227, %v4211
    %v5284 = vpack.c.b16 %v4228, %v4212
    %v5285 = vpack.c.b16 %v4229, %v4213
    %v5286 = vpack.c.b16 %v4230, %v4214
    %v5287 = vpack.c.b16 %v4231, %v4215
    %v5288 = vpack.c.b16 %v4232, %v4216
    %v5289 = vpack.c.b16 %v4233, %v4217
    %v5290 = vpack.c.b16 %v4234, %v4218
    %v5291 = vpack.c.b16 %v4235, %v4219
    %v5292 = vpack.c.b16 %v4236, %v4220
    %v5293 = vpack.c.b16 %v4253, %v4237
    %v5294 = vpack.c.b16 %v4254, %v4238
    %v5295 = vpack.c.b16 %v4255, %v4239
    %v5296 = vpack.c.b16 %v4256, %v4240
    %v5297 = vpack.c.b16 %v4257, %v4241
    %v5298 = vpack.c.b16 %v4258, %v4242
    %v5299 = vpack.c.b16 %v4259, %v4243
    %v5300 = vpack.c.b16 %v4260, %v4244
    %v5301 = vpack.c.b16 %v4261, %v4245
    %v5302 = vpack.c.b16 %v4262, %v4246
    %v5303 = vpack.c.b16 %v4263, %v4247
    %v5304 = vpack.c.b16 %v4264, %v4248
    %v5305 = vpack.c.b16 %v4265, %v4249
    %v5306 = vpack.c.b16 %v4266, %v4250
    %v5307 = vpack.c.b16 %v4267, %v4251
    %v5308 = vpack.c.b16 %v4268, %v4252
    %v5309 = vpack.c.b16 %v4285, %v4269
    %v5310 = vpack.c.b16 %v4286, %v4270
    %v5311 = vpack.c.b16 %v4287, %v4271
    %v5312 = vpack.c.b16 %v4288, %v4272
    %v5313 = vpack.c.b16 %v4289, %v4273
    %v5314 = vpack.c.b16 %v4290, %v4274
    %v5315 = vpack.c.b16 %v4291, %v4275
    %v5316 = vpack.c.b16 %v4292, %v4276
    %v5317 = vpack.c.b16 %v4293, %v4277
    %v5318 = vpack.c.b16 %v4294, %v4278
    %v5319 = vpack.c.b16 %v4295, %v4279
    %v5320 = vpack.c.b16 %v4296, %v4280
    %v5321 = vpack.c.b16 %v4297, %v4281
    %v5322 = vpack.c.b16 %v4298, %v4282
    %v5323 = vpack.c.b16 %v4299, %v4283
    %v5324 = vpack.c.b16 %v4300, %v4284
    %6349 = vmatprep.subr.bf16.mxu0 %v4302
    %6350 = vmatpush1.bf16.msra.mxu0 %v4301
    %6351 = vmatprep.subr.bf16.mxu0 %v4318
    %6352 = vmatpush1.bf16.msra.mxu0 %v4317
    %6353 = vmatprep.subr.bf16.mxu0 %v4334
    %6354 = vmatpush1.bf16.msra.mxu0 %v4333
    %6355 = vmatprep.subr.bf16.mxu0 %v4350
    %6356 = vmatpush1.bf16.msra.mxu0 %v4349
    %6357 = vmatprep.subr.bf16.mxu0 %v4366
    %6358 = vmatpush1.bf16.msra.mxu0 %v4365
    %6359 = vmatprep.subr.bf16.mxu0 %v4382
    %6360 = vmatpush1.bf16.msra.mxu0 %v4381
    %6361 = vmatprep.subr.bf16.mxu0 %v4398
    %6362 = vmatpush1.bf16.msra.mxu0 %v4397
    %6363 = vmatprep.subr.bf16.mxu0 %v4414
    %6364 = vmatpush1.bf16.msra.mxu0 %v4413
    %6365 = vmatprep.subr.bf16.mxu0 %v4430
    %6366 = vmatpush1.bf16.msra.mxu0 %v4429
    %6367 = vmatprep.subr.bf16.mxu0 %v4446
    %6368 = vmatpush1.bf16.msra.mxu0 %v4445
    %6369 = vmatprep.subr.bf16.mxu0 %v4462
    %6370 = vmatpush1.bf16.msra.mxu0 %v4461
    %6371 = vmatprep.subr.bf16.mxu0 %v4478
    %6372 = vmatpush1.bf16.msra.mxu0 %v4477
    %6373 = vmatprep.subr.bf16.mxu0 %v4494
    %6374 = vmatpush1.bf16.msra.mxu0 %v4493
    %6375 = vmatprep.subr.bf16.mxu0 %v4510
    %6376 = vmatpush1.bf16.msra.mxu0 %v4509
    %6377 = vmatprep.subr.bf16.mxu0 %v4526
    %6378 = vmatpush1.bf16.msra.mxu0 %v4525
    %6379 = vmatprep.subr.bf16.mxu0 %v4542
    %6380 = vmatpush1.bf16.msra.mxu0 %v4541
    %6381 = vmatprep.mubr.bf16.mxu0 %v114
    %6382 = vmatmul.mubr.bf16.gmra.mrb[0].mxu0 %v113
    %v6383 = vpop.f32.mrb[0].mxu0
    %v6384 = vadd.f32 %v1152, %v6383
    %v6385 = vpop.f32.mrb[0].mxu0
    %v6386 = vadd.f32 %v1156, %v6385
    %v6387 = vpop.f32.mrb[0].mxu0
    %v6388 = vpop.f32.mrb[0].mxu0
    %6389 = vdwg.mxu0
    %6390 = vmatprep.subr.bf16.mxu0 %v4558
    %6391 = vmatpush1.bf16.msra.mxu0 %v4557
    %6392 = vmatprep.subr.bf16.mxu0 %v4574
    %6393 = vmatpush1.bf16.msra.mxu0 %v4573
    %6394 = vmatprep.subr.bf16.mxu0 %v4590
    %6395 = vmatpush1.bf16.msra.mxu0 %v4589
    %6396 = vmatprep.subr.bf16.mxu0 %v4606
    %6397 = vmatpush1.bf16.msra.mxu0 %v4605
    %6398 = vmatprep.subr.bf16.mxu0 %v4622
    %6399 = vmatpush1.bf16.msra.mxu0 %v4621
    %6400 = vmatprep.subr.bf16.mxu0 %v4638
    %6401 = vmatpush1.bf16.msra.mxu0 %v4637
    %6402 = vmatprep.subr.bf16.mxu0 %v4654
    %6403 = vmatpush1.bf16.msra.mxu0 %v4653
    %6404 = vmatprep.subr.bf16.mxu0 %v4670
    %6405 = vmatpush1.bf16.msra.mxu0 %v4669
    %6406 = vmatprep.subr.bf16.mxu0 %v4686
    %6407 = vmatpush1.bf16.msra.mxu0 %v4685
    %6408 = vmatprep.subr.bf16.mxu0 %v4702
    %6409 = vmatpush1.bf16.msra.mxu0 %v4701
    %6410 = vmatprep.subr.bf16.mxu0 %v4718
    %6411 = vmatpush1.bf16.msra.mxu0 %v4717
    %6412 = vmatprep.subr.bf16.mxu0 %v4734
    %6413 = vmatpush1.bf16.msra.mxu0 %v4733
    %6414 = vmatprep.subr.bf16.mxu0 %v4750
    %6415 = vmatpush1.bf16.msra.mxu0 %v4749
    %6416 = vmatprep.subr.bf16.mxu0 %v4766
    %6417 = vmatpush1.bf16.msra.mxu0 %v4765
    %6418 = vmatprep.subr.bf16.mxu0 %v4782
    %6419 = vmatpush1.bf16.msra.mxu0 %v4781
    %6420 = vmatprep.subr.bf16.mxu0 %v4798
    %6421 = vmatpush1.bf16.msra.mxu0 %v4797
    %6422 = vmatprep.mubr.bf16.mxu0 %v116
    %6423 = vmatmul.mubr.bf16.gmra.mrb[0].mxu0 %v115
    %v6424 = vpop.f32.mrb[0].mxu0
    %v6425 = vadd.f32 %v6384, %v6424
    %v6426 = vpop.f32.mrb[0].mxu0
    %v6427 = vadd.f32 %v6386, %v6426
    %v6428 = vpop.f32.mrb[0].mxu0
    %v6429 = vpop.f32.mrb[0].mxu0
    %6430 = vdwg.mxu0
    %6431 = vmatprep.subr.bf16.mxu0 %v4814
    %6432 = vmatpush1.bf16.msra.mxu0 %v4813
    %6433 = vmatprep.subr.bf16.mxu0 %v4830
    %6434 = vmatpush1.bf16.msra.mxu0 %v4829
    %6435 = vmatprep.subr.bf16.mxu0 %v4846
    %6436 = vmatpush1.bf16.msra.mxu0 %v4845
    %6437 = vmatprep.subr.bf16.mxu0 %v4862
    %6438 = vmatpush1.bf16.msra.mxu0 %v4861
    %6439 = vmatprep.subr.bf16.mxu0 %v4878
    %6440 = vmatpush1.bf16.msra.mxu0 %v4877
    %6441 = vmatprep.subr.bf16.mxu0 %v4894
    %6442 = vmatpush1.bf16.msra.mxu0 %v4893
    %6443 = vmatprep.subr.bf16.mxu0 %v4910
    %6444 = vmatpush1.bf16.msra.mxu0 %v4909
    %6445 = vmatprep.subr.bf16.mxu0 %v4926
    %6446 = vmatpush1.bf16.msra.mxu0 %v4925
    %6447 = vmatprep.subr.bf16.mxu0 %v4942
    %6448 = vmatpush1.bf16.msra.mxu0 %v4941
    %6449 = vmatprep.subr.bf16.mxu0 %v4958
    %6450 = vmatpush1.bf16.msra.mxu0 %v4957
    %6451 = vmatprep.subr.bf16.mxu0 %v4974
    %6452 = vmatpush1.bf16.msra.mxu0 %v4973
    %6453 = vmatprep.subr.bf16.mxu0 %v4990
    %6454 = vmatpush1.bf16.msra.mxu0 %v4989
    %6455 = vmatprep.subr.bf16.mxu0 %v5006
    %6456 = vmatpush1.bf16.msra.mxu0 %v5005
    %6457 = vmatprep.subr.bf16.mxu0 %v5022
    %6458 = vmatpush1.bf16.msra.mxu0 %v5021
    %6459 = vmatprep.subr.bf16.mxu0 %v5038
    %6460 = vmatpush1.bf16.msra.mxu0 %v5037
    %6461 = vmatprep.subr.bf16.mxu0 %v5054
    %6462 = vmatpush1.bf16.msra.mxu0 %v5053
    %6463 = vmatprep.mubr.bf16.mxu0 %v118
    %6464 = vmatmul.mubr.bf16.gmra.mrb[0].mxu0 %v117
    %v6465 = vpop.f32.mrb[0].mxu0
    %v6466 = vadd.f32 %v6425, %v6465
    %v6467 = vpop.f32.mrb[0].mxu0
    %v6468 = vadd.f32 %v6427, %v6467
    %v6469 = vpop.f32.mrb[0].mxu0
    %v6470 = vpop.f32.mrb[0].mxu0
    %6471 = vdwg.mxu0
    %6472 = vmatprep.subr.bf16.mxu0 %v5070
    %6473 = vmatpush1.bf16.msra.mxu0 %v5069
    %6474 = vmatprep.subr.bf16.mxu0 %v5086
    %6475 = vmatpush1.bf16.msra.mxu0 %v5085
    %6476 = vmatprep.subr.bf16.mxu0 %v5102
    %6477 = vmatpush1.bf16.msra.mxu0 %v5101
    %6478 = vmatprep.subr.bf16.mxu0 %v5118
    %6479 = vmatpush1.bf16.msra.mxu0 %v5117
    %6480 = vmatprep.subr.bf16.mxu0 %v5134
    %6481 = vmatpush1.bf16.msra.mxu0 %v5133
    %6482 = vmatprep.subr.bf16.mxu0 %v5150
    %6483 = vmatpush1.bf16.msra.mxu0 %v5149
    %6484 = vmatprep.subr.bf16.mxu0 %v5166
    %6485 = vmatpush1.bf16.msra.mxu0 %v5165
    %6486 = vmatprep.subr.bf16.mxu0 %v5182
    %6487 = vmatpush1.bf16.msra.mxu0 %v5181
    %6488 = vmatprep.subr.bf16.mxu0 %v5198
    %6489 = vmatpush1.bf16.msra.mxu0 %v5197
    %6490 = vmatprep.subr.bf16.mxu0 %v5214
    %6491 = vmatpush1.bf16.msra.mxu0 %v5213
    %6492 = vmatprep.subr.bf16.mxu0 %v5230
    %6493 = vmatpush1.bf16.msra.mxu0 %v5229
    %6494 = vmatprep.subr.bf16.mxu0 %v5246
    %6495 = vmatpush1.bf16.msra.mxu0 %v5245
    %6496 = vmatprep.subr.bf16.mxu0 %v5262
    %6497 = vmatpush1.bf16.msra.mxu0 %v5261
    %6498 = vmatprep.subr.bf16.mxu0 %v5278
    %6499 = vmatpush1.bf16.msra.mxu0 %v5277
    %6500 = vmatprep.subr.bf16.mxu0 %v5294
    %6501 = vmatpush1.bf16.msra.mxu0 %v5293
    %6502 = vmatprep.subr.bf16.mxu0 %v5310
    %6503 = vmatpush1.bf16.msra.mxu0 %v5309
    %6504 = vmatprep.mubr.bf16.mxu0 %v120
    %6505 = vmatmul.mubr.bf16.gmra.mrb[0].mxu0 %v119
    %v6506 = vpop.f32.mrb[0].mxu0
    %v6507 = vadd.f32 %v6466, %v6506
    %v6508 = vpop.f32.mrb[0].mxu0
    %v6509 = vadd.f32 %v6468, %v6508
    %v6510 = vpop.f32.mrb[0].mxu0
    %v6511 = vpop.f32.mrb[0].mxu0
    %6512 = vdwg.mxu0
    %6513 = vmatprep.subr.bf16.mxu0 %v4304
    %6514 = vmatpush1.bf16.msra.mxu0 %v4303
    %6515 = vmatprep.subr.bf16.mxu0 %v4320
    %6516 = vmatpush1.bf16.msra.mxu0 %v4319
    %6517 = vmatprep.subr.bf16.mxu0 %v4336
    %6518 = vmatpush1.bf16.msra.mxu0 %v4335
    %6519 = vmatprep.subr.bf16.mxu0 %v4352
    %6520 = vmatpush1.bf16.msra.mxu0 %v4351
    %6521 = vmatprep.subr.bf16.mxu0 %v4368
    %6522 = vmatpush1.bf16.msra.mxu0 %v4367
    %6523 = vmatprep.subr.bf16.mxu0 %v4384
    %6524 = vmatpush1.bf16.msra.mxu0 %v4383
    %6525 = vmatprep.subr.bf16.mxu0 %v4400
    %6526 = vmatpush1.bf16.msra.mxu0 %v4399
    %6527 = vmatprep.subr.bf16.mxu0 %v4416
    %6528 = vmatpush1.bf16.msra.mxu0 %v4415
    %6529 = vmatprep.subr.bf16.mxu0 %v4432
    %6530 = vmatpush1.bf16.msra.mxu0 %v4431
    %6531 = vmatprep.subr.bf16.mxu0 %v4448
    %6532 = vmatpush1.bf16.msra.mxu0 %v4447
    %6533 = vmatprep.subr.bf16.mxu0 %v4464
    %6534 = vmatpush1.bf16.msra.mxu0 %v4463
    %6535 = vmatprep.subr.bf16.mxu0 %v4480
    %6536 = vmatpush1.bf16.msra.mxu0 %v4479
    %6537 = vmatprep.subr.bf16.mxu0 %v4496
    %6538 = vmatpush1.bf16.msra.mxu0 %v4495
    %6539 = vmatprep.subr.bf16.mxu0 %v4512
    %6540 = vmatpush1.bf16.msra.mxu0 %v4511
    %6541 = vmatprep.subr.bf16.mxu0 %v4528
    %6542 = vmatpush1.bf16.msra.mxu0 %v4527
    %6543 = vmatprep.subr.bf16.mxu0 %v4544
    %6544 = vmatpush1.bf16.msra.mxu0 %v4543
    %6545 = vmatprep.mubr.bf16.mxu0 %v114
    %6546 = vmatmul.mubr.bf16.gmra.mrb[0].mxu0 %v113
    %v6547 = vpop.f32.mrb[0].mxu0
    %v6548 = vadd.f32 %v1160, %v6547
    %v6549 = vpop.f32.mrb[0].mxu0
    %v6550 = vadd.f32 %v1164, %v6549
    %v6551 = vpop.f32.mrb[0].mxu0
    %v6552 = vpop.f32.mrb[0].mxu0
    %6553 = vdwg.mxu0
    %6554 = vmatprep.subr.bf16.mxu0 %v4560
    %6555 = vmatpush1.bf16.msra.mxu0 %v4559
    %6556 = vmatprep.subr.bf16.mxu0 %v4576
    %6557 = vmatpush1.bf16.msra.mxu0 %v4575
    %6558 = vmatprep.subr.bf16.mxu0 %v4592
    %6559 = vmatpush1.bf16.msra.mxu0 %v4591
    %6560 = vmatprep.subr.bf16.mxu0 %v4608
    %6561 = vmatpush1.bf16.msra.mxu0 %v4607
    %6562 = vmatprep.subr.bf16.mxu0 %v4624
    %6563 = vmatpush1.bf16.msra.mxu0 %v4623
    %6564 = vmatprep.subr.bf16.mxu0 %v4640
    %6565 = vmatpush1.bf16.msra.mxu0 %v4639
    %6566 = vmatprep.subr.bf16.mxu0 %v4656
    %6567 = vmatpush1.bf16.msra.mxu0 %v4655
    %6568 = vmatprep.subr.bf16.mxu0 %v4672
    %6569 = vmatpush1.bf16.msra.mxu0 %v4671
    %6570 = vmatprep.subr.bf16.mxu0 %v4688
    %6571 = vmatpush1.bf16.msra.mxu0 %v4687
    %6572 = vmatprep.subr.bf16.mxu0 %v4704
    %6573 = vmatpush1.bf16.msra.mxu0 %v4703
    %6574 = vmatprep.subr.bf16.mxu0 %v4720
    %6575 = vmatpush1.bf16.msra.mxu0 %v4719
    %6576 = vmatprep.subr.bf16.mxu0 %v4736
    %6577 = vmatpush1.bf16.msra.mxu0 %v4735
    %6578 = vmatprep.subr.bf16.mxu0 %v4752
    %6579 = vmatpush1.bf16.msra.mxu0 %v4751
    %6580 = vmatprep.subr.bf16.mxu0 %v4768
    %6581 = vmatpush1.bf16.msra.mxu0 %v4767
    %6582 = vmatprep.subr.bf16.mxu0 %v4784
    %6583 = vmatpush1.bf16.msra.mxu0 %v4783
    %6584 = vmatprep.subr.bf16.mxu0 %v4800
    %6585 = vmatpush1.bf16.msra.mxu0 %v4799
    %6586 = vmatprep.mubr.bf16.mxu0 %v116
    %6587 = vmatmul.mubr.bf16.gmra.mrb[0].mxu0 %v115
    %v6588 = vpop.f32.mrb[0].mxu0
    %v6589 = vadd.f32 %v6548, %v6588
    %v6590 = vpop.f32.mrb[0].mxu0
    %v6591 = vadd.f32 %v6550, %v6590
    %v6592 = vpop.f32.mrb[0].mxu0
    %v6593 = vpop.f32.mrb[0].mxu0
    %6594 = vdwg.mxu0
    %6595 = vmatprep.subr.bf16.mxu0 %v4816
    %6596 = vmatpush1.bf16.msra.mxu0 %v4815
    %6597 = vmatprep.subr.bf16.mxu0 %v4832
    %6598 = vmatpush1.bf16.msra.mxu0 %v4831
    %6599 = vmatprep.subr.bf16.mxu0 %v4848
    %6600 = vmatpush1.bf16.msra.mxu0 %v4847
    %6601 = vmatprep.subr.bf16.mxu0 %v4864
    %6602 = vmatpush1.bf16.msra.mxu0 %v4863
    %6603 = vmatprep.subr.bf16.mxu0 %v4880
    %6604 = vmatpush1.bf16.msra.mxu0 %v4879
    %6605 = vmatprep.subr.bf16.mxu0 %v4896
    %6606 = vmatpush1.bf16.msra.mxu0 %v4895
    %6607 = vmatprep.subr.bf16.mxu0 %v4912
    %6608 = vmatpush1.bf16.msra.mxu0 %v4911
    %6609 = vmatprep.subr.bf16.mxu0 %v4928
    %6610 = vmatpush1.bf16.msra.mxu0 %v4927
    %6611 = vmatprep.subr.bf16.mxu0 %v4944
    %6612 = vmatpush1.bf16.msra.mxu0 %v4943
    %6613 = vmatprep.subr.bf16.mxu0 %v4960
    %6614 = vmatpush1.bf16.msra.mxu0 %v4959
    %6615 = vmatprep.subr.bf16.mxu0 %v4976
    %6616 = vmatpush1.bf16.msra.mxu0 %v4975
    %6617 = vmatprep.subr.bf16.mxu0 %v4992
    %6618 = vmatpush1.bf16.msra.mxu0 %v4991
    %6619 = vmatprep.subr.bf16.mxu0 %v5008
    %6620 = vmatpush1.bf16.msra.mxu0 %v5007
    %6621 = vmatprep.subr.bf16.mxu0 %v5024
    %6622 = vmatpush1.bf16.msra.mxu0 %v5023
    %6623 = vmatprep.subr.bf16.mxu0 %v5040
    %6624 = vmatpush1.bf16.msra.mxu0 %v5039
    %6625 = vmatprep.subr.bf16.mxu0 %v5056
    %6626 = vmatpush1.bf16.msra.mxu0 %v5055
    %6627 = vmatprep.mubr.bf16.mxu0 %v118
    %6628 = vmatmul.mubr.bf16.gmra.mrb[0].mxu0 %v117
    %v6629 = vpop.f32.mrb[0].mxu0
    %v6630 = vadd.f32 %v6589, %v6629
    %v6631 = vpop.f32.mrb[0].mxu0
    %v6632 = vadd.f32 %v6591, %v6631
    %v6633 = vpop.f32.mrb[0].mxu0
    %v6634 = vpop.f32.mrb[0].mxu0
    %6635 = vdwg.mxu0
    %6636 = vmatprep.subr.bf16.mxu0 %v5072
    %6637 = vmatpush1.bf16.msra.mxu0 %v5071
    %6638 = vmatprep.subr.bf16.mxu0 %v5088
    %6639 = vmatpush1.bf16.msra.mxu0 %v5087
    %6640 = vmatprep.subr.bf16.mxu0 %v5104
    %6641 = vmatpush1.bf16.msra.mxu0 %v5103
    %6642 = vmatprep.subr.bf16.mxu0 %v5120
    %6643 = vmatpush1.bf16.msra.mxu0 %v5119
    %6644 = vmatprep.subr.bf16.mxu0 %v5136
    %6645 = vmatpush1.bf16.msra.mxu0 %v5135
    %6646 = vmatprep.subr.bf16.mxu0 %v5152
    %6647 = vmatpush1.bf16.msra.mxu0 %v5151
    %6648 = vmatprep.subr.bf16.mxu0 %v5168
    %6649 = vmatpush1.bf16.msra.mxu0 %v5167
    %6650 = vmatprep.subr.bf16.mxu0 %v5184
    %6651 = vmatpush1.bf16.msra.mxu0 %v5183
    %6652 = vmatprep.subr.bf16.mxu0 %v5200
    %6653 = vmatpush1.bf16.msra.mxu0 %v5199
    %6654 = vmatprep.subr.bf16.mxu0 %v5216
    %6655 = vmatpush1.bf16.msra.mxu0 %v5215
    %6656 = vmatprep.subr.bf16.mxu0 %v5232
    %6657 = vmatpush1.bf16.msra.mxu0 %v5231
    %6658 = vmatprep.subr.bf16.mxu0 %v5248
    %6659 = vmatpush1.bf16.msra.mxu0 %v5247
    %6660 = vmatprep.subr.bf16.mxu0 %v5264
    %6661 = vmatpush1.bf16.msra.mxu0 %v5263
    %6662 = vmatprep.subr.bf16.mxu0 %v5280
    %6663 = vmatpush1.bf16.msra.mxu0 %v5279
    %6664 = vmatprep.subr.bf16.mxu0 %v5296
    %6665 = vmatpush1.bf16.msra.mxu0 %v5295
    %6666 = vmatprep.subr.bf16.mxu0 %v5312
    %6667 = vmatpush1.bf16.msra.mxu0 %v5311
    %6668 = vmatprep.mubr.bf16.mxu0 %v120
    %6669 = vmatmul.mubr.bf16.gmra.mrb[0].mxu0 %v119
    %v6670 = vpop.f32.mrb[0].mxu0
    %v6671 = vadd.f32 %v6630, %v6670
    %v6672 = vpop.f32.mrb[0].mxu0
    %v6673 = vadd.f32 %v6632, %v6672
    %v6674 = vpop.f32.mrb[0].mxu0
    %v6675 = vpop.f32.mrb[0].mxu0
    %6676 = vdwg.mxu0
    %6677 = vmatprep.subr.bf16.mxu0 %v4306
    %6678 = vmatpush1.bf16.msra.mxu0 %v4305
    %6679 = vmatprep.subr.bf16.mxu0 %v4322
    %6680 = vmatpush1.bf16.msra.mxu0 %v4321
    %6681 = vmatprep.subr.bf16.mxu0 %v4338
    %6682 = vmatpush1.bf16.msra.mxu0 %v4337
    %6683 = vmatprep.subr.bf16.mxu0 %v4354
    %6684 = vmatpush1.bf16.msra.mxu0 %v4353
    %6685 = vmatprep.subr.bf16.mxu0 %v4370
    %6686 = vmatpush1.bf16.msra.mxu0 %v4369
    %6687 = vmatprep.subr.bf16.mxu0 %v4386
    %6688 = vmatpush1.bf16.msra.mxu0 %v4385
    %6689 = vmatprep.subr.bf16.mxu0 %v4402
    %6690 = vmatpush1.bf16.msra.mxu0 %v4401
    %6691 = vmatprep.subr.bf16.mxu0 %v4418
    %6692 = vmatpush1.bf16.msra.mxu0 %v4417
    %6693 = vmatprep.subr.bf16.mxu0 %v4434
    %6694 = vmatpush1.bf16.msra.mxu0 %v4433
    %6695 = vmatprep.subr.bf16.mxu0 %v4450
    %6696 = vmatpush1.bf16.msra.mxu0 %v4449
    %6697 = vmatprep.subr.bf16.mxu0 %v4466
    %6698 = vmatpush1.bf16.msra.mxu0 %v4465
    %6699 = vmatprep.subr.bf16.mxu0 %v4482
    %6700 = vmatpush1.bf16.msra.mxu0 %v4481
    %6701 = vmatprep.subr.bf16.mxu0 %v4498
    %6702 = vmatpush1.bf16.msra.mxu0 %v4497
    %6703 = vmatprep.subr.bf16.mxu0 %v4514
    %6704 = vmatpush1.bf16.msra.mxu0 %v4513
    %6705 = vmatprep.subr.bf16.mxu0 %v4530
    %6706 = vmatpush1.bf16.msra.mxu0 %v4529
    %6707 = vmatprep.subr.bf16.mxu0 %v4546
    %6708 = vmatpush1.bf16.msra.mxu0 %v4545
    %6709 = vmatprep.mubr.bf16.mxu0 %v114
    %6710 = vmatmul.mubr.bf16.gmra.mrb[0].mxu0 %v113
    %v6711 = vpop.f32.mrb[0].mxu0
    %v6712 = vadd.f32 %v1168, %v6711
    %v6713 = vpop.f32.mrb[0].mxu0
    %v6714 = vadd.f32 %v1172, %v6713
    %v6715 = vpop.f32.mrb[0].mxu0
    %v6716 = vpop.f32.mrb[0].mxu0
    %6717 = vdwg.mxu0
    %6718 = vmatprep.subr.bf16.mxu0 %v4562
    %6719 = vmatpush1.bf16.msra.mxu0 %v4561
    %6720 = vmatprep.subr.bf16.mxu0 %v4578
    %6721 = vmatpush1.bf16.msra.mxu0 %v4577
    %6722 = vmatprep.subr.bf16.mxu0 %v4594
    %6723 = vmatpush1.bf16.msra.mxu0 %v4593
    %6724 = vmatprep.subr.bf16.mxu0 %v4610
    %6725 = vmatpush1.bf16.msra.mxu0 %v4609
    %6726 = vmatprep.subr.bf16.mxu0 %v4626
    %6727 = vmatpush1.bf16.msra.mxu0 %v4625
    %6728 = vmatprep.subr.bf16.mxu0 %v4642
    %6729 = vmatpush1.bf16.msra.mxu0 %v4641
    %6730 = vmatprep.subr.bf16.mxu0 %v4658
    %6731 = vmatpush1.bf16.msra.mxu0 %v4657
    %6732 = vmatprep.subr.bf16.mxu0 %v4674
    %6733 = vmatpush1.bf16.msra.mxu0 %v4673
    %6734 = vmatprep.subr.bf16.mxu0 %v4690
    %6735 = vmatpush1.bf16.msra.mxu0 %v4689
    %6736 = vmatprep.subr.bf16.mxu0 %v4706
    %6737 = vmatpush1.bf16.msra.mxu0 %v4705
    %6738 = vmatprep.subr.bf16.mxu0 %v4722
    %6739 = vmatpush1.bf16.msra.mxu0 %v4721
    %6740 = vmatprep.subr.bf16.mxu0 %v4738
    %6741 = vmatpush1.bf16.msra.mxu0 %v4737
    %6742 = vmatprep.subr.bf16.mxu0 %v4754
    %6743 = vmatpush1.bf16.msra.mxu0 %v4753
    %6744 = vmatprep.subr.bf16.mxu0 %v4770
    %6745 = vmatpush1.bf16.msra.mxu0 %v4769
    %6746 = vmatprep.subr.bf16.mxu0 %v4786
    %6747 = vmatpush1.bf16.msra.mxu0 %v4785
    %6748 = vmatprep.subr.bf16.mxu0 %v4802
    %6749 = vmatpush1.bf16.msra.mxu0 %v4801
    %6750 = vmatprep.mubr.bf16.mxu0 %v116
    %6751 = vmatmul.mubr.bf16.gmra.mrb[0].mxu0 %v115
    %v6752 = vpop.f32.mrb[0].mxu0
    %v6753 = vadd.f32 %v6712, %v6752
    %v6754 = vpop.f32.mrb[0].mxu0
    %v6755 = vadd.f32 %v6714, %v6754
    %v6756 = vpop.f32.mrb[0].mxu0
    %v6757 = vpop.f32.mrb[0].mxu0
    %6758 = vdwg.mxu0
    %6759 = vmatprep.subr.bf16.mxu0 %v4818
    %6760 = vmatpush1.bf16.msra.mxu0 %v4817
    %6761 = vmatprep.subr.bf16.mxu0 %v4834
    %6762 = vmatpush1.bf16.msra.mxu0 %v4833
    %6763 = vmatprep.subr.bf16.mxu0 %v4850
    %6764 = vmatpush1.bf16.msra.mxu0 %v4849
    %6765 = vmatprep.subr.bf16.mxu0 %v4866
    %6766 = vmatpush1.bf16.msra.mxu0 %v4865
    %6767 = vmatprep.subr.bf16.mxu0 %v4882
    %6768 = vmatpush1.bf16.msra.mxu0 %v4881
    %6769 = vmatprep.subr.bf16.mxu0 %v4898
    %6770 = vmatpush1.bf16.msra.mxu0 %v4897
    %6771 = vmatprep.subr.bf16.mxu0 %v4914
    %6772 = vmatpush1.bf16.msra.mxu0 %v4913
    %6773 = vmatprep.subr.bf16.mxu0 %v4930
    %6774 = vmatpush1.bf16.msra.mxu0 %v4929
    %6775 = vmatprep.subr.bf16.mxu0 %v4946
    %6776 = vmatpush1.bf16.msra.mxu0 %v4945
    %6777 = vmatprep.subr.bf16.mxu0 %v4962
    %6778 = vmatpush1.bf16.msra.mxu0 %v4961
    %6779 = vmatprep.subr.bf16.mxu0 %v4978
    %6780 = vmatpush1.bf16.msra.mxu0 %v4977
    %6781 = vmatprep.subr.bf16.mxu0 %v4994
    %6782 = vmatpush1.bf16.msra.mxu0 %v4993
    %6783 = vmatprep.subr.bf16.mxu0 %v5010
    %6784 = vmatpush1.bf16.msra.mxu0 %v5009
    %6785 = vmatprep.subr.bf16.mxu0 %v5026
    %6786 = vmatpush1.bf16.msra.mxu0 %v5025
    %6787 = vmatprep.subr.bf16.mxu0 %v5042
    %6788 = vmatpush1.bf16.msra.mxu0 %v5041
    %6789 = vmatprep.subr.bf16.mxu0 %v5058
    %6790 = vmatpush1.bf16.msra.mxu0 %v5057
    %6791 = vmatprep.mubr.bf16.mxu0 %v118
    %6792 = vmatmul.mubr.bf16.gmra.mrb[0].mxu0 %v117
    %v6793 = vpop.f32.mrb[0].mxu0
    %v6794 = vadd.f32 %v6753, %v6793
    %v6795 = vpop.f32.mrb[0].mxu0
    %v6796 = vadd.f32 %v6755, %v6795
    %v6797 = vpop.f32.mrb[0].mxu0
    %v6798 = vpop.f32.mrb[0].mxu0
    %6799 = vdwg.mxu0
    %6800 = vmatprep.subr.bf16.mxu0 %v5074
    %6801 = vmatpush1.bf16.msra.mxu0 %v5073
    %6802 = vmatprep.subr.bf16.mxu0 %v5090
    %6803 = vmatpush1.bf16.msra.mxu0 %v5089
    %6804 = vmatprep.subr.bf16.mxu0 %v5106
    %6805 = vmatpush1.bf16.msra.mxu0 %v5105
    %6806 = vmatprep.subr.bf16.mxu0 %v5122
    %6807 = vmatpush1.bf16.msra.mxu0 %v5121
    %6808 = vmatprep.subr.bf16.mxu0 %v5138
    %6809 = vmatpush1.bf16.msra.mxu0 %v5137
    %6810 = vmatprep.subr.bf16.mxu0 %v5154
    %6811 = vmatpush1.bf16.msra.mxu0 %v5153
    %6812 = vmatprep.subr.bf16.mxu0 %v5170
    %6813 = vmatpush1.bf16.msra.mxu0 %v5169
    %6814 = vmatprep.subr.bf16.mxu0 %v5186
    %6815 = vmatpush1.bf16.msra.mxu0 %v5185
    %6816 = vmatprep.subr.bf16.mxu0 %v5202
    %6817 = vmatpush1.bf16.msra.mxu0 %v5201
    %6818 = vmatprep.subr.bf16.mxu0 %v5218
    %6819 = vmatpush1.bf16.msra.mxu0 %v5217
    %6820 = vmatprep.subr.bf16.mxu0 %v5234
    %6821 = vmatpush1.bf16.msra.mxu0 %v5233
    %6822 = vmatprep.subr.bf16.mxu0 %v5250
    %6823 = vmatpush1.bf16.msra.mxu0 %v5249
    %6824 = vmatprep.subr.bf16.mxu0 %v5266
    %6825 = vmatpush1.bf16.msra.mxu0 %v5265
    %6826 = vmatprep.subr.bf16.mxu0 %v5282
    %6827 = vmatpush1.bf16.msra.mxu0 %v5281
    %6828 = vmatprep.subr.bf16.mxu0 %v5298
    %6829 = vmatpush1.bf16.msra.mxu0 %v5297
    %6830 = vmatprep.subr.bf16.mxu0 %v5314
    %6831 = vmatpush1.bf16.msra.mxu0 %v5313
    %6832 = vmatprep.mubr.bf16.mxu0 %v120
    %6833 = vmatmul.mubr.bf16.gmra.mrb[0].mxu0 %v119
    %v6834 = vpop.f32.mrb[0].mxu0
    %v6835 = vadd.f32 %v6794, %v6834
    %v6836 = vpop.f32.mrb[0].mxu0
    %v6837 = vadd.f32 %v6796, %v6836
    %v6838 = vpop.f32.mrb[0].mxu0
    %v6839 = vpop.f32.mrb[0].mxu0
    %6840 = vdwg.mxu0
    %6841 = vmatprep.subr.bf16.mxu0 %v4308
    %6842 = vmatpush1.bf16.msra.mxu0 %v4307
    %6843 = vmatprep.subr.bf16.mxu0 %v4324
    %6844 = vmatpush1.bf16.msra.mxu0 %v4323
    %6845 = vmatprep.subr.bf16.mxu0 %v4340
    %6846 = vmatpush1.bf16.msra.mxu0 %v4339
    %6847 = vmatprep.subr.bf16.mxu0 %v4356
    %6848 = vmatpush1.bf16.msra.mxu0 %v4355
    %6849 = vmatprep.subr.bf16.mxu0 %v4372
    %6850 = vmatpush1.bf16.msra.mxu0 %v4371
    %6851 = vmatprep.subr.bf16.mxu0 %v4388
    %6852 = vmatpush1.bf16.msra.mxu0 %v4387
    %6853 = vmatprep.subr.bf16.mxu0 %v4404
    %6854 = vmatpush1.bf16.msra.mxu0 %v4403
    %6855 = vmatprep.subr.bf16.mxu0 %v4420
    %6856 = vmatpush1.bf16.msra.mxu0 %v4419
    %6857 = vmatprep.subr.bf16.mxu0 %v4436
    %6858 = vmatpush1.bf16.msra.mxu0 %v4435
    %6859 = vmatprep.subr.bf16.mxu0 %v4452
    %6860 = vmatpush1.bf16.msra.mxu0 %v4451
    %6861 = vmatprep.subr.bf16.mxu0 %v4468
    %6862 = vmatpush1.bf16.msra.mxu0 %v4467
    %6863 = vmatprep.subr.bf16.mxu0 %v4484
    %6864 = vmatpush1.bf16.msra.mxu0 %v4483
    %6865 = vmatprep.subr.bf16.mxu0 %v4500
    %6866 = vmatpush1.bf16.msra.mxu0 %v4499
    %6867 = vmatprep.subr.bf16.mxu0 %v4516
    %6868 = vmatpush1.bf16.msra.mxu0 %v4515
    %6869 = vmatprep.subr.bf16.mxu0 %v4532
    %6870 = vmatpush1.bf16.msra.mxu0 %v4531
    %6871 = vmatprep.subr.bf16.mxu0 %v4548
    %6872 = vmatpush1.bf16.msra.mxu0 %v4547
    %6873 = vmatprep.mubr.bf16.mxu0 %v114
    %6874 = vmatmul.mubr.bf16.gmra.mrb[0].mxu0 %v113
    %v6875 = vpop.f32.mrb[0].mxu0
    %v6876 = vadd.f32 %v1176, %v6875
    %v6877 = vpop.f32.mrb[0].mxu0
    %v6878 = vadd.f32 %v1180, %v6877
    %v6879 = vpop.f32.mrb[0].mxu0
    %v6880 = vpop.f32.mrb[0].mxu0
    %6881 = vdwg.mxu0
    %6882 = vmatprep.subr.bf16.mxu0 %v4564
    %6883 = vmatpush1.bf16.msra.mxu0 %v4563
    %6884 = vmatprep.subr.bf16.mxu0 %v4580
    %6885 = vmatpush1.bf16.msra.mxu0 %v4579
    %6886 = vmatprep.subr.bf16.mxu0 %v4596
    %6887 = vmatpush1.bf16.msra.mxu0 %v4595
    %6888 = vmatprep.subr.bf16.mxu0 %v4612
    %6889 = vmatpush1.bf16.msra.mxu0 %v4611
    %6890 = vmatprep.subr.bf16.mxu0 %v4628
    %6891 = vmatpush1.bf16.msra.mxu0 %v4627
    %6892 = vmatprep.subr.bf16.mxu0 %v4644
    %6893 = vmatpush1.bf16.msra.mxu0 %v4643
    %6894 = vmatprep.subr.bf16.mxu0 %v4660
    %6895 = vmatpush1.bf16.msra.mxu0 %v4659
    %6896 = vmatprep.subr.bf16.mxu0 %v4676
    %6897 = vmatpush1.bf16.msra.mxu0 %v4675
    %6898 = vmatprep.subr.bf16.mxu0 %v4692
    %6899 = vmatpush1.bf16.msra.mxu0 %v4691
    %6900 = vmatprep.subr.bf16.mxu0 %v4708
    %6901 = vmatpush1.bf16.msra.mxu0 %v4707
    %6902 = vmatprep.subr.bf16.mxu0 %v4724
    %6903 = vmatpush1.bf16.msra.mxu0 %v4723
    %6904 = vmatprep.subr.bf16.mxu0 %v4740
    %6905 = vmatpush1.bf16.msra.mxu0 %v4739
    %6906 = vmatprep.subr.bf16.mxu0 %v4756
    %6907 = vmatpush1.bf16.msra.mxu0 %v4755
    %6908 = vmatprep.subr.bf16.mxu0 %v4772
    %6909 = vmatpush1.bf16.msra.mxu0 %v4771
    %6910 = vmatprep.subr.bf16.mxu0 %v4788
    %6911 = vmatpush1.bf16.msra.mxu0 %v4787
    %6912 = vmatprep.subr.bf16.mxu0 %v4804
    %6913 = vmatpush1.bf16.msra.mxu0 %v4803
    %6914 = vmatprep.mubr.bf16.mxu0 %v116
    %6915 = vmatmul.mubr.bf16.gmra.mrb[0].mxu0 %v115
    %v6916 = vpop.f32.mrb[0].mxu0
    %v6917 = vadd.f32 %v6876, %v6916
    %v6918 = vpop.f32.mrb[0].mxu0
    %v6919 = vadd.f32 %v6878, %v6918
    %v6920 = vpop.f32.mrb[0].mxu0
    %v6921 = vpop.f32.mrb[0].mxu0
    %6922 = vdwg.mxu0
    %6923 = vmatprep.subr.bf16.mxu0 %v4820
    %6924 = vmatpush1.bf16.msra.mxu0 %v4819
    %6925 = vmatprep.subr.bf16.mxu0 %v4836
    %6926 = vmatpush1.bf16.msra.mxu0 %v4835
    %6927 = vmatprep.subr.bf16.mxu0 %v4852
    %6928 = vmatpush1.bf16.msra.mxu0 %v4851
    %6929 = vmatprep.subr.bf16.mxu0 %v4868
    %6930 = vmatpush1.bf16.msra.mxu0 %v4867
    %6931 = vmatprep.subr.bf16.mxu0 %v4884
    %6932 = vmatpush1.bf16.msra.mxu0 %v4883
    %6933 = vmatprep.subr.bf16.mxu0 %v4900
    %6934 = vmatpush1.bf16.msra.mxu0 %v4899
    %6935 = vmatprep.subr.bf16.mxu0 %v4916
    %6936 = vmatpush1.bf16.msra.mxu0 %v4915
    %6937 = vmatprep.subr.bf16.mxu0 %v4932
    %6938 = vmatpush1.bf16.msra.mxu0 %v4931
    %6939 = vmatprep.subr.bf16.mxu0 %v4948
    %6940 = vmatpush1.bf16.msra.mxu0 %v4947
    %6941 = vmatprep.subr.bf16.mxu0 %v4964
    %6942 = vmatpush1.bf16.msra.mxu0 %v4963
    %6943 = vmatprep.subr.bf16.mxu0 %v4980
    %6944 = vmatpush1.bf16.msra.mxu0 %v4979
    %6945 = vmatprep.subr.bf16.mxu0 %v4996
    %6946 = vmatpush1.bf16.msra.mxu0 %v4995
    %6947 = vmatprep.subr.bf16.mxu0 %v5012
    %6948 = vmatpush1.bf16.msra.mxu0 %v5011
    %6949 = vmatprep.subr.bf16.mxu0 %v5028
    %6950 = vmatpush1.bf16.msra.mxu0 %v5027
    %6951 = vmatprep.subr.bf16.mxu0 %v5044
    %6952 = vmatpush1.bf16.msra.mxu0 %v5043
    %6953 = vmatprep.subr.bf16.mxu0 %v5060
    %6954 = vmatpush1.bf16.msra.mxu0 %v5059
    %6955 = vmatprep.mubr.bf16.mxu0 %v118
    %6956 = vmatmul.mubr.bf16.gmra.mrb[0].mxu0 %v117
    %v6957 = vpop.f32.mrb[0].mxu0
    %v6958 = vadd.f32 %v6917, %v6957
    %v6959 = vpop.f32.mrb[0].mxu0
    %v6960 = vadd.f32 %v6919, %v6959
    %v6961 = vpop.f32.mrb[0].mxu0
    %v6962 = vpop.f32.mrb[0].mxu0
    %6963 = vdwg.mxu0
    %6964 = vmatprep.subr.bf16.mxu0 %v5076
    %6965 = vmatpush1.bf16.msra.mxu0 %v5075
    %6966 = vmatprep.subr.bf16.mxu0 %v5092
    %6967 = vmatpush1.bf16.msra.mxu0 %v5091
    %6968 = vmatprep.subr.bf16.mxu0 %v5108
    %6969 = vmatpush1.bf16.msra.mxu0 %v5107
    %6970 = vmatprep.subr.bf16.mxu0 %v5124
    %6971 = vmatpush1.bf16.msra.mxu0 %v5123
    %6972 = vmatprep.subr.bf16.mxu0 %v5140
    %6973 = vmatpush1.bf16.msra.mxu0 %v5139
    %6974 = vmatprep.subr.bf16.mxu0 %v5156
    %6975 = vmatpush1.bf16.msra.mxu0 %v5155
    %6976 = vmatprep.subr.bf16.mxu0 %v5172
    %6977 = vmatpush1.bf16.msra.mxu0 %v5171
    %6978 = vmatprep.subr.bf16.mxu0 %v5188
    %6979 = vmatpush1.bf16.msra.mxu0 %v5187
    %6980 = vmatprep.subr.bf16.mxu0 %v5204
    %6981 = vmatpush1.bf16.msra.mxu0 %v5203
    %6982 = vmatprep.subr.bf16.mxu0 %v5220
    %6983 = vmatpush1.bf16.msra.mxu0 %v5219
    %6984 = vmatprep.subr.bf16.mxu0 %v5236
    %6985 = vmatpush1.bf16.msra.mxu0 %v5235
    %6986 = vmatprep.subr.bf16.mxu0 %v5252
    %6987 = vmatpush1.bf16.msra.mxu0 %v5251
    %6988 = vmatprep.subr.bf16.mxu0 %v5268
    %6989 = vmatpush1.bf16.msra.mxu0 %v5267
    %6990 = vmatprep.subr.bf16.mxu0 %v5284
    %6991 = vmatpush1.bf16.msra.mxu0 %v5283
    %6992 = vmatprep.subr.bf16.mxu0 %v5300
    %6993 = vmatpush1.bf16.msra.mxu0 %v5299
    %6994 = vmatprep.subr.bf16.mxu0 %v5316
    %6995 = vmatpush1.bf16.msra.mxu0 %v5315
    %6996 = vmatprep.mubr.bf16.mxu0 %v120
    %6997 = vmatmul.mubr.bf16.gmra.mrb[0].mxu0 %v119
    %v6998 = vpop.f32.mrb[0].mxu0
    %v6999 = vadd.f32 %v6958, %v6998
    %v7000 = vpop.f32.mrb[0].mxu0
    %v7001 = vadd.f32 %v6960, %v7000
    %v7002 = vpop.f32.mrb[0].mxu0
    %v7003 = vpop.f32.mrb[0].mxu0
    %7004 = vdwg.mxu0
    %7005 = vmatprep.subr.bf16.mxu0 %v4310
    %7006 = vmatpush1.bf16.msra.mxu0 %v4309
    %7007 = vmatprep.subr.bf16.mxu0 %v4326
    %7008 = vmatpush1.bf16.msra.mxu0 %v4325
    %7009 = vmatprep.subr.bf16.mxu0 %v4342
    %7010 = vmatpush1.bf16.msra.mxu0 %v4341
    %7011 = vmatprep.subr.bf16.mxu0 %v4358
    %7012 = vmatpush1.bf16.msra.mxu0 %v4357
    %7013 = vmatprep.subr.bf16.mxu0 %v4374
    %7014 = vmatpush1.bf16.msra.mxu0 %v4373
    %7015 = vmatprep.subr.bf16.mxu0 %v4390
    %7016 = vmatpush1.bf16.msra.mxu0 %v4389
    %7017 = vmatprep.subr.bf16.mxu0 %v4406
    %7018 = vmatpush1.bf16.msra.mxu0 %v4405
    %7019 = vmatprep.subr.bf16.mxu0 %v4422
    %7020 = vmatpush1.bf16.msra.mxu0 %v4421
    %7021 = vmatprep.subr.bf16.mxu0 %v4438
    %7022 = vmatpush1.bf16.msra.mxu0 %v4437
    %7023 = vmatprep.subr.bf16.mxu0 %v4454
    %7024 = vmatpush1.bf16.msra.mxu0 %v4453
    %7025 = vmatprep.subr.bf16.mxu0 %v4470
    %7026 = vmatpush1.bf16.msra.mxu0 %v4469
    %7027 = vmatprep.subr.bf16.mxu0 %v4486
    %7028 = vmatpush1.bf16.msra.mxu0 %v4485
    %7029 = vmatprep.subr.bf16.mxu0 %v4502
    %7030 = vmatpush1.bf16.msra.mxu0 %v4501
    %7031 = vmatprep.subr.bf16.mxu0 %v4518
    %7032 = vmatpush1.bf16.msra.mxu0 %v4517
    %7033 = vmatprep.subr.bf16.mxu0 %v4534
    %7034 = vmatpush1.bf16.msra.mxu0 %v4533
    %7035 = vmatprep.subr.bf16.mxu0 %v4550
    %7036 = vmatpush1.bf16.msra.mxu0 %v4549
    %7037 = vmatprep.mubr.bf16.mxu0 %v114
    %7038 = vmatmul.mubr.bf16.gmra.mrb[0].mxu0 %v113
    %v7039 = vpop.f32.mrb[0].mxu0
    %v7040 = vadd.f32 %v1184, %v7039
    %v7041 = vpop.f32.mrb[0].mxu0
    %v7042 = vadd.f32 %v1188, %v7041
    %v7043 = vpop.f32.mrb[0].mxu0
    %v7044 = vpop.f32.mrb[0].mxu0
    %7045 = vdwg.mxu0
    %7046 = vmatprep.subr.bf16.mxu0 %v4566
    %7047 = vmatpush1.bf16.msra.mxu0 %v4565
    %7048 = vmatprep.subr.bf16.mxu0 %v4582
    %7049 = vmatpush1.bf16.msra.mxu0 %v4581
    %7050 = vmatprep.subr.bf16.mxu0 %v4598
    %7051 = vmatpush1.bf16.msra.mxu0 %v4597
    %7052 = vmatprep.subr.bf16.mxu0 %v4614
    %7053 = vmatpush1.bf16.msra.mxu0 %v4613
    %7054 = vmatprep.subr.bf16.mxu0 %v4630
    %7055 = vmatpush1.bf16.msra.mxu0 %v4629
    %7056 = vmatprep.subr.bf16.mxu0 %v4646
    %7057 = vmatpush1.bf16.msra.mxu0 %v4645
    %7058 = vmatprep.subr.bf16.mxu0 %v4662
    %7059 = vmatpush1.bf16.msra.mxu0 %v4661
    %7060 = vmatprep.subr.bf16.mxu0 %v4678
    %7061 = vmatpush1.bf16.msra.mxu0 %v4677
    %7062 = vmatprep.subr.bf16.mxu0 %v4694
    %7063 = vmatpush1.bf16.msra.mxu0 %v4693
    %7064 = vmatprep.subr.bf16.mxu0 %v4710
    %7065 = vmatpush1.bf16.msra.mxu0 %v4709
    %7066 = vmatprep.subr.bf16.mxu0 %v4726
    %7067 = vmatpush1.bf16.msra.mxu0 %v4725
    %7068 = vmatprep.subr.bf16.mxu0 %v4742
    %7069 = vmatpush1.bf16.msra.mxu0 %v4741
    %7070 = vmatprep.subr.bf16.mxu0 %v4758
    %7071 = vmatpush1.bf16.msra.mxu0 %v4757
    %7072 = vmatprep.subr.bf16.mxu0 %v4774
    %7073 = vmatpush1.bf16.msra.mxu0 %v4773
    %7074 = vmatprep.subr.bf16.mxu0 %v4790
    %7075 = vmatpush1.bf16.msra.mxu0 %v4789
    %7076 = vmatprep.subr.bf16.mxu0 %v4806
    %7077 = vmatpush1.bf16.msra.mxu0 %v4805
    %7078 = vmatprep.mubr.bf16.mxu0 %v116
    %7079 = vmatmul.mubr.bf16.gmra.mrb[0].mxu0 %v115
    %v7080 = vpop.f32.mrb[0].mxu0
    %v7081 = vadd.f32 %v7040, %v7080
    %v7082 = vpop.f32.mrb[0].mxu0
    %v7083 = vadd.f32 %v7042, %v7082
    %v7084 = vpop.f32.mrb[0].mxu0
    %v7085 = vpop.f32.mrb[0].mxu0
    %7086 = vdwg.mxu0
    %7087 = vmatprep.subr.bf16.mxu0 %v4822
    %7088 = vmatpush1.bf16.msra.mxu0 %v4821
    %7089 = vmatprep.subr.bf16.mxu0 %v4838
    %7090 = vmatpush1.bf16.msra.mxu0 %v4837
    %7091 = vmatprep.subr.bf16.mxu0 %v4854
    %7092 = vmatpush1.bf16.msra.mxu0 %v4853
    %7093 = vmatprep.subr.bf16.mxu0 %v4870
    %7094 = vmatpush1.bf16.msra.mxu0 %v4869
    %7095 = vmatprep.subr.bf16.mxu0 %v4886
    %7096 = vmatpush1.bf16.msra.mxu0 %v4885
    %7097 = vmatprep.subr.bf16.mxu0 %v4902
    %7098 = vmatpush1.bf16.msra.mxu0 %v4901
    %7099 = vmatprep.subr.bf16.mxu0 %v4918
    %7100 = vmatpush1.bf16.msra.mxu0 %v4917
    %7101 = vmatprep.subr.bf16.mxu0 %v4934
    %7102 = vmatpush1.bf16.msra.mxu0 %v4933
    %7103 = vmatprep.subr.bf16.mxu0 %v4950
    %7104 = vmatpush1.bf16.msra.mxu0 %v4949
    %7105 = vmatprep.subr.bf16.mxu0 %v4966
    %7106 = vmatpush1.bf16.msra.mxu0 %v4965
    %7107 = vmatprep.subr.bf16.mxu0 %v4982
    %7108 = vmatpush1.bf16.msra.mxu0 %v4981
    %7109 = vmatprep.subr.bf16.mxu0 %v4998
    %7110 = vmatpush1.bf16.msra.mxu0 %v4997
    %7111 = vmatprep.subr.bf16.mxu0 %v5014
    %7112 = vmatpush1.bf16.msra.mxu0 %v5013
    %7113 = vmatprep.subr.bf16.mxu0 %v5030
    %7114 = vmatpush1.bf16.msra.mxu0 %v5029
    %7115 = vmatprep.subr.bf16.mxu0 %v5046
    %7116 = vmatpush1.bf16.msra.mxu0 %v5045
    %7117 = vmatprep.subr.bf16.mxu0 %v5062
    %7118 = vmatpush1.bf16.msra.mxu0 %v5061
    %7119 = vmatprep.mubr.bf16.mxu0 %v118
    %7120 = vmatmul.mubr.bf16.gmra.mrb[0].mxu0 %v117
    %v7121 = vpop.f32.mrb[0].mxu0
    %v7122 = vadd.f32 %v7081, %v7121
    %v7123 = vpop.f32.mrb[0].mxu0
    %v7124 = vadd.f32 %v7083, %v7123
    %v7125 = vpop.f32.mrb[0].mxu0
    %v7126 = vpop.f32.mrb[0].mxu0
    %7127 = vdwg.mxu0
    %7128 = vmatprep.subr.bf16.mxu0 %v5078
    %7129 = vmatpush1.bf16.msra.mxu0 %v5077
    %7130 = vmatprep.subr.bf16.mxu0 %v5094
    %7131 = vmatpush1.bf16.msra.mxu0 %v5093
    %7132 = vmatprep.subr.bf16.mxu0 %v5110
    %7133 = vmatpush1.bf16.msra.mxu0 %v5109
    %7134 = vmatprep.subr.bf16.mxu0 %v5126
    %7135 = vmatpush1.bf16.msra.mxu0 %v5125
    %7136 = vmatprep.subr.bf16.mxu0 %v5142
    %7137 = vmatpush1.bf16.msra.mxu0 %v5141
    %7138 = vmatprep.subr.bf16.mxu0 %v5158
    %7139 = vmatpush1.bf16.msra.mxu0 %v5157
    %7140 = vmatprep.subr.bf16.mxu0 %v5174
    %7141 = vmatpush1.bf16.msra.mxu0 %v5173
    %7142 = vmatprep.subr.bf16.mxu0 %v5190
    %7143 = vmatpush1.bf16.msra.mxu0 %v5189
    %7144 = vmatprep.subr.bf16.mxu0 %v5206
    %7145 = vmatpush1.bf16.msra.mxu0 %v5205
    %7146 = vmatprep.subr.bf16.mxu0 %v5222
    %7147 = vmatpush1.bf16.msra.mxu0 %v5221
    %7148 = vmatprep.subr.bf16.mxu0 %v5238
    %7149 = vmatpush1.bf16.msra.mxu0 %v5237
    %7150 = vmatprep.subr.bf16.mxu0 %v5254
    %7151 = vmatpush1.bf16.msra.mxu0 %v5253
    %7152 = vmatprep.subr.bf16.mxu0 %v5270
    %7153 = vmatpush1.bf16.msra.mxu0 %v5269
    %7154 = vmatprep.subr.bf16.mxu0 %v5286
    %7155 = vmatpush1.bf16.msra.mxu0 %v5285
    %7156 = vmatprep.subr.bf16.mxu0 %v5302
    %7157 = vmatpush1.bf16.msra.mxu0 %v5301
    %7158 = vmatprep.subr.bf16.mxu0 %v5318
    %7159 = vmatpush1.bf16.msra.mxu0 %v5317
    %7160 = vmatprep.mubr.bf16.mxu0 %v120
    %7161 = vmatmul.mubr.bf16.gmra.mrb[0].mxu0 %v119
    %v7162 = vpop.f32.mrb[0].mxu0
    %v7163 = vadd.f32 %v7122, %v7162
    %v7164 = vpop.f32.mrb[0].mxu0
    %v7165 = vadd.f32 %v7124, %v7164
    %v7166 = vpop.f32.mrb[0].mxu0
    %v7167 = vpop.f32.mrb[0].mxu0
    %7168 = vdwg.mxu0
    %7169 = vmatprep.subr.bf16.mxu0 %v4312
    %7170 = vmatpush1.bf16.msra.mxu0 %v4311
    %7171 = vmatprep.subr.bf16.mxu0 %v4328
    %7172 = vmatpush1.bf16.msra.mxu0 %v4327
    %7173 = vmatprep.subr.bf16.mxu0 %v4344
    %7174 = vmatpush1.bf16.msra.mxu0 %v4343
    %7175 = vmatprep.subr.bf16.mxu0 %v4360
    %7176 = vmatpush1.bf16.msra.mxu0 %v4359
    %7177 = vmatprep.subr.bf16.mxu0 %v4376
    %7178 = vmatpush1.bf16.msra.mxu0 %v4375
    %7179 = vmatprep.subr.bf16.mxu0 %v4392
    %7180 = vmatpush1.bf16.msra.mxu0 %v4391
    %7181 = vmatprep.subr.bf16.mxu0 %v4408
    %7182 = vmatpush1.bf16.msra.mxu0 %v4407
    %7183 = vmatprep.subr.bf16.mxu0 %v4424
    %7184 = vmatpush1.bf16.msra.mxu0 %v4423
    %7185 = vmatprep.subr.bf16.mxu0 %v4440
    %7186 = vmatpush1.bf16.msra.mxu0 %v4439
    %7187 = vmatprep.subr.bf16.mxu0 %v4456
    %7188 = vmatpush1.bf16.msra.mxu0 %v4455
    %7189 = vmatprep.subr.bf16.mxu0 %v4472
    %7190 = vmatpush1.bf16.msra.mxu0 %v4471
    %7191 = vmatprep.subr.bf16.mxu0 %v4488
    %7192 = vmatpush1.bf16.msra.mxu0 %v4487
    %7193 = vmatprep.subr.bf16.mxu0 %v4504
    %7194 = vmatpush1.bf16.msra.mxu0 %v4503
    %7195 = vmatprep.subr.bf16.mxu0 %v4520
    %7196 = vmatpush1.bf16.msra.mxu0 %v4519
    %7197 = vmatprep.subr.bf16.mxu0 %v4536
    %7198 = vmatpush1.bf16.msra.mxu0 %v4535
    %7199 = vmatprep.subr.bf16.mxu0 %v4552
    %7200 = vmatpush1.bf16.msra.mxu0 %v4551
    %7201 = vmatprep.mubr.bf16.mxu0 %v114
    %7202 = vmatmul.mubr.bf16.gmra.mrb[0].mxu0 %v113
    %v7203 = vpop.f32.mrb[0].mxu0
    %v7204 = vadd.f32 %v1192, %v7203
    %v7205 = vpop.f32.mrb[0].mxu0
    %v7206 = vadd.f32 %v1196, %v7205
    %v7207 = vpop.f32.mrb[0].mxu0
    %v7208 = vpop.f32.mrb[0].mxu0
    %7209 = vdwg.mxu0
    %7210 = vmatprep.subr.bf16.mxu0 %v4568
    %7211 = vmatpush1.bf16.msra.mxu0 %v4567
    %7212 = vmatprep.subr.bf16.mxu0 %v4584
    %7213 = vmatpush1.bf16.msra.mxu0 %v4583
    %7214 = vmatprep.subr.bf16.mxu0 %v4600
    %7215 = vmatpush1.bf16.msra.mxu0 %v4599
    %7216 = vmatprep.subr.bf16.mxu0 %v4616
    %7217 = vmatpush1.bf16.msra.mxu0 %v4615
    %7218 = vmatprep.subr.bf16.mxu0 %v4632
    %7219 = vmatpush1.bf16.msra.mxu0 %v4631
    %7220 = vmatprep.subr.bf16.mxu0 %v4648
    %7221 = vmatpush1.bf16.msra.mxu0 %v4647
    %7222 = vmatprep.subr.bf16.mxu0 %v4664
    %7223 = vmatpush1.bf16.msra.mxu0 %v4663
    %7224 = vmatprep.subr.bf16.mxu0 %v4680
    %7225 = vmatpush1.bf16.msra.mxu0 %v4679
    %7226 = vmatprep.subr.bf16.mxu0 %v4696
    %7227 = vmatpush1.bf16.msra.mxu0 %v4695
    %7228 = vmatprep.subr.bf16.mxu0 %v4712
    %7229 = vmatpush1.bf16.msra.mxu0 %v4711
    %7230 = vmatprep.subr.bf16.mxu0 %v4728
    %7231 = vmatpush1.bf16.msra.mxu0 %v4727
    %7232 = vmatprep.subr.bf16.mxu0 %v4744
    %7233 = vmatpush1.bf16.msra.mxu0 %v4743
    %7234 = vmatprep.subr.bf16.mxu0 %v4760
    %7235 = vmatpush1.bf16.msra.mxu0 %v4759
    %7236 = vmatprep.subr.bf16.mxu0 %v4776
    %7237 = vmatpush1.bf16.msra.mxu0 %v4775
    %7238 = vmatprep.subr.bf16.mxu0 %v4792
    %7239 = vmatpush1.bf16.msra.mxu0 %v4791
    %7240 = vmatprep.subr.bf16.mxu0 %v4808
    %7241 = vmatpush1.bf16.msra.mxu0 %v4807
    %7242 = vmatprep.mubr.bf16.mxu0 %v116
    %7243 = vmatmul.mubr.bf16.gmra.mrb[0].mxu0 %v115
    %v7244 = vpop.f32.mrb[0].mxu0
    %v7245 = vadd.f32 %v7204, %v7244
    %v7246 = vpop.f32.mrb[0].mxu0
    %v7247 = vadd.f32 %v7206, %v7246
    %v7248 = vpop.f32.mrb[0].mxu0
    %v7249 = vpop.f32.mrb[0].mxu0
    %7250 = vdwg.mxu0
    %7251 = vmatprep.subr.bf16.mxu0 %v4824
    %7252 = vmatpush1.bf16.msra.mxu0 %v4823
    %7253 = vmatprep.subr.bf16.mxu0 %v4840
    %7254 = vmatpush1.bf16.msra.mxu0 %v4839
    %7255 = vmatprep.subr.bf16.mxu0 %v4856
    %7256 = vmatpush1.bf16.msra.mxu0 %v4855
    %7257 = vmatprep.subr.bf16.mxu0 %v4872
    %7258 = vmatpush1.bf16.msra.mxu0 %v4871
    %7259 = vmatprep.subr.bf16.mxu0 %v4888
    %7260 = vmatpush1.bf16.msra.mxu0 %v4887
    %7261 = vmatprep.subr.bf16.mxu0 %v4904
    %7262 = vmatpush1.bf16.msra.mxu0 %v4903
    %7263 = vmatprep.subr.bf16.mxu0 %v4920
    %7264 = vmatpush1.bf16.msra.mxu0 %v4919
    %7265 = vmatprep.subr.bf16.mxu0 %v4936
    %7266 = vmatpush1.bf16.msra.mxu0 %v4935
    %7267 = vmatprep.subr.bf16.mxu0 %v4952
    %7268 = vmatpush1.bf16.msra.mxu0 %v4951
    %7269 = vmatprep.subr.bf16.mxu0 %v4968
    %7270 = vmatpush1.bf16.msra.mxu0 %v4967
    %7271 = vmatprep.subr.bf16.mxu0 %v4984
    %7272 = vmatpush1.bf16.msra.mxu0 %v4983
    %7273 = vmatprep.subr.bf16.mxu0 %v5000
    %7274 = vmatpush1.bf16.msra.mxu0 %v4999
    %7275 = vmatprep.subr.bf16.mxu0 %v5016
    %7276 = vmatpush1.bf16.msra.mxu0 %v5015
    %7277 = vmatprep.subr.bf16.mxu0 %v5032
    %7278 = vmatpush1.bf16.msra.mxu0 %v5031
    %7279 = vmatprep.subr.bf16.mxu0 %v5048
    %7280 = vmatpush1.bf16.msra.mxu0 %v5047
    %7281 = vmatprep.subr.bf16.mxu0 %v5064
    %7282 = vmatpush1.bf16.msra.mxu0 %v5063
    %7283 = vmatprep.mubr.bf16.mxu0 %v118
    %7284 = vmatmul.mubr.bf16.gmra.mrb[0].mxu0 %v117
    %v7285 = vpop.f32.mrb[0].mxu0
    %v7286 = vadd.f32 %v7245, %v7285
    %v7287 = vpop.f32.mrb[0].mxu0
    %v7288 = vadd.f32 %v7247, %v7287
    %v7289 = vpop.f32.mrb[0].mxu0
    %v7290 = vpop.f32.mrb[0].mxu0
    %7291 = vdwg.mxu0
    %7292 = vmatprep.subr.bf16.mxu0 %v5080
    %7293 = vmatpush1.bf16.msra.mxu0 %v5079
    %7294 = vmatprep.subr.bf16.mxu0 %v5096
    %7295 = vmatpush1.bf16.msra.mxu0 %v5095
    %7296 = vmatprep.subr.bf16.mxu0 %v5112
    %7297 = vmatpush1.bf16.msra.mxu0 %v5111
    %7298 = vmatprep.subr.bf16.mxu0 %v5128
    %7299 = vmatpush1.bf16.msra.mxu0 %v5127
    %7300 = vmatprep.subr.bf16.mxu0 %v5144
    %7301 = vmatpush1.bf16.msra.mxu0 %v5143
    %7302 = vmatprep.subr.bf16.mxu0 %v5160
    %7303 = vmatpush1.bf16.msra.mxu0 %v5159
    %7304 = vmatprep.subr.bf16.mxu0 %v5176
    %7305 = vmatpush1.bf16.msra.mxu0 %v5175
    %7306 = vmatprep.subr.bf16.mxu0 %v5192
    %7307 = vmatpush1.bf16.msra.mxu0 %v5191
    %7308 = vmatprep.subr.bf16.mxu0 %v5208
    %7309 = vmatpush1.bf16.msra.mxu0 %v5207
    %7310 = vmatprep.subr.bf16.mxu0 %v5224
    %7311 = vmatpush1.bf16.msra.mxu0 %v5223
    %7312 = vmatprep.subr.bf16.mxu0 %v5240
    %7313 = vmatpush1.bf16.msra.mxu0 %v5239
    %7314 = vmatprep.subr.bf16.mxu0 %v5256
    %7315 = vmatpush1.bf16.msra.mxu0 %v5255
    %7316 = vmatprep.subr.bf16.mxu0 %v5272
    %7317 = vmatpush1.bf16.msra.mxu0 %v5271
    %7318 = vmatprep.subr.bf16.mxu0 %v5288
    %7319 = vmatpush1.bf16.msra.mxu0 %v5287
    %7320 = vmatprep.subr.bf16.mxu0 %v5304
    %7321 = vmatpush1.bf16.msra.mxu0 %v5303
    %7322 = vmatprep.subr.bf16.mxu0 %v5320
    %7323 = vmatpush1.bf16.msra.mxu0 %v5319
    %7324 = vmatprep.mubr.bf16.mxu0 %v120
    %7325 = vmatmul.mubr.bf16.gmra.mrb[0].mxu0 %v119
    %v7326 = vpop.f32.mrb[0].mxu0
    %v7327 = vadd.f32 %v7286, %v7326
    %v7328 = vpop.f32.mrb[0].mxu0
    %v7329 = vadd.f32 %v7288, %v7328
    %v7330 = vpop.f32.mrb[0].mxu0
    %v7331 = vpop.f32.mrb[0].mxu0
    %7332 = vdwg.mxu0
    %7333 = vmatprep.subr.bf16.mxu0 %v4314
    %7334 = vmatpush1.bf16.msra.mxu0 %v4313
    %7335 = vmatprep.subr.bf16.mxu0 %v4330
    %7336 = vmatpush1.bf16.msra.mxu0 %v4329
    %7337 = vmatprep.subr.bf16.mxu0 %v4346
    %7338 = vmatpush1.bf16.msra.mxu0 %v4345
    %7339 = vmatprep.subr.bf16.mxu0 %v4362
    %7340 = vmatpush1.bf16.msra.mxu0 %v4361
    %7341 = vmatprep.subr.bf16.mxu0 %v4378
    %7342 = vmatpush1.bf16.msra.mxu0 %v4377
    %7343 = vmatprep.subr.bf16.mxu0 %v4394
    %7344 = vmatpush1.bf16.msra.mxu0 %v4393
    %7345 = vmatprep.subr.bf16.mxu0 %v4410
    %7346 = vmatpush1.bf16.msra.mxu0 %v4409
    %7347 = vmatprep.subr.bf16.mxu0 %v4426
    %7348 = vmatpush1.bf16.msra.mxu0 %v4425
    %7349 = vmatprep.subr.bf16.mxu0 %v4442
    %7350 = vmatpush1.bf16.msra.mxu0 %v4441
    %7351 = vmatprep.subr.bf16.mxu0 %v4458
    %7352 = vmatpush1.bf16.msra.mxu0 %v4457
    %7353 = vmatprep.subr.bf16.mxu0 %v4474
    %7354 = vmatpush1.bf16.msra.mxu0 %v4473
    %7355 = vmatprep.subr.bf16.mxu0 %v4490
    %7356 = vmatpush1.bf16.msra.mxu0 %v4489
    %7357 = vmatprep.subr.bf16.mxu0 %v4506
    %7358 = vmatpush1.bf16.msra.mxu0 %v4505
    %7359 = vmatprep.subr.bf16.mxu0 %v4522
    %7360 = vmatpush1.bf16.msra.mxu0 %v4521
    %7361 = vmatprep.subr.bf16.mxu0 %v4538
    %7362 = vmatpush1.bf16.msra.mxu0 %v4537
    %7363 = vmatprep.subr.bf16.mxu0 %v4554
    %7364 = vmatpush1.bf16.msra.mxu0 %v4553
    %7365 = vmatprep.mubr.bf16.mxu0 %v114
    %7366 = vmatmul.mubr.bf16.gmra.mrb[0].mxu0 %v113
    %v7367 = vpop.f32.mrb[0].mxu0
    %v7368 = vadd.f32 %v1200, %v7367
    %v7369 = vpop.f32.mrb[0].mxu0
    %v7370 = vadd.f32 %v1204, %v7369
    %v7371 = vpop.f32.mrb[0].mxu0
    %v7372 = vpop.f32.mrb[0].mxu0
    %7373 = vdwg.mxu0
    %7374 = vmatprep.subr.bf16.mxu0 %v4570
    %7375 = vmatpush1.bf16.msra.mxu0 %v4569
    %7376 = vmatprep.subr.bf16.mxu0 %v4586
    %7377 = vmatpush1.bf16.msra.mxu0 %v4585
    %7378 = vmatprep.subr.bf16.mxu0 %v4602
    %7379 = vmatpush1.bf16.msra.mxu0 %v4601
    %7380 = vmatprep.subr.bf16.mxu0 %v4618
    %7381 = vmatpush1.bf16.msra.mxu0 %v4617
    %7382 = vmatprep.subr.bf16.mxu0 %v4634
    %7383 = vmatpush1.bf16.msra.mxu0 %v4633
    %7384 = vmatprep.subr.bf16.mxu0 %v4650
    %7385 = vmatpush1.bf16.msra.mxu0 %v4649
    %7386 = vmatprep.subr.bf16.mxu0 %v4666
    %7387 = vmatpush1.bf16.msra.mxu0 %v4665
    %7388 = vmatprep.subr.bf16.mxu0 %v4682
    %7389 = vmatpush1.bf16.msra.mxu0 %v4681
    %7390 = vmatprep.subr.bf16.mxu0 %v4698
    %7391 = vmatpush1.bf16.msra.mxu0 %v4697
    %7392 = vmatprep.subr.bf16.mxu0 %v4714
    %7393 = vmatpush1.bf16.msra.mxu0 %v4713
    %7394 = vmatprep.subr.bf16.mxu0 %v4730
    %7395 = vmatpush1.bf16.msra.mxu0 %v4729
    %7396 = vmatprep.subr.bf16.mxu0 %v4746
    %7397 = vmatpush1.bf16.msra.mxu0 %v4745
    %7398 = vmatprep.subr.bf16.mxu0 %v4762
    %7399 = vmatpush1.bf16.msra.mxu0 %v4761
    %7400 = vmatprep.subr.bf16.mxu0 %v4778
    %7401 = vmatpush1.bf16.msra.mxu0 %v4777
    %7402 = vmatprep.subr.bf16.mxu0 %v4794
    %7403 = vmatpush1.bf16.msra.mxu0 %v4793
    %7404 = vmatprep.subr.bf16.mxu0 %v4810
    %7405 = vmatpush1.bf16.msra.mxu0 %v4809
    %7406 = vmatprep.mubr.bf16.mxu0 %v116
    %7407 = vmatmul.mubr.bf16.gmra.mrb[0].mxu0 %v115
    %v7408 = vpop.f32.mrb[0].mxu0
    %v7409 = vadd.f32 %v7368, %v7408
    %v7410 = vpop.f32.mrb[0].mxu0
    %v7411 = vadd.f32 %v7370, %v7410
    %v7412 = vpop.f32.mrb[0].mxu0
    %v7413 = vpop.f32.mrb[0].mxu0
    %7414 = vdwg.mxu0
    %7415 = vmatprep.subr.bf16.mxu0 %v4826
    %7416 = vmatpush1.bf16.msra.mxu0 %v4825
    %7417 = vmatprep.subr.bf16.mxu0 %v4842
    %7418 = vmatpush1.bf16.msra.mxu0 %v4841
    %7419 = vmatprep.subr.bf16.mxu0 %v4858
    %7420 = vmatpush1.bf16.msra.mxu0 %v4857
    %7421 = vmatprep.subr.bf16.mxu0 %v4874
    %7422 = vmatpush1.bf16.msra.mxu0 %v4873
    %7423 = vmatprep.subr.bf16.mxu0 %v4890
    %7424 = vmatpush1.bf16.msra.mxu0 %v4889
    %7425 = vmatprep.subr.bf16.mxu0 %v4906
    %7426 = vmatpush1.bf16.msra.mxu0 %v4905
    %7427 = vmatprep.subr.bf16.mxu0 %v4922
    %7428 = vmatpush1.bf16.msra.mxu0 %v4921
    %7429 = vmatprep.subr.bf16.mxu0 %v4938
    %7430 = vmatpush1.bf16.msra.mxu0 %v4937
    %7431 = vmatprep.subr.bf16.mxu0 %v4954
    %7432 = vmatpush1.bf16.msra.mxu0 %v4953
    %7433 = vmatprep.subr.bf16.mxu0 %v4970
    %7434 = vmatpush1.bf16.msra.mxu0 %v4969
    %7435 = vmatprep.subr.bf16.mxu0 %v4986
    %7436 = vmatpush1.bf16.msra.mxu0 %v4985
    %7437 = vmatprep.subr.bf16.mxu0 %v5002
    %7438 = vmatpush1.bf16.msra.mxu0 %v5001
    %7439 = vmatprep.subr.bf16.mxu0 %v5018
    %7440 = vmatpush1.bf16.msra.mxu0 %v5017
    %7441 = vmatprep.subr.bf16.mxu0 %v5034
    %7442 = vmatpush1.bf16.msra.mxu0 %v5033
    %7443 = vmatprep.subr.bf16.mxu0 %v5050
    %7444 = vmatpush1.bf16.msra.mxu0 %v5049
    %7445 = vmatprep.subr.bf16.mxu0 %v5066
    %7446 = vmatpush1.bf16.msra.mxu0 %v5065
    %7447 = vmatprep.mubr.bf16.mxu0 %v118
    %7448 = vmatmul.mubr.bf16.gmra.mrb[0].mxu0 %v117
    %v7449 = vpop.f32.mrb[0].mxu0
    %v7450 = vadd.f32 %v7409, %v7449
    %v7451 = vpop.f32.mrb[0].mxu0
    %v7452 = vadd.f32 %v7411, %v7451
    %v7453 = vpop.f32.mrb[0].mxu0
    %v7454 = vpop.f32.mrb[0].mxu0
    %7455 = vdwg.mxu0
    %7456 = vmatprep.subr.bf16.mxu0 %v5082
    %7457 = vmatpush1.bf16.msra.mxu0 %v5081
    %7458 = vmatprep.subr.bf16.mxu0 %v5098
    %7459 = vmatpush1.bf16.msra.mxu0 %v5097
    %7460 = vmatprep.subr.bf16.mxu0 %v5114
    %7461 = vmatpush1.bf16.msra.mxu0 %v5113
    %7462 = vmatprep.subr.bf16.mxu0 %v5130
    %7463 = vmatpush1.bf16.msra.mxu0 %v5129
    %7464 = vmatprep.subr.bf16.mxu0 %v5146
    %7465 = vmatpush1.bf16.msra.mxu0 %v5145
    %7466 = vmatprep.subr.bf16.mxu0 %v5162
    %7467 = vmatpush1.bf16.msra.mxu0 %v5161
    %7468 = vmatprep.subr.bf16.mxu0 %v5178
    %7469 = vmatpush1.bf16.msra.mxu0 %v5177
    %7470 = vmatprep.subr.bf16.mxu0 %v5194
    %7471 = vmatpush1.bf16.msra.mxu0 %v5193
    %7472 = vmatprep.subr.bf16.mxu0 %v5210
    %7473 = vmatpush1.bf16.msra.mxu0 %v5209
    %7474 = vmatprep.subr.bf16.mxu0 %v5226
    %7475 = vmatpush1.bf16.msra.mxu0 %v5225
    %7476 = vmatprep.subr.bf16.mxu0 %v5242
    %7477 = vmatpush1.bf16.msra.mxu0 %v5241
    %7478 = vmatprep.subr.bf16.mxu0 %v5258
    %7479 = vmatpush1.bf16.msra.mxu0 %v5257
    %7480 = vmatprep.subr.bf16.mxu0 %v5274
    %7481 = vmatpush1.bf16.msra.mxu0 %v5273
    %7482 = vmatprep.subr.bf16.mxu0 %v5290
    %7483 = vmatpush1.bf16.msra.mxu0 %v5289
    %7484 = vmatprep.subr.bf16.mxu0 %v5306
    %7485 = vmatpush1.bf16.msra.mxu0 %v5305
    %7486 = vmatprep.subr.bf16.mxu0 %v5322
    %7487 = vmatpush1.bf16.msra.mxu0 %v5321
    %7488 = vmatprep.mubr.bf16.mxu0 %v120
    %7489 = vmatmul.mubr.bf16.gmra.mrb[0].mxu0 %v119
    %v7490 = vpop.f32.mrb[0].mxu0
    %v7491 = vadd.f32 %v7450, %v7490
    %v7492 = vpop.f32.mrb[0].mxu0
    %v7493 = vadd.f32 %v7452, %v7492
    %v7494 = vpop.f32.mrb[0].mxu0
    %v7495 = vpop.f32.mrb[0].mxu0
    %7496 = vdwg.mxu0
    %7497 = vmatprep.subr.bf16.mxu0 %v4316
    %7498 = vmatpush1.bf16.msra.mxu0 %v4315
    %7499 = vmatprep.subr.bf16.mxu0 %v4332
    %7500 = vmatpush1.bf16.msra.mxu0 %v4331
    %7501 = vmatprep.subr.bf16.mxu0 %v4348
    %7502 = vmatpush1.bf16.msra.mxu0 %v4347
    %7503 = vmatprep.subr.bf16.mxu0 %v4364
    %7504 = vmatpush1.bf16.msra.mxu0 %v4363
    %7505 = vmatprep.subr.bf16.mxu0 %v4380
    %7506 = vmatpush1.bf16.msra.mxu0 %v4379
    %7507 = vmatprep.subr.bf16.mxu0 %v4396
    %7508 = vmatpush1.bf16.msra.mxu0 %v4395
    %7509 = vmatprep.subr.bf16.mxu0 %v4412
    %7510 = vmatpush1.bf16.msra.mxu0 %v4411
    %7511 = vmatprep.subr.bf16.mxu0 %v4428
    %7512 = vmatpush1.bf16.msra.mxu0 %v4427
    %7513 = vmatprep.subr.bf16.mxu0 %v4444
    %7514 = vmatpush1.bf16.msra.mxu0 %v4443
    %7515 = vmatprep.subr.bf16.mxu0 %v4460
    %7516 = vmatpush1.bf16.msra.mxu0 %v4459
    %7517 = vmatprep.subr.bf16.mxu0 %v4476
    %7518 = vmatpush1.bf16.msra.mxu0 %v4475
    %7519 = vmatprep.subr.bf16.mxu0 %v4492
    %7520 = vmatpush1.bf16.msra.mxu0 %v4491
    %7521 = vmatprep.subr.bf16.mxu0 %v4508
    %7522 = vmatpush1.bf16.msra.mxu0 %v4507
    %7523 = vmatprep.subr.bf16.mxu0 %v4524
    %7524 = vmatpush1.bf16.msra.mxu0 %v4523
    %7525 = vmatprep.subr.bf16.mxu0 %v4540
    %7526 = vmatpush1.bf16.msra.mxu0 %v4539
    %7527 = vmatprep.subr.bf16.mxu0 %v4556
    %7528 = vmatpush1.bf16.msra.mxu0 %v4555
    %7529 = vmatprep.mubr.bf16.mxu0 %v114
    %7530 = vmatmul.mubr.bf16.gmra.mrb[0].mxu0 %v113
    %v7531 = vpop.f32.mrb[0].mxu0
    %v7532 = vadd.f32 %v1208, %v7531
    %v7533 = vpop.f32.mrb[0].mxu0
    %v7534 = vadd.f32 %v1212, %v7533
    %v7535 = vpop.f32.mrb[0].mxu0
    %v7536 = vpop.f32.mrb[0].mxu0
    %7537 = vdwg.mxu0
    %7538 = vmatprep.subr.bf16.mxu0 %v4572
    %7539 = vmatpush1.bf16.msra.mxu0 %v4571
    %7540 = vmatprep.subr.bf16.mxu0 %v4588
    %7541 = vmatpush1.bf16.msra.mxu0 %v4587
    %7542 = vmatprep.subr.bf16.mxu0 %v4604
    %7543 = vmatpush1.bf16.msra.mxu0 %v4603
    %7544 = vmatprep.subr.bf16.mxu0 %v4620
    %7545 = vmatpush1.bf16.msra.mxu0 %v4619
    %7546 = vmatprep.subr.bf16.mxu0 %v4636
    %7547 = vmatpush1.bf16.msra.mxu0 %v4635
    %7548 = vmatprep.subr.bf16.mxu0 %v4652
    %7549 = vmatpush1.bf16.msra.mxu0 %v4651
    %7550 = vmatprep.subr.bf16.mxu0 %v4668
    %7551 = vmatpush1.bf16.msra.mxu0 %v4667
    %7552 = vmatprep.subr.bf16.mxu0 %v4684
    %7553 = vmatpush1.bf16.msra.mxu0 %v4683
    %7554 = vmatprep.subr.bf16.mxu0 %v4700
    %7555 = vmatpush1.bf16.msra.mxu0 %v4699
    %7556 = vmatprep.subr.bf16.mxu0 %v4716
    %7557 = vmatpush1.bf16.msra.mxu0 %v4715
    %7558 = vmatprep.subr.bf16.mxu0 %v4732
    %7559 = vmatpush1.bf16.msra.mxu0 %v4731
    %7560 = vmatprep.subr.bf16.mxu0 %v4748
    %7561 = vmatpush1.bf16.msra.mxu0 %v4747
    %7562 = vmatprep.subr.bf16.mxu0 %v4764
    %7563 = vmatpush1.bf16.msra.mxu0 %v4763
    %7564 = vmatprep.subr.bf16.mxu0 %v4780
    %7565 = vmatpush1.bf16.msra.mxu0 %v4779
    %7566 = vmatprep.subr.bf16.mxu0 %v4796
    %7567 = vmatpush1.bf16.msra.mxu0 %v4795
    %7568 = vmatprep.subr.bf16.mxu0 %v4812
    %7569 = vmatpush1.bf16.msra.mxu0 %v4811
    %7570 = vmatprep.mubr.bf16.mxu0 %v116
    %7571 = vmatmul.mubr.bf16.gmra.mrb[0].mxu0 %v115
    %v7572 = vpop.f32.mrb[0].mxu0
    %v7573 = vadd.f32 %v7532, %v7572
    %v7574 = vpop.f32.mrb[0].mxu0
    %v7575 = vadd.f32 %v7534, %v7574
    %v7576 = vpop.f32.mrb[0].mxu0
    %v7577 = vpop.f32.mrb[0].mxu0
    %7578 = vdwg.mxu0
    %7579 = vmatprep.subr.bf16.mxu0 %v4828
    %7580 = vmatpush1.bf16.msra.mxu0 %v4827
    %7581 = vmatprep.subr.bf16.mxu0 %v4844
    %7582 = vmatpush1.bf16.msra.mxu0 %v4843
    %7583 = vmatprep.subr.bf16.mxu0 %v4860
    %7584 = vmatpush1.bf16.msra.mxu0 %v4859
    %7585 = vmatprep.subr.bf16.mxu0 %v4876
    %7586 = vmatpush1.bf16.msra.mxu0 %v4875
    %7587 = vmatprep.subr.bf16.mxu0 %v4892
    %7588 = vmatpush1.bf16.msra.mxu0 %v4891
    %7589 = vmatprep.subr.bf16.mxu0 %v4908
    %7590 = vmatpush1.bf16.msra.mxu0 %v4907
    %7591 = vmatprep.subr.bf16.mxu0 %v4924
    %7592 = vmatpush1.bf16.msra.mxu0 %v4923
    %7593 = vmatprep.subr.bf16.mxu0 %v4940
    %7594 = vmatpush1.bf16.msra.mxu0 %v4939
    %7595 = vmatprep.subr.bf16.mxu0 %v4956
    %7596 = vmatpush1.bf16.msra.mxu0 %v4955
    %7597 = vmatprep.subr.bf16.mxu0 %v4972
    %7598 = vmatpush1.bf16.msra.mxu0 %v4971
    %7599 = vmatprep.subr.bf16.mxu0 %v4988
    %7600 = vmatpush1.bf16.msra.mxu0 %v4987
    %7601 = vmatprep.subr.bf16.mxu0 %v5004
    %7602 = vmatpush1.bf16.msra.mxu0 %v5003
    %7603 = vmatprep.subr.bf16.mxu0 %v5020
    %7604 = vmatpush1.bf16.msra.mxu0 %v5019
    %7605 = vmatprep.subr.bf16.mxu0 %v5036
    %7606 = vmatpush1.bf16.msra.mxu0 %v5035
    %7607 = vmatprep.subr.bf16.mxu0 %v5052
    %7608 = vmatpush1.bf16.msra.mxu0 %v5051
    %7609 = vmatprep.subr.bf16.mxu0 %v5068
    %7610 = vmatpush1.bf16.msra.mxu0 %v5067
    %7611 = vmatprep.mubr.bf16.mxu0 %v118
    %7612 = vmatmul.mubr.bf16.gmra.mrb[0].mxu0 %v117
    %v7613 = vpop.f32.mrb[0].mxu0
    %v7614 = vadd.f32 %v7573, %v7613
    %v7615 = vpop.f32.mrb[0].mxu0
    %v7616 = vadd.f32 %v7575, %v7615
    %v7617 = vpop.f32.mrb[0].mxu0
    %v7618 = vpop.f32.mrb[0].mxu0
    %7619 = vdwg.mxu0
    %7620 = vmatprep.subr.bf16.mxu0 %v5084
    %7621 = vmatpush1.bf16.msra.mxu0 %v5083
    %7622 = vmatprep.subr.bf16.mxu0 %v5100
    %7623 = vmatpush1.bf16.msra.mxu0 %v5099
    %7624 = vmatprep.subr.bf16.mxu0 %v5116
    %7625 = vmatpush1.bf16.msra.mxu0 %v5115
    %7626 = vmatprep.subr.bf16.mxu0 %v5132
    %7627 = vmatpush1.bf16.msra.mxu0 %v5131
    %7628 = vmatprep.subr.bf16.mxu0 %v5148
    %7629 = vmatpush1.bf16.msra.mxu0 %v5147
    %7630 = vmatprep.subr.bf16.mxu0 %v5164
    %7631 = vmatpush1.bf16.msra.mxu0 %v5163
    %7632 = vmatprep.subr.bf16.mxu0 %v5180
    %7633 = vmatpush1.bf16.msra.mxu0 %v5179
    %7634 = vmatprep.subr.bf16.mxu0 %v5196
    %7635 = vmatpush1.bf16.msra.mxu0 %v5195
    %7636 = vmatprep.subr.bf16.mxu0 %v5212
    %7637 = vmatpush1.bf16.msra.mxu0 %v5211
    %7638 = vmatprep.subr.bf16.mxu0 %v5228
    %7639 = vmatpush1.bf16.msra.mxu0 %v5227
    %7640 = vmatprep.subr.bf16.mxu0 %v5244
    %7641 = vmatpush1.bf16.msra.mxu0 %v5243
    %7642 = vmatprep.subr.bf16.mxu0 %v5260
    %7643 = vmatpush1.bf16.msra.mxu0 %v5259
    %7644 = vmatprep.subr.bf16.mxu0 %v5276
    %7645 = vmatpush1.bf16.msra.mxu0 %v5275
    %7646 = vmatprep.subr.bf16.mxu0 %v5292
    %7647 = vmatpush1.bf16.msra.mxu0 %v5291
    %7648 = vmatprep.subr.bf16.mxu0 %v5308
    %7649 = vmatpush1.bf16.msra.mxu0 %v5307
    %7650 = vmatprep.subr.bf16.mxu0 %v5324
    %7651 = vmatpush1.bf16.msra.mxu0 %v5323
    %7652 = vmatprep.mubr.bf16.mxu0 %v120
    %7653 = vmatmul.mubr.bf16.gmra.mrb[0].mxu0 %v119
    %v7654 = vpop.f32.mrb[0].mxu0
    %v7655 = vadd.f32 %v7614, %v7654
    %v7656 = vpop.f32.mrb[0].mxu0
    %v7657 = vadd.f32 %v7616, %v7656
    %v7658 = vpop.f32.mrb[0].mxu0
    %v7659 = vpop.f32.mrb[0].mxu0
    %7660 = vdwg.mxu0
    %v7661 = vmul.f32 %v6507, 0.1
    %v7662 = vmul.f32 %v6509, 0.1
    %v7663 = vmul.f32 %v6671, 0.1
    %v7664 = vmul.f32 %v6673, 0.1
    %v7665 = vmul.f32 %v6835, 0.1
    %v7666 = vmul.f32 %v6837, 0.1
    %v7667 = vmul.f32 %v6999, 0.1
    %v7668 = vmul.f32 %v7001, 0.1
    %v7669 = vmul.f32 %v7163, 0.1
    %v7670 = vmul.f32 %v7165, 0.1
    %v7671 = vmul.f32 %v7327, 0.1
    %v7672 = vmul.f32 %v7329, 0.1
    %v7673 = vmul.f32 %v7491, 0.1
    %v7674 = vmul.f32 %v7493, 0.1
    %v7675 = vmul.f32 %v7655, 0.1
    %v7676 = vmul.f32 %v7657, 0.1
    %v7677 = vmax.f32 %v6507, %v7661
    %v7678 = vmax.f32 %v6509, %v7662
    %v7679 = vmax.f32 %v6671, %v7663
    %v7680 = vmax.f32 %v6673, %v7664
    %v7681 = vmax.f32 %v6835, %v7665
    %v7682 = vmax.f32 %v6837, %v7666
    %v7683 = vmax.f32 %v6999, %v7667
    %v7684 = vmax.f32 %v7001, %v7668
    %v7685 = vmax.f32 %v7163, %v7669
    %v7686 = vmax.f32 %v7165, %v7670
    %v7687 = vmax.f32 %v7327, %v7671
    %v7688 = vmax.f32 %v7329, %v7672
    %v7689 = vmax.f32 %v7491, %v7673
    %v7690 = vmax.f32 %v7493, %v7674
    %v7691 = vmax.f32 %v7655, %v7675
    %v7692 = vmax.f32 %v7657, %v7676
    %v7693 = vpack.c.bf16 %v7677, %v7677
    %v7694 = vpack.c.bf16 %v7678, %v7678
    %v7695 = vpack.c.bf16 %v7679, %v7679
    %v7696 = vpack.c.bf16 %v7680, %v7680
    %v7697 = vpack.c.bf16 %v7681, %v7681
    %v7698 = vpack.c.bf16 %v7682, %v7682
    %v7699 = vpack.c.bf16 %v7683, %v7683
    %v7700 = vpack.c.bf16 %v7684, %v7684
    %v7701 = vpack.c.bf16 %v7685, %v7685
    %v7702 = vpack.c.bf16 %v7686, %v7686
    %v7703 = vpack.c.bf16 %v7687, %v7687
    %v7704 = vpack.c.bf16 %v7688, %v7688
    %v7705 = vpack.c.bf16 %v7689, %v7689
    %v7706 = vpack.c.bf16 %v7690, %v7690
    %v7707 = vpack.c.bf16 %v7691, %v7691
    %v7708 = vpack.c.bf16 %v7692, %v7692
    %v7709 = vld [vmem:[#allocation6] sm:$0xff]
    %v7710 = vld [vmem:[#allocation6 + $0x8] sm:$0xff]
    %v7711 = vld [vmem:[#allocation6 + $0x10] sm:$0xff]
    %v7712 = vld [vmem:[#allocation6 + $0x18] sm:$0xff]
    %v7713 = vld [vmem:[#allocation6 + $0x20] sm:$0xff]
    %v7714 = vld [vmem:[#allocation6 + $0x28] sm:$0xff]
    %v7715 = vld [vmem:[#allocation6 + $0x30] sm:$0xff]
    %v7716 = vld [vmem:[#allocation6 + $0x38] sm:$0xff]
    %v7717 = vld [vmem:[#allocation6 + $0x40] sm:$0xff]
    %v7718 = vld [vmem:[#allocation6 + $0x48] sm:$0xff]
    %v7719 = vld [vmem:[#allocation6 + $0x50] sm:$0xff]
    %v7720 = vld [vmem:[#allocation6 + $0x58] sm:$0xff]
    %v7721 = vld [vmem:[#allocation6 + $0x60] sm:$0xff]
    %v7722 = vld [vmem:[#allocation6 + $0x68] sm:$0xff]
    %v7723 = vld [vmem:[#allocation6 + $0x70] sm:$0xff]
    %v7724 = vld [vmem:[#allocation6 + $0x78] sm:$0xff]
    %v7725 = vld [vmem:[#allocation6 + $0x80] sm:$0xff]
    %v7726 = vld [vmem:[#allocation6 + $0x88] sm:$0xff]
    %v7727 = vld [vmem:[#allocation6 + $0x90] sm:$0xff]
    %v7728 = vld [vmem:[#allocation6 + $0x98] sm:$0xff]
    %v7729 = vld [vmem:[#allocation6 + $0xa0] sm:$0xff]
    %v7730 = vld [vmem:[#allocation6 + $0xa8] sm:$0xff]
    %v7731 = vld [vmem:[#allocation6 + $0xb0] sm:$0xff]
    %v7732 = vld [vmem:[#allocation6 + $0xb8] sm:$0xff]
    %v7733 = vld [vmem:[#allocation6 + $0xc0] sm:$0xff]
    %v7734 = vld [vmem:[#allocation6 + $0xc8] sm:$0xff]
    %v7735 = vld [vmem:[#allocation6 + $0xd0] sm:$0xff]
    %v7736 = vld [vmem:[#allocation6 + $0xd8] sm:$0xff]
    %v7737 = vld [vmem:[#allocation6 + $0xe0] sm:$0xff]
    %v7738 = vld [vmem:[#allocation6 + $0xe8] sm:$0xff]
    %v7739 = vld [vmem:[#allocation6 + $0xf0] sm:$0xff]
    %v7740 = vld [vmem:[#allocation6 + $0xf8] sm:$0xff]
    %v7741 = vld [vmem:[#allocation6 + $0x100] sm:$0xff]
    %v7742 = vld [vmem:[#allocation6 + $0x108] sm:$0xff]
    %v7743 = vld [vmem:[#allocation6 + $0x110] sm:$0xff]
    %v7744 = vld [vmem:[#allocation6 + $0x118] sm:$0xff]
    %v7745 = vld [vmem:[#allocation6 + $0x120] sm:$0xff]
    %v7746 = vld [vmem:[#allocation6 + $0x128] sm:$0xff]
    %v7747 = vld [vmem:[#allocation6 + $0x130] sm:$0xff]
    %v7748 = vld [vmem:[#allocation6 + $0x138] sm:$0xff]
    %v7749 = vld [vmem:[#allocation6 + $0x140] sm:$0xff]
    %v7750 = vld [vmem:[#allocation6 + $0x148] sm:$0xff]
    %v7751 = vld [vmem:[#allocation6 + $0x150] sm:$0xff]
    %v7752 = vld [vmem:[#allocation6 + $0x158] sm:$0xff]
    %v7753 = vld [vmem:[#allocation6 + $0x160] sm:$0xff]
    %v7754 = vld [vmem:[#allocation6 + $0x168] sm:$0xff]
    %v7755 = vld [vmem:[#allocation6 + $0x170] sm:$0xff]
    %v7756 = vld [vmem:[#allocation6 + $0x178] sm:$0xff]
    %v7757 = vld [vmem:[#allocation6 + $0x180] sm:$0xff]
    %v7758 = vld [vmem:[#allocation6 + $0x188] sm:$0xff]
    %v7759 = vld [vmem:[#allocation6 + $0x190] sm:$0xff]
    %v7760 = vld [vmem:[#allocation6 + $0x198] sm:$0xff]
    %v7761 = vld [vmem:[#allocation6 + $0x1a0] sm:$0xff]
    %v7762 = vld [vmem:[#allocation6 + $0x1a8] sm:$0xff]
    %v7763 = vld [vmem:[#allocation6 + $0x1b0] sm:$0xff]
    %v7764 = vld [vmem:[#allocation6 + $0x1b8] sm:$0xff]
    %v7765 = vld [vmem:[#allocation6 + $0x1c0] sm:$0xff]
    %v7766 = vld [vmem:[#allocation6 + $0x1c8] sm:$0xff]
    %v7767 = vld [vmem:[#allocation6 + $0x1d0] sm:$0xff]
    %v7768 = vld [vmem:[#allocation6 + $0x1d8] sm:$0xff]
    %v7769 = vld [vmem:[#allocation6 + $0x1e0] sm:$0xff]
    %v7770 = vld [vmem:[#allocation6 + $0x1e8] sm:$0xff]
    %v7771 = vld [vmem:[#allocation6 + $0x1f0] sm:$0xff]
    %v7772 = vld [vmem:[#allocation6 + $0x1f8] sm:$0xff]
    %v7773 = vld [vmem:[#allocation6 + $0x200] sm:$0xff]
    %v7774 = vld [vmem:[#allocation6 + $0x208] sm:$0xff]
    %v7775 = vld [vmem:[#allocation6 + $0x210] sm:$0xff]
    %v7776 = vld [vmem:[#allocation6 + $0x218] sm:$0xff]
    %v7777 = vld [vmem:[#allocation6 + $0x220] sm:$0xff]
    %v7778 = vld [vmem:[#allocation6 + $0x228] sm:$0xff]
    %v7779 = vld [vmem:[#allocation6 + $0x230] sm:$0xff]
    %v7780 = vld [vmem:[#allocation6 + $0x238] sm:$0xff]
    %v7781 = vld [vmem:[#allocation6 + $0x240] sm:$0xff]
    %v7782 = vld [vmem:[#allocation6 + $0x248] sm:$0xff]
    %v7783 = vld [vmem:[#allocation6 + $0x250] sm:$0xff]
    %v7784 = vld [vmem:[#allocation6 + $0x258] sm:$0xff]
    %v7785 = vld [vmem:[#allocation6 + $0x260] sm:$0xff]
    %v7786 = vld [vmem:[#allocation6 + $0x268] sm:$0xff]
    %v7787 = vld [vmem:[#allocation6 + $0x270] sm:$0xff]
    %v7788 = vld [vmem:[#allocation6 + $0x278] sm:$0xff]
    %v7789 = vld [vmem:[#allocation6 + $0x280] sm:$0xff]
    %v7790 = vld [vmem:[#allocation6 + $0x288] sm:$0xff]
    %v7791 = vld [vmem:[#allocation6 + $0x290] sm:$0xff]
    %v7792 = vld [vmem:[#allocation6 + $0x298] sm:$0xff]
    %v7793 = vld [vmem:[#allocation6 + $0x2a0] sm:$0xff]
    %v7794 = vld [vmem:[#allocation6 + $0x2a8] sm:$0xff]
    %v7795 = vld [vmem:[#allocation6 + $0x2b0] sm:$0xff]
    %v7796 = vld [vmem:[#allocation6 + $0x2b8] sm:$0xff]
    %v7797 = vld [vmem:[#allocation6 + $0x2c0] sm:$0xff]
    %v7798 = vld [vmem:[#allocation6 + $0x2c8] sm:$0xff]
    %v7799 = vld [vmem:[#allocation6 + $0x2d0] sm:$0xff]
    %v7800 = vld [vmem:[#allocation6 + $0x2d8] sm:$0xff]
    %v7801 = vld [vmem:[#allocation6 + $0x2e0] sm:$0xff]
    %v7802 = vld [vmem:[#allocation6 + $0x2e8] sm:$0xff]
    %v7803 = vld [vmem:[#allocation6 + $0x2f0] sm:$0xff]
    %v7804 = vld [vmem:[#allocation6 + $0x2f8] sm:$0xff]
    %v7805 = vld [vmem:[#allocation6 + $0x300] sm:$0xff]
    %v7806 = vld [vmem:[#allocation6 + $0x308] sm:$0xff]
    %v7807 = vld [vmem:[#allocation6 + $0x310] sm:$0xff]
    %v7808 = vld [vmem:[#allocation6 + $0x318] sm:$0xff]
    %v7809 = vld [vmem:[#allocation6 + $0x320] sm:$0xff]
    %v7810 = vld [vmem:[#allocation6 + $0x328] sm:$0xff]
    %v7811 = vld [vmem:[#allocation6 + $0x330] sm:$0xff]
    %v7812 = vld [vmem:[#allocation6 + $0x338] sm:$0xff]
    %v7813 = vld [vmem:[#allocation6 + $0x340] sm:$0xff]
    %v7814 = vld [vmem:[#allocation6 + $0x348] sm:$0xff]
    %v7815 = vld [vmem:[#allocation6 + $0x350] sm:$0xff]
    %v7816 = vld [vmem:[#allocation6 + $0x358] sm:$0xff]
    %v7817 = vld [vmem:[#allocation6 + $0x360] sm:$0xff]
    %v7818 = vld [vmem:[#allocation6 + $0x368] sm:$0xff]
    %v7819 = vld [vmem:[#allocation6 + $0x370] sm:$0xff]
    %v7820 = vld [vmem:[#allocation6 + $0x378] sm:$0xff]
    %v7821 = vld [vmem:[#allocation6 + $0x380] sm:$0xff]
    %v7822 = vld [vmem:[#allocation6 + $0x388] sm:$0xff]
    %v7823 = vld [vmem:[#allocation6 + $0x390] sm:$0xff]
    %v7824 = vld [vmem:[#allocation6 + $0x398] sm:$0xff]
    %v7825 = vld [vmem:[#allocation6 + $0x3a0] sm:$0xff]
    %v7826 = vld [vmem:[#allocation6 + $0x3a8] sm:$0xff]
    %v7827 = vld [vmem:[#allocation6 + $0x3b0] sm:$0xff]
    %v7828 = vld [vmem:[#allocation6 + $0x3b8] sm:$0xff]
    %v7829 = vld [vmem:[#allocation6 + $0x3c0] sm:$0xff]
    %v7830 = vld [vmem:[#allocation6 + $0x3c8] sm:$0xff]
    %v7831 = vld [vmem:[#allocation6 + $0x3d0] sm:$0xff]
    %v7832 = vld [vmem:[#allocation6 + $0x3d8] sm:$0xff]
    %v7833 = vld [vmem:[#allocation6 + $0x3e0] sm:$0xff]
    %v7834 = vld [vmem:[#allocation6 + $0x3e8] sm:$0xff]
    %v7835 = vld [vmem:[#allocation6 + $0x3f0] sm:$0xff]
    %v7836 = vld [vmem:[#allocation6 + $0x3f8] sm:$0xff]
    %s7837 = scalar_lea.vmem [#allocation6], 1024
    %v7838 = vld [vmem:[%s7837] sm:$0xff]
    %v7839 = vld [vmem:[%s7837 + $0x8] sm:$0xff]
    %v7840 = vld [vmem:[%s7837 + $0x10] sm:$0xff]
    %v7841 = vld [vmem:[%s7837 + $0x18] sm:$0xff]
    %v7842 = vld [vmem:[%s7837 + $0x20] sm:$0xff]
    %v7843 = vld [vmem:[%s7837 + $0x28] sm:$0xff]
    %v7844 = vld [vmem:[%s7837 + $0x30] sm:$0xff]
    %v7845 = vld [vmem:[%s7837 + $0x38] sm:$0xff]
    %v7846 = vld [vmem:[%s7837 + $0x40] sm:$0xff]
    %v7847 = vld [vmem:[%s7837 + $0x48] sm:$0xff]
    %v7848 = vld [vmem:[%s7837 + $0x50] sm:$0xff]
    %v7849 = vld [vmem:[%s7837 + $0x58] sm:$0xff]
    %v7850 = vld [vmem:[%s7837 + $0x60] sm:$0xff]
    %v7851 = vld [vmem:[%s7837 + $0x68] sm:$0xff]
    %v7852 = vld [vmem:[%s7837 + $0x70] sm:$0xff]
    %v7853 = vld [vmem:[%s7837 + $0x78] sm:$0xff]
    %v7854 = vld [vmem:[%s7837 + $0x80] sm:$0xff]
    %v7855 = vld [vmem:[%s7837 + $0x88] sm:$0xff]
    %v7856 = vld [vmem:[%s7837 + $0x90] sm:$0xff]
    %v7857 = vld [vmem:[%s7837 + $0x98] sm:$0xff]
    %v7858 = vld [vmem:[%s7837 + $0xa0] sm:$0xff]
    %v7859 = vld [vmem:[%s7837 + $0xa8] sm:$0xff]
    %v7860 = vld [vmem:[%s7837 + $0xb0] sm:$0xff]
    %v7861 = vld [vmem:[%s7837 + $0xb8] sm:$0xff]
    %v7862 = vld [vmem:[%s7837 + $0xc0] sm:$0xff]
    %v7863 = vld [vmem:[%s7837 + $0xc8] sm:$0xff]
    %v7864 = vld [vmem:[%s7837 + $0xd0] sm:$0xff]
    %v7865 = vld [vmem:[%s7837 + $0xd8] sm:$0xff]
    %v7866 = vld [vmem:[%s7837 + $0xe0] sm:$0xff]
    %v7867 = vld [vmem:[%s7837 + $0xe8] sm:$0xff]
    %v7868 = vld [vmem:[%s7837 + $0xf0] sm:$0xff]
    %v7869 = vld [vmem:[%s7837 + $0xf8] sm:$0xff]
    %v7870 = vld [vmem:[%s7837 + $0x100] sm:$0xff]
    %v7871 = vld [vmem:[%s7837 + $0x108] sm:$0xff]
    %v7872 = vld [vmem:[%s7837 + $0x110] sm:$0xff]
    %v7873 = vld [vmem:[%s7837 + $0x118] sm:$0xff]
    %v7874 = vld [vmem:[%s7837 + $0x120] sm:$0xff]
    %v7875 = vld [vmem:[%s7837 + $0x128] sm:$0xff]
    %v7876 = vld [vmem:[%s7837 + $0x130] sm:$0xff]
    %v7877 = vld [vmem:[%s7837 + $0x138] sm:$0xff]
    %v7878 = vld [vmem:[%s7837 + $0x140] sm:$0xff]
    %v7879 = vld [vmem:[%s7837 + $0x148] sm:$0xff]
    %v7880 = vld [vmem:[%s7837 + $0x150] sm:$0xff]
    %v7881 = vld [vmem:[%s7837 + $0x158] sm:$0xff]
    %v7882 = vld [vmem:[%s7837 + $0x160] sm:$0xff]
    %v7883 = vld [vmem:[%s7837 + $0x168] sm:$0xff]
    %v7884 = vld [vmem:[%s7837 + $0x170] sm:$0xff]
    %v7885 = vld [vmem:[%s7837 + $0x178] sm:$0xff]
    %v7886 = vld [vmem:[%s7837 + $0x180] sm:$0xff]
    %v7887 = vld [vmem:[%s7837 + $0x188] sm:$0xff]
    %v7888 = vld [vmem:[%s7837 + $0x190] sm:$0xff]
    %v7889 = vld [vmem:[%s7837 + $0x198] sm:$0xff]
    %v7890 = vld [vmem:[%s7837 + $0x1a0] sm:$0xff]
    %v7891 = vld [vmem:[%s7837 + $0x1a8] sm:$0xff]
    %v7892 = vld [vmem:[%s7837 + $0x1b0] sm:$0xff]
    %v7893 = vld [vmem:[%s7837 + $0x1b8] sm:$0xff]
    %v7894 = vld [vmem:[%s7837 + $0x1c0] sm:$0xff]
    %v7895 = vld [vmem:[%s7837 + $0x1c8] sm:$0xff]
    %v7896 = vld [vmem:[%s7837 + $0x1d0] sm:$0xff]
    %v7897 = vld [vmem:[%s7837 + $0x1d8] sm:$0xff]
    %v7898 = vld [vmem:[%s7837 + $0x1e0] sm:$0xff]
    %v7899 = vld [vmem:[%s7837 + $0x1e8] sm:$0xff]
    %v7900 = vld [vmem:[%s7837 + $0x1f0] sm:$0xff]
    %v7901 = vld [vmem:[%s7837 + $0x1f8] sm:$0xff]
    %v7902 = vld [vmem:[%s7837 + $0x200] sm:$0xff]
    %v7903 = vld [vmem:[%s7837 + $0x208] sm:$0xff]
    %v7904 = vld [vmem:[%s7837 + $0x210] sm:$0xff]
    %v7905 = vld [vmem:[%s7837 + $0x218] sm:$0xff]
    %v7906 = vld [vmem:[%s7837 + $0x220] sm:$0xff]
    %v7907 = vld [vmem:[%s7837 + $0x228] sm:$0xff]
    %v7908 = vld [vmem:[%s7837 + $0x230] sm:$0xff]
    %v7909 = vld [vmem:[%s7837 + $0x238] sm:$0xff]
    %v7910 = vld [vmem:[%s7837 + $0x240] sm:$0xff]
    %v7911 = vld [vmem:[%s7837 + $0x248] sm:$0xff]
    %v7912 = vld [vmem:[%s7837 + $0x250] sm:$0xff]
    %v7913 = vld [vmem:[%s7837 + $0x258] sm:$0xff]
    %v7914 = vld [vmem:[%s7837 + $0x260] sm:$0xff]
    %v7915 = vld [vmem:[%s7837 + $0x268] sm:$0xff]
    %v7916 = vld [vmem:[%s7837 + $0x270] sm:$0xff]
    %v7917 = vld [vmem:[%s7837 + $0x278] sm:$0xff]
    %v7918 = vld [vmem:[%s7837 + $0x280] sm:$0xff]
    %v7919 = vld [vmem:[%s7837 + $0x288] sm:$0xff]
    %v7920 = vld [vmem:[%s7837 + $0x290] sm:$0xff]
    %v7921 = vld [vmem:[%s7837 + $0x298] sm:$0xff]
    %v7922 = vld [vmem:[%s7837 + $0x2a0] sm:$0xff]
    %v7923 = vld [vmem:[%s7837 + $0x2a8] sm:$0xff]
    %v7924 = vld [vmem:[%s7837 + $0x2b0] sm:$0xff]
    %v7925 = vld [vmem:[%s7837 + $0x2b8] sm:$0xff]
    %v7926 = vld [vmem:[%s7837 + $0x2c0] sm:$0xff]
    %v7927 = vld [vmem:[%s7837 + $0x2c8] sm:$0xff]
    %v7928 = vld [vmem:[%s7837 + $0x2d0] sm:$0xff]
    %v7929 = vld [vmem:[%s7837 + $0x2d8] sm:$0xff]
    %v7930 = vld [vmem:[%s7837 + $0x2e0] sm:$0xff]
    %v7931 = vld [vmem:[%s7837 + $0x2e8] sm:$0xff]
    %v7932 = vld [vmem:[%s7837 + $0x2f0] sm:$0xff]
    %v7933 = vld [vmem:[%s7837 + $0x2f8] sm:$0xff]
    %v7934 = vld [vmem:[%s7837 + $0x300] sm:$0xff]
    %v7935 = vld [vmem:[%s7837 + $0x308] sm:$0xff]
    %v7936 = vld [vmem:[%s7837 + $0x310] sm:$0xff]
    %v7937 = vld [vmem:[%s7837 + $0x318] sm:$0xff]
    %v7938 = vld [vmem:[%s7837 + $0x320] sm:$0xff]
    %v7939 = vld [vmem:[%s7837 + $0x328] sm:$0xff]
    %v7940 = vld [vmem:[%s7837 + $0x330] sm:$0xff]
    %v7941 = vld [vmem:[%s7837 + $0x338] sm:$0xff]
    %v7942 = vld [vmem:[%s7837 + $0x340] sm:$0xff]
    %v7943 = vld [vmem:[%s7837 + $0x348] sm:$0xff]
    %v7944 = vld [vmem:[%s7837 + $0x350] sm:$0xff]
    %v7945 = vld [vmem:[%s7837 + $0x358] sm:$0xff]
    %v7946 = vld [vmem:[%s7837 + $0x360] sm:$0xff]
    %v7947 = vld [vmem:[%s7837 + $0x368] sm:$0xff]
    %v7948 = vld [vmem:[%s7837 + $0x370] sm:$0xff]
    %v7949 = vld [vmem:[%s7837 + $0x378] sm:$0xff]
    %v7950 = vld [vmem:[%s7837 + $0x380] sm:$0xff]
    %v7951 = vld [vmem:[%s7837 + $0x388] sm:$0xff]
    %v7952 = vld [vmem:[%s7837 + $0x390] sm:$0xff]
    %v7953 = vld [vmem:[%s7837 + $0x398] sm:$0xff]
    %v7954 = vld [vmem:[%s7837 + $0x3a0] sm:$0xff]
    %v7955 = vld [vmem:[%s7837 + $0x3a8] sm:$0xff]
    %v7956 = vld [vmem:[%s7837 + $0x3b0] sm:$0xff]
    %v7957 = vld [vmem:[%s7837 + $0x3b8] sm:$0xff]
    %v7958 = vld [vmem:[%s7837 + $0x3c0] sm:$0xff]
    %v7959 = vld [vmem:[%s7837 + $0x3c8] sm:$0xff]
    %v7960 = vld [vmem:[%s7837 + $0x3d0] sm:$0xff]
    %v7961 = vld [vmem:[%s7837 + $0x3d8] sm:$0xff]
    %v7962 = vld [vmem:[%s7837 + $0x3e0] sm:$0xff]
    %v7963 = vld [vmem:[%s7837 + $0x3e8] sm:$0xff]
    %v7964 = vld [vmem:[%s7837 + $0x3f0] sm:$0xff]
    %v7965 = vld [vmem:[%s7837 + $0x3f8] sm:$0xff]
    %v7966 = vld [vmem:[#allocation7] sm:$0x3]
    %v7968 = vlaneseq
    %v7969 = vshrl.u32 %v7968, 7
    %v7970 = vsub.s32 0, %v7969
    %v7971 = vrot.slane %v7966, %v7970
    %v7972 = vlaneseq
    %v7973 = vshrl.u32 %v7972, 7
    %v7974 = vsub.s32 1, %v7973
    %v7975 = vrot.slane %v7966, %v7974
    %v8106 = vunpack.c.l.b16 %v7709
    %v8107 = vunpack.c.h.b16 %v7709
    %v8108 = vunpack.c.l.b16 %v7710
    %v8109 = vunpack.c.h.b16 %v7710
    %v8110 = vunpack.c.l.b16 %v7711
    %v8111 = vunpack.c.h.b16 %v7711
    %v8112 = vunpack.c.l.b16 %v7712
    %v8113 = vunpack.c.h.b16 %v7712
    %v8114 = vunpack.c.l.b16 %v7713
    %v8115 = vunpack.c.h.b16 %v7713
    %v8116 = vunpack.c.l.b16 %v7714
    %v8117 = vunpack.c.h.b16 %v7714
    %v8118 = vunpack.c.l.b16 %v7715
    %v8119 = vunpack.c.h.b16 %v7715
    %v8120 = vunpack.c.l.b16 %v7716
    %v8121 = vunpack.c.h.b16 %v7716
    %v8122 = vunpack.c.l.b16 %v7717
    %v8123 = vunpack.c.h.b16 %v7717
    %v8124 = vunpack.c.l.b16 %v7718
    %v8125 = vunpack.c.h.b16 %v7718
    %v8126 = vunpack.c.l.b16 %v7719
    %v8127 = vunpack.c.h.b16 %v7719
    %v8128 = vunpack.c.l.b16 %v7720
    %v8129 = vunpack.c.h.b16 %v7720
    %v8130 = vunpack.c.l.b16 %v7721
    %v8131 = vunpack.c.h.b16 %v7721
    %v8132 = vunpack.c.l.b16 %v7722
    %v8133 = vunpack.c.h.b16 %v7722
    %v8134 = vunpack.c.l.b16 %v7723
    %v8135 = vunpack.c.h.b16 %v7723
    %v8136 = vunpack.c.l.b16 %v7724
    %v8137 = vunpack.c.h.b16 %v7724
    %v8138 = vunpack.c.l.b16 %v7725
    %v8139 = vunpack.c.h.b16 %v7725
    %v8140 = vunpack.c.l.b16 %v7726
    %v8141 = vunpack.c.h.b16 %v7726
    %v8142 = vunpack.c.l.b16 %v7727
    %v8143 = vunpack.c.h.b16 %v7727
    %v8144 = vunpack.c.l.b16 %v7728
    %v8145 = vunpack.c.h.b16 %v7728
    %v8146 = vunpack.c.l.b16 %v7729
    %v8147 = vunpack.c.h.b16 %v7729
    %v8148 = vunpack.c.l.b16 %v7730
    %v8149 = vunpack.c.h.b16 %v7730
    %v8150 = vunpack.c.l.b16 %v7731
    %v8151 = vunpack.c.h.b16 %v7731
    %v8152 = vunpack.c.l.b16 %v7732
    %v8153 = vunpack.c.h.b16 %v7732
    %v8154 = vunpack.c.l.b16 %v7733
    %v8155 = vunpack.c.h.b16 %v7733
    %v8156 = vunpack.c.l.b16 %v7734
    %v8157 = vunpack.c.h.b16 %v7734
    %v8158 = vunpack.c.l.b16 %v7735
    %v8159 = vunpack.c.h.b16 %v7735
    %v8160 = vunpack.c.l.b16 %v7736
    %v8161 = vunpack.c.h.b16 %v7736
    %v8162 = vunpack.c.l.b16 %v7737
    %v8163 = vunpack.c.h.b16 %v7737
    %v8164 = vunpack.c.l.b16 %v7738
    %v8165 = vunpack.c.h.b16 %v7738
    %v8166 = vunpack.c.l.b16 %v7739
    %v8167 = vunpack.c.h.b16 %v7739
    %v8168 = vunpack.c.l.b16 %v7740
    %v8169 = vunpack.c.h.b16 %v7740
    %v8170 = vunpack.c.l.b16 %v7741
    %v8171 = vunpack.c.h.b16 %v7741
    %v8172 = vunpack.c.l.b16 %v7742
    %v8173 = vunpack.c.h.b16 %v7742
    %v8174 = vunpack.c.l.b16 %v7743
    %v8175 = vunpack.c.h.b16 %v7743
    %v8176 = vunpack.c.l.b16 %v7744
    %v8177 = vunpack.c.h.b16 %v7744
    %v8178 = vunpack.c.l.b16 %v7745
    %v8179 = vunpack.c.h.b16 %v7745
    %v8180 = vunpack.c.l.b16 %v7746
    %v8181 = vunpack.c.h.b16 %v7746
    %v8182 = vunpack.c.l.b16 %v7747
    %v8183 = vunpack.c.h.b16 %v7747
    %v8184 = vunpack.c.l.b16 %v7748
    %v8185 = vunpack.c.h.b16 %v7748
    %v8186 = vunpack.c.l.b16 %v7749
    %v8187 = vunpack.c.h.b16 %v7749
    %v8188 = vunpack.c.l.b16 %v7750
    %v8189 = vunpack.c.h.b16 %v7750
    %v8190 = vunpack.c.l.b16 %v7751
    %v8191 = vunpack.c.h.b16 %v7751
    %v8192 = vunpack.c.l.b16 %v7752
    %v8193 = vunpack.c.h.b16 %v7752
    %v8194 = vunpack.c.l.b16 %v7753
    %v8195 = vunpack.c.h.b16 %v7753
    %v8196 = vunpack.c.l.b16 %v7754
    %v8197 = vunpack.c.h.b16 %v7754
    %v8198 = vunpack.c.l.b16 %v7755
    %v8199 = vunpack.c.h.b16 %v7755
    %v8200 = vunpack.c.l.b16 %v7756
    %v8201 = vunpack.c.h.b16 %v7756
    %v8202 = vunpack.c.l.b16 %v7757
    %v8203 = vunpack.c.h.b16 %v7757
    %v8204 = vunpack.c.l.b16 %v7758
    %v8205 = vunpack.c.h.b16 %v7758
    %v8206 = vunpack.c.l.b16 %v7759
    %v8207 = vunpack.c.h.b16 %v7759
    %v8208 = vunpack.c.l.b16 %v7760
    %v8209 = vunpack.c.h.b16 %v7760
    %v8210 = vunpack.c.l.b16 %v7761
    %v8211 = vunpack.c.h.b16 %v7761
    %v8212 = vunpack.c.l.b16 %v7762
    %v8213 = vunpack.c.h.b16 %v7762
    %v8214 = vunpack.c.l.b16 %v7763
    %v8215 = vunpack.c.h.b16 %v7763
    %v8216 = vunpack.c.l.b16 %v7764
    %v8217 = vunpack.c.h.b16 %v7764
    %v8218 = vunpack.c.l.b16 %v7765
    %v8219 = vunpack.c.h.b16 %v7765
    %v8220 = vunpack.c.l.b16 %v7766
    %v8221 = vunpack.c.h.b16 %v7766
    %v8222 = vunpack.c.l.b16 %v7767
    %v8223 = vunpack.c.h.b16 %v7767
    %v8224 = vunpack.c.l.b16 %v7768
    %v8225 = vunpack.c.h.b16 %v7768
    %v8226 = vunpack.c.l.b16 %v7769
    %v8227 = vunpack.c.h.b16 %v7769
    %v8228 = vunpack.c.l.b16 %v7770
    %v8229 = vunpack.c.h.b16 %v7770
    %v8230 = vunpack.c.l.b16 %v7771
    %v8231 = vunpack.c.h.b16 %v7771
    %v8232 = vunpack.c.l.b16 %v7772
    %v8233 = vunpack.c.h.b16 %v7772
    %v8234 = vunpack.c.l.b16 %v7773
    %v8235 = vunpack.c.h.b16 %v7773
    %v8236 = vunpack.c.l.b16 %v7774
    %v8237 = vunpack.c.h.b16 %v7774
    %v8238 = vunpack.c.l.b16 %v7775
    %v8239 = vunpack.c.h.b16 %v7775
    %v8240 = vunpack.c.l.b16 %v7776
    %v8241 = vunpack.c.h.b16 %v7776
    %v8242 = vunpack.c.l.b16 %v7777
    %v8243 = vunpack.c.h.b16 %v7777
    %v8244 = vunpack.c.l.b16 %v7778
    %v8245 = vunpack.c.h.b16 %v7778
    %v8246 = vunpack.c.l.b16 %v7779
    %v8247 = vunpack.c.h.b16 %v7779
    %v8248 = vunpack.c.l.b16 %v7780
    %v8249 = vunpack.c.h.b16 %v7780
    %v8250 = vunpack.c.l.b16 %v7781
    %v8251 = vunpack.c.h.b16 %v7781
    %v8252 = vunpack.c.l.b16 %v7782
    %v8253 = vunpack.c.h.b16 %v7782
    %v8254 = vunpack.c.l.b16 %v7783
    %v8255 = vunpack.c.h.b16 %v7783
    %v8256 = vunpack.c.l.b16 %v7784
    %v8257 = vunpack.c.h.b16 %v7784
    %v8258 = vunpack.c.l.b16 %v7785
    %v8259 = vunpack.c.h.b16 %v7785
    %v8260 = vunpack.c.l.b16 %v7786
    %v8261 = vunpack.c.h.b16 %v7786
    %v8262 = vunpack.c.l.b16 %v7787
    %v8263 = vunpack.c.h.b16 %v7787
    %v8264 = vunpack.c.l.b16 %v7788
    %v8265 = vunpack.c.h.b16 %v7788
    %v8266 = vunpack.c.l.b16 %v7789
    %v8267 = vunpack.c.h.b16 %v7789
    %v8268 = vunpack.c.l.b16 %v7790
    %v8269 = vunpack.c.h.b16 %v7790
    %v8270 = vunpack.c.l.b16 %v7791
    %v8271 = vunpack.c.h.b16 %v7791
    %v8272 = vunpack.c.l.b16 %v7792
    %v8273 = vunpack.c.h.b16 %v7792
    %v8274 = vunpack.c.l.b16 %v7793
    %v8275 = vunpack.c.h.b16 %v7793
    %v8276 = vunpack.c.l.b16 %v7794
    %v8277 = vunpack.c.h.b16 %v7794
    %v8278 = vunpack.c.l.b16 %v7795
    %v8279 = vunpack.c.h.b16 %v7795
    %v8280 = vunpack.c.l.b16 %v7796
    %v8281 = vunpack.c.h.b16 %v7796
    %v8282 = vunpack.c.l.b16 %v7797
    %v8283 = vunpack.c.h.b16 %v7797
    %v8284 = vunpack.c.l.b16 %v7798
    %v8285 = vunpack.c.h.b16 %v7798
    %v8286 = vunpack.c.l.b16 %v7799
    %v8287 = vunpack.c.h.b16 %v7799
    %v8288 = vunpack.c.l.b16 %v7800
    %v8289 = vunpack.c.h.b16 %v7800
    %v8290 = vunpack.c.l.b16 %v7801
    %v8291 = vunpack.c.h.b16 %v7801
    %v8292 = vunpack.c.l.b16 %v7802
    %v8293 = vunpack.c.h.b16 %v7802
    %v8294 = vunpack.c.l.b16 %v7803
    %v8295 = vunpack.c.h.b16 %v7803
    %v8296 = vunpack.c.l.b16 %v7804
    %v8297 = vunpack.c.h.b16 %v7804
    %v8298 = vunpack.c.l.b16 %v7805
    %v8299 = vunpack.c.h.b16 %v7805
    %v8300 = vunpack.c.l.b16 %v7806
    %v8301 = vunpack.c.h.b16 %v7806
    %v8302 = vunpack.c.l.b16 %v7807
    %v8303 = vunpack.c.h.b16 %v7807
    %v8304 = vunpack.c.l.b16 %v7808
    %v8305 = vunpack.c.h.b16 %v7808
    %v8306 = vunpack.c.l.b16 %v7809
    %v8307 = vunpack.c.h.b16 %v7809
    %v8308 = vunpack.c.l.b16 %v7810
    %v8309 = vunpack.c.h.b16 %v7810
    %v8310 = vunpack.c.l.b16 %v7811
    %v8311 = vunpack.c.h.b16 %v7811
    %v8312 = vunpack.c.l.b16 %v7812
    %v8313 = vunpack.c.h.b16 %v7812
    %v8314 = vunpack.c.l.b16 %v7813
    %v8315 = vunpack.c.h.b16 %v7813
    %v8316 = vunpack.c.l.b16 %v7814
    %v8317 = vunpack.c.h.b16 %v7814
    %v8318 = vunpack.c.l.b16 %v7815
    %v8319 = vunpack.c.h.b16 %v7815
    %v8320 = vunpack.c.l.b16 %v7816
    %v8321 = vunpack.c.h.b16 %v7816
    %v8322 = vunpack.c.l.b16 %v7817
    %v8323 = vunpack.c.h.b16 %v7817
    %v8324 = vunpack.c.l.b16 %v7818
    %v8325 = vunpack.c.h.b16 %v7818
    %v8326 = vunpack.c.l.b16 %v7819
    %v8327 = vunpack.c.h.b16 %v7819
    %v8328 = vunpack.c.l.b16 %v7820
    %v8329 = vunpack.c.h.b16 %v7820
    %v8330 = vunpack.c.l.b16 %v7821
    %v8331 = vunpack.c.h.b16 %v7821
    %v8332 = vunpack.c.l.b16 %v7822
    %v8333 = vunpack.c.h.b16 %v7822
    %v8334 = vunpack.c.l.b16 %v7823
    %v8335 = vunpack.c.h.b16 %v7823
    %v8336 = vunpack.c.l.b16 %v7824
    %v8337 = vunpack.c.h.b16 %v7824
    %v8338 = vunpack.c.l.b16 %v7825
    %v8339 = vunpack.c.h.b16 %v7825
    %v8340 = vunpack.c.l.b16 %v7826
    %v8341 = vunpack.c.h.b16 %v7826
    %v8342 = vunpack.c.l.b16 %v7827
    %v8343 = vunpack.c.h.b16 %v7827
    %v8344 = vunpack.c.l.b16 %v7828
    %v8345 = vunpack.c.h.b16 %v7828
    %v8346 = vunpack.c.l.b16 %v7829
    %v8347 = vunpack.c.h.b16 %v7829
    %v8348 = vunpack.c.l.b16 %v7830
    %v8349 = vunpack.c.h.b16 %v7830
    %v8350 = vunpack.c.l.b16 %v7831
    %v8351 = vunpack.c.h.b16 %v7831
    %v8352 = vunpack.c.l.b16 %v7832
    %v8353 = vunpack.c.h.b16 %v7832
    %v8354 = vunpack.c.l.b16 %v7833
    %v8355 = vunpack.c.h.b16 %v7833
    %v8356 = vunpack.c.l.b16 %v7834
    %v8357 = vunpack.c.h.b16 %v7834
    %v8358 = vunpack.c.l.b16 %v7835
    %v8359 = vunpack.c.h.b16 %v7835
    %v8360 = vunpack.c.l.b16 %v7836
    %v8361 = vunpack.c.h.b16 %v7836
    %v8362 = vpack.c.b16 %v8108, %v8106
    %v8363 = vpack.c.b16 %v8109, %v8107
    %v8364 = vpack.c.b16 %v8112, %v8110
    %v8365 = vpack.c.b16 %v8113, %v8111
    %v8366 = vpack.c.b16 %v8116, %v8114
    %v8367 = vpack.c.b16 %v8117, %v8115
    %v8368 = vpack.c.b16 %v8120, %v8118
    %v8369 = vpack.c.b16 %v8121, %v8119
    %v8370 = vpack.c.b16 %v8124, %v8122
    %v8371 = vpack.c.b16 %v8125, %v8123
    %v8372 = vpack.c.b16 %v8128, %v8126
    %v8373 = vpack.c.b16 %v8129, %v8127
    %v8374 = vpack.c.b16 %v8132, %v8130
    %v8375 = vpack.c.b16 %v8133, %v8131
    %v8376 = vpack.c.b16 %v8136, %v8134
    %v8377 = vpack.c.b16 %v8137, %v8135
    %v8378 = vpack.c.b16 %v8140, %v8138
    %v8379 = vpack.c.b16 %v8141, %v8139
    %v8380 = vpack.c.b16 %v8144, %v8142
    %v8381 = vpack.c.b16 %v8145, %v8143
    %v8382 = vpack.c.b16 %v8148, %v8146
    %v8383 = vpack.c.b16 %v8149, %v8147
    %v8384 = vpack.c.b16 %v8152, %v8150
    %v8385 = vpack.c.b16 %v8153, %v8151
    %v8386 = vpack.c.b16 %v8156, %v8154
    %v8387 = vpack.c.b16 %v8157, %v8155
    %v8388 = vpack.c.b16 %v8160, %v8158
    %v8389 = vpack.c.b16 %v8161, %v8159
    %v8390 = vpack.c.b16 %v8164, %v8162
    %v8391 = vpack.c.b16 %v8165, %v8163
    %v8392 = vpack.c.b16 %v8168, %v8166
    %v8393 = vpack.c.b16 %v8169, %v8167
    %v8394 = vpack.c.b16 %v8172, %v8170
    %v8395 = vpack.c.b16 %v8173, %v8171
    %v8396 = vpack.c.b16 %v8176, %v8174
    %v8397 = vpack.c.b16 %v8177, %v8175
    %v8398 = vpack.c.b16 %v8180, %v8178
    %v8399 = vpack.c.b16 %v8181, %v8179
    %v8400 = vpack.c.b16 %v8184, %v8182
    %v8401 = vpack.c.b16 %v8185, %v8183
    %v8402 = vpack.c.b16 %v8188, %v8186
    %v8403 = vpack.c.b16 %v8189, %v8187
    %v8404 = vpack.c.b16 %v8192, %v8190
    %v8405 = vpack.c.b16 %v8193, %v8191
    %v8406 = vpack.c.b16 %v8196, %v8194
    %v8407 = vpack.c.b16 %v8197, %v8195
    %v8408 = vpack.c.b16 %v8200, %v8198
    %v8409 = vpack.c.b16 %v8201, %v8199
    %v8410 = vpack.c.b16 %v8204, %v8202
    %v8411 = vpack.c.b16 %v8205, %v8203
    %v8412 = vpack.c.b16 %v8208, %v8206
    %v8413 = vpack.c.b16 %v8209, %v8207
    %v8414 = vpack.c.b16 %v8212, %v8210
    %v8415 = vpack.c.b16 %v8213, %v8211
    %v8416 = vpack.c.b16 %v8216, %v8214
    %v8417 = vpack.c.b16 %v8217, %v8215
    %v8418 = vpack.c.b16 %v8220, %v8218
    %v8419 = vpack.c.b16 %v8221, %v8219
    %v8420 = vpack.c.b16 %v8224, %v8222
    %v8421 = vpack.c.b16 %v8225, %v8223
    %v8422 = vpack.c.b16 %v8228, %v8226
    %v8423 = vpack.c.b16 %v8229, %v8227
    %v8424 = vpack.c.b16 %v8232, %v8230
    %v8425 = vpack.c.b16 %v8233, %v8231
    %v8426 = vpack.c.b16 %v8236, %v8234
    %v8427 = vpack.c.b16 %v8237, %v8235
    %v8428 = vpack.c.b16 %v8240, %v8238
    %v8429 = vpack.c.b16 %v8241, %v8239
    %v8430 = vpack.c.b16 %v8244, %v8242
    %v8431 = vpack.c.b16 %v8245, %v8243
    %v8432 = vpack.c.b16 %v8248, %v8246
    %v8433 = vpack.c.b16 %v8249, %v8247
    %v8434 = vpack.c.b16 %v8252, %v8250
    %v8435 = vpack.c.b16 %v8253, %v8251
    %v8436 = vpack.c.b16 %v8256, %v8254
    %v8437 = vpack.c.b16 %v8257, %v8255
    %v8438 = vpack.c.b16 %v8260, %v8258
    %v8439 = vpack.c.b16 %v8261, %v8259
    %v8440 = vpack.c.b16 %v8264, %v8262
    %v8441 = vpack.c.b16 %v8265, %v8263
    %v8442 = vpack.c.b16 %v8268, %v8266
    %v8443 = vpack.c.b16 %v8269, %v8267
    %v8444 = vpack.c.b16 %v8272, %v8270
    %v8445 = vpack.c.b16 %v8273, %v8271
    %v8446 = vpack.c.b16 %v8276, %v8274
    %v8447 = vpack.c.b16 %v8277, %v8275
    %v8448 = vpack.c.b16 %v8280, %v8278
    %v8449 = vpack.c.b16 %v8281, %v8279
    %v8450 = vpack.c.b16 %v8284, %v8282
    %v8451 = vpack.c.b16 %v8285, %v8283
    %v8452 = vpack.c.b16 %v8288, %v8286
    %v8453 = vpack.c.b16 %v8289, %v8287
    %v8454 = vpack.c.b16 %v8292, %v8290
    %v8455 = vpack.c.b16 %v8293, %v8291
    %v8456 = vpack.c.b16 %v8296, %v8294
    %v8457 = vpack.c.b16 %v8297, %v8295
    %v8458 = vpack.c.b16 %v8300, %v8298
    %v8459 = vpack.c.b16 %v8301, %v8299
    %v8460 = vpack.c.b16 %v8304, %v8302
    %v8461 = vpack.c.b16 %v8305, %v8303
    %v8462 = vpack.c.b16 %v8308, %v8306
    %v8463 = vpack.c.b16 %v8309, %v8307
    %v8464 = vpack.c.b16 %v8312, %v8310
    %v8465 = vpack.c.b16 %v8313, %v8311
    %v8466 = vpack.c.b16 %v8316, %v8314
    %v8467 = vpack.c.b16 %v8317, %v8315
    %v8468 = vpack.c.b16 %v8320, %v8318
    %v8469 = vpack.c.b16 %v8321, %v8319
    %v8470 = vpack.c.b16 %v8324, %v8322
    %v8471 = vpack.c.b16 %v8325, %v8323
    %v8472 = vpack.c.b16 %v8328, %v8326
    %v8473 = vpack.c.b16 %v8329, %v8327
    %v8474 = vpack.c.b16 %v8332, %v8330
    %v8475 = vpack.c.b16 %v8333, %v8331
    %v8476 = vpack.c.b16 %v8336, %v8334
    %v8477 = vpack.c.b16 %v8337, %v8335
    %v8478 = vpack.c.b16 %v8340, %v8338
    %v8479 = vpack.c.b16 %v8341, %v8339
    %v8480 = vpack.c.b16 %v8344, %v8342
    %v8481 = vpack.c.b16 %v8345, %v8343
    %v8482 = vpack.c.b16 %v8348, %v8346
    %v8483 = vpack.c.b16 %v8349, %v8347
    %v8484 = vpack.c.b16 %v8352, %v8350
    %v8485 = vpack.c.b16 %v8353, %v8351
    %v8486 = vpack.c.b16 %v8356, %v8354
    %v8487 = vpack.c.b16 %v8357, %v8355
    %v8488 = vpack.c.b16 %v8360, %v8358
    %v8489 = vpack.c.b16 %v8361, %v8359
    %8618 = vmatprep.subr.bf16.mxu0 %v8363
    %8619 = vmatpush1.bf16.msra.mxu0 %v8362
    %8620 = vmatprep.subr.bf16.mxu0 %v8365
    %8621 = vmatpush1.bf16.msra.mxu0 %v8364
    %8622 = vmatprep.subr.bf16.mxu0 %v8367
    %8623 = vmatpush1.bf16.msra.mxu0 %v8366
    %8624 = vmatprep.subr.bf16.mxu0 %v8369
    %8625 = vmatpush1.bf16.msra.mxu0 %v8368
    %8626 = vmatprep.subr.bf16.mxu0 %v8371
    %8627 = vmatpush1.bf16.msra.mxu0 %v8370
    %8628 = vmatprep.subr.bf16.mxu0 %v8373
    %8629 = vmatpush1.bf16.msra.mxu0 %v8372
    %8630 = vmatprep.subr.bf16.mxu0 %v8375
    %8631 = vmatpush1.bf16.msra.mxu0 %v8374
    %8632 = vmatprep.subr.bf16.mxu0 %v8377
    %8633 = vmatpush1.bf16.msra.mxu0 %v8376
    %8634 = vmatprep.subr.bf16.mxu0 %v8379
    %8635 = vmatpush1.bf16.msra.mxu0 %v8378
    %8636 = vmatprep.subr.bf16.mxu0 %v8381
    %8637 = vmatpush1.bf16.msra.mxu0 %v8380
    %8638 = vmatprep.subr.bf16.mxu0 %v8383
    %8639 = vmatpush1.bf16.msra.mxu0 %v8382
    %8640 = vmatprep.subr.bf16.mxu0 %v8385
    %8641 = vmatpush1.bf16.msra.mxu0 %v8384
    %8642 = vmatprep.subr.bf16.mxu0 %v8387
    %8643 = vmatpush1.bf16.msra.mxu0 %v8386
    %8644 = vmatprep.subr.bf16.mxu0 %v8389
    %8645 = vmatpush1.bf16.msra.mxu0 %v8388
    %8646 = vmatprep.subr.bf16.mxu0 %v8391
    %8647 = vmatpush1.bf16.msra.mxu0 %v8390
    %8648 = vmatprep.subr.bf16.mxu0 %v8393
    %8649 = vmatpush1.bf16.msra.mxu0 %v8392
    %8650 = vmatprep.mubr.bf16.mxu0 %v7694
    %8651 = vmatmul.mubr.bf16.gmra.mrb[0].mxu0 %v7693
    %v8652 = vpop.f32.mrb[0].mxu0
    %v8653 = vadd.f32 %v7971, %v8652
    %v8654 = vpop.f32.mrb[0].mxu0
    %v8655 = vadd.f32 %v7975, %v8654
    %v8656 = vpop.f32.mrb[0].mxu0
    %v8657 = vpop.f32.mrb[0].mxu0
    %8658 = vdwg.mxu0
    %8659 = vmatprep.subr.bf16.mxu0 %v8395
    %8660 = vmatpush1.bf16.msra.mxu0 %v8394
    %8661 = vmatprep.subr.bf16.mxu0 %v8397
    %8662 = vmatpush1.bf16.msra.mxu0 %v8396
    %8663 = vmatprep.subr.bf16.mxu0 %v8399
    %8664 = vmatpush1.bf16.msra.mxu0 %v8398
    %8665 = vmatprep.subr.bf16.mxu0 %v8401
    %8666 = vmatpush1.bf16.msra.mxu0 %v8400
    %8667 = vmatprep.subr.bf16.mxu0 %v8403
    %8668 = vmatpush1.bf16.msra.mxu0 %v8402
    %8669 = vmatprep.subr.bf16.mxu0 %v8405
    %8670 = vmatpush1.bf16.msra.mxu0 %v8404
    %8671 = vmatprep.subr.bf16.mxu0 %v8407
    %8672 = vmatpush1.bf16.msra.mxu0 %v8406
    %8673 = vmatprep.subr.bf16.mxu0 %v8409
    %8674 = vmatpush1.bf16.msra.mxu0 %v8408
    %8675 = vmatprep.subr.bf16.mxu0 %v8411
    %8676 = vmatpush1.bf16.msra.mxu0 %v8410
    %8677 = vmatprep.subr.bf16.mxu0 %v8413
    %8678 = vmatpush1.bf16.msra.mxu0 %v8412
    %8679 = vmatprep.subr.bf16.mxu0 %v8415
    %8680 = vmatpush1.bf16.msra.mxu0 %v8414
    %8681 = vmatprep.subr.bf16.mxu0 %v8417
    %8682 = vmatpush1.bf16.msra.mxu0 %v8416
    %8683 = vmatprep.subr.bf16.mxu0 %v8419
    %8684 = vmatpush1.bf16.msra.mxu0 %v8418
    %8685 = vmatprep.subr.bf16.mxu0 %v8421
    %8686 = vmatpush1.bf16.msra.mxu0 %v8420
    %8687 = vmatprep.subr.bf16.mxu0 %v8423
    %8688 = vmatpush1.bf16.msra.mxu0 %v8422
    %8689 = vmatprep.subr.bf16.mxu0 %v8425
    %8690 = vmatpush1.bf16.msra.mxu0 %v8424
    %8691 = vmatprep.mubr.bf16.mxu0 %v7696
    %8692 = vmatmul.mubr.bf16.gmra.mrb[0].mxu0 %v7695
    %v8693 = vpop.f32.mrb[0].mxu0
    %v8694 = vadd.f32 %v8653, %v8693
    %v8695 = vpop.f32.mrb[0].mxu0
    %v8696 = vadd.f32 %v8655, %v8695
    %v8697 = vpop.f32.mrb[0].mxu0
    %v8698 = vpop.f32.mrb[0].mxu0
    %8699 = vdwg.mxu0
    %8700 = vmatprep.subr.bf16.mxu0 %v8427
    %8701 = vmatpush1.bf16.msra.mxu0 %v8426
    %8702 = vmatprep.subr.bf16.mxu0 %v8429
    %8703 = vmatpush1.bf16.msra.mxu0 %v8428
    %8704 = vmatprep.subr.bf16.mxu0 %v8431
    %8705 = vmatpush1.bf16.msra.mxu0 %v8430
    %8706 = vmatprep.subr.bf16.mxu0 %v8433
    %8707 = vmatpush1.bf16.msra.mxu0 %v8432
    %8708 = vmatprep.subr.bf16.mxu0 %v8435
    %8709 = vmatpush1.bf16.msra.mxu0 %v8434
    %8710 = vmatprep.subr.bf16.mxu0 %v8437
    %8711 = vmatpush1.bf16.msra.mxu0 %v8436
    %8712 = vmatprep.subr.bf16.mxu0 %v8439
    %8713 = vmatpush1.bf16.msra.mxu0 %v8438
    %8714 = vmatprep.subr.bf16.mxu0 %v8441
    %8715 = vmatpush1.bf16.msra.mxu0 %v8440
    %8716 = vmatprep.subr.bf16.mxu0 %v8443
    %8717 = vmatpush1.bf16.msra.mxu0 %v8442
    %8718 = vmatprep.subr.bf16.mxu0 %v8445
    %8719 = vmatpush1.bf16.msra.mxu0 %v8444
    %8720 = vmatprep.subr.bf16.mxu0 %v8447
    %8721 = vmatpush1.bf16.msra.mxu0 %v8446
    %8722 = vmatprep.subr.bf16.mxu0 %v8449
    %8723 = vmatpush1.bf16.msra.mxu0 %v8448
    %8724 = vmatprep.subr.bf16.mxu0 %v8451
    %8725 = vmatpush1.bf16.msra.mxu0 %v8450
    %8726 = vmatprep.subr.bf16.mxu0 %v8453
    %8727 = vmatpush1.bf16.msra.mxu0 %v8452
    %8728 = vmatprep.subr.bf16.mxu0 %v8455
    %8729 = vmatpush1.bf16.msra.mxu0 %v8454
    %8730 = vmatprep.subr.bf16.mxu0 %v8457
    %8731 = vmatpush1.bf16.msra.mxu0 %v8456
    %8732 = vmatprep.mubr.bf16.mxu0 %v7698
    %8733 = vmatmul.mubr.bf16.gmra.mrb[0].mxu0 %v7697
    %v8734 = vpop.f32.mrb[0].mxu0
    %v8735 = vadd.f32 %v8694, %v8734
    %v8736 = vpop.f32.mrb[0].mxu0
    %v8737 = vadd.f32 %v8696, %v8736
    %v8738 = vpop.f32.mrb[0].mxu0
    %v8739 = vpop.f32.mrb[0].mxu0
    %8740 = vdwg.mxu0
    %8741 = vmatprep.subr.bf16.mxu0 %v8459
    %8742 = vmatpush1.bf16.msra.mxu0 %v8458
    %8743 = vmatprep.subr.bf16.mxu0 %v8461
    %8744 = vmatpush1.bf16.msra.mxu0 %v8460
    %8745 = vmatprep.subr.bf16.mxu0 %v8463
    %8746 = vmatpush1.bf16.msra.mxu0 %v8462
    %8747 = vmatprep.subr.bf16.mxu0 %v8465
    %8748 = vmatpush1.bf16.msra.mxu0 %v8464
    %8749 = vmatprep.subr.bf16.mxu0 %v8467
    %8750 = vmatpush1.bf16.msra.mxu0 %v8466
    %8751 = vmatprep.subr.bf16.mxu0 %v8469
    %8752 = vmatpush1.bf16.msra.mxu0 %v8468
    %8753 = vmatprep.subr.bf16.mxu0 %v8471
    %8754 = vmatpush1.bf16.msra.mxu0 %v8470
    %8755 = vmatprep.subr.bf16.mxu0 %v8473
    %8756 = vmatpush1.bf16.msra.mxu0 %v8472
    %8757 = vmatprep.subr.bf16.mxu0 %v8475
    %8758 = vmatpush1.bf16.msra.mxu0 %v8474
    %8759 = vmatprep.subr.bf16.mxu0 %v8477
    %8760 = vmatpush1.bf16.msra.mxu0 %v8476
    %8761 = vmatprep.subr.bf16.mxu0 %v8479
    %8762 = vmatpush1.bf16.msra.mxu0 %v8478
    %8763 = vmatprep.subr.bf16.mxu0 %v8481
    %8764 = vmatpush1.bf16.msra.mxu0 %v8480
    %8765 = vmatprep.subr.bf16.mxu0 %v8483
    %8766 = vmatpush1.bf16.msra.mxu0 %v8482
    %8767 = vmatprep.subr.bf16.mxu0 %v8485
    %8768 = vmatpush1.bf16.msra.mxu0 %v8484
    %8769 = vmatprep.subr.bf16.mxu0 %v8487
    %8770 = vmatpush1.bf16.msra.mxu0 %v8486
    %8771 = vmatprep.subr.bf16.mxu0 %v8489
    %8772 = vmatpush1.bf16.msra.mxu0 %v8488
    %8773 = vmatprep.mubr.bf16.mxu0 %v7700
    %8774 = vmatmul.mubr.bf16.gmra.mrb[0].mxu0 %v7699
    %v8775 = vpop.f32.mrb[0].mxu0
    %v8776 = vadd.f32 %v8735, %v8775
    %v8777 = vpop.f32.mrb[0].mxu0
    %v8778 = vadd.f32 %v8737, %v8777
    %v8779 = vpop.f32.mrb[0].mxu0
    %v8780 = vpop.f32.mrb[0].mxu0
    %8781 = vdwg.mxu0
    %v8782 = vmul.f32 %v8776, 0.1
    %v8783 = vmul.f32 %v8778, 0.1
    %v8784 = vmax.f32 %v8776, %v8782
    %v8785 = vmax.f32 %v8778, %v8783
    %v8786 = vpack.c.bf16 %v8784, %v8784
    %v8787 = vpack.c.bf16 %v8785, %v8785
    %s8788 = scalar_lea.vmem [#allocation7], 2
    %v8789 = vld [vmem:[%s8788] sm:$0x3]
    %v8791 = vlaneseq
    %v8792 = vshrl.u32 %v8791, 7
    %v8793 = vsub.s32 0, %v8792
    %v8794 = vrot.slane %v8789, %v8793
    %v8795 = vlaneseq
    %v8796 = vshrl.u32 %v8795, 7
    %v8797 = vsub.s32 1, %v8796
    %v8798 = vrot.slane %v8789, %v8797
    %v8929 = vunpack.c.l.b16 %v7838
    %v8930 = vunpack.c.h.b16 %v7838
    %v8931 = vunpack.c.l.b16 %v7839
    %v8932 = vunpack.c.h.b16 %v7839
    %v8933 = vunpack.c.l.b16 %v7840
    %v8934 = vunpack.c.h.b16 %v7840
    %v8935 = vunpack.c.l.b16 %v7841
    %v8936 = vunpack.c.h.b16 %v7841
    %v8937 = vunpack.c.l.b16 %v7842
    %v8938 = vunpack.c.h.b16 %v7842
    %v8939 = vunpack.c.l.b16 %v7843
    %v8940 = vunpack.c.h.b16 %v7843
    %v8941 = vunpack.c.l.b16 %v7844
    %v8942 = vunpack.c.h.b16 %v7844
    %v8943 = vunpack.c.l.b16 %v7845
    %v8944 = vunpack.c.h.b16 %v7845
    %v8945 = vunpack.c.l.b16 %v7846
    %v8946 = vunpack.c.h.b16 %v7846
    %v8947 = vunpack.c.l.b16 %v7847
    %v8948 = vunpack.c.h.b16 %v7847
    %v8949 = vunpack.c.l.b16 %v7848
    %v8950 = vunpack.c.h.b16 %v7848
    %v8951 = vunpack.c.l.b16 %v7849
    %v8952 = vunpack.c.h.b16 %v7849
    %v8953 = vunpack.c.l.b16 %v7850
    %v8954 = vunpack.c.h.b16 %v7850
    %v8955 = vunpack.c.l.b16 %v7851
    %v8956 = vunpack.c.h.b16 %v7851
    %v8957 = vunpack.c.l.b16 %v7852
    %v8958 = vunpack.c.h.b16 %v7852
    %v8959 = vunpack.c.l.b16 %v7853
    %v8960 = vunpack.c.h.b16 %v7853
    %v8961 = vunpack.c.l.b16 %v7854
    %v8962 = vunpack.c.h.b16 %v7854
    %v8963 = vunpack.c.l.b16 %v7855
    %v8964 = vunpack.c.h.b16 %v7855
    %v8965 = vunpack.c.l.b16 %v7856
    %v8966 = vunpack.c.h.b16 %v7856
    %v8967 = vunpack.c.l.b16 %v7857
    %v8968 = vunpack.c.h.b16 %v7857
    %v8969 = vunpack.c.l.b16 %v7858
    %v8970 = vunpack.c.h.b16 %v7858
    %v8971 = vunpack.c.l.b16 %v7859
    %v8972 = vunpack.c.h.b16 %v7859
    %v8973 = vunpack.c.l.b16 %v7860
    %v8974 = vunpack.c.h.b16 %v7860
    %v8975 = vunpack.c.l.b16 %v7861
    %v8976 = vunpack.c.h.b16 %v7861
    %v8977 = vunpack.c.l.b16 %v7862
    %v8978 = vunpack.c.h.b16 %v7862
    %v8979 = vunpack.c.l.b16 %v7863
    %v8980 = vunpack.c.h.b16 %v7863
    %v8981 = vunpack.c.l.b16 %v7864
    %v8982 = vunpack.c.h.b16 %v7864
    %v8983 = vunpack.c.l.b16 %v7865
    %v8984 = vunpack.c.h.b16 %v7865
    %v8985 = vunpack.c.l.b16 %v7866
    %v8986 = vunpack.c.h.b16 %v7866
    %v8987 = vunpack.c.l.b16 %v7867
    %v8988 = vunpack.c.h.b16 %v7867
    %v8989 = vunpack.c.l.b16 %v7868
    %v8990 = vunpack.c.h.b16 %v7868
    %v8991 = vunpack.c.l.b16 %v7869
    %v8992 = vunpack.c.h.b16 %v7869
    %v8993 = vunpack.c.l.b16 %v7870
    %v8994 = vunpack.c.h.b16 %v7870
    %v8995 = vunpack.c.l.b16 %v7871
    %v8996 = vunpack.c.h.b16 %v7871
    %v8997 = vunpack.c.l.b16 %v7872
    %v8998 = vunpack.c.h.b16 %v7872
    %v8999 = vunpack.c.l.b16 %v7873
    %v9000 = vunpack.c.h.b16 %v7873
    %v9001 = vunpack.c.l.b16 %v7874
    %v9002 = vunpack.c.h.b16 %v7874
    %v9003 = vunpack.c.l.b16 %v7875
    %v9004 = vunpack.c.h.b16 %v7875
    %v9005 = vunpack.c.l.b16 %v7876
    %v9006 = vunpack.c.h.b16 %v7876
    %v9007 = vunpack.c.l.b16 %v7877
    %v9008 = vunpack.c.h.b16 %v7877
    %v9009 = vunpack.c.l.b16 %v7878
    %v9010 = vunpack.c.h.b16 %v7878
    %v9011 = vunpack.c.l.b16 %v7879
    %v9012 = vunpack.c.h.b16 %v7879
    %v9013 = vunpack.c.l.b16 %v7880
    %v9014 = vunpack.c.h.b16 %v7880
    %v9015 = vunpack.c.l.b16 %v7881
    %v9016 = vunpack.c.h.b16 %v7881
    %v9017 = vunpack.c.l.b16 %v7882
    %v9018 = vunpack.c.h.b16 %v7882
    %v9019 = vunpack.c.l.b16 %v7883
    %v9020 = vunpack.c.h.b16 %v7883
    %v9021 = vunpack.c.l.b16 %v7884
    %v9022 = vunpack.c.h.b16 %v7884
    %v9023 = vunpack.c.l.b16 %v7885
    %v9024 = vunpack.c.h.b16 %v7885
    %v9025 = vunpack.c.l.b16 %v7886
    %v9026 = vunpack.c.h.b16 %v7886
    %v9027 = vunpack.c.l.b16 %v7887
    %v9028 = vunpack.c.h.b16 %v7887
    %v9029 = vunpack.c.l.b16 %v7888
    %v9030 = vunpack.c.h.b16 %v7888
    %v9031 = vunpack.c.l.b16 %v7889
    %v9032 = vunpack.c.h.b16 %v7889
    %v9033 = vunpack.c.l.b16 %v7890
    %v9034 = vunpack.c.h.b16 %v7890
    %v9035 = vunpack.c.l.b16 %v7891
    %v9036 = vunpack.c.h.b16 %v7891
    %v9037 = vunpack.c.l.b16 %v7892
    %v9038 = vunpack.c.h.b16 %v7892
    %v9039 = vunpack.c.l.b16 %v7893
    %v9040 = vunpack.c.h.b16 %v7893
    %v9041 = vunpack.c.l.b16 %v7894
    %v9042 = vunpack.c.h.b16 %v7894
    %v9043 = vunpack.c.l.b16 %v7895
    %v9044 = vunpack.c.h.b16 %v7895
    %v9045 = vunpack.c.l.b16 %v7896
    %v9046 = vunpack.c.h.b16 %v7896
    %v9047 = vunpack.c.l.b16 %v7897
    %v9048 = vunpack.c.h.b16 %v7897
    %v9049 = vunpack.c.l.b16 %v7898
    %v9050 = vunpack.c.h.b16 %v7898
    %v9051 = vunpack.c.l.b16 %v7899
    %v9052 = vunpack.c.h.b16 %v7899
    %v9053 = vunpack.c.l.b16 %v7900
    %v9054 = vunpack.c.h.b16 %v7900
    %v9055 = vunpack.c.l.b16 %v7901
    %v9056 = vunpack.c.h.b16 %v7901
    %v9057 = vunpack.c.l.b16 %v7902
    %v9058 = vunpack.c.h.b16 %v7902
    %v9059 = vunpack.c.l.b16 %v7903
    %v9060 = vunpack.c.h.b16 %v7903
    %v9061 = vunpack.c.l.b16 %v7904
    %v9062 = vunpack.c.h.b16 %v7904
    %v9063 = vunpack.c.l.b16 %v7905
    %v9064 = vunpack.c.h.b16 %v7905
    %v9065 = vunpack.c.l.b16 %v7906
    %v9066 = vunpack.c.h.b16 %v7906
    %v9067 = vunpack.c.l.b16 %v7907
    %v9068 = vunpack.c.h.b16 %v7907
    %v9069 = vunpack.c.l.b16 %v7908
    %v9070 = vunpack.c.h.b16 %v7908
    %v9071 = vunpack.c.l.b16 %v7909
    %v9072 = vunpack.c.h.b16 %v7909
    %v9073 = vunpack.c.l.b16 %v7910
    %v9074 = vunpack.c.h.b16 %v7910
    %v9075 = vunpack.c.l.b16 %v7911
    %v9076 = vunpack.c.h.b16 %v7911
    %v9077 = vunpack.c.l.b16 %v7912
    %v9078 = vunpack.c.h.b16 %v7912
    %v9079 = vunpack.c.l.b16 %v7913
    %v9080 = vunpack.c.h.b16 %v7913
    %v9081 = vunpack.c.l.b16 %v7914
    %v9082 = vunpack.c.h.b16 %v7914
    %v9083 = vunpack.c.l.b16 %v7915
    %v9084 = vunpack.c.h.b16 %v7915
    %v9085 = vunpack.c.l.b16 %v7916
    %v9086 = vunpack.c.h.b16 %v7916
    %v9087 = vunpack.c.l.b16 %v7917
    %v9088 = vunpack.c.h.b16 %v7917
    %v9089 = vunpack.c.l.b16 %v7918
    %v9090 = vunpack.c.h.b16 %v7918
    %v9091 = vunpack.c.l.b16 %v7919
    %v9092 = vunpack.c.h.b16 %v7919
    %v9093 = vunpack.c.l.b16 %v7920
    %v9094 = vunpack.c.h.b16 %v7920
    %v9095 = vunpack.c.l.b16 %v7921
    %v9096 = vunpack.c.h.b16 %v7921
    %v9097 = vunpack.c.l.b16 %v7922
    %v9098 = vunpack.c.h.b16 %v7922
    %v9099 = vunpack.c.l.b16 %v7923
    %v9100 = vunpack.c.h.b16 %v7923
    %v9101 = vunpack.c.l.b16 %v7924
    %v9102 = vunpack.c.h.b16 %v7924
    %v9103 = vunpack.c.l.b16 %v7925
    %v9104 = vunpack.c.h.b16 %v7925
    %v9105 = vunpack.c.l.b16 %v7926
    %v9106 = vunpack.c.h.b16 %v7926
    %v9107 = vunpack.c.l.b16 %v7927
    %v9108 = vunpack.c.h.b16 %v7927
    %v9109 = vunpack.c.l.b16 %v7928
    %v9110 = vunpack.c.h.b16 %v7928
    %v9111 = vunpack.c.l.b16 %v7929
    %v9112 = vunpack.c.h.b16 %v7929
    %v9113 = vunpack.c.l.b16 %v7930
    %v9114 = vunpack.c.h.b16 %v7930
    %v9115 = vunpack.c.l.b16 %v7931
    %v9116 = vunpack.c.h.b16 %v7931
    %v9117 = vunpack.c.l.b16 %v7932
    %v9118 = vunpack.c.h.b16 %v7932
    %v9119 = vunpack.c.l.b16 %v7933
    %v9120 = vunpack.c.h.b16 %v7933
    %v9121 = vunpack.c.l.b16 %v7934
    %v9122 = vunpack.c.h.b16 %v7934
    %v9123 = vunpack.c.l.b16 %v7935
    %v9124 = vunpack.c.h.b16 %v7935
    %v9125 = vunpack.c.l.b16 %v7936
    %v9126 = vunpack.c.h.b16 %v7936
    %v9127 = vunpack.c.l.b16 %v7937
    %v9128 = vunpack.c.h.b16 %v7937
    %v9129 = vunpack.c.l.b16 %v7938
    %v9130 = vunpack.c.h.b16 %v7938
    %v9131 = vunpack.c.l.b16 %v7939
    %v9132 = vunpack.c.h.b16 %v7939
    %v9133 = vunpack.c.l.b16 %v7940
    %v9134 = vunpack.c.h.b16 %v7940
    %v9135 = vunpack.c.l.b16 %v7941
    %v9136 = vunpack.c.h.b16 %v7941
    %v9137 = vunpack.c.l.b16 %v7942
    %v9138 = vunpack.c.h.b16 %v7942
    %v9139 = vunpack.c.l.b16 %v7943
    %v9140 = vunpack.c.h.b16 %v7943
    %v9141 = vunpack.c.l.b16 %v7944
    %v9142 = vunpack.c.h.b16 %v7944
    %v9143 = vunpack.c.l.b16 %v7945
    %v9144 = vunpack.c.h.b16 %v7945
    %v9145 = vunpack.c.l.b16 %v7946
    %v9146 = vunpack.c.h.b16 %v7946
    %v9147 = vunpack.c.l.b16 %v7947
    %v9148 = vunpack.c.h.b16 %v7947
    %v9149 = vunpack.c.l.b16 %v7948
    %v9150 = vunpack.c.h.b16 %v7948
    %v9151 = vunpack.c.l.b16 %v7949
    %v9152 = vunpack.c.h.b16 %v7949
    %v9153 = vunpack.c.l.b16 %v7950
    %v9154 = vunpack.c.h.b16 %v7950
    %v9155 = vunpack.c.l.b16 %v7951
    %v9156 = vunpack.c.h.b16 %v7951
    %v9157 = vunpack.c.l.b16 %v7952
    %v9158 = vunpack.c.h.b16 %v7952
    %v9159 = vunpack.c.l.b16 %v7953
    %v9160 = vunpack.c.h.b16 %v7953
    %v9161 = vunpack.c.l.b16 %v7954
    %v9162 = vunpack.c.h.b16 %v7954
    %v9163 = vunpack.c.l.b16 %v7955
    %v9164 = vunpack.c.h.b16 %v7955
    %v9165 = vunpack.c.l.b16 %v7956
    %v9166 = vunpack.c.h.b16 %v7956
    %v9167 = vunpack.c.l.b16 %v7957
    %v9168 = vunpack.c.h.b16 %v7957
    %v9169 = vunpack.c.l.b16 %v7958
    %v9170 = vunpack.c.h.b16 %v7958
    %v9171 = vunpack.c.l.b16 %v7959
    %v9172 = vunpack.c.h.b16 %v7959
    %v9173 = vunpack.c.l.b16 %v7960
    %v9174 = vunpack.c.h.b16 %v7960
    %v9175 = vunpack.c.l.b16 %v7961
    %v9176 = vunpack.c.h.b16 %v7961
    %v9177 = vunpack.c.l.b16 %v7962
    %v9178 = vunpack.c.h.b16 %v7962
    %v9179 = vunpack.c.l.b16 %v7963
    %v9180 = vunpack.c.h.b16 %v7963
    %v9181 = vunpack.c.l.b16 %v7964
    %v9182 = vunpack.c.h.b16 %v7964
    %v9183 = vunpack.c.l.b16 %v7965
    %v9184 = vunpack.c.h.b16 %v7965
    %v9185 = vpack.c.b16 %v8931, %v8929
    %v9186 = vpack.c.b16 %v8932, %v8930
    %v9187 = vpack.c.b16 %v8935, %v8933
    %v9188 = vpack.c.b16 %v8936, %v8934
    %v9189 = vpack.c.b16 %v8939, %v8937
    %v9190 = vpack.c.b16 %v8940, %v8938
    %v9191 = vpack.c.b16 %v8943, %v8941
    %v9192 = vpack.c.b16 %v8944, %v8942
    %v9193 = vpack.c.b16 %v8947, %v8945
    %v9194 = vpack.c.b16 %v8948, %v8946
    %v9195 = vpack.c.b16 %v8951, %v8949
    %v9196 = vpack.c.b16 %v8952, %v8950
    %v9197 = vpack.c.b16 %v8955, %v8953
    %v9198 = vpack.c.b16 %v8956, %v8954
    %v9199 = vpack.c.b16 %v8959, %v8957
    %v9200 = vpack.c.b16 %v8960, %v8958
    %v9201 = vpack.c.b16 %v8963, %v8961
    %v9202 = vpack.c.b16 %v8964, %v8962
    %v9203 = vpack.c.b16 %v8967, %v8965
    %v9204 = vpack.c.b16 %v8968, %v8966
    %v9205 = vpack.c.b16 %v8971, %v8969
    %v9206 = vpack.c.b16 %v8972, %v8970
    %v9207 = vpack.c.b16 %v8975, %v8973
    %v9208 = vpack.c.b16 %v8976, %v8974
    %v9209 = vpack.c.b16 %v8979, %v8977
    %v9210 = vpack.c.b16 %v8980, %v8978
    %v9211 = vpack.c.b16 %v8983, %v8981
    %v9212 = vpack.c.b16 %v8984, %v8982
    %v9213 = vpack.c.b16 %v8987, %v8985
    %v9214 = vpack.c.b16 %v8988, %v8986
    %v9215 = vpack.c.b16 %v8991, %v8989
    %v9216 = vpack.c.b16 %v8992, %v8990
    %v9217 = vpack.c.b16 %v8995, %v8993
    %v9218 = vpack.c.b16 %v8996, %v8994
    %v9219 = vpack.c.b16 %v8999, %v8997
    %v9220 = vpack.c.b16 %v9000, %v8998
    %v9221 = vpack.c.b16 %v9003, %v9001
    %v9222 = vpack.c.b16 %v9004, %v9002
    %v9223 = vpack.c.b16 %v9007, %v9005
    %v9224 = vpack.c.b16 %v9008, %v9006
    %v9225 = vpack.c.b16 %v9011, %v9009
    %v9226 = vpack.c.b16 %v9012, %v9010
    %v9227 = vpack.c.b16 %v9015, %v9013
    %v9228 = vpack.c.b16 %v9016, %v9014
    %v9229 = vpack.c.b16 %v9019, %v9017
    %v9230 = vpack.c.b16 %v9020, %v9018
    %v9231 = vpack.c.b16 %v9023, %v9021
    %v9232 = vpack.c.b16 %v9024, %v9022
    %v9233 = vpack.c.b16 %v9027, %v9025
    %v9234 = vpack.c.b16 %v9028, %v9026
    %v9235 = vpack.c.b16 %v9031, %v9029
    %v9236 = vpack.c.b16 %v9032, %v9030
    %v9237 = vpack.c.b16 %v9035, %v9033
    %v9238 = vpack.c.b16 %v9036, %v9034
    %v9239 = vpack.c.b16 %v9039, %v9037
    %v9240 = vpack.c.b16 %v9040, %v9038
    %v9241 = vpack.c.b16 %v9043, %v9041
    %v9242 = vpack.c.b16 %v9044, %v9042
    %v9243 = vpack.c.b16 %v9047, %v9045
    %v9244 = vpack.c.b16 %v9048, %v9046
    %v9245 = vpack.c.b16 %v9051, %v9049
    %v9246 = vpack.c.b16 %v9052, %v9050
    %v9247 = vpack.c.b16 %v9055, %v9053
    %v9248 = vpack.c.b16 %v9056, %v9054
    %v9249 = vpack.c.b16 %v9059, %v9057
    %v9250 = vpack.c.b16 %v9060, %v9058
    %v9251 = vpack.c.b16 %v9063, %v9061
    %v9252 = vpack.c.b16 %v9064, %v9062
    %v9253 = vpack.c.b16 %v9067, %v9065
    %v9254 = vpack.c.b16 %v9068, %v9066
    %v9255 = vpack.c.b16 %v9071, %v9069
    %v9256 = vpack.c.b16 %v9072, %v9070
    %v9257 = vpack.c.b16 %v9075, %v9073
    %v9258 = vpack.c.b16 %v9076, %v9074
    %v9259 = vpack.c.b16 %v9079, %v9077
    %v9260 = vpack.c.b16 %v9080, %v9078
    %v9261 = vpack.c.b16 %v9083, %v9081
    %v9262 = vpack.c.b16 %v9084, %v9082
    %v9263 = vpack.c.b16 %v9087, %v9085
    %v9264 = vpack.c.b16 %v9088, %v9086
    %v9265 = vpack.c.b16 %v9091, %v9089
    %v9266 = vpack.c.b16 %v9092, %v9090
    %v9267 = vpack.c.b16 %v9095, %v9093
    %v9268 = vpack.c.b16 %v9096, %v9094
    %v9269 = vpack.c.b16 %v9099, %v9097
    %v9270 = vpack.c.b16 %v9100, %v9098
    %v9271 = vpack.c.b16 %v9103, %v9101
    %v9272 = vpack.c.b16 %v9104, %v9102
    %v9273 = vpack.c.b16 %v9107, %v9105
    %v9274 = vpack.c.b16 %v9108, %v9106
    %v9275 = vpack.c.b16 %v9111, %v9109
    %v9276 = vpack.c.b16 %v9112, %v9110
    %v9277 = vpack.c.b16 %v9115, %v9113
    %v9278 = vpack.c.b16 %v9116, %v9114
    %v9279 = vpack.c.b16 %v9119, %v9117
    %v9280 = vpack.c.b16 %v9120, %v9118
    %v9281 = vpack.c.b16 %v9123, %v9121
    %v9282 = vpack.c.b16 %v9124, %v9122
    %v9283 = vpack.c.b16 %v9127, %v9125
    %v9284 = vpack.c.b16 %v9128, %v9126
    %v9285 = vpack.c.b16 %v9131, %v9129
    %v9286 = vpack.c.b16 %v9132, %v9130
    %v9287 = vpack.c.b16 %v9135, %v9133
    %v9288 = vpack.c.b16 %v9136, %v9134
    %v9289 = vpack.c.b16 %v9139, %v9137
    %v9290 = vpack.c.b16 %v9140, %v9138
    %v9291 = vpack.c.b16 %v9143, %v9141
    %v9292 = vpack.c.b16 %v9144, %v9142
    %v9293 = vpack.c.b16 %v9147, %v9145
    %v9294 = vpack.c.b16 %v9148, %v9146
    %v9295 = vpack.c.b16 %v9151, %v9149
    %v9296 = vpack.c.b16 %v9152, %v9150
    %v9297 = vpack.c.b16 %v9155, %v9153
    %v9298 = vpack.c.b16 %v9156, %v9154
    %v9299 = vpack.c.b16 %v9159, %v9157
    %v9300 = vpack.c.b16 %v9160, %v9158
    %v9301 = vpack.c.b16 %v9163, %v9161
    %v9302 = vpack.c.b16 %v9164, %v9162
    %v9303 = vpack.c.b16 %v9167, %v9165
    %v9304 = vpack.c.b16 %v9168, %v9166
    %v9305 = vpack.c.b16 %v9171, %v9169
    %v9306 = vpack.c.b16 %v9172, %v9170
    %v9307 = vpack.c.b16 %v9175, %v9173
    %v9308 = vpack.c.b16 %v9176, %v9174
    %v9309 = vpack.c.b16 %v9179, %v9177
    %v9310 = vpack.c.b16 %v9180, %v9178
    %v9311 = vpack.c.b16 %v9183, %v9181
    %v9312 = vpack.c.b16 %v9184, %v9182
    %9441 = vmatprep.subr.bf16.mxu0 %v9186
    %9442 = vmatpush1.bf16.msra.mxu0 %v9185
    %9443 = vmatprep.subr.bf16.mxu0 %v9188
    %9444 = vmatpush1.bf16.msra.mxu0 %v9187
    %9445 = vmatprep.subr.bf16.mxu0 %v9190
    %9446 = vmatpush1.bf16.msra.mxu0 %v9189
    %9447 = vmatprep.subr.bf16.mxu0 %v9192
    %9448 = vmatpush1.bf16.msra.mxu0 %v9191
    %9449 = vmatprep.subr.bf16.mxu0 %v9194
    %9450 = vmatpush1.bf16.msra.mxu0 %v9193
    %9451 = vmatprep.subr.bf16.mxu0 %v9196
    %9452 = vmatpush1.bf16.msra.mxu0 %v9195
    %9453 = vmatprep.subr.bf16.mxu0 %v9198
    %9454 = vmatpush1.bf16.msra.mxu0 %v9197
    %9455 = vmatprep.subr.bf16.mxu0 %v9200
    %9456 = vmatpush1.bf16.msra.mxu0 %v9199
    %9457 = vmatprep.subr.bf16.mxu0 %v9202
    %9458 = vmatpush1.bf16.msra.mxu0 %v9201
    %9459 = vmatprep.subr.bf16.mxu0 %v9204
    %9460 = vmatpush1.bf16.msra.mxu0 %v9203
    %9461 = vmatprep.subr.bf16.mxu0 %v9206
    %9462 = vmatpush1.bf16.msra.mxu0 %v9205
    %9463 = vmatprep.subr.bf16.mxu0 %v9208
    %9464 = vmatpush1.bf16.msra.mxu0 %v9207
    %9465 = vmatprep.subr.bf16.mxu0 %v9210
    %9466 = vmatpush1.bf16.msra.mxu0 %v9209
    %9467 = vmatprep.subr.bf16.mxu0 %v9212
    %9468 = vmatpush1.bf16.msra.mxu0 %v9211
    %9469 = vmatprep.subr.bf16.mxu0 %v9214
    %9470 = vmatpush1.bf16.msra.mxu0 %v9213
    %9471 = vmatprep.subr.bf16.mxu0 %v9216
    %9472 = vmatpush1.bf16.msra.mxu0 %v9215
    %9473 = vmatprep.mubr.bf16.mxu0 %v7702
    %9474 = vmatmul.mubr.bf16.gmra.mrb[0].mxu0 %v7701
    %v9475 = vpop.f32.mrb[0].mxu0
    %v9476 = vadd.f32 %v8794, %v9475
    %v9477 = vpop.f32.mrb[0].mxu0
    %v9478 = vadd.f32 %v8798, %v9477
    %v9479 = vpop.f32.mrb[0].mxu0
    %v9480 = vpop.f32.mrb[0].mxu0
    %9481 = vdwg.mxu0
    %9482 = vmatprep.subr.bf16.mxu0 %v9218
    %9483 = vmatpush1.bf16.msra.mxu0 %v9217
    %9484 = vmatprep.subr.bf16.mxu0 %v9220
    %9485 = vmatpush1.bf16.msra.mxu0 %v9219
    %9486 = vmatprep.subr.bf16.mxu0 %v9222
    %9487 = vmatpush1.bf16.msra.mxu0 %v9221
    %9488 = vmatprep.subr.bf16.mxu0 %v9224
    %9489 = vmatpush1.bf16.msra.mxu0 %v9223
    %9490 = vmatprep.subr.bf16.mxu0 %v9226
    %9491 = vmatpush1.bf16.msra.mxu0 %v9225
    %9492 = vmatprep.subr.bf16.mxu0 %v9228
    %9493 = vmatpush1.bf16.msra.mxu0 %v9227
    %9494 = vmatprep.subr.bf16.mxu0 %v9230
    %9495 = vmatpush1.bf16.msra.mxu0 %v9229
    %9496 = vmatprep.subr.bf16.mxu0 %v9232
    %9497 = vmatpush1.bf16.msra.mxu0 %v9231
    %9498 = vmatprep.subr.bf16.mxu0 %v9234
    %9499 = vmatpush1.bf16.msra.mxu0 %v9233
    %9500 = vmatprep.subr.bf16.mxu0 %v9236
    %9501 = vmatpush1.bf16.msra.mxu0 %v9235
    %9502 = vmatprep.subr.bf16.mxu0 %v9238
    %9503 = vmatpush1.bf16.msra.mxu0 %v9237
    %9504 = vmatprep.subr.bf16.mxu0 %v9240
    %9505 = vmatpush1.bf16.msra.mxu0 %v9239
    %9506 = vmatprep.subr.bf16.mxu0 %v9242
    %9507 = vmatpush1.bf16.msra.mxu0 %v9241
    %9508 = vmatprep.subr.bf16.mxu0 %v9244
    %9509 = vmatpush1.bf16.msra.mxu0 %v9243
    %9510 = vmatprep.subr.bf16.mxu0 %v9246
    %9511 = vmatpush1.bf16.msra.mxu0 %v9245
    %9512 = vmatprep.subr.bf16.mxu0 %v9248
    %9513 = vmatpush1.bf16.msra.mxu0 %v9247
    %9514 = vmatprep.mubr.bf16.mxu0 %v7704
    %9515 = vmatmul.mubr.bf16.gmra.mrb[0].mxu0 %v7703
    %v9516 = vpop.f32.mrb[0].mxu0
    %v9517 = vadd.f32 %v9476, %v9516
    %v9518 = vpop.f32.mrb[0].mxu0
    %v9519 = vadd.f32 %v9478, %v9518
    %v9520 = vpop.f32.mrb[0].mxu0
    %v9521 = vpop.f32.mrb[0].mxu0
    %9522 = vdwg.mxu0
    %9523 = vmatprep.subr.bf16.mxu0 %v9250
    %9524 = vmatpush1.bf16.msra.mxu0 %v9249
    %9525 = vmatprep.subr.bf16.mxu0 %v9252
    %9526 = vmatpush1.bf16.msra.mxu0 %v9251
    %9527 = vmatprep.subr.bf16.mxu0 %v9254
    %9528 = vmatpush1.bf16.msra.mxu0 %v9253
    %9529 = vmatprep.subr.bf16.mxu0 %v9256
    %9530 = vmatpush1.bf16.msra.mxu0 %v9255
    %9531 = vmatprep.subr.bf16.mxu0 %v9258
    %9532 = vmatpush1.bf16.msra.mxu0 %v9257
    %9533 = vmatprep.subr.bf16.mxu0 %v9260
    %9534 = vmatpush1.bf16.msra.mxu0 %v9259
    %9535 = vmatprep.subr.bf16.mxu0 %v9262
    %9536 = vmatpush1.bf16.msra.mxu0 %v9261
    %9537 = vmatprep.subr.bf16.mxu0 %v9264
    %9538 = vmatpush1.bf16.msra.mxu0 %v9263
    %9539 = vmatprep.subr.bf16.mxu0 %v9266
    %9540 = vmatpush1.bf16.msra.mxu0 %v9265
    %9541 = vmatprep.subr.bf16.mxu0 %v9268
    %9542 = vmatpush1.bf16.msra.mxu0 %v9267
    %9543 = vmatprep.subr.bf16.mxu0 %v9270
    %9544 = vmatpush1.bf16.msra.mxu0 %v9269
    %9545 = vmatprep.subr.bf16.mxu0 %v9272
    %9546 = vmatpush1.bf16.msra.mxu0 %v9271
    %9547 = vmatprep.subr.bf16.mxu0 %v9274
    %9548 = vmatpush1.bf16.msra.mxu0 %v9273
    %9549 = vmatprep.subr.bf16.mxu0 %v9276
    %9550 = vmatpush1.bf16.msra.mxu0 %v9275
    %9551 = vmatprep.subr.bf16.mxu0 %v9278
    %9552 = vmatpush1.bf16.msra.mxu0 %v9277
    %9553 = vmatprep.subr.bf16.mxu0 %v9280
    %9554 = vmatpush1.bf16.msra.mxu0 %v9279
    %9555 = vmatprep.mubr.bf16.mxu0 %v7706
    %9556 = vmatmul.mubr.bf16.gmra.mrb[0].mxu0 %v7705
    %v9557 = vpop.f32.mrb[0].mxu0
    %v9558 = vadd.f32 %v9517, %v9557
    %v9559 = vpop.f32.mrb[0].mxu0
    %v9560 = vadd.f32 %v9519, %v9559
    %v9561 = vpop.f32.mrb[0].mxu0
    %v9562 = vpop.f32.mrb[0].mxu0
    %9563 = vdwg.mxu0
    %9564 = vmatprep.subr.bf16.mxu0 %v9282
    %9565 = vmatpush1.bf16.msra.mxu0 %v9281
    %9566 = vmatprep.subr.bf16.mxu0 %v9284
    %9567 = vmatpush1.bf16.msra.mxu0 %v9283
    %9568 = vmatprep.subr.bf16.mxu0 %v9286
    %9569 = vmatpush1.bf16.msra.mxu0 %v9285
    %9570 = vmatprep.subr.bf16.mxu0 %v9288
    %9571 = vmatpush1.bf16.msra.mxu0 %v9287
    %9572 = vmatprep.subr.bf16.mxu0 %v9290
    %9573 = vmatpush1.bf16.msra.mxu0 %v9289
    %9574 = vmatprep.subr.bf16.mxu0 %v9292
    %9575 = vmatpush1.bf16.msra.mxu0 %v9291
    %9576 = vmatprep.subr.bf16.mxu0 %v9294
    %9577 = vmatpush1.bf16.msra.mxu0 %v9293
    %9578 = vmatprep.subr.bf16.mxu0 %v9296
    %9579 = vmatpush1.bf16.msra.mxu0 %v9295
    %9580 = vmatprep.subr.bf16.mxu0 %v9298
    %9581 = vmatpush1.bf16.msra.mxu0 %v9297
    %9582 = vmatprep.subr.bf16.mxu0 %v9300
    %9583 = vmatpush1.bf16.msra.mxu0 %v9299
    %9584 = vmatprep.subr.bf16.mxu0 %v9302
    %9585 = vmatpush1.bf16.msra.mxu0 %v9301
    %9586 = vmatprep.subr.bf16.mxu0 %v9304
    %9587 = vmatpush1.bf16.msra.mxu0 %v9303
    %9588 = vmatprep.subr.bf16.mxu0 %v9306
    %9589 = vmatpush1.bf16.msra.mxu0 %v9305
    %9590 = vmatprep.subr.bf16.mxu0 %v9308
    %9591 = vmatpush1.bf16.msra.mxu0 %v9307
    %9592 = vmatprep.subr.bf16.mxu0 %v9310
    %9593 = vmatpush1.bf16.msra.mxu0 %v9309
    %9594 = vmatprep.subr.bf16.mxu0 %v9312
    %9595 = vmatpush1.bf16.msra.mxu0 %v9311
    %9596 = vmatprep.mubr.bf16.mxu0 %v7708
    %9597 = vmatmul.mubr.bf16.gmra.mrb[0].mxu0 %v7707
    %v9598 = vpop.f32.mrb[0].mxu0
    %v9599 = vadd.f32 %v9558, %v9598
    %v9600 = vpop.f32.mrb[0].mxu0
    %v9601 = vadd.f32 %v9560, %v9600
    %v9602 = vpop.f32.mrb[0].mxu0
    %v9603 = vpop.f32.mrb[0].mxu0
    %9604 = vdwg.mxu0
    %v9605 = vmul.f32 %v9599, 0.1
    %v9606 = vmul.f32 %v9601, 0.1
    %v9607 = vmax.f32 %v9599, %v9605
    %v9608 = vmax.f32 %v9601, %v9606
    %v9609 = vpack.c.bf16 %v9607, %v9607
    %v9610 = vpack.c.bf16 %v9608, %v9608
    %v9611 = vld [vmem:[#allocation9] sm:$0xf]
    %v9612 = vld [vmem:[#allocation9 + $0x4] sm:$0xf]
    %v9613 = vld [vmem:[#allocation9 + $0x8] sm:$0xf]
    %v9614 = vld [vmem:[#allocation9 + $0xc] sm:$0xf]
    %v9615 = vld [vmem:[#allocation9 + $0x10] sm:$0xf]
    %v9616 = vld [vmem:[#allocation9 + $0x14] sm:$0xf]
    %v9617 = vld [vmem:[#allocation9 + $0x18] sm:$0xf]
    %v9618 = vld [vmem:[#allocation9 + $0x1c] sm:$0xf]
    %v9619 = vld [vmem:[#allocation9 + $0x20] sm:$0xf]
    %v9620 = vld [vmem:[#allocation9 + $0x24] sm:$0xf]
    %v9621 = vld [vmem:[#allocation9 + $0x28] sm:$0xf]
    %v9622 = vld [vmem:[#allocation9 + $0x2c] sm:$0xf]
    %v9623 = vld [vmem:[#allocation9 + $0x30] sm:$0xf]
    %v9624 = vld [vmem:[#allocation9 + $0x34] sm:$0xf]
    %v9625 = vld [vmem:[#allocation9 + $0x38] sm:$0xf]
    %v9626 = vld [vmem:[#allocation9 + $0x3c] sm:$0xf]
    %v9627 = vld [vmem:[#allocation9 + $0x40] sm:$0xf]
    %v9628 = vld [vmem:[#allocation9 + $0x44] sm:$0xf]
    %v9629 = vld [vmem:[#allocation9 + $0x48] sm:$0xf]
    %v9630 = vld [vmem:[#allocation9 + $0x4c] sm:$0xf]
    %v9631 = vld [vmem:[#allocation9 + $0x50] sm:$0xf]
    %v9632 = vld [vmem:[#allocation9 + $0x54] sm:$0xf]
    %v9633 = vld [vmem:[#allocation9 + $0x58] sm:$0xf]
    %v9634 = vld [vmem:[#allocation9 + $0x5c] sm:$0xf]
    %v9635 = vld [vmem:[#allocation9 + $0x60] sm:$0xf]
    %v9636 = vld [vmem:[#allocation9 + $0x64] sm:$0xf]
    %v9637 = vld [vmem:[#allocation9 + $0x68] sm:$0xf]
    %v9638 = vld [vmem:[#allocation9 + $0x6c] sm:$0xf]
    %v9639 = vld [vmem:[#allocation9 + $0x70] sm:$0xf]
    %v9640 = vld [vmem:[#allocation9 + $0x74] sm:$0xf]
    %v9641 = vld [vmem:[#allocation9 + $0x78] sm:$0xf]
    %v9642 = vld [vmem:[#allocation9 + $0x7c] sm:$0xf]
    %s9643 = scalar_lea.vmem [#allocation9], 128
    %v9644 = vld [vmem:[%s9643] sm:$0xf]
    %v9645 = vld [vmem:[%s9643 + $0x4] sm:$0xf]
    %v9646 = vld [vmem:[%s9643 + $0x8] sm:$0xf]
    %v9647 = vld [vmem:[%s9643 + $0xc] sm:$0xf]
    %v9648 = vld [vmem:[%s9643 + $0x10] sm:$0xf]
    %v9649 = vld [vmem:[%s9643 + $0x14] sm:$0xf]
    %v9650 = vld [vmem:[%s9643 + $0x18] sm:$0xf]
    %v9651 = vld [vmem:[%s9643 + $0x1c] sm:$0xf]
    %v9652 = vld [vmem:[%s9643 + $0x20] sm:$0xf]
    %v9653 = vld [vmem:[%s9643 + $0x24] sm:$0xf]
    %v9654 = vld [vmem:[%s9643 + $0x28] sm:$0xf]
    %v9655 = vld [vmem:[%s9643 + $0x2c] sm:$0xf]
    %v9656 = vld [vmem:[%s9643 + $0x30] sm:$0xf]
    %v9657 = vld [vmem:[%s9643 + $0x34] sm:$0xf]
    %v9658 = vld [vmem:[%s9643 + $0x38] sm:$0xf]
    %v9659 = vld [vmem:[%s9643 + $0x3c] sm:$0xf]
    %v9660 = vld [vmem:[%s9643 + $0x40] sm:$0xf]
    %v9661 = vld [vmem:[%s9643 + $0x44] sm:$0xf]
    %v9662 = vld [vmem:[%s9643 + $0x48] sm:$0xf]
    %v9663 = vld [vmem:[%s9643 + $0x4c] sm:$0xf]
    %v9664 = vld [vmem:[%s9643 + $0x50] sm:$0xf]
    %v9665 = vld [vmem:[%s9643 + $0x54] sm:$0xf]
    %v9666 = vld [vmem:[%s9643 + $0x58] sm:$0xf]
    %v9667 = vld [vmem:[%s9643 + $0x5c] sm:$0xf]
    %v9668 = vld [vmem:[%s9643 + $0x60] sm:$0xf]
    %v9669 = vld [vmem:[%s9643 + $0x64] sm:$0xf]
    %v9670 = vld [vmem:[%s9643 + $0x68] sm:$0xf]
    %v9671 = vld [vmem:[%s9643 + $0x6c] sm:$0xf]
    %v9672 = vld [vmem:[%s9643 + $0x70] sm:$0xf]
    %v9673 = vld [vmem:[%s9643 + $0x74] sm:$0xf]
    %v9674 = vld [vmem:[%s9643 + $0x78] sm:$0xf]
    %v9675 = vld [vmem:[%s9643 + $0x7c] sm:$0xf]
    %v9708 = vunpack.c.l.b16 %v9644
    %v9709 = vunpack.c.l.b16 %v9645
    %v9710 = vunpack.c.l.b16 %v9646
    %v9711 = vunpack.c.l.b16 %v9647
    %v9712 = vunpack.c.l.b16 %v9648
    %v9713 = vunpack.c.l.b16 %v9649
    %v9714 = vunpack.c.l.b16 %v9650
    %v9715 = vunpack.c.l.b16 %v9651
    %v9716 = vunpack.c.l.b16 %v9652
    %v9717 = vunpack.c.l.b16 %v9653
    %v9718 = vunpack.c.l.b16 %v9654
    %v9719 = vunpack.c.l.b16 %v9655
    %v9720 = vunpack.c.l.b16 %v9656
    %v9721 = vunpack.c.l.b16 %v9657
    %v9722 = vunpack.c.l.b16 %v9658
    %v9723 = vunpack.c.l.b16 %v9659
    %v9724 = vunpack.c.l.b16 %v9660
    %v9725 = vunpack.c.l.b16 %v9661
    %v9726 = vunpack.c.l.b16 %v9662
    %v9727 = vunpack.c.l.b16 %v9663
    %v9728 = vunpack.c.l.b16 %v9664
    %v9729 = vunpack.c.l.b16 %v9665
    %v9730 = vunpack.c.l.b16 %v9666
    %v9731 = vunpack.c.l.b16 %v9667
    %v9732 = vunpack.c.l.b16 %v9668
    %v9733 = vunpack.c.l.b16 %v9669
    %v9734 = vunpack.c.l.b16 %v9670
    %v9735 = vunpack.c.l.b16 %v9671
    %v9736 = vunpack.c.l.b16 %v9672
    %v9737 = vunpack.c.l.b16 %v9673
    %v9738 = vunpack.c.l.b16 %v9674
    %v9739 = vunpack.c.l.b16 %v9675
    %v9740 = vpack.c.b16 %v9709, %v9708
    %v9741 = vpack.c.b16 %v9711, %v9710
    %v9742 = vpack.c.b16 %v9713, %v9712
    %v9743 = vpack.c.b16 %v9715, %v9714
    %v9744 = vpack.c.b16 %v9717, %v9716
    %v9745 = vpack.c.b16 %v9719, %v9718
    %v9746 = vpack.c.b16 %v9721, %v9720
    %v9747 = vpack.c.b16 %v9723, %v9722
    %v9748 = vpack.c.b16 %v9725, %v9724
    %v9749 = vpack.c.b16 %v9727, %v9726
    %v9750 = vpack.c.b16 %v9729, %v9728
    %v9751 = vpack.c.b16 %v9731, %v9730
    %v9752 = vpack.c.b16 %v9733, %v9732
    %v9753 = vpack.c.b16 %v9735, %v9734
    %v9754 = vpack.c.b16 %v9737, %v9736
    %v9755 = vpack.c.b16 %v9739, %v9738
    %9772 = vmatprep.subr.bf16.mxu0 0
    %9773 = vmatpush1.bf16.msra.mxu0 %v9740
    %9774 = vmatprep.subr.bf16.mxu0 0
    %9775 = vmatpush1.bf16.msra.mxu0 %v9741
    %9776 = vmatprep.subr.bf16.mxu0 0
    %9777 = vmatpush1.bf16.msra.mxu0 %v9742
    %9778 = vmatprep.subr.bf16.mxu0 0
    %9779 = vmatpush1.bf16.msra.mxu0 %v9743
    %9780 = vmatprep.subr.bf16.mxu0 0
    %9781 = vmatpush1.bf16.msra.mxu0 %v9744
    %9782 = vmatprep.subr.bf16.mxu0 0
    %9783 = vmatpush1.bf16.msra.mxu0 %v9745
    %9784 = vmatprep.subr.bf16.mxu0 0
    %9785 = vmatpush1.bf16.msra.mxu0 %v9746
    %9786 = vmatprep.subr.bf16.mxu0 0
    %9787 = vmatpush1.bf16.msra.mxu0 %v9747
    %9788 = vmatprep.subr.bf16.mxu0 0
    %9789 = vmatpush1.bf16.msra.mxu0 %v9748
    %9790 = vmatprep.subr.bf16.mxu0 0
    %9791 = vmatpush1.bf16.msra.mxu0 %v9749
    %9792 = vmatprep.subr.bf16.mxu0 0
    %9793 = vmatpush1.bf16.msra.mxu0 %v9750
    %9794 = vmatprep.subr.bf16.mxu0 0
    %9795 = vmatpush1.bf16.msra.mxu0 %v9751
    %9796 = vmatprep.subr.bf16.mxu0 0
    %9797 = vmatpush1.bf16.msra.mxu0 %v9752
    %9798 = vmatprep.subr.bf16.mxu0 0
    %9799 = vmatpush1.bf16.msra.mxu0 %v9753
    %9800 = vmatprep.subr.bf16.mxu0 0
    %9801 = vmatpush1.bf16.msra.mxu0 %v9754
    %9802 = vmatprep.subr.bf16.mxu0 0
    %9803 = vmatpush1.bf16.msra.mxu0 %v9755
    %9804 = vmatprep.mubr.bf16.mxu0 %v9610
    %9805 = vmatmul.mubr.bf16.gmra.mrb[0].mxu0 %v9609
    %v9806 = vpop.f32.mrb[0].mxu0
    %v9807 = vadd.f32 0.0, %v9806
    %v9808 = vpop.f32.mrb[0].mxu0
    %v9809 = vpop.f32.mrb[0].mxu0
    %v9810 = vpop.f32.mrb[0].mxu0
    %9811 = vdwg.mxu0
    %v9844 = vunpack.c.l.b16 %v9611
    %v9845 = vunpack.c.l.b16 %v9612
    %v9846 = vunpack.c.l.b16 %v9613
    %v9847 = vunpack.c.l.b16 %v9614
    %v9848 = vunpack.c.l.b16 %v9615
    %v9849 = vunpack.c.l.b16 %v9616
    %v9850 = vunpack.c.l.b16 %v9617
    %v9851 = vunpack.c.l.b16 %v9618
    %v9852 = vunpack.c.l.b16 %v9619
    %v9853 = vunpack.c.l.b16 %v9620
    %v9854 = vunpack.c.l.b16 %v9621
    %v9855 = vunpack.c.l.b16 %v9622
    %v9856 = vunpack.c.l.b16 %v9623
    %v9857 = vunpack.c.l.b16 %v9624
    %v9858 = vunpack.c.l.b16 %v9625
    %v9859 = vunpack.c.l.b16 %v9626
    %v9860 = vunpack.c.l.b16 %v9627
    %v9861 = vunpack.c.l.b16 %v9628
    %v9862 = vunpack.c.l.b16 %v9629
    %v9863 = vunpack.c.l.b16 %v9630
    %v9864 = vunpack.c.l.b16 %v9631
    %v9865 = vunpack.c.l.b16 %v9632
    %v9866 = vunpack.c.l.b16 %v9633
    %v9867 = vunpack.c.l.b16 %v9634
    %v9868 = vunpack.c.l.b16 %v9635
    %v9869 = vunpack.c.l.b16 %v9636
    %v9870 = vunpack.c.l.b16 %v9637
    %v9871 = vunpack.c.l.b16 %v9638
    %v9872 = vunpack.c.l.b16 %v9639
    %v9873 = vunpack.c.l.b16 %v9640
    %v9874 = vunpack.c.l.b16 %v9641
    %v9875 = vunpack.c.l.b16 %v9642
    %v9876 = vpack.c.b16 %v9845, %v9844
    %v9877 = vpack.c.b16 %v9847, %v9846
    %v9878 = vpack.c.b16 %v9849, %v9848
    %v9879 = vpack.c.b16 %v9851, %v9850
    %v9880 = vpack.c.b16 %v9853, %v9852
    %v9881 = vpack.c.b16 %v9855, %v9854
    %v9882 = vpack.c.b16 %v9857, %v9856
    %v9883 = vpack.c.b16 %v9859, %v9858
    %v9884 = vpack.c.b16 %v9861, %v9860
    %v9885 = vpack.c.b16 %v9863, %v9862
    %v9886 = vpack.c.b16 %v9865, %v9864
    %v9887 = vpack.c.b16 %v9867, %v9866
    %v9888 = vpack.c.b16 %v9869, %v9868
    %v9889 = vpack.c.b16 %v9871, %v9870
    %v9890 = vpack.c.b16 %v9873, %v9872
    %v9891 = vpack.c.b16 %v9875, %v9874
    %9908 = vmatprep.subr.bf16.mxu0 0
    %9909 = vmatpush1.bf16.msra.mxu0 %v9876
    %9910 = vmatprep.subr.bf16.mxu0 0
    %9911 = vmatpush1.bf16.msra.mxu0 %v9877
    %9912 = vmatprep.subr.bf16.mxu0 0
    %9913 = vmatpush1.bf16.msra.mxu0 %v9878
    %9914 = vmatprep.subr.bf16.mxu0 0
    %9915 = vmatpush1.bf16.msra.mxu0 %v9879
    %9916 = vmatprep.subr.bf16.mxu0 0
    %9917 = vmatpush1.bf16.msra.mxu0 %v9880
    %9918 = vmatprep.subr.bf16.mxu0 0
    %9919 = vmatpush1.bf16.msra.mxu0 %v9881
    %9920 = vmatprep.subr.bf16.mxu0 0
    %9921 = vmatpush1.bf16.msra.mxu0 %v9882
    %9922 = vmatprep.subr.bf16.mxu0 0
    %9923 = vmatpush1.bf16.msra.mxu0 %v9883
    %9924 = vmatprep.subr.bf16.mxu0 0
    %9925 = vmatpush1.bf16.msra.mxu0 %v9884
    %9926 = vmatprep.subr.bf16.mxu0 0
    %9927 = vmatpush1.bf16.msra.mxu0 %v9885
    %9928 = vmatprep.subr.bf16.mxu0 0
    %9929 = vmatpush1.bf16.msra.mxu0 %v9886
    %9930 = vmatprep.subr.bf16.mxu0 0
    %9931 = vmatpush1.bf16.msra.mxu0 %v9887
    %9932 = vmatprep.subr.bf16.mxu0 0
    %9933 = vmatpush1.bf16.msra.mxu0 %v9888
    %9934 = vmatprep.subr.bf16.mxu0 0
    %9935 = vmatpush1.bf16.msra.mxu0 %v9889
    %9936 = vmatprep.subr.bf16.mxu0 0
    %9937 = vmatpush1.bf16.msra.mxu0 %v9890
    %9938 = vmatprep.subr.bf16.mxu0 0
    %9939 = vmatpush1.bf16.msra.mxu0 %v9891
    %9940 = vmatprep.mubr.bf16.mxu0 %v8787
    %9941 = vmatmul.mubr.bf16.gmra.mrb[0].mxu0 %v8786
    %v9942 = vpop.f32.mrb[0].mxu0
    %v9943 = vadd.f32 %v9807, %v9942
    %v9944 = vpop.f32.mrb[0].mxu0
    %v9945 = vpop.f32.mrb[0].mxu0
    %v9946 = vpop.f32.mrb[0].mxu0
    %9947 = vdwg.mxu0
    %v9948 = vld [vmem:[#allocation10] sm:$0x1]
    %v9950 = vlaneseq
    %v9951 = vshrl.u32 %v9950, 7
    %v9952 = vsub.s32 0, %v9951
    %v9953 = vrot.slane %v9948, %v9952
    %v9955 = vadd.f32 %v9943, %v9953
    %9956 = vst [vmem:[%s7] sm:$0xff] %v9955
    // Predicated region
    $region54: #{auxi_head_forward.1} parent=1 // pred_check
      _
    $region55: #{auxi_head_forward.1} parent=1 // pred_check_branch
      %9958 = sbr.rel (0) target = $region57
    $region56: #{auxi_head_forward.1} parent=1 // pred_region
      _
    $region57: #{auxi_head_forward.1} parent=1 // pred_fallthru
      _
    // Predicated region
    $region58: #{auxi_head_forward.1} parent=1 // pred_check
      _
    $region59: #{auxi_head_forward.1} parent=1 // pred_check_branch
      %9960 = sbr.rel (0) target = $region61
    $region60: #{auxi_head_forward.1} parent=1 // pred_region
      _
    $region61: #{auxi_head_forward.1} parent=1 // pred_fallthru
      _
    %9961 = vsyncpa [#allocation3], 1
    %9962 = vsyncpa [#allocation5], 1
    %9963 = vsyncpa [#allocation8], 1
    %9964 = vsyncpa [#allocation11], 1

</llo_original>
